<compile_context>
chip_gen: v7x
topology: tpu7x:2x2x1
jax: 0.10.0
libtpu: 0.0.40
codegen_flags: <defaults>
</compile_context>

<pallas_src>
import functools

import numpy as np
import jax
import jax.numpy as jnp
from jax.experimental import pallas as pl
from jax.experimental.pallas import tpu as pltpu

NEG = -9.0e15  # same "minus infinity" constant the PyTorch module uses


# ----------------------------------------------------------------------------
# Fused Pallas kernel: the entire SemGCN forward in one pallas_call
# ----------------------------------------------------------------------------
def _make_fused_kernel(num_layers: int):
    n_sgc = 2 + 2 * num_layers  # total SemGraphConv layers

    def kernel(x_ref, m_ref, b_ref, o_ref):
        # One pre-fused SemGraphConv (+ folded bias/BN affine, optional ReLU).
        # `l` is a static Python int (layer loop is unrolled).
        def layer(h, l, relu):
            # bf16 operands, f32 accumulation on the MXU.
            out = jnp.dot(h.astype(jnp.bfloat16), m_ref[l],
                          preferred_element_type=jnp.float32)
            out = out + b_ref[l]                      # (bias*scale + shift), f32
            if relu:
                out = jnp.maximum(out, 0.0)
            return out

        act = layer(x_ref[...], 0, True)              # gconv_input
        for i in range(num_layers):                   # residual blocks
            residual = act
            h = layer(act, 1 + 2 * i, True)
            act = layer(h, 2 + 2 * i, True) + residual
        o_ref[...] = layer(act, n_sgc - 1, False)     # gconv_output (no BN/ReLU)

    return kernel


# ----------------------------------------------------------------------------
# Batch-tile planning (static, shape-derived)
# ----------------------------------------------------------------------------
def _tile_plan(B: int):
    bp = max(8, ((B + 7) // 8) * 8)        # pad batch to a multiple of 8 sublanes
    tb = min(bp, 256)                      # target M-dim of 256 for the MXU
    bp = ((bp + tb - 1) // tb) * tb        # make padded batch a multiple of tb
    n_tiles = bp // tb
    # v7x has 2 TensorCores: split a single large tile so the "parallel" grid
    # axis actually distributes work (keep tb a multiple of 8).
    if n_tiles == 1 and tb >= 16 and tb % 16 == 0:
        tb //= 2
        n_tiles = 2
    return bp, tb, n_tiles


# ----------------------------------------------------------------------------
# Jitted apply: pad/flatten input, launch the single fused kernel, slice output
# ----------------------------------------------------------------------------
@functools.partial(jax.jit,
                   static_argnames=("num_layers", "joints", "cpad", "cin", "cout"))
def _semgcn_apply(x, m_stack, b_stack, *, num_layers, joints, cpad, cin, cout):
    if x.ndim == 2:                        # bx(J*cin) -> bxJxcin
        x = x.reshape(x.shape[0], joints, cin)
    B = x.shape[0]
    JC = joints * cpad
    n_sgc = 2 + 2 * num_layers

    bp, tb, n_tiles = _tile_plan(B)

    # Pad channels to cpad, pad batch to bp, flatten joints into a lane-dense
    # 512-wide row (index j*cpad + c), cast matmul operand to bf16.
    xp = jnp.pad(x.astype(jnp.float32),
                 ((0, bp - B), (0, 0), (0, cpad - cin)))
    x_flat = xp.reshape(bp, JC).astype(jnp.bfloat16)

    flops = 2 * bp * JC * JC * n_sgc
    bytes_accessed = (bp * JC * 2                 # x (bf16)
                      + n_sgc * JC * JC * 2       # fused weights (bf16)
                      + n_sgc * JC * 4            # bias (f32)
                      + bp * JC * 4)              # output (f32)

    out = pl.pallas_call(
        _make_fused_kernel(num_layers),
        out_shape=jax.ShapeDtypeStruct((bp, JC), jnp.float32),
        grid=(n_tiles,),
        in_specs=[
            pl.BlockSpec((tb, JC), lambda b: (b, 0)),                # activations
            pl.BlockSpec((n_sgc, JC, JC), lambda b: (0, 0, 0)),      # fused M_l
            pl.BlockSpec((n_sgc, 1, JC), lambda b: (0, 0, 0)),       # fused bias
        ],
        out_specs=pl.BlockSpec((tb, JC), lambda b: (b, 0)),
        compiler_params=pltpu.CompilerParams(
            dimension_semantics=("parallel",),
            vmem_limit_bytes=48 * 1024 * 1024),
        cost_estimate=pl.CostEstimate(
            flops=int(flops), transcendentals=0,
            bytes_accessed=int(bytes_accessed)),
    )(x_flat, m_stack, b_stack)

    return out[:B].reshape(B, joints, cpad)[:, :, :cout]


# ----------------------------------------------------------------------------
# Host-side packing (done ONCE): fold BN affine + bias, pre-fuse each layer
# into a single (J*CPAD, J*CPAD) operator, upload to device.
# ----------------------------------------------------------------------------
def pack_semgcn_params(params, num_layers=4):
    layer_list = [params["input"]]
    for blk in params["res"]:
        layer_list += list(blk)
    layer_list.append(params["output"])
    n_sgc = len(layer_list)
    assert n_sgc == 2 + 2 * num_layers

    J = int(np.asarray(layer_list[0]["adj_off"]).shape[0])
    cin0 = int(np.asarray(layer_list[0]["w0"]).shape[0])
    cout_final = int(np.asarray(layer_list[-1]["w0"]).shape[1])
    cpad = 8
    for p in layer_list:
        w0 = np.asarray(p["w0"])
        cpad = max(cpad, w0.shape[0], w0.shape[1])
    JC = J * cpad

    m_stack = np.zeros((n_sgc, JC, JC), np.float32)
    b_stack = np.zeros((n_sgc, 1, JC), np.float32)
    for l, p in enumerate(layer_list):
        w0 = np.asarray(p["w0"], np.float32)
        w1 = np.asarray(p["w1"], np.float32)
        sc = np.asarray(p["scale"], np.float32).reshape(-1)
        sh = np.asarray(p["shift"], np.float32).reshape(-1)
        bias = np.asarray(p["bias"], np.float32).reshape(-1)
        adj_diag = np.asarray(p["adj_diag"], np.float32).reshape(-1)
        adj_off = np.asarray(p["adj_off"], np.float32)
        cin, cout = w0.shape

        w0p = np.zeros((cpad, cpad), np.float32)
        w1p = np.zeros((cpad, cpad), np.float32)
        w0p[:cin, :cout] = w0 * sc[None, :]          # fold BN scale
        w1p[:cin, :cout] = w1 * sc[None, :]

        # out[b,j,d] = adj_diag[j]*(x[b,j]@w0') + sum_k adj_off[j,k]*(x[b,k]@w1')
        # flattened (row = k*cpad+c, col = j*cpad+d):
        m_stack[l] = (np.kron(np.diag(adj_diag), w0p) +
                      np.kron(adj_off.T, w1p))

        bcol = np.zeros((cpad,), np.float32)
        bcol[:cout] = bias * sc + sh                 # fold BN shift
        b_stack[l, 0, :] = np.tile(bcol, J)

    return dict(
        m_stack=jnp.asarray(m_stack, jnp.bfloat16),  # MXU-native operand dtype
        b_stack=jnp.asarray(b_stack, jnp.float32),
        meta=dict(num_layers=num_layers, joints=J, cpad=int(cpad),
                  cin=cin0, cout=cout_final),
    )


def semgcn_forward(x, packed):
    m = packed["meta"]
    return _semgcn_apply(x, packed["m_stack"], packed["b_stack"],
                         num_layers=m["num_layers"], joints=m["joints"],
                         cpad=m["cpad"], cin=m["cin"], cout=m["cout"])


# ----------------------------------------------------------------------------
# Parameter construction (deterministic, mirrors the module __init__)
# ----------------------------------------------------------------------------
def _xavier_uniform(key, shape, gain=1.414):
    fan_in, fan_out = shape[-2], shape[-1]
    bound = gain * np.sqrt(6.0 / (fan_in + fan_out))
    return jax.random.uniform(key, shape, jnp.float32, -bound, bound)


def init_semgconv(key, cin, cout, adj_np, with_bn):
    k1, k2 = jax.random.split(key)
    W = _xavier_uniform(k1, (2, cin, cout))
    stdv = 1.0 / np.sqrt(cout)
    bias = jax.random.uniform(k2, (1, cout), jnp.float32, -stdv, stdv)

    # e is init'd to 1 (nn.init.constant_); the softmaxed masked adjacency
    # depends only on parameters, so it is precomputed host-side.
    mask = adj_np > 0
    e = np.ones((int(mask.sum()),), np.float32)
    logits = np.full(adj_np.shape, NEG, dtype=np.float32)
    logits[mask] = e
    logits = logits - logits.max(axis=1, keepdims=True)
    expl = np.exp(logits)
    A = expl / expl.sum(axis=1, keepdims=True)               # softmax(dim=1)
    I = np.eye(adj_np.shape[0], dtype=np.float32)
    adj_diag = np.diag(A).copy().astype(np.float32)          # (J,)  == adj*I
    adj_off = (A * (1.0 - I)).astype(np.float32)             # (J,J) == adj*(1-I)

    if with_bn:   # BatchNorm1d default init, inference mode (running stats)
        gamma = np.ones((1, cout), np.float32)
        beta = np.zeros((1, cout), np.float32)
        run_mean = np.zeros((1, cout), np.float32)
        run_var = np.ones((1, cout), np.float32)
        scale = gamma / np.sqrt(run_var + 1e-5)
        shift = beta - run_mean * scale
    else:         # output SemGraphConv has no BN: identity affine
        scale = np.ones((1, cout), np.float32)
        shift = np.zeros((1, cout), np.float32)

    return dict(w0=W[0], w1=W[1], bias=bias,
                adj_diag=adj_diag, adj_off=adj_off,
                scale=scale, shift=shift)


# ----------------------------------------------------------------------------
# Pure-JAX reference (f32) for in-script correctness check
# ----------------------------------------------------------------------------
def _ref_forward(x, params, num_layers=4):
    def layer(xx, p, relu, res=None):
        h0 = jnp.einsum('bjc,cd->bjd', xx, p['w0'])
        h1 = jnp.einsum('bjc,cd->bjd', xx, p['w1'])
        out = (jnp.asarray(p['adj_diag'])[None, :, None] * h0 +
               jnp.einsum('jk,bkd->bjd', jnp.asarray(p['adj_off']), h1))
        out = out + jnp.asarray(p['bias'])
        out = out * jnp.asarray(p['scale']) + jnp.asarray(p['shift'])
        if relu:
            out = jnp.maximum(out, 0.0)
        if res is not None:
            out = out + res
        return out

    if x.ndim == 2:
        x = x.reshape(x.shape[0], 16, 2)
    out = layer(x, params['input'], True)
    for i in range(num_layers):
        p1, p2 = params['res'][i]
        out = layer(layer(out, p1, True), p2, True, res=out)
    return layer(out, params['output'], False)


# ----------------------------------------------------------------------------
if __name__ == "__main__":
    J, HID, NUM_LAYERS, B = 16, 32, 4, 2

    # simple skeleton-like adjacency: self-loops + chain edges on 16 joints
    adj_np = np.eye(J, dtype=np.float32)
    for i in range(J - 1):
        adj_np[i, i + 1] = 1.0
        adj_np[i + 1, i] = 1.0

    key = jax.random.PRNGKey(0)
    keys = jax.random.split(key, 2 + 2 * NUM_LAYERS + 1)
    params = {
        'input': init_semgconv(keys[0], 2, HID, adj_np, with_bn=True),
        'res': [(init_semgconv(keys[1 + 2 * i], HID, HID, adj_np, with_bn=True),
                 init_semgconv(keys[2 + 2 * i], HID, HID, adj_np, with_bn=True))
                for i in range(NUM_LAYERS)],
        'output': init_semgconv(keys[1 + 2 * NUM_LAYERS], HID, 3, adj_np,
                                with_bn=False),
    }

    x = jax.random.normal(keys[-1], (B, J, 2), jnp.float32)

    packed = pack_semgcn_params(params, NUM_LAYERS)   # host packing done ONCE

    out = semgcn_forward(x, packed)
    out = jax.block_until_ready(out)
    assert out.shape == (B, J, 3)

    ref = _ref_forward(x, params, NUM_LAYERS)
    out_np = np.asarray(out, np.float32)
    ref_np = np.asarray(ref, np.float32)
    # bf16 matmul operands over 10 chained layers -> compare with a normalized
    # tolerance instead of f32-level rtol/atol.
    denom = max(float(np.max(np.abs(ref_np))), 1e-3)
    max_rel = float(np.max(np.abs(out_np - ref_np))) / denom
    assert max_rel < 5e-2, f"mismatch: normalized max error {max_rel:.4f}"
    print("KERNEL_OK")
</pallas_src>

<mosaic_0001>
module attributes {stable_mosaic.version = 11 : i64} {
  func.func @kernel(%arg0: i32, %arg1: memref<8x512xbf16, #tpu.memory_space<vmem>>, %arg2: memref<10x512x512xbf16, #tpu.memory_space<vmem>>, %arg3: memref<10x1x512xf32, #tpu.memory_space<vmem>>, %arg4: memref<8x512xf32, #tpu.memory_space<vmem>>) attributes {dimension_semantics = [#tpu.dimension_semantics<parallel>], iteration_bounds = array<i64: 1>, scalar_prefetch = 0 : i64, scratch_operands = 0 : i64, tpu.core_type = #tpu.core_type<tc>, window_params = [{transform_indices = @transform_0, window_bounds = array<i64: 8, 512>}, {pipeline_mode = #tpu.pipeline_mode<synchronous>, transform_indices = @transform_1, window_bounds = array<i64: 10, 512, 512>}, {pipeline_mode = #tpu.pipeline_mode<synchronous>, transform_indices = @transform_2, window_bounds = array<i64: 10, 1, 512>}, {transform_indices = @transform_3, window_bounds = array<i64: 8, 512>}]} {
    %c0 = arith.constant 0 : index
    %c0_0 = arith.constant 0 : index
    %0 = vector.load %arg1[%c0, %c0_0] : memref<8x512xbf16, #tpu.memory_space<vmem>>, vector<8x512xbf16>
    %c0_1 = arith.constant 0 : index
    %c0_2 = arith.constant 0 : index
    %c0_3 = arith.constant 0 : index
    %1 = vector.load %arg2[%c0_1, %c0_2, %c0_3] : memref<10x512x512xbf16, #tpu.memory_space<vmem>>, vector<1x512x512xbf16>
    %2 = vector.shape_cast %1 : vector<1x512x512xbf16> to vector<512x512xbf16>
    %cst = arith.constant dense<0.000000e+00> : vector<8x512xf32>
    %3 = tpu.matmul %0, %2, %cst {dimension_numbers = #tpu.dot_dimension_numbers<[1], [0], [0], [1], [0, 0, 1, 1], [], []>} : vector<8x512xbf16>, vector<512x512xbf16>, vector<8x512xf32> -> vector<8x512xf32>
    %c0_4 = arith.constant 0 : index
    %c0_5 = arith.constant 0 : index
    %c0_6 = arith.constant 0 : index
    %4 = vector.load %arg3[%c0_4, %c0_5, %c0_6] : memref<10x1x512xf32, #tpu.memory_space<vmem>>, vector<1x1x512xf32>
    %5 = vector.shape_cast %4 : vector<1x1x512xf32> to vector<1x512xf32>
    %6 = vector.broadcast %5 : vector<1x512xf32> to vector<8x512xf32>
    %7 = arith.addf %3, %6 : vector<8x512xf32>
    %cst_7 = arith.constant 0.000000e+00 : f32
    %8 = vector.broadcast %cst_7 : f32 to vector<8x512xf32>
    %9 = arith.maximumf %7, %8 : vector<8x512xf32>
    %10 = arith.truncf %9 : vector<8x512xf32> to vector<8x512xbf16>
    %c1 = arith.constant 1 : index
    %c0_8 = arith.constant 0 : index
    %c0_9 = arith.constant 0 : index
    %11 = vector.load %arg2[%c1, %c0_8, %c0_9] : memref<10x512x512xbf16, #tpu.memory_space<vmem>>, vector<1x512x512xbf16>
    %12 = vector.shape_cast %11 : vector<1x512x512xbf16> to vector<512x512xbf16>
    %cst_10 = arith.constant dense<0.000000e+00> : vector<8x512xf32>
    %13 = tpu.matmul %10, %12, %cst_10 {dimension_numbers = #tpu.dot_dimension_numbers<[1], [0], [0], [1], [0, 0, 1, 1], [], []>} : vector<8x512xbf16>, vector<512x512xbf16>, vector<8x512xf32> -> vector<8x512xf32>
    %c1_11 = arith.constant 1 : index
    %c0_12 = arith.constant 0 : index
    %c0_13 = arith.constant 0 : index
    %14 = vector.load %arg3[%c1_11, %c0_12, %c0_13] : memref<10x1x512xf32, #tpu.memory_space<vmem>>, vector<1x1x512xf32>
    %15 = vector.shape_cast %14 : vector<1x1x512xf32> to vector<1x512xf32>
    %16 = vector.broadcast %15 : vector<1x512xf32> to vector<8x512xf32>
    %17 = arith.addf %13, %16 : vector<8x512xf32>
    %cst_14 = arith.constant 0.000000e+00 : f32
    %18 = vector.broadcast %cst_14 : f32 to vector<8x512xf32>
    %19 = arith.maximumf %17, %18 : vector<8x512xf32>
    %20 = arith.truncf %19 : vector<8x512xf32> to vector<8x512xbf16>
    %c2 = arith.constant 2 : index
    %c0_15 = arith.constant 0 : index
    %c0_16 = arith.constant 0 : index
    %21 = vector.load %arg2[%c2, %c0_15, %c0_16] : memref<10x512x512xbf16, #tpu.memory_space<vmem>>, vector<1x512x512xbf16>
    %22 = vector.shape_cast %21 : vector<1x512x512xbf16> to vector<512x512xbf16>
    %cst_17 = arith.constant dense<0.000000e+00> : vector<8x512xf32>
    %23 = tpu.matmul %20, %22, %cst_17 {dimension_numbers = #tpu.dot_dimension_numbers<[1], [0], [0], [1], [0, 0, 1, 1], [], []>} : vector<8x512xbf16>, vector<512x512xbf16>, vector<8x512xf32> -> vector<8x512xf32>
    %c2_18 = arith.constant 2 : index
    %c0_19 = arith.constant 0 : index
    %c0_20 = arith.constant 0 : index
    %24 = vector.load %arg3[%c2_18, %c0_19, %c0_20] : memref<10x1x512xf32, #tpu.memory_space<vmem>>, vector<1x1x512xf32>
    %25 = vector.shape_cast %24 : vector<1x1x512xf32> to vector<1x512xf32>
    %26 = vector.broadcast %25 : vector<1x512xf32> to vector<8x512xf32>
    %27 = arith.addf %23, %26 : vector<8x512xf32>
    %cst_21 = arith.constant 0.000000e+00 : f32
    %28 = vector.broadcast %cst_21 : f32 to vector<8x512xf32>
    %29 = arith.maximumf %27, %28 : vector<8x512xf32>
    %30 = arith.addf %29, %9 : vector<8x512xf32>
    %31 = arith.truncf %30 : vector<8x512xf32> to vector<8x512xbf16>
    %c3 = arith.constant 3 : index
    %c0_22 = arith.constant 0 : index
    %c0_23 = arith.constant 0 : index
    %32 = vector.load %arg2[%c3, %c0_22, %c0_23] : memref<10x512x512xbf16, #tpu.memory_space<vmem>>, vector<1x512x512xbf16>
    %33 = vector.shape_cast %32 : vector<1x512x512xbf16> to vector<512x512xbf16>
    %cst_24 = arith.constant dense<0.000000e+00> : vector<8x512xf32>
    %34 = tpu.matmul %31, %33, %cst_24 {dimension_numbers = #tpu.dot_dimension_numbers<[1], [0], [0], [1], [0, 0, 1, 1], [], []>} : vector<8x512xbf16>, vector<512x512xbf16>, vector<8x512xf32> -> vector<8x512xf32>
    %c3_25 = arith.constant 3 : index
    %c0_26 = arith.constant 0 : index
    %c0_27 = arith.constant 0 : index
    %35 = vector.load %arg3[%c3_25, %c0_26, %c0_27] : memref<10x1x512xf32, #tpu.memory_space<vmem>>, vector<1x1x512xf32>
    %36 = vector.shape_cast %35 : vector<1x1x512xf32> to vector<1x512xf32>
    %37 = vector.broadcast %36 : vector<1x512xf32> to vector<8x512xf32>
    %38 = arith.addf %34, %37 : vector<8x512xf32>
    %cst_28 = arith.constant 0.000000e+00 : f32
    %39 = vector.broadcast %cst_28 : f32 to vector<8x512xf32>
    %40 = arith.maximumf %38, %39 : vector<8x512xf32>
    %41 = arith.truncf %40 : vector<8x512xf32> to vector<8x512xbf16>
    %c4 = arith.constant 4 : index
    %c0_29 = arith.constant 0 : index
    %c0_30 = arith.constant 0 : index
    %42 = vector.load %arg2[%c4, %c0_29, %c0_30] : memref<10x512x512xbf16, #tpu.memory_space<vmem>>, vector<1x512x512xbf16>
    %43 = vector.shape_cast %42 : vector<1x512x512xbf16> to vector<512x512xbf16>
    %cst_31 = arith.constant dense<0.000000e+00> : vector<8x512xf32>
    %44 = tpu.matmul %41, %43, %cst_31 {dimension_numbers = #tpu.dot_dimension_numbers<[1], [0], [0], [1], [0, 0, 1, 1], [], []>} : vector<8x512xbf16>, vector<512x512xbf16>, vector<8x512xf32> -> vector<8x512xf32>
    %c4_32 = arith.constant 4 : index
    %c0_33 = arith.constant 0 : index
    %c0_34 = arith.constant 0 : index
    %45 = vector.load %arg3[%c4_32, %c0_33, %c0_34] : memref<10x1x512xf32, #tpu.memory_space<vmem>>, vector<1x1x512xf32>
    %46 = vector.shape_cast %45 : vector<1x1x512xf32> to vector<1x512xf32>
    %47 = vector.broadcast %46 : vector<1x512xf32> to vector<8x512xf32>
    %48 = arith.addf %44, %47 : vector<8x512xf32>
    %cst_35 = arith.constant 0.000000e+00 : f32
    %49 = vector.broadcast %cst_35 : f32 to vector<8x512xf32>
    %50 = arith.maximumf %48, %49 : vector<8x512xf32>
    %51 = arith.addf %50, %30 : vector<8x512xf32>
    %52 = arith.truncf %51 : vector<8x512xf32> to vector<8x512xbf16>
    %c5 = arith.constant 5 : index
    %c0_36 = arith.constant 0 : index
    %c0_37 = arith.constant 0 : index
    %53 = vector.load %arg2[%c5, %c0_36, %c0_37] : memref<10x512x512xbf16, #tpu.memory_space<vmem>>, vector<1x512x512xbf16>
    %54 = vector.shape_cast %53 : vector<1x512x512xbf16> to vector<512x512xbf16>
    %cst_38 = arith.constant dense<0.000000e+00> : vector<8x512xf32>
    %55 = tpu.matmul %52, %54, %cst_38 {dimension_numbers = #tpu.dot_dimension_numbers<[1], [0], [0], [1], [0, 0, 1, 1], [], []>} : vector<8x512xbf16>, vector<512x512xbf16>, vector<8x512xf32> -> vector<8x512xf32>
    %c5_39 = arith.constant 5 : index
    %c0_40 = arith.constant 0 : index
    %c0_41 = arith.constant 0 : index
    %56 = vector.load %arg3[%c5_39, %c0_40, %c0_41] : memref<10x1x512xf32, #tpu.memory_space<vmem>>, vector<1x1x512xf32>
    %57 = vector.shape_cast %56 : vector<1x1x512xf32> to vector<1x512xf32>
    %58 = vector.broadcast %57 : vector<1x512xf32> to vector<8x512xf32>
    %59 = arith.addf %55, %58 : vector<8x512xf32>
    %cst_42 = arith.constant 0.000000e+00 : f32
    %60 = vector.broadcast %cst_42 : f32 to vector<8x512xf32>
    %61 = arith.maximumf %59, %60 : vector<8x512xf32>
    %62 = arith.truncf %61 : vector<8x512xf32> to vector<8x512xbf16>
    %c6 = arith.constant 6 : index
    %c0_43 = arith.constant 0 : index
    %c0_44 = arith.constant 0 : index
    %63 = vector.load %arg2[%c6, %c0_43, %c0_44] : memref<10x512x512xbf16, #tpu.memory_space<vmem>>, vector<1x512x512xbf16>
    %64 = vector.shape_cast %63 : vector<1x512x512xbf16> to vector<512x512xbf16>
    %cst_45 = arith.constant dense<0.000000e+00> : vector<8x512xf32>
    %65 = tpu.matmul %62, %64, %cst_45 {dimension_numbers = #tpu.dot_dimension_numbers<[1], [0], [0], [1], [0, 0, 1, 1], [], []>} : vector<8x512xbf16>, vector<512x512xbf16>, vector<8x512xf32> -> vector<8x512xf32>
    %c6_46 = arith.constant 6 : index
    %c0_47 = arith.constant 0 : index
    %c0_48 = arith.constant 0 : index
    %66 = vector.load %arg3[%c6_46, %c0_47, %c0_48] : memref<10x1x512xf32, #tpu.memory_space<vmem>>, vector<1x1x512xf32>
    %67 = vector.shape_cast %66 : vector<1x1x512xf32> to vector<1x512xf32>
    %68 = vector.broadcast %67 : vector<1x512xf32> to vector<8x512xf32>
    %69 = arith.addf %65, %68 : vector<8x512xf32>
    %cst_49 = arith.constant 0.000000e+00 : f32
    %70 = vector.broadcast %cst_49 : f32 to vector<8x512xf32>
    %71 = arith.maximumf %69, %70 : vector<8x512xf32>
    %72 = arith.addf %71, %51 : vector<8x512xf32>
    %73 = arith.truncf %72 : vector<8x512xf32> to vector<8x512xbf16>
    %c7 = arith.constant 7 : index
    %c0_50 = arith.constant 0 : index
    %c0_51 = arith.constant 0 : index
    %74 = vector.load %arg2[%c7, %c0_50, %c0_51] : memref<10x512x512xbf16, #tpu.memory_space<vmem>>, vector<1x512x512xbf16>
    %75 = vector.shape_cast %74 : vector<1x512x512xbf16> to vector<512x512xbf16>
    %cst_52 = arith.constant dense<0.000000e+00> : vector<8x512xf32>
    %76 = tpu.matmul %73, %75, %cst_52 {dimension_numbers = #tpu.dot_dimension_numbers<[1], [0], [0], [1], [0, 0, 1, 1], [], []>} : vector<8x512xbf16>, vector<512x512xbf16>, vector<8x512xf32> -> vector<8x512xf32>
    %c7_53 = arith.constant 7 : index
    %c0_54 = arith.constant 0 : index
    %c0_55 = arith.constant 0 : index
    %77 = vector.load %arg3[%c7_53, %c0_54, %c0_55] : memref<10x1x512xf32, #tpu.memory_space<vmem>>, vector<1x1x512xf32>
    %78 = vector.shape_cast %77 : vector<1x1x512xf32> to vector<1x512xf32>
    %79 = vector.broadcast %78 : vector<1x512xf32> to vector<8x512xf32>
    %80 = arith.addf %76, %79 : vector<8x512xf32>
    %cst_56 = arith.constant 0.000000e+00 : f32
    %81 = vector.broadcast %cst_56 : f32 to vector<8x512xf32>
    %82 = arith.maximumf %80, %81 : vector<8x512xf32>
    %83 = arith.truncf %82 : vector<8x512xf32> to vector<8x512xbf16>
    %c8 = arith.constant 8 : index
    %c0_57 = arith.constant 0 : index
    %c0_58 = arith.constant 0 : index
    %84 = vector.load %arg2[%c8, %c0_57, %c0_58] : memref<10x512x512xbf16, #tpu.memory_space<vmem>>, vector<1x512x512xbf16>
    %85 = vector.shape_cast %84 : vector<1x512x512xbf16> to vector<512x512xbf16>
    %cst_59 = arith.constant dense<0.000000e+00> : vector<8x512xf32>
    %86 = tpu.matmul %83, %85, %cst_59 {dimension_numbers = #tpu.dot_dimension_numbers<[1], [0], [0], [1], [0, 0, 1, 1], [], []>} : vector<8x512xbf16>, vector<512x512xbf16>, vector<8x512xf32> -> vector<8x512xf32>
    %c8_60 = arith.constant 8 : index
    %c0_61 = arith.constant 0 : index
    %c0_62 = arith.constant 0 : index
    %87 = vector.load %arg3[%c8_60, %c0_61, %c0_62] : memref<10x1x512xf32, #tpu.memory_space<vmem>>, vector<1x1x512xf32>
    %88 = vector.shape_cast %87 : vector<1x1x512xf32> to vector<1x512xf32>
    %89 = vector.broadcast %88 : vector<1x512xf32> to vector<8x512xf32>
    %90 = arith.addf %86, %89 : vector<8x512xf32>
    %cst_63 = arith.constant 0.000000e+00 : f32
    %91 = vector.broadcast %cst_63 : f32 to vector<8x512xf32>
    %92 = arith.maximumf %90, %91 : vector<8x512xf32>
    %93 = arith.addf %92, %72 : vector<8x512xf32>
    %94 = arith.truncf %93 : vector<8x512xf32> to vector<8x512xbf16>
    %c9 = arith.constant 9 : index
    %c0_64 = arith.constant 0 : index
    %c0_65 = arith.constant 0 : index
    %95 = vector.load %arg2[%c9, %c0_64, %c0_65] : memref<10x512x512xbf16, #tpu.memory_space<vmem>>, vector<1x512x512xbf16>
    %96 = vector.shape_cast %95 : vector<1x512x512xbf16> to vector<512x512xbf16>
    %cst_66 = arith.constant dense<0.000000e+00> : vector<8x512xf32>
    %97 = tpu.matmul %94, %96, %cst_66 {dimension_numbers = #tpu.dot_dimension_numbers<[1], [0], [0], [1], [0, 0, 1, 1], [], []>} : vector<8x512xbf16>, vector<512x512xbf16>, vector<8x512xf32> -> vector<8x512xf32>
    %c9_67 = arith.constant 9 : index
    %c0_68 = arith.constant 0 : index
    %c0_69 = arith.constant 0 : index
    %98 = vector.load %arg3[%c9_67, %c0_68, %c0_69] : memref<10x1x512xf32, #tpu.memory_space<vmem>>, vector<1x1x512xf32>
    %99 = vector.shape_cast %98 : vector<1x1x512xf32> to vector<1x512xf32>
    %100 = vector.broadcast %99 : vector<1x512xf32> to vector<8x512xf32>
    %101 = arith.addf %97, %100 : vector<8x512xf32>
    %c0_70 = arith.constant 0 : index
    %c0_71 = arith.constant 0 : index
    %102 = vector.load %arg4[%c0_70, %c0_71] : memref<8x512xf32, #tpu.memory_space<vmem>>, vector<8x512xf32>
    tpu.vector_store %arg4[%c0_70, %c0_71], %101 {strides = array<i32>} : memref<8x512xf32, #tpu.memory_space<vmem>>, vector<8x512xf32>,
    return
  }
  func.func @transform_0(%arg0: i32) -> (i32, i32) {
    %c0_i32 = arith.constant 0 : i32
    %c0_i32_0 = arith.constant 0 : i32
    return %arg0, %c0_i32 : i32, i32
  }
  func.func @transform_1(%arg0: i32) -> (i32, i32, i32) {
    %c0_i32 = arith.constant 0 : i32
    %c0_i32_0 = arith.constant 0 : i32
    %c0_i32_1 = arith.constant 0 : i32
    %c0_i32_2 = arith.constant 0 : i32
    return %c0_i32, %c0_i32_0, %c0_i32_1 : i32, i32, i32
  }
  func.func @transform_2(%arg0: i32) -> (i32, i32, i32) {
    %c0_i32 = arith.constant 0 : i32
    %c0_i32_0 = arith.constant 0 : i32
    %c0_i32_1 = arith.constant 0 : i32
    %c0_i32_2 = arith.constant 0 : i32
    return %c0_i32, %c0_i32_0, %c0_i32_1 : i32, i32, i32
  }
  func.func @transform_3(%arg0: i32) -> (i32, i32) {
    %c0_i32 = arith.constant 0 : i32
    %c0_i32_0 = arith.constant 0 : i32
    return %arg0, %c0_i32 : i32, i32
  }
}

</mosaic_0001>

<llo_original>
// kernel: _semgcn_apply.1
$region0: #{_semgcn_apply.1}
  #allocation0 [shape = 'u32[]', space=smem, size = 0x4, offset = 0x4, fixed_abs, tag = 'smem constant byte address 0x4 - core index']
  #allocation1 [shape = 'u32[144,128]{1,0:T(1,128)}', space=vmem, size = 0x12000, scoped, tag = 'internal scratch']
  %s0 = inlined_call_operand.vmem [shape: bf16[8,512], index: 0, kind: input, shape index: {}]
  %s1 = inlined_call_operand.hbm [shape: bf16[10,512,512], index: 1, kind: input, shape index: {}]
  %s2 = inlined_call_operand.hbm [shape: f32[10,1,512], index: 2, kind: input, shape index: {}]
  %s3 = inlined_call_operand.vmem [shape: f32[8,512], index: 3, kind: output, shape index: {}]
  %s4 = sld [smem:[#allocation0]]
  $region30: #{_semgcn_apply.1} parent=0
    _
  %s6 = ssub.s32 1, %s4
  %s7 = scalar_select 0, %s6, %s4
  $region1: #{_semgcn_apply.1} parent=0
    #allocation2 [shape = 'u8[5242880]{0}', space=vmem, size = 0x500000, scoped, tag = 'input window, operand 1, single buffered']
    #allocation3 [shape = 's32[1]{0}', space=sflag, size = 0x4, scoped, tag = 'scoped memory for _semgcn_apply.1']
    #allocation4 [shape = 'u8[20480]{0}', space=vmem, size = 0x5000, scoped, tag = 'input window, operand 2, single buffered']
    #allocation5 [shape = 's32[1]{0}', space=sflag, size = 0x4, scoped, tag = 'scoped memory for _semgcn_apply.1']
    %8 = vsyncpa [#allocation3], 0
    %9 = vsyncpa [#allocation5], 0
    // Predicated region
    $region2: #{_semgcn_apply.1} parent=1 // pred_check
      _
    $region3: #{_semgcn_apply.1} parent=1 // pred_check_branch
      %11 = sbr.rel (0) target = $region5
    $region4: #{_semgcn_apply.1} parent=1 // pred_region
      _
    $region5: #{_semgcn_apply.1} parent=1 // pred_fallthru
      _
    // Predicated region
    $region6: #{_semgcn_apply.1} parent=1 // pred_check
      _
    $region7: #{_semgcn_apply.1} parent=1 // pred_check_branch
      %13 = sbr.rel (0) target = $region9
    $region8: #{_semgcn_apply.1} parent=1 // pred_region
      %s15 = ssub.s32 163840, 163840
      %16 = vsyncadd [#allocation3], %s15
      %s17 = sshll.u32 [#allocation2], 4
      %s18 = int_to_ptr.vmem [resolvable:$true] %s17
      %23 = dma.hbm_to_vmem [thread:$0]  %s1, 163840, %s18, [#allocation3], 256, 256, 16
    $region9: #{_semgcn_apply.1} parent=1 // pred_fallthru
      _
    // Predicated region
    $region10: #{_semgcn_apply.1} parent=1 // pred_check
      _
    $region11: #{_semgcn_apply.1} parent=1 // pred_check_branch
      %25 = sbr.rel (0) target = $region13
    $region12: #{_semgcn_apply.1} parent=1 // pred_region
      %s27 = ssub.s32 640, 640
      %28 = vsyncadd [#allocation5], %s27
      %s29 = sshll.u32 [#allocation4], 4
      %s30 = int_to_ptr.vmem [resolvable:$true] %s29
      %35 = dma.hbm_to_vmem [thread:$0]  %s2, 640, %s30, [#allocation5], 64, 64, 4
    $region13: #{_semgcn_apply.1} parent=1 // pred_fallthru
      _
    // Predicated region
    $region14: #{_semgcn_apply.1} parent=1 // pred_check
      _
    $region15: #{_semgcn_apply.1} parent=1 // pred_check_branch
      %37 = sbr.rel (0) target = $region17
    $region16: #{_semgcn_apply.1} parent=1 // pred_region
      %38 = dma.done [#allocation3], 163840
    $region17: #{_semgcn_apply.1} parent=1 // pred_fallthru
      _
    // Predicated region
    $region18: #{_semgcn_apply.1} parent=1 // pred_check
      _
    $region19: #{_semgcn_apply.1} parent=1 // pred_check_branch
      %40 = sbr.rel (0) target = $region21
    $region20: #{_semgcn_apply.1} parent=1 // pred_region
      %41 = dma.done [#allocation5], 640
    $region21: #{_semgcn_apply.1} parent=1 // pred_fallthru
      _
    %v42 = vld [vmem:[%s0] sm:$0xff]
    %v43 = vld [vmem:[%s0 + $0x8] sm:$0xff]
    %v44 = vld [vmem:[#allocation2] sm:$0xff]
    %v45 = vld [vmem:[#allocation2 + $0x8] sm:$0xff]
    %v46 = vld [vmem:[#allocation2 + $0x10] sm:$0xff]
    %v47 = vld [vmem:[#allocation2 + $0x18] sm:$0xff]
    %v48 = vld [vmem:[#allocation2 + $0x20] sm:$0xff]
    %v49 = vld [vmem:[#allocation2 + $0x28] sm:$0xff]
    %v50 = vld [vmem:[#allocation2 + $0x30] sm:$0xff]
    %v51 = vld [vmem:[#allocation2 + $0x38] sm:$0xff]
    %v52 = vld [vmem:[#allocation2 + $0x40] sm:$0xff]
    %v53 = vld [vmem:[#allocation2 + $0x48] sm:$0xff]
    %v54 = vld [vmem:[#allocation2 + $0x50] sm:$0xff]
    %v55 = vld [vmem:[#allocation2 + $0x58] sm:$0xff]
    %v56 = vld [vmem:[#allocation2 + $0x60] sm:$0xff]
    %v57 = vld [vmem:[#allocation2 + $0x68] sm:$0xff]
    %v58 = vld [vmem:[#allocation2 + $0x70] sm:$0xff]
    %v59 = vld [vmem:[#allocation2 + $0x78] sm:$0xff]
    %v60 = vld [vmem:[#allocation2 + $0x80] sm:$0xff]
    %v61 = vld [vmem:[#allocation2 + $0x88] sm:$0xff]
    %v62 = vld [vmem:[#allocation2 + $0x90] sm:$0xff]
    %v63 = vld [vmem:[#allocation2 + $0x98] sm:$0xff]
    %v64 = vld [vmem:[#allocation2 + $0xa0] sm:$0xff]
    %v65 = vld [vmem:[#allocation2 + $0xa8] sm:$0xff]
    %v66 = vld [vmem:[#allocation2 + $0xb0] sm:$0xff]
    %v67 = vld [vmem:[#allocation2 + $0xb8] sm:$0xff]
    %v68 = vld [vmem:[#allocation2 + $0xc0] sm:$0xff]
    %v69 = vld [vmem:[#allocation2 + $0xc8] sm:$0xff]
    %v70 = vld [vmem:[#allocation2 + $0xd0] sm:$0xff]
    %v71 = vld [vmem:[#allocation2 + $0xd8] sm:$0xff]
    %v72 = vld [vmem:[#allocation2 + $0xe0] sm:$0xff]
    %v73 = vld [vmem:[#allocation2 + $0xe8] sm:$0xff]
    %v74 = vld [vmem:[#allocation2 + $0xf0] sm:$0xff]
    %v75 = vld [vmem:[#allocation2 + $0xf8] sm:$0xff]
    %v76 = vld [vmem:[#allocation2 + $0x100] sm:$0xff]
    %v77 = vld [vmem:[#allocation2 + $0x108] sm:$0xff]
    %v78 = vld [vmem:[#allocation2 + $0x110] sm:$0xff]
    %v79 = vld [vmem:[#allocation2 + $0x118] sm:$0xff]
    %v80 = vld [vmem:[#allocation2 + $0x120] sm:$0xff]
    %v81 = vld [vmem:[#allocation2 + $0x128] sm:$0xff]
    %v82 = vld [vmem:[#allocation2 + $0x130] sm:$0xff]
    %v83 = vld [vmem:[#allocation2 + $0x138] sm:$0xff]
    %v84 = vld [vmem:[#allocation2 + $0x140] sm:$0xff]
    %v85 = vld [vmem:[#allocation2 + $0x148] sm:$0xff]
    %v86 = vld [vmem:[#allocation2 + $0x150] sm:$0xff]
    %v87 = vld [vmem:[#allocation2 + $0x158] sm:$0xff]
    %v88 = vld [vmem:[#allocation2 + $0x160] sm:$0xff]
    %v89 = vld [vmem:[#allocation2 + $0x168] sm:$0xff]
    %v90 = vld [vmem:[#allocation2 + $0x170] sm:$0xff]
    %v91 = vld [vmem:[#allocation2 + $0x178] sm:$0xff]
    %v92 = vld [vmem:[#allocation2 + $0x180] sm:$0xff]
    %v93 = vld [vmem:[#allocation2 + $0x188] sm:$0xff]
    %v94 = vld [vmem:[#allocation2 + $0x190] sm:$0xff]
    %v95 = vld [vmem:[#allocation2 + $0x198] sm:$0xff]
    %v96 = vld [vmem:[#allocation2 + $0x1a0] sm:$0xff]
    %v97 = vld [vmem:[#allocation2 + $0x1a8] sm:$0xff]
    %v98 = vld [vmem:[#allocation2 + $0x1b0] sm:$0xff]
    %v99 = vld [vmem:[#allocation2 + $0x1b8] sm:$0xff]
    %v100 = vld [vmem:[#allocation2 + $0x1c0] sm:$0xff]
    %v101 = vld [vmem:[#allocation2 + $0x1c8] sm:$0xff]
    %v102 = vld [vmem:[#allocation2 + $0x1d0] sm:$0xff]
    %v103 = vld [vmem:[#allocation2 + $0x1d8] sm:$0xff]
    %v104 = vld [vmem:[#allocation2 + $0x1e0] sm:$0xff]
    %v105 = vld [vmem:[#allocation2 + $0x1e8] sm:$0xff]
    %v106 = vld [vmem:[#allocation2 + $0x1f0] sm:$0xff]
    %v107 = vld [vmem:[#allocation2 + $0x1f8] sm:$0xff]
    %v108 = vld [vmem:[#allocation2 + $0x200] sm:$0xff]
    %v109 = vld [vmem:[#allocation2 + $0x208] sm:$0xff]
    %v110 = vld [vmem:[#allocation2 + $0x210] sm:$0xff]
    %v111 = vld [vmem:[#allocation2 + $0x218] sm:$0xff]
    %v112 = vld [vmem:[#allocation2 + $0x220] sm:$0xff]
    %v113 = vld [vmem:[#allocation2 + $0x228] sm:$0xff]
    %v114 = vld [vmem:[#allocation2 + $0x230] sm:$0xff]
    %v115 = vld [vmem:[#allocation2 + $0x238] sm:$0xff]
    %v116 = vld [vmem:[#allocation2 + $0x240] sm:$0xff]
    %v117 = vld [vmem:[#allocation2 + $0x248] sm:$0xff]
    %v118 = vld [vmem:[#allocation2 + $0x250] sm:$0xff]
    %v119 = vld [vmem:[#allocation2 + $0x258] sm:$0xff]
    %v120 = vld [vmem:[#allocation2 + $0x260] sm:$0xff]
    %v121 = vld [vmem:[#allocation2 + $0x268] sm:$0xff]
    %v122 = vld [vmem:[#allocation2 + $0x270] sm:$0xff]
    %v123 = vld [vmem:[#allocation2 + $0x278] sm:$0xff]
    %v124 = vld [vmem:[#allocation2 + $0x280] sm:$0xff]
    %v125 = vld [vmem:[#allocation2 + $0x288] sm:$0xff]
    %v126 = vld [vmem:[#allocation2 + $0x290] sm:$0xff]
    %v127 = vld [vmem:[#allocation2 + $0x298] sm:$0xff]
    %v128 = vld [vmem:[#allocation2 + $0x2a0] sm:$0xff]
    %v129 = vld [vmem:[#allocation2 + $0x2a8] sm:$0xff]
    %v130 = vld [vmem:[#allocation2 + $0x2b0] sm:$0xff]
    %v131 = vld [vmem:[#allocation2 + $0x2b8] sm:$0xff]
    %v132 = vld [vmem:[#allocation2 + $0x2c0] sm:$0xff]
    %v133 = vld [vmem:[#allocation2 + $0x2c8] sm:$0xff]
    %v134 = vld [vmem:[#allocation2 + $0x2d0] sm:$0xff]
    %v135 = vld [vmem:[#allocation2 + $0x2d8] sm:$0xff]
    %v136 = vld [vmem:[#allocation2 + $0x2e0] sm:$0xff]
    %v137 = vld [vmem:[#allocation2 + $0x2e8] sm:$0xff]
    %v138 = vld [vmem:[#allocation2 + $0x2f0] sm:$0xff]
    %v139 = vld [vmem:[#allocation2 + $0x2f8] sm:$0xff]
    %v140 = vld [vmem:[#allocation2 + $0x300] sm:$0xff]
    %v141 = vld [vmem:[#allocation2 + $0x308] sm:$0xff]
    %v142 = vld [vmem:[#allocation2 + $0x310] sm:$0xff]
    %v143 = vld [vmem:[#allocation2 + $0x318] sm:$0xff]
    %v144 = vld [vmem:[#allocation2 + $0x320] sm:$0xff]
    %v145 = vld [vmem:[#allocation2 + $0x328] sm:$0xff]
    %v146 = vld [vmem:[#allocation2 + $0x330] sm:$0xff]
    %v147 = vld [vmem:[#allocation2 + $0x338] sm:$0xff]
    %v148 = vld [vmem:[#allocation2 + $0x340] sm:$0xff]
    %v149 = vld [vmem:[#allocation2 + $0x348] sm:$0xff]
    %v150 = vld [vmem:[#allocation2 + $0x350] sm:$0xff]
    %v151 = vld [vmem:[#allocation2 + $0x358] sm:$0xff]
    %v152 = vld [vmem:[#allocation2 + $0x360] sm:$0xff]
    %v153 = vld [vmem:[#allocation2 + $0x368] sm:$0xff]
    %v154 = vld [vmem:[#allocation2 + $0x370] sm:$0xff]
    %v155 = vld [vmem:[#allocation2 + $0x378] sm:$0xff]
    %v156 = vld [vmem:[#allocation2 + $0x380] sm:$0xff]
    %v157 = vld [vmem:[#allocation2 + $0x388] sm:$0xff]
    %v158 = vld [vmem:[#allocation2 + $0x390] sm:$0xff]
    %v159 = vld [vmem:[#allocation2 + $0x398] sm:$0xff]
    %v160 = vld [vmem:[#allocation2 + $0x3a0] sm:$0xff]
    %v161 = vld [vmem:[#allocation2 + $0x3a8] sm:$0xff]
    %v162 = vld [vmem:[#allocation2 + $0x3b0] sm:$0xff]
    %v163 = vld [vmem:[#allocation2 + $0x3b8] sm:$0xff]
    %v164 = vld [vmem:[#allocation2 + $0x3c0] sm:$0xff]
    %v165 = vld [vmem:[#allocation2 + $0x3c8] sm:$0xff]
    %v166 = vld [vmem:[#allocation2 + $0x3d0] sm:$0xff]
    %v167 = vld [vmem:[#allocation2 + $0x3d8] sm:$0xff]
    %v168 = vld [vmem:[#allocation2 + $0x3e0] sm:$0xff]
    %v169 = vld [vmem:[#allocation2 + $0x3e8] sm:$0xff]
    %v170 = vld [vmem:[#allocation2 + $0x3f0] sm:$0xff]
    %v171 = vld [vmem:[#allocation2 + $0x3f8] sm:$0xff]
    %v172 = vld [vmem:[#allocation4] sm:$0xf]
    %v174 = vlaneseq
    %v175 = vshrl.u32 %v174, 7
    %v176 = vsub.s32 0, %v175
    %v177 = vrot.slane %v172, %v176
    %v178 = vlaneseq
    %v179 = vshrl.u32 %v178, 7
    %v180 = vsub.s32 1, %v179
    %v181 = vrot.slane %v172, %v180
    %v182 = vlaneseq
    %v183 = vshrl.u32 %v182, 7
    %v184 = vsub.s32 2, %v183
    %v185 = vrot.slane %v172, %v184
    %v186 = vlaneseq
    %v187 = vshrl.u32 %v186, 7
    %v188 = vsub.s32 3, %v187
    %v189 = vrot.slane %v172, %v188
    %v196 = vunpack.c.l.b16 %v42
    %v197 = vunpack.c.h.b16 %v42
    %v198 = vunpack.c.l.b16 %v43
    %v199 = vunpack.c.h.b16 %v43
    %v200 = vpack.c.b16 %v196, %v196
    %v201 = vpack.c.b16 %v197, %v197
    %v202 = vpack.c.b16 %v198, %v198
    %v203 = vpack.c.b16 %v199, %v199
    %v336 = vunpack.c.l.b16 %v44
    %v337 = vunpack.c.h.b16 %v44
    %v338 = vunpack.c.l.b16 %v45
    %v339 = vunpack.c.h.b16 %v45
    %v340 = vunpack.c.l.b16 %v46
    %v341 = vunpack.c.h.b16 %v46
    %v342 = vunpack.c.l.b16 %v47
    %v343 = vunpack.c.h.b16 %v47
    %v344 = vunpack.c.l.b16 %v48
    %v345 = vunpack.c.h.b16 %v48
    %v346 = vunpack.c.l.b16 %v49
    %v347 = vunpack.c.h.b16 %v49
    %v348 = vunpack.c.l.b16 %v50
    %v349 = vunpack.c.h.b16 %v50
    %v350 = vunpack.c.l.b16 %v51
    %v351 = vunpack.c.h.b16 %v51
    %v352 = vunpack.c.l.b16 %v52
    %v353 = vunpack.c.h.b16 %v52
    %v354 = vunpack.c.l.b16 %v53
    %v355 = vunpack.c.h.b16 %v53
    %v356 = vunpack.c.l.b16 %v54
    %v357 = vunpack.c.h.b16 %v54
    %v358 = vunpack.c.l.b16 %v55
    %v359 = vunpack.c.h.b16 %v55
    %v360 = vunpack.c.l.b16 %v56
    %v361 = vunpack.c.h.b16 %v56
    %v362 = vunpack.c.l.b16 %v57
    %v363 = vunpack.c.h.b16 %v57
    %v364 = vunpack.c.l.b16 %v58
    %v365 = vunpack.c.h.b16 %v58
    %v366 = vunpack.c.l.b16 %v59
    %v367 = vunpack.c.h.b16 %v59
    %v368 = vunpack.c.l.b16 %v60
    %v369 = vunpack.c.h.b16 %v60
    %v370 = vunpack.c.l.b16 %v61
    %v371 = vunpack.c.h.b16 %v61
    %v372 = vunpack.c.l.b16 %v62
    %v373 = vunpack.c.h.b16 %v62
    %v374 = vunpack.c.l.b16 %v63
    %v375 = vunpack.c.h.b16 %v63
    %v376 = vunpack.c.l.b16 %v64
    %v377 = vunpack.c.h.b16 %v64
    %v378 = vunpack.c.l.b16 %v65
    %v379 = vunpack.c.h.b16 %v65
    %v380 = vunpack.c.l.b16 %v66
    %v381 = vunpack.c.h.b16 %v66
    %v382 = vunpack.c.l.b16 %v67
    %v383 = vunpack.c.h.b16 %v67
    %v384 = vunpack.c.l.b16 %v68
    %v385 = vunpack.c.h.b16 %v68
    %v386 = vunpack.c.l.b16 %v69
    %v387 = vunpack.c.h.b16 %v69
    %v388 = vunpack.c.l.b16 %v70
    %v389 = vunpack.c.h.b16 %v70
    %v390 = vunpack.c.l.b16 %v71
    %v391 = vunpack.c.h.b16 %v71
    %v392 = vunpack.c.l.b16 %v72
    %v393 = vunpack.c.h.b16 %v72
    %v394 = vunpack.c.l.b16 %v73
    %v395 = vunpack.c.h.b16 %v73
    %v396 = vunpack.c.l.b16 %v74
    %v397 = vunpack.c.h.b16 %v74
    %v398 = vunpack.c.l.b16 %v75
    %v399 = vunpack.c.h.b16 %v75
    %v400 = vunpack.c.l.b16 %v76
    %v401 = vunpack.c.h.b16 %v76
    %v402 = vunpack.c.l.b16 %v77
    %v403 = vunpack.c.h.b16 %v77
    %v404 = vunpack.c.l.b16 %v78
    %v405 = vunpack.c.h.b16 %v78
    %v406 = vunpack.c.l.b16 %v79
    %v407 = vunpack.c.h.b16 %v79
    %v408 = vunpack.c.l.b16 %v80
    %v409 = vunpack.c.h.b16 %v80
    %v410 = vunpack.c.l.b16 %v81
    %v411 = vunpack.c.h.b16 %v81
    %v412 = vunpack.c.l.b16 %v82
    %v413 = vunpack.c.h.b16 %v82
    %v414 = vunpack.c.l.b16 %v83
    %v415 = vunpack.c.h.b16 %v83
    %v416 = vunpack.c.l.b16 %v84
    %v417 = vunpack.c.h.b16 %v84
    %v418 = vunpack.c.l.b16 %v85
    %v419 = vunpack.c.h.b16 %v85
    %v420 = vunpack.c.l.b16 %v86
    %v421 = vunpack.c.h.b16 %v86
    %v422 = vunpack.c.l.b16 %v87
    %v423 = vunpack.c.h.b16 %v87
    %v424 = vunpack.c.l.b16 %v88
    %v425 = vunpack.c.h.b16 %v88
    %v426 = vunpack.c.l.b16 %v89
    %v427 = vunpack.c.h.b16 %v89
    %v428 = vunpack.c.l.b16 %v90
    %v429 = vunpack.c.h.b16 %v90
    %v430 = vunpack.c.l.b16 %v91
    %v431 = vunpack.c.h.b16 %v91
    %v432 = vunpack.c.l.b16 %v92
    %v433 = vunpack.c.h.b16 %v92
    %v434 = vunpack.c.l.b16 %v93
    %v435 = vunpack.c.h.b16 %v93
    %v436 = vunpack.c.l.b16 %v94
    %v437 = vunpack.c.h.b16 %v94
    %v438 = vunpack.c.l.b16 %v95
    %v439 = vunpack.c.h.b16 %v95
    %v440 = vunpack.c.l.b16 %v96
    %v441 = vunpack.c.h.b16 %v96
    %v442 = vunpack.c.l.b16 %v97
    %v443 = vunpack.c.h.b16 %v97
    %v444 = vunpack.c.l.b16 %v98
    %v445 = vunpack.c.h.b16 %v98
    %v446 = vunpack.c.l.b16 %v99
    %v447 = vunpack.c.h.b16 %v99
    %v448 = vunpack.c.l.b16 %v100
    %v449 = vunpack.c.h.b16 %v100
    %v450 = vunpack.c.l.b16 %v101
    %v451 = vunpack.c.h.b16 %v101
    %v452 = vunpack.c.l.b16 %v102
    %v453 = vunpack.c.h.b16 %v102
    %v454 = vunpack.c.l.b16 %v103
    %v455 = vunpack.c.h.b16 %v103
    %v456 = vunpack.c.l.b16 %v104
    %v457 = vunpack.c.h.b16 %v104
    %v458 = vunpack.c.l.b16 %v105
    %v459 = vunpack.c.h.b16 %v105
    %v460 = vunpack.c.l.b16 %v106
    %v461 = vunpack.c.h.b16 %v106
    %v462 = vunpack.c.l.b16 %v107
    %v463 = vunpack.c.h.b16 %v107
    %v464 = vunpack.c.l.b16 %v108
    %v465 = vunpack.c.h.b16 %v108
    %v466 = vunpack.c.l.b16 %v109
    %v467 = vunpack.c.h.b16 %v109
    %v468 = vunpack.c.l.b16 %v110
    %v469 = vunpack.c.h.b16 %v110
    %v470 = vunpack.c.l.b16 %v111
    %v471 = vunpack.c.h.b16 %v111
    %v472 = vunpack.c.l.b16 %v112
    %v473 = vunpack.c.h.b16 %v112
    %v474 = vunpack.c.l.b16 %v113
    %v475 = vunpack.c.h.b16 %v113
    %v476 = vunpack.c.l.b16 %v114
    %v477 = vunpack.c.h.b16 %v114
    %v478 = vunpack.c.l.b16 %v115
    %v479 = vunpack.c.h.b16 %v115
    %v480 = vunpack.c.l.b16 %v116
    %v481 = vunpack.c.h.b16 %v116
    %v482 = vunpack.c.l.b16 %v117
    %v483 = vunpack.c.h.b16 %v117
    %v484 = vunpack.c.l.b16 %v118
    %v485 = vunpack.c.h.b16 %v118
    %v486 = vunpack.c.l.b16 %v119
    %v487 = vunpack.c.h.b16 %v119
    %v488 = vunpack.c.l.b16 %v120
    %v489 = vunpack.c.h.b16 %v120
    %v490 = vunpack.c.l.b16 %v121
    %v491 = vunpack.c.h.b16 %v121
    %v492 = vunpack.c.l.b16 %v122
    %v493 = vunpack.c.h.b16 %v122
    %v494 = vunpack.c.l.b16 %v123
    %v495 = vunpack.c.h.b16 %v123
    %v496 = vunpack.c.l.b16 %v124
    %v497 = vunpack.c.h.b16 %v124
    %v498 = vunpack.c.l.b16 %v125
    %v499 = vunpack.c.h.b16 %v125
    %v500 = vunpack.c.l.b16 %v126
    %v501 = vunpack.c.h.b16 %v126
    %v502 = vunpack.c.l.b16 %v127
    %v503 = vunpack.c.h.b16 %v127
    %v504 = vunpack.c.l.b16 %v128
    %v505 = vunpack.c.h.b16 %v128
    %v506 = vunpack.c.l.b16 %v129
    %v507 = vunpack.c.h.b16 %v129
    %v508 = vunpack.c.l.b16 %v130
    %v509 = vunpack.c.h.b16 %v130
    %v510 = vunpack.c.l.b16 %v131
    %v511 = vunpack.c.h.b16 %v131
    %v512 = vunpack.c.l.b16 %v132
    %v513 = vunpack.c.h.b16 %v132
    %v514 = vunpack.c.l.b16 %v133
    %v515 = vunpack.c.h.b16 %v133
    %v516 = vunpack.c.l.b16 %v134
    %v517 = vunpack.c.h.b16 %v134
    %v518 = vunpack.c.l.b16 %v135
    %v519 = vunpack.c.h.b16 %v135
    %v520 = vunpack.c.l.b16 %v136
    %v521 = vunpack.c.h.b16 %v136
    %v522 = vunpack.c.l.b16 %v137
    %v523 = vunpack.c.h.b16 %v137
    %v524 = vunpack.c.l.b16 %v138
    %v525 = vunpack.c.h.b16 %v138
    %v526 = vunpack.c.l.b16 %v139
    %v527 = vunpack.c.h.b16 %v139
    %v528 = vunpack.c.l.b16 %v140
    %v529 = vunpack.c.h.b16 %v140
    %v530 = vunpack.c.l.b16 %v141
    %v531 = vunpack.c.h.b16 %v141
    %v532 = vunpack.c.l.b16 %v142
    %v533 = vunpack.c.h.b16 %v142
    %v534 = vunpack.c.l.b16 %v143
    %v535 = vunpack.c.h.b16 %v143
    %v536 = vunpack.c.l.b16 %v144
    %v537 = vunpack.c.h.b16 %v144
    %v538 = vunpack.c.l.b16 %v145
    %v539 = vunpack.c.h.b16 %v145
    %v540 = vunpack.c.l.b16 %v146
    %v541 = vunpack.c.h.b16 %v146
    %v542 = vunpack.c.l.b16 %v147
    %v543 = vunpack.c.h.b16 %v147
    %v544 = vunpack.c.l.b16 %v148
    %v545 = vunpack.c.h.b16 %v148
    %v546 = vunpack.c.l.b16 %v149
    %v547 = vunpack.c.h.b16 %v149
    %v548 = vunpack.c.l.b16 %v150
    %v549 = vunpack.c.h.b16 %v150
    %v550 = vunpack.c.l.b16 %v151
    %v551 = vunpack.c.h.b16 %v151
    %v552 = vunpack.c.l.b16 %v152
    %v553 = vunpack.c.h.b16 %v152
    %v554 = vunpack.c.l.b16 %v153
    %v555 = vunpack.c.h.b16 %v153
    %v556 = vunpack.c.l.b16 %v154
    %v557 = vunpack.c.h.b16 %v154
    %v558 = vunpack.c.l.b16 %v155
    %v559 = vunpack.c.h.b16 %v155
    %v560 = vunpack.c.l.b16 %v156
    %v561 = vunpack.c.h.b16 %v156
    %v562 = vunpack.c.l.b16 %v157
    %v563 = vunpack.c.h.b16 %v157
    %v564 = vunpack.c.l.b16 %v158
    %v565 = vunpack.c.h.b16 %v158
    %v566 = vunpack.c.l.b16 %v159
    %v567 = vunpack.c.h.b16 %v159
    %v568 = vunpack.c.l.b16 %v160
    %v569 = vunpack.c.h.b16 %v160
    %v570 = vunpack.c.l.b16 %v161
    %v571 = vunpack.c.h.b16 %v161
    %v572 = vunpack.c.l.b16 %v162
    %v573 = vunpack.c.h.b16 %v162
    %v574 = vunpack.c.l.b16 %v163
    %v575 = vunpack.c.h.b16 %v163
    %v576 = vunpack.c.l.b16 %v164
    %v577 = vunpack.c.h.b16 %v164
    %v578 = vunpack.c.l.b16 %v165
    %v579 = vunpack.c.h.b16 %v165
    %v580 = vunpack.c.l.b16 %v166
    %v581 = vunpack.c.h.b16 %v166
    %v582 = vunpack.c.l.b16 %v167
    %v583 = vunpack.c.h.b16 %v167
    %v584 = vunpack.c.l.b16 %v168
    %v585 = vunpack.c.h.b16 %v168
    %v586 = vunpack.c.l.b16 %v169
    %v587 = vunpack.c.h.b16 %v169
    %v588 = vunpack.c.l.b16 %v170
    %v589 = vunpack.c.h.b16 %v170
    %v590 = vunpack.c.l.b16 %v171
    %v591 = vunpack.c.h.b16 %v171
    %v592 = vpack.c.b16 %v340, %v336
    %v593 = vpack.c.b16 %v341, %v337
    %v594 = vpack.c.b16 %v342, %v338
    %v595 = vpack.c.b16 %v343, %v339
    %v596 = vpack.c.b16 %v348, %v344
    %v597 = vpack.c.b16 %v349, %v345
    %v598 = vpack.c.b16 %v350, %v346
    %v599 = vpack.c.b16 %v351, %v347
    %v600 = vpack.c.b16 %v356, %v352
    %v601 = vpack.c.b16 %v357, %v353
    %v602 = vpack.c.b16 %v358, %v354
    %v603 = vpack.c.b16 %v359, %v355
    %v604 = vpack.c.b16 %v364, %v360
    %v605 = vpack.c.b16 %v365, %v361
    %v606 = vpack.c.b16 %v366, %v362
    %v607 = vpack.c.b16 %v367, %v363
    %v608 = vpack.c.b16 %v372, %v368
    %v609 = vpack.c.b16 %v373, %v369
    %v610 = vpack.c.b16 %v374, %v370
    %v611 = vpack.c.b16 %v375, %v371
    %v612 = vpack.c.b16 %v380, %v376
    %v613 = vpack.c.b16 %v381, %v377
    %v614 = vpack.c.b16 %v382, %v378
    %v615 = vpack.c.b16 %v383, %v379
    %v616 = vpack.c.b16 %v388, %v384
    %v617 = vpack.c.b16 %v389, %v385
    %v618 = vpack.c.b16 %v390, %v386
    %v619 = vpack.c.b16 %v391, %v387
    %v620 = vpack.c.b16 %v396, %v392
    %v621 = vpack.c.b16 %v397, %v393
    %v622 = vpack.c.b16 %v398, %v394
    %v623 = vpack.c.b16 %v399, %v395
    %v624 = vpack.c.b16 %v404, %v400
    %v625 = vpack.c.b16 %v405, %v401
    %v626 = vpack.c.b16 %v406, %v402
    %v627 = vpack.c.b16 %v407, %v403
    %v628 = vpack.c.b16 %v412, %v408
    %v629 = vpack.c.b16 %v413, %v409
    %v630 = vpack.c.b16 %v414, %v410
    %v631 = vpack.c.b16 %v415, %v411
    %v632 = vpack.c.b16 %v420, %v416
    %v633 = vpack.c.b16 %v421, %v417
    %v634 = vpack.c.b16 %v422, %v418
    %v635 = vpack.c.b16 %v423, %v419
    %v636 = vpack.c.b16 %v428, %v424
    %v637 = vpack.c.b16 %v429, %v425
    %v638 = vpack.c.b16 %v430, %v426
    %v639 = vpack.c.b16 %v431, %v427
    %v640 = vpack.c.b16 %v436, %v432
    %v641 = vpack.c.b16 %v437, %v433
    %v642 = vpack.c.b16 %v438, %v434
    %v643 = vpack.c.b16 %v439, %v435
    %v644 = vpack.c.b16 %v444, %v440
    %v645 = vpack.c.b16 %v445, %v441
    %v646 = vpack.c.b16 %v446, %v442
    %v647 = vpack.c.b16 %v447, %v443
    %v648 = vpack.c.b16 %v452, %v448
    %v649 = vpack.c.b16 %v453, %v449
    %v650 = vpack.c.b16 %v454, %v450
    %v651 = vpack.c.b16 %v455, %v451
    %v652 = vpack.c.b16 %v460, %v456
    %v653 = vpack.c.b16 %v461, %v457
    %v654 = vpack.c.b16 %v462, %v458
    %v655 = vpack.c.b16 %v463, %v459
    %v656 = vpack.c.b16 %v468, %v464
    %v657 = vpack.c.b16 %v469, %v465
    %v658 = vpack.c.b16 %v470, %v466
    %v659 = vpack.c.b16 %v471, %v467
    %v660 = vpack.c.b16 %v476, %v472
    %v661 = vpack.c.b16 %v477, %v473
    %v662 = vpack.c.b16 %v478, %v474
    %v663 = vpack.c.b16 %v479, %v475
    %v664 = vpack.c.b16 %v484, %v480
    %v665 = vpack.c.b16 %v485, %v481
    %v666 = vpack.c.b16 %v486, %v482
    %v667 = vpack.c.b16 %v487, %v483
    %v668 = vpack.c.b16 %v492, %v488
    %v669 = vpack.c.b16 %v493, %v489
    %v670 = vpack.c.b16 %v494, %v490
    %v671 = vpack.c.b16 %v495, %v491
    %v672 = vpack.c.b16 %v500, %v496
    %v673 = vpack.c.b16 %v501, %v497
    %v674 = vpack.c.b16 %v502, %v498
    %v675 = vpack.c.b16 %v503, %v499
    %v676 = vpack.c.b16 %v508, %v504
    %v677 = vpack.c.b16 %v509, %v505
    %v678 = vpack.c.b16 %v510, %v506
    %v679 = vpack.c.b16 %v511, %v507
    %v680 = vpack.c.b16 %v516, %v512
    %v681 = vpack.c.b16 %v517, %v513
    %v682 = vpack.c.b16 %v518, %v514
    %v683 = vpack.c.b16 %v519, %v515
    %v684 = vpack.c.b16 %v524, %v520
    %v685 = vpack.c.b16 %v525, %v521
    %v686 = vpack.c.b16 %v526, %v522
    %v687 = vpack.c.b16 %v527, %v523
    %v688 = vpack.c.b16 %v532, %v528
    %v689 = vpack.c.b16 %v533, %v529
    %v690 = vpack.c.b16 %v534, %v530
    %v691 = vpack.c.b16 %v535, %v531
    %v692 = vpack.c.b16 %v540, %v536
    %v693 = vpack.c.b16 %v541, %v537
    %v694 = vpack.c.b16 %v542, %v538
    %v695 = vpack.c.b16 %v543, %v539
    %v696 = vpack.c.b16 %v548, %v544
    %v697 = vpack.c.b16 %v549, %v545
    %v698 = vpack.c.b16 %v550, %v546
    %v699 = vpack.c.b16 %v551, %v547
    %v700 = vpack.c.b16 %v556, %v552
    %v701 = vpack.c.b16 %v557, %v553
    %v702 = vpack.c.b16 %v558, %v554
    %v703 = vpack.c.b16 %v559, %v555
    %v704 = vpack.c.b16 %v564, %v560
    %v705 = vpack.c.b16 %v565, %v561
    %v706 = vpack.c.b16 %v566, %v562
    %v707 = vpack.c.b16 %v567, %v563
    %v708 = vpack.c.b16 %v572, %v568
    %v709 = vpack.c.b16 %v573, %v569
    %v710 = vpack.c.b16 %v574, %v570
    %v711 = vpack.c.b16 %v575, %v571
    %v712 = vpack.c.b16 %v580, %v576
    %v713 = vpack.c.b16 %v581, %v577
    %v714 = vpack.c.b16 %v582, %v578
    %v715 = vpack.c.b16 %v583, %v579
    %v716 = vpack.c.b16 %v588, %v584
    %v717 = vpack.c.b16 %v589, %v585
    %v718 = vpack.c.b16 %v590, %v586
    %v719 = vpack.c.b16 %v591, %v587
    %848 = vmatprep.subr.bf16.mxu0 %v593
    %849 = vmatpush1.bf16.msra.mxu0 %v592
    %850 = vmatprep.subr.bf16.mxu0 %v597
    %851 = vmatpush1.bf16.msra.mxu0 %v596
    %852 = vmatprep.subr.bf16.mxu0 %v601
    %853 = vmatpush1.bf16.msra.mxu0 %v600
    %854 = vmatprep.subr.bf16.mxu0 %v605
    %855 = vmatpush1.bf16.msra.mxu0 %v604
    %856 = vmatprep.subr.bf16.mxu0 %v609
    %857 = vmatpush1.bf16.msra.mxu0 %v608
    %858 = vmatprep.subr.bf16.mxu0 %v613
    %859 = vmatpush1.bf16.msra.mxu0 %v612
    %860 = vmatprep.subr.bf16.mxu0 %v617
    %861 = vmatpush1.bf16.msra.mxu0 %v616
    %862 = vmatprep.subr.bf16.mxu0 %v621
    %863 = vmatpush1.bf16.msra.mxu0 %v620
    %864 = vmatprep.subr.bf16.mxu0 %v625
    %865 = vmatpush1.bf16.msra.mxu0 %v624
    %866 = vmatprep.subr.bf16.mxu0 %v629
    %867 = vmatpush1.bf16.msra.mxu0 %v628
    %868 = vmatprep.subr.bf16.mxu0 %v633
    %869 = vmatpush1.bf16.msra.mxu0 %v632
    %870 = vmatprep.subr.bf16.mxu0 %v637
    %871 = vmatpush1.bf16.msra.mxu0 %v636
    %872 = vmatprep.subr.bf16.mxu0 %v641
    %873 = vmatpush1.bf16.msra.mxu0 %v640
    %874 = vmatprep.subr.bf16.mxu0 %v645
    %875 = vmatpush1.bf16.msra.mxu0 %v644
    %876 = vmatprep.subr.bf16.mxu0 %v649
    %877 = vmatpush1.bf16.msra.mxu0 %v648
    %878 = vmatprep.subr.bf16.mxu0 %v653
    %879 = vmatpush1.bf16.msra.mxu0 %v652
    %880 = vmatprep.mubr.bf16.mxu0 %v201
    %881 = vmatmul.mubr.bf16.gmra.mrb[0].mxu0 %v200
    %v882 = vpop.f32.mrb[0].mxu0
    %v883 = vadd.f32 %v177, %v882
    %v884 = vpop.f32.mrb[0].mxu0
    %v885 = vadd.f32 %v181, %v884
    %v886 = vpop.f32.mrb[0].mxu0
    %v887 = vpop.f32.mrb[0].mxu0
    %888 = vdwg.mxu0
    %889 = vmatprep.subr.bf16.mxu0 %v657
    %890 = vmatpush1.bf16.msra.mxu0 %v656
    %891 = vmatprep.subr.bf16.mxu0 %v661
    %892 = vmatpush1.bf16.msra.mxu0 %v660
    %893 = vmatprep.subr.bf16.mxu0 %v665
    %894 = vmatpush1.bf16.msra.mxu0 %v664
    %895 = vmatprep.subr.bf16.mxu0 %v669
    %896 = vmatpush1.bf16.msra.mxu0 %v668
    %897 = vmatprep.subr.bf16.mxu0 %v673
    %898 = vmatpush1.bf16.msra.mxu0 %v672
    %899 = vmatprep.subr.bf16.mxu0 %v677
    %900 = vmatpush1.bf16.msra.mxu0 %v676
    %901 = vmatprep.subr.bf16.mxu0 %v681
    %902 = vmatpush1.bf16.msra.mxu0 %v680
    %903 = vmatprep.subr.bf16.mxu0 %v685
    %904 = vmatpush1.bf16.msra.mxu0 %v684
    %905 = vmatprep.subr.bf16.mxu0 %v689
    %906 = vmatpush1.bf16.msra.mxu0 %v688
    %907 = vmatprep.subr.bf16.mxu0 %v693
    %908 = vmatpush1.bf16.msra.mxu0 %v692
    %909 = vmatprep.subr.bf16.mxu0 %v697
    %910 = vmatpush1.bf16.msra.mxu0 %v696
    %911 = vmatprep.subr.bf16.mxu0 %v701
    %912 = vmatpush1.bf16.msra.mxu0 %v700
    %913 = vmatprep.subr.bf16.mxu0 %v705
    %914 = vmatpush1.bf16.msra.mxu0 %v704
    %915 = vmatprep.subr.bf16.mxu0 %v709
    %916 = vmatpush1.bf16.msra.mxu0 %v708
    %917 = vmatprep.subr.bf16.mxu0 %v713
    %918 = vmatpush1.bf16.msra.mxu0 %v712
    %919 = vmatprep.subr.bf16.mxu0 %v717
    %920 = vmatpush1.bf16.msra.mxu0 %v716
    %921 = vmatprep.mubr.bf16.mxu0 %v203
    %922 = vmatmul.mubr.bf16.gmra.mrb[0].mxu0 %v202
    %v923 = vpop.f32.mrb[0].mxu0
    %v924 = vadd.f32 %v883, %v923
    %v925 = vpop.f32.mrb[0].mxu0
    %v926 = vadd.f32 %v885, %v925
    %v927 = vpop.f32.mrb[0].mxu0
    %v928 = vpop.f32.mrb[0].mxu0
    %929 = vdwg.mxu0
    %930 = vmatprep.subr.bf16.mxu0 %v595
    %931 = vmatpush1.bf16.msra.mxu0 %v594
    %932 = vmatprep.subr.bf16.mxu0 %v599
    %933 = vmatpush1.bf16.msra.mxu0 %v598
    %934 = vmatprep.subr.bf16.mxu0 %v603
    %935 = vmatpush1.bf16.msra.mxu0 %v602
    %936 = vmatprep.subr.bf16.mxu0 %v607
    %937 = vmatpush1.bf16.msra.mxu0 %v606
    %938 = vmatprep.subr.bf16.mxu0 %v611
    %939 = vmatpush1.bf16.msra.mxu0 %v610
    %940 = vmatprep.subr.bf16.mxu0 %v615
    %941 = vmatpush1.bf16.msra.mxu0 %v614
    %942 = vmatprep.subr.bf16.mxu0 %v619
    %943 = vmatpush1.bf16.msra.mxu0 %v618
    %944 = vmatprep.subr.bf16.mxu0 %v623
    %945 = vmatpush1.bf16.msra.mxu0 %v622
    %946 = vmatprep.subr.bf16.mxu0 %v627
    %947 = vmatpush1.bf16.msra.mxu0 %v626
    %948 = vmatprep.subr.bf16.mxu0 %v631
    %949 = vmatpush1.bf16.msra.mxu0 %v630
    %950 = vmatprep.subr.bf16.mxu0 %v635
    %951 = vmatpush1.bf16.msra.mxu0 %v634
    %952 = vmatprep.subr.bf16.mxu0 %v639
    %953 = vmatpush1.bf16.msra.mxu0 %v638
    %954 = vmatprep.subr.bf16.mxu0 %v643
    %955 = vmatpush1.bf16.msra.mxu0 %v642
    %956 = vmatprep.subr.bf16.mxu0 %v647
    %957 = vmatpush1.bf16.msra.mxu0 %v646
    %958 = vmatprep.subr.bf16.mxu0 %v651
    %959 = vmatpush1.bf16.msra.mxu0 %v650
    %960 = vmatprep.subr.bf16.mxu0 %v655
    %961 = vmatpush1.bf16.msra.mxu0 %v654
    %962 = vmatprep.mubr.bf16.mxu0 %v201
    %963 = vmatmul.mubr.bf16.gmra.mrb[0].mxu0 %v200
    %v964 = vpop.f32.mrb[0].mxu0
    %v965 = vadd.f32 %v185, %v964
    %v966 = vpop.f32.mrb[0].mxu0
    %v967 = vadd.f32 %v189, %v966
    %v968 = vpop.f32.mrb[0].mxu0
    %v969 = vpop.f32.mrb[0].mxu0
    %970 = vdwg.mxu0
    %971 = vmatprep.subr.bf16.mxu0 %v659
    %972 = vmatpush1.bf16.msra.mxu0 %v658
    %973 = vmatprep.subr.bf16.mxu0 %v663
    %974 = vmatpush1.bf16.msra.mxu0 %v662
    %975 = vmatprep.subr.bf16.mxu0 %v667
    %976 = vmatpush1.bf16.msra.mxu0 %v666
    %977 = vmatprep.subr.bf16.mxu0 %v671
    %978 = vmatpush1.bf16.msra.mxu0 %v670
    %979 = vmatprep.subr.bf16.mxu0 %v675
    %980 = vmatpush1.bf16.msra.mxu0 %v674
    %981 = vmatprep.subr.bf16.mxu0 %v679
    %982 = vmatpush1.bf16.msra.mxu0 %v678
    %983 = vmatprep.subr.bf16.mxu0 %v683
    %984 = vmatpush1.bf16.msra.mxu0 %v682
    %985 = vmatprep.subr.bf16.mxu0 %v687
    %986 = vmatpush1.bf16.msra.mxu0 %v686
    %987 = vmatprep.subr.bf16.mxu0 %v691
    %988 = vmatpush1.bf16.msra.mxu0 %v690
    %989 = vmatprep.subr.bf16.mxu0 %v695
    %990 = vmatpush1.bf16.msra.mxu0 %v694
    %991 = vmatprep.subr.bf16.mxu0 %v699
    %992 = vmatpush1.bf16.msra.mxu0 %v698
    %993 = vmatprep.subr.bf16.mxu0 %v703
    %994 = vmatpush1.bf16.msra.mxu0 %v702
    %995 = vmatprep.subr.bf16.mxu0 %v707
    %996 = vmatpush1.bf16.msra.mxu0 %v706
    %997 = vmatprep.subr.bf16.mxu0 %v711
    %998 = vmatpush1.bf16.msra.mxu0 %v710
    %999 = vmatprep.subr.bf16.mxu0 %v715
    %1000 = vmatpush1.bf16.msra.mxu0 %v714
    %1001 = vmatprep.subr.bf16.mxu0 %v719
    %1002 = vmatpush1.bf16.msra.mxu0 %v718
    %1003 = vmatprep.mubr.bf16.mxu0 %v203
    %1004 = vmatmul.mubr.bf16.gmra.mrb[0].mxu0 %v202
    %v1005 = vpop.f32.mrb[0].mxu0
    %v1006 = vadd.f32 %v965, %v1005
    %v1007 = vpop.f32.mrb[0].mxu0
    %v1008 = vadd.f32 %v967, %v1007
    %v1009 = vpop.f32.mrb[0].mxu0
    %v1010 = vpop.f32.mrb[0].mxu0
    %1011 = vdwg.mxu0
    %v1012 = vmax.f32 %v924, 0.0
    %v1013 = vmax.f32 %v926, 0.0
    %v1014 = vmax.f32 %v1006, 0.0
    %v1015 = vmax.f32 %v1008, 0.0
    %v1016 = vpack.c.bf16 %v1012, %v1012
    %v1017 = vpack.c.bf16 %v1013, %v1013
    %v1018 = vpack.c.bf16 %v1014, %v1014
    %v1019 = vpack.c.bf16 %v1015, %v1015
    %s1020 = scalar_lea.vmem [#allocation2], 1024
    %v1021 = vld [vmem:[%s1020] sm:$0xff]
    %v1022 = vld [vmem:[%s1020 + $0x8] sm:$0xff]
    %v1023 = vld [vmem:[%s1020 + $0x10] sm:$0xff]
    %v1024 = vld [vmem:[%s1020 + $0x18] sm:$0xff]
    %v1025 = vld [vmem:[%s1020 + $0x20] sm:$0xff]
    %v1026 = vld [vmem:[%s1020 + $0x28] sm:$0xff]
    %v1027 = vld [vmem:[%s1020 + $0x30] sm:$0xff]
    %v1028 = vld [vmem:[%s1020 + $0x38] sm:$0xff]
    %v1029 = vld [vmem:[%s1020 + $0x40] sm:$0xff]
    %v1030 = vld [vmem:[%s1020 + $0x48] sm:$0xff]
    %v1031 = vld [vmem:[%s1020 + $0x50] sm:$0xff]
    %v1032 = vld [vmem:[%s1020 + $0x58] sm:$0xff]
    %v1033 = vld [vmem:[%s1020 + $0x60] sm:$0xff]
    %v1034 = vld [vmem:[%s1020 + $0x68] sm:$0xff]
    %v1035 = vld [vmem:[%s1020 + $0x70] sm:$0xff]
    %v1036 = vld [vmem:[%s1020 + $0x78] sm:$0xff]
    %v1037 = vld [vmem:[%s1020 + $0x80] sm:$0xff]
    %v1038 = vld [vmem:[%s1020 + $0x88] sm:$0xff]
    %v1039 = vld [vmem:[%s1020 + $0x90] sm:$0xff]
    %v1040 = vld [vmem:[%s1020 + $0x98] sm:$0xff]
    %v1041 = vld [vmem:[%s1020 + $0xa0] sm:$0xff]
    %v1042 = vld [vmem:[%s1020 + $0xa8] sm:$0xff]
    %v1043 = vld [vmem:[%s1020 + $0xb0] sm:$0xff]
    %v1044 = vld [vmem:[%s1020 + $0xb8] sm:$0xff]
    %v1045 = vld [vmem:[%s1020 + $0xc0] sm:$0xff]
    %v1046 = vld [vmem:[%s1020 + $0xc8] sm:$0xff]
    %v1047 = vld [vmem:[%s1020 + $0xd0] sm:$0xff]
    %v1048 = vld [vmem:[%s1020 + $0xd8] sm:$0xff]
    %v1049 = vld [vmem:[%s1020 + $0xe0] sm:$0xff]
    %v1050 = vld [vmem:[%s1020 + $0xe8] sm:$0xff]
    %v1051 = vld [vmem:[%s1020 + $0xf0] sm:$0xff]
    %v1052 = vld [vmem:[%s1020 + $0xf8] sm:$0xff]
    %v1053 = vld [vmem:[%s1020 + $0x100] sm:$0xff]
    %v1054 = vld [vmem:[%s1020 + $0x108] sm:$0xff]
    %v1055 = vld [vmem:[%s1020 + $0x110] sm:$0xff]
    %v1056 = vld [vmem:[%s1020 + $0x118] sm:$0xff]
    %v1057 = vld [vmem:[%s1020 + $0x120] sm:$0xff]
    %v1058 = vld [vmem:[%s1020 + $0x128] sm:$0xff]
    %v1059 = vld [vmem:[%s1020 + $0x130] sm:$0xff]
    %v1060 = vld [vmem:[%s1020 + $0x138] sm:$0xff]
    %v1061 = vld [vmem:[%s1020 + $0x140] sm:$0xff]
    %v1062 = vld [vmem:[%s1020 + $0x148] sm:$0xff]
    %v1063 = vld [vmem:[%s1020 + $0x150] sm:$0xff]
    %v1064 = vld [vmem:[%s1020 + $0x158] sm:$0xff]
    %v1065 = vld [vmem:[%s1020 + $0x160] sm:$0xff]
    %v1066 = vld [vmem:[%s1020 + $0x168] sm:$0xff]
    %v1067 = vld [vmem:[%s1020 + $0x170] sm:$0xff]
    %v1068 = vld [vmem:[%s1020 + $0x178] sm:$0xff]
    %v1069 = vld [vmem:[%s1020 + $0x180] sm:$0xff]
    %v1070 = vld [vmem:[%s1020 + $0x188] sm:$0xff]
    %v1071 = vld [vmem:[%s1020 + $0x190] sm:$0xff]
    %v1072 = vld [vmem:[%s1020 + $0x198] sm:$0xff]
    %v1073 = vld [vmem:[%s1020 + $0x1a0] sm:$0xff]
    %v1074 = vld [vmem:[%s1020 + $0x1a8] sm:$0xff]
    %v1075 = vld [vmem:[%s1020 + $0x1b0] sm:$0xff]
    %v1076 = vld [vmem:[%s1020 + $0x1b8] sm:$0xff]
    %v1077 = vld [vmem:[%s1020 + $0x1c0] sm:$0xff]
    %v1078 = vld [vmem:[%s1020 + $0x1c8] sm:$0xff]
    %v1079 = vld [vmem:[%s1020 + $0x1d0] sm:$0xff]
    %v1080 = vld [vmem:[%s1020 + $0x1d8] sm:$0xff]
    %v1081 = vld [vmem:[%s1020 + $0x1e0] sm:$0xff]
    %v1082 = vld [vmem:[%s1020 + $0x1e8] sm:$0xff]
    %v1083 = vld [vmem:[%s1020 + $0x1f0] sm:$0xff]
    %v1084 = vld [vmem:[%s1020 + $0x1f8] sm:$0xff]
    %v1085 = vld [vmem:[%s1020 + $0x200] sm:$0xff]
    %v1086 = vld [vmem:[%s1020 + $0x208] sm:$0xff]
    %v1087 = vld [vmem:[%s1020 + $0x210] sm:$0xff]
    %v1088 = vld [vmem:[%s1020 + $0x218] sm:$0xff]
    %v1089 = vld [vmem:[%s1020 + $0x220] sm:$0xff]
    %v1090 = vld [vmem:[%s1020 + $0x228] sm:$0xff]
    %v1091 = vld [vmem:[%s1020 + $0x230] sm:$0xff]
    %v1092 = vld [vmem:[%s1020 + $0x238] sm:$0xff]
    %v1093 = vld [vmem:[%s1020 + $0x240] sm:$0xff]
    %v1094 = vld [vmem:[%s1020 + $0x248] sm:$0xff]
    %v1095 = vld [vmem:[%s1020 + $0x250] sm:$0xff]
    %v1096 = vld [vmem:[%s1020 + $0x258] sm:$0xff]
    %v1097 = vld [vmem:[%s1020 + $0x260] sm:$0xff]
    %v1098 = vld [vmem:[%s1020 + $0x268] sm:$0xff]
    %v1099 = vld [vmem:[%s1020 + $0x270] sm:$0xff]
    %v1100 = vld [vmem:[%s1020 + $0x278] sm:$0xff]
    %v1101 = vld [vmem:[%s1020 + $0x280] sm:$0xff]
    %v1102 = vld [vmem:[%s1020 + $0x288] sm:$0xff]
    %v1103 = vld [vmem:[%s1020 + $0x290] sm:$0xff]
    %v1104 = vld [vmem:[%s1020 + $0x298] sm:$0xff]
    %v1105 = vld [vmem:[%s1020 + $0x2a0] sm:$0xff]
    %v1106 = vld [vmem:[%s1020 + $0x2a8] sm:$0xff]
    %v1107 = vld [vmem:[%s1020 + $0x2b0] sm:$0xff]
    %v1108 = vld [vmem:[%s1020 + $0x2b8] sm:$0xff]
    %v1109 = vld [vmem:[%s1020 + $0x2c0] sm:$0xff]
    %v1110 = vld [vmem:[%s1020 + $0x2c8] sm:$0xff]
    %v1111 = vld [vmem:[%s1020 + $0x2d0] sm:$0xff]
    %v1112 = vld [vmem:[%s1020 + $0x2d8] sm:$0xff]
    %v1113 = vld [vmem:[%s1020 + $0x2e0] sm:$0xff]
    %v1114 = vld [vmem:[%s1020 + $0x2e8] sm:$0xff]
    %v1115 = vld [vmem:[%s1020 + $0x2f0] sm:$0xff]
    %v1116 = vld [vmem:[%s1020 + $0x2f8] sm:$0xff]
    %v1117 = vld [vmem:[%s1020 + $0x300] sm:$0xff]
    %v1118 = vld [vmem:[%s1020 + $0x308] sm:$0xff]
    %v1119 = vld [vmem:[%s1020 + $0x310] sm:$0xff]
    %v1120 = vld [vmem:[%s1020 + $0x318] sm:$0xff]
    %v1121 = vld [vmem:[%s1020 + $0x320] sm:$0xff]
    %v1122 = vld [vmem:[%s1020 + $0x328] sm:$0xff]
    %v1123 = vld [vmem:[%s1020 + $0x330] sm:$0xff]
    %v1124 = vld [vmem:[%s1020 + $0x338] sm:$0xff]
    %v1125 = vld [vmem:[%s1020 + $0x340] sm:$0xff]
    %v1126 = vld [vmem:[%s1020 + $0x348] sm:$0xff]
    %v1127 = vld [vmem:[%s1020 + $0x350] sm:$0xff]
    %v1128 = vld [vmem:[%s1020 + $0x358] sm:$0xff]
    %v1129 = vld [vmem:[%s1020 + $0x360] sm:$0xff]
    %v1130 = vld [vmem:[%s1020 + $0x368] sm:$0xff]
    %v1131 = vld [vmem:[%s1020 + $0x370] sm:$0xff]
    %v1132 = vld [vmem:[%s1020 + $0x378] sm:$0xff]
    %v1133 = vld [vmem:[%s1020 + $0x380] sm:$0xff]
    %v1134 = vld [vmem:[%s1020 + $0x388] sm:$0xff]
    %v1135 = vld [vmem:[%s1020 + $0x390] sm:$0xff]
    %v1136 = vld [vmem:[%s1020 + $0x398] sm:$0xff]
    %v1137 = vld [vmem:[%s1020 + $0x3a0] sm:$0xff]
    %v1138 = vld [vmem:[%s1020 + $0x3a8] sm:$0xff]
    %v1139 = vld [vmem:[%s1020 + $0x3b0] sm:$0xff]
    %v1140 = vld [vmem:[%s1020 + $0x3b8] sm:$0xff]
    %v1141 = vld [vmem:[%s1020 + $0x3c0] sm:$0xff]
    %v1142 = vld [vmem:[%s1020 + $0x3c8] sm:$0xff]
    %v1143 = vld [vmem:[%s1020 + $0x3d0] sm:$0xff]
    %v1144 = vld [vmem:[%s1020 + $0x3d8] sm:$0xff]
    %v1145 = vld [vmem:[%s1020 + $0x3e0] sm:$0xff]
    %v1146 = vld [vmem:[%s1020 + $0x3e8] sm:$0xff]
    %v1147 = vld [vmem:[%s1020 + $0x3f0] sm:$0xff]
    %v1148 = vld [vmem:[%s1020 + $0x3f8] sm:$0xff]
    %s1149 = scalar_lea.vmem [#allocation4], 4
    %v1150 = vld [vmem:[%s1149] sm:$0xf]
    %v1152 = vlaneseq
    %v1153 = vshrl.u32 %v1152, 7
    %v1154 = vsub.s32 0, %v1153
    %v1155 = vrot.slane %v1150, %v1154
    %v1156 = vlaneseq
    %v1157 = vshrl.u32 %v1156, 7
    %v1158 = vsub.s32 1, %v1157
    %v1159 = vrot.slane %v1150, %v1158
    %v1160 = vlaneseq
    %v1161 = vshrl.u32 %v1160, 7
    %v1162 = vsub.s32 2, %v1161
    %v1163 = vrot.slane %v1150, %v1162
    %v1164 = vlaneseq
    %v1165 = vshrl.u32 %v1164, 7
    %v1166 = vsub.s32 3, %v1165
    %v1167 = vrot.slane %v1150, %v1166
    %v1300 = vunpack.c.l.b16 %v1021
    %v1301 = vunpack.c.h.b16 %v1021
    %v1302 = vunpack.c.l.b16 %v1022
    %v1303 = vunpack.c.h.b16 %v1022
    %v1304 = vunpack.c.l.b16 %v1023
    %v1305 = vunpack.c.h.b16 %v1023
    %v1306 = vunpack.c.l.b16 %v1024
    %v1307 = vunpack.c.h.b16 %v1024
    %v1308 = vunpack.c.l.b16 %v1025
    %v1309 = vunpack.c.h.b16 %v1025
    %v1310 = vunpack.c.l.b16 %v1026
    %v1311 = vunpack.c.h.b16 %v1026
    %v1312 = vunpack.c.l.b16 %v1027
    %v1313 = vunpack.c.h.b16 %v1027
    %v1314 = vunpack.c.l.b16 %v1028
    %v1315 = vunpack.c.h.b16 %v1028
    %v1316 = vunpack.c.l.b16 %v1029
    %v1317 = vunpack.c.h.b16 %v1029
    %v1318 = vunpack.c.l.b16 %v1030
    %v1319 = vunpack.c.h.b16 %v1030
    %v1320 = vunpack.c.l.b16 %v1031
    %v1321 = vunpack.c.h.b16 %v1031
    %v1322 = vunpack.c.l.b16 %v1032
    %v1323 = vunpack.c.h.b16 %v1032
    %v1324 = vunpack.c.l.b16 %v1033
    %v1325 = vunpack.c.h.b16 %v1033
    %v1326 = vunpack.c.l.b16 %v1034
    %v1327 = vunpack.c.h.b16 %v1034
    %v1328 = vunpack.c.l.b16 %v1035
    %v1329 = vunpack.c.h.b16 %v1035
    %v1330 = vunpack.c.l.b16 %v1036
    %v1331 = vunpack.c.h.b16 %v1036
    %v1332 = vunpack.c.l.b16 %v1037
    %v1333 = vunpack.c.h.b16 %v1037
    %v1334 = vunpack.c.l.b16 %v1038
    %v1335 = vunpack.c.h.b16 %v1038
    %v1336 = vunpack.c.l.b16 %v1039
    %v1337 = vunpack.c.h.b16 %v1039
    %v1338 = vunpack.c.l.b16 %v1040
    %v1339 = vunpack.c.h.b16 %v1040
    %v1340 = vunpack.c.l.b16 %v1041
    %v1341 = vunpack.c.h.b16 %v1041
    %v1342 = vunpack.c.l.b16 %v1042
    %v1343 = vunpack.c.h.b16 %v1042
    %v1344 = vunpack.c.l.b16 %v1043
    %v1345 = vunpack.c.h.b16 %v1043
    %v1346 = vunpack.c.l.b16 %v1044
    %v1347 = vunpack.c.h.b16 %v1044
    %v1348 = vunpack.c.l.b16 %v1045
    %v1349 = vunpack.c.h.b16 %v1045
    %v1350 = vunpack.c.l.b16 %v1046
    %v1351 = vunpack.c.h.b16 %v1046
    %v1352 = vunpack.c.l.b16 %v1047
    %v1353 = vunpack.c.h.b16 %v1047
    %v1354 = vunpack.c.l.b16 %v1048
    %v1355 = vunpack.c.h.b16 %v1048
    %v1356 = vunpack.c.l.b16 %v1049
    %v1357 = vunpack.c.h.b16 %v1049
    %v1358 = vunpack.c.l.b16 %v1050
    %v1359 = vunpack.c.h.b16 %v1050
    %v1360 = vunpack.c.l.b16 %v1051
    %v1361 = vunpack.c.h.b16 %v1051
    %v1362 = vunpack.c.l.b16 %v1052
    %v1363 = vunpack.c.h.b16 %v1052
    %v1364 = vunpack.c.l.b16 %v1053
    %v1365 = vunpack.c.h.b16 %v1053
    %v1366 = vunpack.c.l.b16 %v1054
    %v1367 = vunpack.c.h.b16 %v1054
    %v1368 = vunpack.c.l.b16 %v1055
    %v1369 = vunpack.c.h.b16 %v1055
    %v1370 = vunpack.c.l.b16 %v1056
    %v1371 = vunpack.c.h.b16 %v1056
    %v1372 = vunpack.c.l.b16 %v1057
    %v1373 = vunpack.c.h.b16 %v1057
    %v1374 = vunpack.c.l.b16 %v1058
    %v1375 = vunpack.c.h.b16 %v1058
    %v1376 = vunpack.c.l.b16 %v1059
    %v1377 = vunpack.c.h.b16 %v1059
    %v1378 = vunpack.c.l.b16 %v1060
    %v1379 = vunpack.c.h.b16 %v1060
    %v1380 = vunpack.c.l.b16 %v1061
    %v1381 = vunpack.c.h.b16 %v1061
    %v1382 = vunpack.c.l.b16 %v1062
    %v1383 = vunpack.c.h.b16 %v1062
    %v1384 = vunpack.c.l.b16 %v1063
    %v1385 = vunpack.c.h.b16 %v1063
    %v1386 = vunpack.c.l.b16 %v1064
    %v1387 = vunpack.c.h.b16 %v1064
    %v1388 = vunpack.c.l.b16 %v1065
    %v1389 = vunpack.c.h.b16 %v1065
    %v1390 = vunpack.c.l.b16 %v1066
    %v1391 = vunpack.c.h.b16 %v1066
    %v1392 = vunpack.c.l.b16 %v1067
    %v1393 = vunpack.c.h.b16 %v1067
    %v1394 = vunpack.c.l.b16 %v1068
    %v1395 = vunpack.c.h.b16 %v1068
    %v1396 = vunpack.c.l.b16 %v1069
    %v1397 = vunpack.c.h.b16 %v1069
    %v1398 = vunpack.c.l.b16 %v1070
    %v1399 = vunpack.c.h.b16 %v1070
    %v1400 = vunpack.c.l.b16 %v1071
    %v1401 = vunpack.c.h.b16 %v1071
    %v1402 = vunpack.c.l.b16 %v1072
    %v1403 = vunpack.c.h.b16 %v1072
    %v1404 = vunpack.c.l.b16 %v1073
    %v1405 = vunpack.c.h.b16 %v1073
    %v1406 = vunpack.c.l.b16 %v1074
    %v1407 = vunpack.c.h.b16 %v1074
    %v1408 = vunpack.c.l.b16 %v1075
    %v1409 = vunpack.c.h.b16 %v1075
    %v1410 = vunpack.c.l.b16 %v1076
    %v1411 = vunpack.c.h.b16 %v1076
    %v1412 = vunpack.c.l.b16 %v1077
    %v1413 = vunpack.c.h.b16 %v1077
    %v1414 = vunpack.c.l.b16 %v1078
    %v1415 = vunpack.c.h.b16 %v1078
    %v1416 = vunpack.c.l.b16 %v1079
    %v1417 = vunpack.c.h.b16 %v1079
    %v1418 = vunpack.c.l.b16 %v1080
    %v1419 = vunpack.c.h.b16 %v1080
    %v1420 = vunpack.c.l.b16 %v1081
    %v1421 = vunpack.c.h.b16 %v1081
    %v1422 = vunpack.c.l.b16 %v1082
    %v1423 = vunpack.c.h.b16 %v1082
    %v1424 = vunpack.c.l.b16 %v1083
    %v1425 = vunpack.c.h.b16 %v1083
    %v1426 = vunpack.c.l.b16 %v1084
    %v1427 = vunpack.c.h.b16 %v1084
    %v1428 = vunpack.c.l.b16 %v1085
    %v1429 = vunpack.c.h.b16 %v1085
    %v1430 = vunpack.c.l.b16 %v1086
    %v1431 = vunpack.c.h.b16 %v1086
    %v1432 = vunpack.c.l.b16 %v1087
    %v1433 = vunpack.c.h.b16 %v1087
    %v1434 = vunpack.c.l.b16 %v1088
    %v1435 = vunpack.c.h.b16 %v1088
    %v1436 = vunpack.c.l.b16 %v1089
    %v1437 = vunpack.c.h.b16 %v1089
    %v1438 = vunpack.c.l.b16 %v1090
    %v1439 = vunpack.c.h.b16 %v1090
    %v1440 = vunpack.c.l.b16 %v1091
    %v1441 = vunpack.c.h.b16 %v1091
    %v1442 = vunpack.c.l.b16 %v1092
    %v1443 = vunpack.c.h.b16 %v1092
    %v1444 = vunpack.c.l.b16 %v1093
    %v1445 = vunpack.c.h.b16 %v1093
    %v1446 = vunpack.c.l.b16 %v1094
    %v1447 = vunpack.c.h.b16 %v1094
    %v1448 = vunpack.c.l.b16 %v1095
    %v1449 = vunpack.c.h.b16 %v1095
    %v1450 = vunpack.c.l.b16 %v1096
    %v1451 = vunpack.c.h.b16 %v1096
    %v1452 = vunpack.c.l.b16 %v1097
    %v1453 = vunpack.c.h.b16 %v1097
    %v1454 = vunpack.c.l.b16 %v1098
    %v1455 = vunpack.c.h.b16 %v1098
    %v1456 = vunpack.c.l.b16 %v1099
    %v1457 = vunpack.c.h.b16 %v1099
    %v1458 = vunpack.c.l.b16 %v1100
    %v1459 = vunpack.c.h.b16 %v1100
    %v1460 = vunpack.c.l.b16 %v1101
    %v1461 = vunpack.c.h.b16 %v1101
    %v1462 = vunpack.c.l.b16 %v1102
    %v1463 = vunpack.c.h.b16 %v1102
    %v1464 = vunpack.c.l.b16 %v1103
    %v1465 = vunpack.c.h.b16 %v1103
    %v1466 = vunpack.c.l.b16 %v1104
    %v1467 = vunpack.c.h.b16 %v1104
    %v1468 = vunpack.c.l.b16 %v1105
    %v1469 = vunpack.c.h.b16 %v1105
    %v1470 = vunpack.c.l.b16 %v1106
    %v1471 = vunpack.c.h.b16 %v1106
    %v1472 = vunpack.c.l.b16 %v1107
    %v1473 = vunpack.c.h.b16 %v1107
    %v1474 = vunpack.c.l.b16 %v1108
    %v1475 = vunpack.c.h.b16 %v1108
    %v1476 = vunpack.c.l.b16 %v1109
    %v1477 = vunpack.c.h.b16 %v1109
    %v1478 = vunpack.c.l.b16 %v1110
    %v1479 = vunpack.c.h.b16 %v1110
    %v1480 = vunpack.c.l.b16 %v1111
    %v1481 = vunpack.c.h.b16 %v1111
    %v1482 = vunpack.c.l.b16 %v1112
    %v1483 = vunpack.c.h.b16 %v1112
    %v1484 = vunpack.c.l.b16 %v1113
    %v1485 = vunpack.c.h.b16 %v1113
    %v1486 = vunpack.c.l.b16 %v1114
    %v1487 = vunpack.c.h.b16 %v1114
    %v1488 = vunpack.c.l.b16 %v1115
    %v1489 = vunpack.c.h.b16 %v1115
    %v1490 = vunpack.c.l.b16 %v1116
    %v1491 = vunpack.c.h.b16 %v1116
    %v1492 = vunpack.c.l.b16 %v1117
    %v1493 = vunpack.c.h.b16 %v1117
    %v1494 = vunpack.c.l.b16 %v1118
    %v1495 = vunpack.c.h.b16 %v1118
    %v1496 = vunpack.c.l.b16 %v1119
    %v1497 = vunpack.c.h.b16 %v1119
    %v1498 = vunpack.c.l.b16 %v1120
    %v1499 = vunpack.c.h.b16 %v1120
    %v1500 = vunpack.c.l.b16 %v1121
    %v1501 = vunpack.c.h.b16 %v1121
    %v1502 = vunpack.c.l.b16 %v1122
    %v1503 = vunpack.c.h.b16 %v1122
    %v1504 = vunpack.c.l.b16 %v1123
    %v1505 = vunpack.c.h.b16 %v1123
    %v1506 = vunpack.c.l.b16 %v1124
    %v1507 = vunpack.c.h.b16 %v1124
    %v1508 = vunpack.c.l.b16 %v1125
    %v1509 = vunpack.c.h.b16 %v1125
    %v1510 = vunpack.c.l.b16 %v1126
    %v1511 = vunpack.c.h.b16 %v1126
    %v1512 = vunpack.c.l.b16 %v1127
    %v1513 = vunpack.c.h.b16 %v1127
    %v1514 = vunpack.c.l.b16 %v1128
    %v1515 = vunpack.c.h.b16 %v1128
    %v1516 = vunpack.c.l.b16 %v1129
    %v1517 = vunpack.c.h.b16 %v1129
    %v1518 = vunpack.c.l.b16 %v1130
    %v1519 = vunpack.c.h.b16 %v1130
    %v1520 = vunpack.c.l.b16 %v1131
    %v1521 = vunpack.c.h.b16 %v1131
    %v1522 = vunpack.c.l.b16 %v1132
    %v1523 = vunpack.c.h.b16 %v1132
    %v1524 = vunpack.c.l.b16 %v1133
    %v1525 = vunpack.c.h.b16 %v1133
    %v1526 = vunpack.c.l.b16 %v1134
    %v1527 = vunpack.c.h.b16 %v1134
    %v1528 = vunpack.c.l.b16 %v1135
    %v1529 = vunpack.c.h.b16 %v1135
    %v1530 = vunpack.c.l.b16 %v1136
    %v1531 = vunpack.c.h.b16 %v1136
    %v1532 = vunpack.c.l.b16 %v1137
    %v1533 = vunpack.c.h.b16 %v1137
    %v1534 = vunpack.c.l.b16 %v1138
    %v1535 = vunpack.c.h.b16 %v1138
    %v1536 = vunpack.c.l.b16 %v1139
    %v1537 = vunpack.c.h.b16 %v1139
    %v1538 = vunpack.c.l.b16 %v1140
    %v1539 = vunpack.c.h.b16 %v1140
    %v1540 = vunpack.c.l.b16 %v1141
    %v1541 = vunpack.c.h.b16 %v1141
    %v1542 = vunpack.c.l.b16 %v1142
    %v1543 = vunpack.c.h.b16 %v1142
    %v1544 = vunpack.c.l.b16 %v1143
    %v1545 = vunpack.c.h.b16 %v1143
    %v1546 = vunpack.c.l.b16 %v1144
    %v1547 = vunpack.c.h.b16 %v1144
    %v1548 = vunpack.c.l.b16 %v1145
    %v1549 = vunpack.c.h.b16 %v1145
    %v1550 = vunpack.c.l.b16 %v1146
    %v1551 = vunpack.c.h.b16 %v1146
    %v1552 = vunpack.c.l.b16 %v1147
    %v1553 = vunpack.c.h.b16 %v1147
    %v1554 = vunpack.c.l.b16 %v1148
    %v1555 = vunpack.c.h.b16 %v1148
    %v1556 = vpack.c.b16 %v1304, %v1300
    %v1557 = vpack.c.b16 %v1305, %v1301
    %v1558 = vpack.c.b16 %v1306, %v1302
    %v1559 = vpack.c.b16 %v1307, %v1303
    %v1560 = vpack.c.b16 %v1312, %v1308
    %v1561 = vpack.c.b16 %v1313, %v1309
    %v1562 = vpack.c.b16 %v1314, %v1310
    %v1563 = vpack.c.b16 %v1315, %v1311
    %v1564 = vpack.c.b16 %v1320, %v1316
    %v1565 = vpack.c.b16 %v1321, %v1317
    %v1566 = vpack.c.b16 %v1322, %v1318
    %v1567 = vpack.c.b16 %v1323, %v1319
    %v1568 = vpack.c.b16 %v1328, %v1324
    %v1569 = vpack.c.b16 %v1329, %v1325
    %v1570 = vpack.c.b16 %v1330, %v1326
    %v1571 = vpack.c.b16 %v1331, %v1327
    %v1572 = vpack.c.b16 %v1336, %v1332
    %v1573 = vpack.c.b16 %v1337, %v1333
    %v1574 = vpack.c.b16 %v1338, %v1334
    %v1575 = vpack.c.b16 %v1339, %v1335
    %v1576 = vpack.c.b16 %v1344, %v1340
    %v1577 = vpack.c.b16 %v1345, %v1341
    %v1578 = vpack.c.b16 %v1346, %v1342
    %v1579 = vpack.c.b16 %v1347, %v1343
    %v1580 = vpack.c.b16 %v1352, %v1348
    %v1581 = vpack.c.b16 %v1353, %v1349
    %v1582 = vpack.c.b16 %v1354, %v1350
    %v1583 = vpack.c.b16 %v1355, %v1351
    %v1584 = vpack.c.b16 %v1360, %v1356
    %v1585 = vpack.c.b16 %v1361, %v1357
    %v1586 = vpack.c.b16 %v1362, %v1358
    %v1587 = vpack.c.b16 %v1363, %v1359
    %v1588 = vpack.c.b16 %v1368, %v1364
    %v1589 = vpack.c.b16 %v1369, %v1365
    %v1590 = vpack.c.b16 %v1370, %v1366
    %v1591 = vpack.c.b16 %v1371, %v1367
    %v1592 = vpack.c.b16 %v1376, %v1372
    %v1593 = vpack.c.b16 %v1377, %v1373
    %v1594 = vpack.c.b16 %v1378, %v1374
    %v1595 = vpack.c.b16 %v1379, %v1375
    %v1596 = vpack.c.b16 %v1384, %v1380
    %v1597 = vpack.c.b16 %v1385, %v1381
    %v1598 = vpack.c.b16 %v1386, %v1382
    %v1599 = vpack.c.b16 %v1387, %v1383
    %v1600 = vpack.c.b16 %v1392, %v1388
    %v1601 = vpack.c.b16 %v1393, %v1389
    %v1602 = vpack.c.b16 %v1394, %v1390
    %v1603 = vpack.c.b16 %v1395, %v1391
    %v1604 = vpack.c.b16 %v1400, %v1396
    %v1605 = vpack.c.b16 %v1401, %v1397
    %v1606 = vpack.c.b16 %v1402, %v1398
    %v1607 = vpack.c.b16 %v1403, %v1399
    %v1608 = vpack.c.b16 %v1408, %v1404
    %v1609 = vpack.c.b16 %v1409, %v1405
    %v1610 = vpack.c.b16 %v1410, %v1406
    %v1611 = vpack.c.b16 %v1411, %v1407
    %v1612 = vpack.c.b16 %v1416, %v1412
    %v1613 = vpack.c.b16 %v1417, %v1413
    %v1614 = vpack.c.b16 %v1418, %v1414
    %v1615 = vpack.c.b16 %v1419, %v1415
    %v1616 = vpack.c.b16 %v1424, %v1420
    %v1617 = vpack.c.b16 %v1425, %v1421
    %v1618 = vpack.c.b16 %v1426, %v1422
    %v1619 = vpack.c.b16 %v1427, %v1423
    %v1620 = vpack.c.b16 %v1432, %v1428
    %v1621 = vpack.c.b16 %v1433, %v1429
    %v1622 = vpack.c.b16 %v1434, %v1430
    %v1623 = vpack.c.b16 %v1435, %v1431
    %v1624 = vpack.c.b16 %v1440, %v1436
    %v1625 = vpack.c.b16 %v1441, %v1437
    %v1626 = vpack.c.b16 %v1442, %v1438
    %v1627 = vpack.c.b16 %v1443, %v1439
    %v1628 = vpack.c.b16 %v1448, %v1444
    %v1629 = vpack.c.b16 %v1449, %v1445
    %v1630 = vpack.c.b16 %v1450, %v1446
    %v1631 = vpack.c.b16 %v1451, %v1447
    %v1632 = vpack.c.b16 %v1456, %v1452
    %v1633 = vpack.c.b16 %v1457, %v1453
    %v1634 = vpack.c.b16 %v1458, %v1454
    %v1635 = vpack.c.b16 %v1459, %v1455
    %v1636 = vpack.c.b16 %v1464, %v1460
    %v1637 = vpack.c.b16 %v1465, %v1461
    %v1638 = vpack.c.b16 %v1466, %v1462
    %v1639 = vpack.c.b16 %v1467, %v1463
    %v1640 = vpack.c.b16 %v1472, %v1468
    %v1641 = vpack.c.b16 %v1473, %v1469
    %v1642 = vpack.c.b16 %v1474, %v1470
    %v1643 = vpack.c.b16 %v1475, %v1471
    %v1644 = vpack.c.b16 %v1480, %v1476
    %v1645 = vpack.c.b16 %v1481, %v1477
    %v1646 = vpack.c.b16 %v1482, %v1478
    %v1647 = vpack.c.b16 %v1483, %v1479
    %v1648 = vpack.c.b16 %v1488, %v1484
    %v1649 = vpack.c.b16 %v1489, %v1485
    %v1650 = vpack.c.b16 %v1490, %v1486
    %v1651 = vpack.c.b16 %v1491, %v1487
    %v1652 = vpack.c.b16 %v1496, %v1492
    %v1653 = vpack.c.b16 %v1497, %v1493
    %v1654 = vpack.c.b16 %v1498, %v1494
    %v1655 = vpack.c.b16 %v1499, %v1495
    %v1656 = vpack.c.b16 %v1504, %v1500
    %v1657 = vpack.c.b16 %v1505, %v1501
    %v1658 = vpack.c.b16 %v1506, %v1502
    %v1659 = vpack.c.b16 %v1507, %v1503
    %v1660 = vpack.c.b16 %v1512, %v1508
    %v1661 = vpack.c.b16 %v1513, %v1509
    %v1662 = vpack.c.b16 %v1514, %v1510
    %v1663 = vpack.c.b16 %v1515, %v1511
    %v1664 = vpack.c.b16 %v1520, %v1516
    %v1665 = vpack.c.b16 %v1521, %v1517
    %v1666 = vpack.c.b16 %v1522, %v1518
    %v1667 = vpack.c.b16 %v1523, %v1519
    %v1668 = vpack.c.b16 %v1528, %v1524
    %v1669 = vpack.c.b16 %v1529, %v1525
    %v1670 = vpack.c.b16 %v1530, %v1526
    %v1671 = vpack.c.b16 %v1531, %v1527
    %v1672 = vpack.c.b16 %v1536, %v1532
    %v1673 = vpack.c.b16 %v1537, %v1533
    %v1674 = vpack.c.b16 %v1538, %v1534
    %v1675 = vpack.c.b16 %v1539, %v1535
    %v1676 = vpack.c.b16 %v1544, %v1540
    %v1677 = vpack.c.b16 %v1545, %v1541
    %v1678 = vpack.c.b16 %v1546, %v1542
    %v1679 = vpack.c.b16 %v1547, %v1543
    %v1680 = vpack.c.b16 %v1552, %v1548
    %v1681 = vpack.c.b16 %v1553, %v1549
    %v1682 = vpack.c.b16 %v1554, %v1550
    %v1683 = vpack.c.b16 %v1555, %v1551
    %1812 = vmatprep.subr.bf16.mxu0 %v1557
    %1813 = vmatpush1.bf16.msra.mxu0 %v1556
    %1814 = vmatprep.subr.bf16.mxu0 %v1561
    %1815 = vmatpush1.bf16.msra.mxu0 %v1560
    %1816 = vmatprep.subr.bf16.mxu0 %v1565
    %1817 = vmatpush1.bf16.msra.mxu0 %v1564
    %1818 = vmatprep.subr.bf16.mxu0 %v1569
    %1819 = vmatpush1.bf16.msra.mxu0 %v1568
    %1820 = vmatprep.subr.bf16.mxu0 %v1573
    %1821 = vmatpush1.bf16.msra.mxu0 %v1572
    %1822 = vmatprep.subr.bf16.mxu0 %v1577
    %1823 = vmatpush1.bf16.msra.mxu0 %v1576
    %1824 = vmatprep.subr.bf16.mxu0 %v1581
    %1825 = vmatpush1.bf16.msra.mxu0 %v1580
    %1826 = vmatprep.subr.bf16.mxu0 %v1585
    %1827 = vmatpush1.bf16.msra.mxu0 %v1584
    %1828 = vmatprep.subr.bf16.mxu0 %v1589
    %1829 = vmatpush1.bf16.msra.mxu0 %v1588
    %1830 = vmatprep.subr.bf16.mxu0 %v1593
    %1831 = vmatpush1.bf16.msra.mxu0 %v1592
    %1832 = vmatprep.subr.bf16.mxu0 %v1597
    %1833 = vmatpush1.bf16.msra.mxu0 %v1596
    %1834 = vmatprep.subr.bf16.mxu0 %v1601
    %1835 = vmatpush1.bf16.msra.mxu0 %v1600
    %1836 = vmatprep.subr.bf16.mxu0 %v1605
    %1837 = vmatpush1.bf16.msra.mxu0 %v1604
    %1838 = vmatprep.subr.bf16.mxu0 %v1609
    %1839 = vmatpush1.bf16.msra.mxu0 %v1608
    %1840 = vmatprep.subr.bf16.mxu0 %v1613
    %1841 = vmatpush1.bf16.msra.mxu0 %v1612
    %1842 = vmatprep.subr.bf16.mxu0 %v1617
    %1843 = vmatpush1.bf16.msra.mxu0 %v1616
    %1844 = vmatprep.mubr.bf16.mxu0 %v1017
    %1845 = vmatmul.mubr.bf16.gmra.mrb[0].mxu0 %v1016
    %v1846 = vpop.f32.mrb[0].mxu0
    %v1847 = vadd.f32 %v1155, %v1846
    %v1848 = vpop.f32.mrb[0].mxu0
    %v1849 = vadd.f32 %v1159, %v1848
    %v1850 = vpop.f32.mrb[0].mxu0
    %v1851 = vpop.f32.mrb[0].mxu0
    %1852 = vdwg.mxu0
    %1853 = vmatprep.subr.bf16.mxu0 %v1621
    %1854 = vmatpush1.bf16.msra.mxu0 %v1620
    %1855 = vmatprep.subr.bf16.mxu0 %v1625
    %1856 = vmatpush1.bf16.msra.mxu0 %v1624
    %1857 = vmatprep.subr.bf16.mxu0 %v1629
    %1858 = vmatpush1.bf16.msra.mxu0 %v1628
    %1859 = vmatprep.subr.bf16.mxu0 %v1633
    %1860 = vmatpush1.bf16.msra.mxu0 %v1632
    %1861 = vmatprep.subr.bf16.mxu0 %v1637
    %1862 = vmatpush1.bf16.msra.mxu0 %v1636
    %1863 = vmatprep.subr.bf16.mxu0 %v1641
    %1864 = vmatpush1.bf16.msra.mxu0 %v1640
    %1865 = vmatprep.subr.bf16.mxu0 %v1645
    %1866 = vmatpush1.bf16.msra.mxu0 %v1644
    %1867 = vmatprep.subr.bf16.mxu0 %v1649
    %1868 = vmatpush1.bf16.msra.mxu0 %v1648
    %1869 = vmatprep.subr.bf16.mxu0 %v1653
    %1870 = vmatpush1.bf16.msra.mxu0 %v1652
    %1871 = vmatprep.subr.bf16.mxu0 %v1657
    %1872 = vmatpush1.bf16.msra.mxu0 %v1656
    %1873 = vmatprep.subr.bf16.mxu0 %v1661
    %1874 = vmatpush1.bf16.msra.mxu0 %v1660
    %1875 = vmatprep.subr.bf16.mxu0 %v1665
    %1876 = vmatpush1.bf16.msra.mxu0 %v1664
    %1877 = vmatprep.subr.bf16.mxu0 %v1669
    %1878 = vmatpush1.bf16.msra.mxu0 %v1668
    %1879 = vmatprep.subr.bf16.mxu0 %v1673
    %1880 = vmatpush1.bf16.msra.mxu0 %v1672
    %1881 = vmatprep.subr.bf16.mxu0 %v1677
    %1882 = vmatpush1.bf16.msra.mxu0 %v1676
    %1883 = vmatprep.subr.bf16.mxu0 %v1681
    %1884 = vmatpush1.bf16.msra.mxu0 %v1680
    %1885 = vmatprep.mubr.bf16.mxu0 %v1019
    %1886 = vmatmul.mubr.bf16.gmra.mrb[0].mxu0 %v1018
    %v1887 = vpop.f32.mrb[0].mxu0
    %v1888 = vadd.f32 %v1847, %v1887
    %v1889 = vpop.f32.mrb[0].mxu0
    %v1890 = vadd.f32 %v1849, %v1889
    %v1891 = vpop.f32.mrb[0].mxu0
    %v1892 = vpop.f32.mrb[0].mxu0
    %1893 = vdwg.mxu0
    %1894 = vmatprep.subr.bf16.mxu0 %v1559
    %1895 = vmatpush1.bf16.msra.mxu0 %v1558
    %1896 = vmatprep.subr.bf16.mxu0 %v1563
    %1897 = vmatpush1.bf16.msra.mxu0 %v1562
    %1898 = vmatprep.subr.bf16.mxu0 %v1567
    %1899 = vmatpush1.bf16.msra.mxu0 %v1566
    %1900 = vmatprep.subr.bf16.mxu0 %v1571
    %1901 = vmatpush1.bf16.msra.mxu0 %v1570
    %1902 = vmatprep.subr.bf16.mxu0 %v1575
    %1903 = vmatpush1.bf16.msra.mxu0 %v1574
    %1904 = vmatprep.subr.bf16.mxu0 %v1579
    %1905 = vmatpush1.bf16.msra.mxu0 %v1578
    %1906 = vmatprep.subr.bf16.mxu0 %v1583
    %1907 = vmatpush1.bf16.msra.mxu0 %v1582
    %1908 = vmatprep.subr.bf16.mxu0 %v1587
    %1909 = vmatpush1.bf16.msra.mxu0 %v1586
    %1910 = vmatprep.subr.bf16.mxu0 %v1591
    %1911 = vmatpush1.bf16.msra.mxu0 %v1590
    %1912 = vmatprep.subr.bf16.mxu0 %v1595
    %1913 = vmatpush1.bf16.msra.mxu0 %v1594
    %1914 = vmatprep.subr.bf16.mxu0 %v1599
    %1915 = vmatpush1.bf16.msra.mxu0 %v1598
    %1916 = vmatprep.subr.bf16.mxu0 %v1603
    %1917 = vmatpush1.bf16.msra.mxu0 %v1602
    %1918 = vmatprep.subr.bf16.mxu0 %v1607
    %1919 = vmatpush1.bf16.msra.mxu0 %v1606
    %1920 = vmatprep.subr.bf16.mxu0 %v1611
    %1921 = vmatpush1.bf16.msra.mxu0 %v1610
    %1922 = vmatprep.subr.bf16.mxu0 %v1615
    %1923 = vmatpush1.bf16.msra.mxu0 %v1614
    %1924 = vmatprep.subr.bf16.mxu0 %v1619
    %1925 = vmatpush1.bf16.msra.mxu0 %v1618
    %1926 = vmatprep.mubr.bf16.mxu0 %v1017
    %1927 = vmatmul.mubr.bf16.gmra.mrb[0].mxu0 %v1016
    %v1928 = vpop.f32.mrb[0].mxu0
    %v1929 = vadd.f32 %v1163, %v1928
    %v1930 = vpop.f32.mrb[0].mxu0
    %v1931 = vadd.f32 %v1167, %v1930
    %v1932 = vpop.f32.mrb[0].mxu0
    %v1933 = vpop.f32.mrb[0].mxu0
    %1934 = vdwg.mxu0
    %1935 = vmatprep.subr.bf16.mxu0 %v1623
    %1936 = vmatpush1.bf16.msra.mxu0 %v1622
    %1937 = vmatprep.subr.bf16.mxu0 %v1627
    %1938 = vmatpush1.bf16.msra.mxu0 %v1626
    %1939 = vmatprep.subr.bf16.mxu0 %v1631
    %1940 = vmatpush1.bf16.msra.mxu0 %v1630
    %1941 = vmatprep.subr.bf16.mxu0 %v1635
    %1942 = vmatpush1.bf16.msra.mxu0 %v1634
    %1943 = vmatprep.subr.bf16.mxu0 %v1639
    %1944 = vmatpush1.bf16.msra.mxu0 %v1638
    %1945 = vmatprep.subr.bf16.mxu0 %v1643
    %1946 = vmatpush1.bf16.msra.mxu0 %v1642
    %1947 = vmatprep.subr.bf16.mxu0 %v1647
    %1948 = vmatpush1.bf16.msra.mxu0 %v1646
    %1949 = vmatprep.subr.bf16.mxu0 %v1651
    %1950 = vmatpush1.bf16.msra.mxu0 %v1650
    %1951 = vmatprep.subr.bf16.mxu0 %v1655
    %1952 = vmatpush1.bf16.msra.mxu0 %v1654
    %1953 = vmatprep.subr.bf16.mxu0 %v1659
    %1954 = vmatpush1.bf16.msra.mxu0 %v1658
    %1955 = vmatprep.subr.bf16.mxu0 %v1663
    %1956 = vmatpush1.bf16.msra.mxu0 %v1662
    %1957 = vmatprep.subr.bf16.mxu0 %v1667
    %1958 = vmatpush1.bf16.msra.mxu0 %v1666
    %1959 = vmatprep.subr.bf16.mxu0 %v1671
    %1960 = vmatpush1.bf16.msra.mxu0 %v1670
    %1961 = vmatprep.subr.bf16.mxu0 %v1675
    %1962 = vmatpush1.bf16.msra.mxu0 %v1674
    %1963 = vmatprep.subr.bf16.mxu0 %v1679
    %1964 = vmatpush1.bf16.msra.mxu0 %v1678
    %1965 = vmatprep.subr.bf16.mxu0 %v1683
    %1966 = vmatpush1.bf16.msra.mxu0 %v1682
    %1967 = vmatprep.mubr.bf16.mxu0 %v1019
    %1968 = vmatmul.mubr.bf16.gmra.mrb[0].mxu0 %v1018
    %v1969 = vpop.f32.mrb[0].mxu0
    %v1970 = vadd.f32 %v1929, %v1969
    %v1971 = vpop.f32.mrb[0].mxu0
    %v1972 = vadd.f32 %v1931, %v1971
    %v1973 = vpop.f32.mrb[0].mxu0
    %v1974 = vpop.f32.mrb[0].mxu0
    %1975 = vdwg.mxu0
    %v1976 = vmax.f32 %v1888, 0.0
    %v1977 = vmax.f32 %v1890, 0.0
    %v1978 = vmax.f32 %v1970, 0.0
    %v1979 = vmax.f32 %v1972, 0.0
    %v1980 = vpack.c.bf16 %v1976, %v1976
    %v1981 = vpack.c.bf16 %v1977, %v1977
    %v1982 = vpack.c.bf16 %v1978, %v1978
    %v1983 = vpack.c.bf16 %v1979, %v1979
    %s1984 = scalar_lea.vmem [#allocation2], 2048
    %v1985 = vld [vmem:[%s1984] sm:$0xff]
    %v1986 = vld [vmem:[%s1984 + $0x8] sm:$0xff]
    %v1987 = vld [vmem:[%s1984 + $0x10] sm:$0xff]
    %v1988 = vld [vmem:[%s1984 + $0x18] sm:$0xff]
    %v1989 = vld [vmem:[%s1984 + $0x20] sm:$0xff]
    %v1990 = vld [vmem:[%s1984 + $0x28] sm:$0xff]
    %v1991 = vld [vmem:[%s1984 + $0x30] sm:$0xff]
    %v1992 = vld [vmem:[%s1984 + $0x38] sm:$0xff]
    %v1993 = vld [vmem:[%s1984 + $0x40] sm:$0xff]
    %v1994 = vld [vmem:[%s1984 + $0x48] sm:$0xff]
    %v1995 = vld [vmem:[%s1984 + $0x50] sm:$0xff]
    %v1996 = vld [vmem:[%s1984 + $0x58] sm:$0xff]
    %v1997 = vld [vmem:[%s1984 + $0x60] sm:$0xff]
    %v1998 = vld [vmem:[%s1984 + $0x68] sm:$0xff]
    %v1999 = vld [vmem:[%s1984 + $0x70] sm:$0xff]
    %v2000 = vld [vmem:[%s1984 + $0x78] sm:$0xff]
    %v2001 = vld [vmem:[%s1984 + $0x80] sm:$0xff]
    %v2002 = vld [vmem:[%s1984 + $0x88] sm:$0xff]
    %v2003 = vld [vmem:[%s1984 + $0x90] sm:$0xff]
    %v2004 = vld [vmem:[%s1984 + $0x98] sm:$0xff]
    %v2005 = vld [vmem:[%s1984 + $0xa0] sm:$0xff]
    %v2006 = vld [vmem:[%s1984 + $0xa8] sm:$0xff]
    %v2007 = vld [vmem:[%s1984 + $0xb0] sm:$0xff]
    %v2008 = vld [vmem:[%s1984 + $0xb8] sm:$0xff]
    %v2009 = vld [vmem:[%s1984 + $0xc0] sm:$0xff]
    %v2010 = vld [vmem:[%s1984 + $0xc8] sm:$0xff]
    %v2011 = vld [vmem:[%s1984 + $0xd0] sm:$0xff]
    %v2012 = vld [vmem:[%s1984 + $0xd8] sm:$0xff]
    %v2013 = vld [vmem:[%s1984 + $0xe0] sm:$0xff]
    %v2014 = vld [vmem:[%s1984 + $0xe8] sm:$0xff]
    %v2015 = vld [vmem:[%s1984 + $0xf0] sm:$0xff]
    %v2016 = vld [vmem:[%s1984 + $0xf8] sm:$0xff]
    %v2017 = vld [vmem:[%s1984 + $0x100] sm:$0xff]
    %v2018 = vld [vmem:[%s1984 + $0x108] sm:$0xff]
    %v2019 = vld [vmem:[%s1984 + $0x110] sm:$0xff]
    %v2020 = vld [vmem:[%s1984 + $0x118] sm:$0xff]
    %v2021 = vld [vmem:[%s1984 + $0x120] sm:$0xff]
    %v2022 = vld [vmem:[%s1984 + $0x128] sm:$0xff]
    %v2023 = vld [vmem:[%s1984 + $0x130] sm:$0xff]
    %v2024 = vld [vmem:[%s1984 + $0x138] sm:$0xff]
    %v2025 = vld [vmem:[%s1984 + $0x140] sm:$0xff]
    %v2026 = vld [vmem:[%s1984 + $0x148] sm:$0xff]
    %v2027 = vld [vmem:[%s1984 + $0x150] sm:$0xff]
    %v2028 = vld [vmem:[%s1984 + $0x158] sm:$0xff]
    %v2029 = vld [vmem:[%s1984 + $0x160] sm:$0xff]
    %v2030 = vld [vmem:[%s1984 + $0x168] sm:$0xff]
    %v2031 = vld [vmem:[%s1984 + $0x170] sm:$0xff]
    %v2032 = vld [vmem:[%s1984 + $0x178] sm:$0xff]
    %v2033 = vld [vmem:[%s1984 + $0x180] sm:$0xff]
    %v2034 = vld [vmem:[%s1984 + $0x188] sm:$0xff]
    %v2035 = vld [vmem:[%s1984 + $0x190] sm:$0xff]
    %v2036 = vld [vmem:[%s1984 + $0x198] sm:$0xff]
    %v2037 = vld [vmem:[%s1984 + $0x1a0] sm:$0xff]
    %v2038 = vld [vmem:[%s1984 + $0x1a8] sm:$0xff]
    %v2039 = vld [vmem:[%s1984 + $0x1b0] sm:$0xff]
    %v2040 = vld [vmem:[%s1984 + $0x1b8] sm:$0xff]
    %v2041 = vld [vmem:[%s1984 + $0x1c0] sm:$0xff]
    %v2042 = vld [vmem:[%s1984 + $0x1c8] sm:$0xff]
    %v2043 = vld [vmem:[%s1984 + $0x1d0] sm:$0xff]
    %v2044 = vld [vmem:[%s1984 + $0x1d8] sm:$0xff]
    %v2045 = vld [vmem:[%s1984 + $0x1e0] sm:$0xff]
    %v2046 = vld [vmem:[%s1984 + $0x1e8] sm:$0xff]
    %v2047 = vld [vmem:[%s1984 + $0x1f0] sm:$0xff]
    %v2048 = vld [vmem:[%s1984 + $0x1f8] sm:$0xff]
    %v2049 = vld [vmem:[%s1984 + $0x200] sm:$0xff]
    %v2050 = vld [vmem:[%s1984 + $0x208] sm:$0xff]
    %v2051 = vld [vmem:[%s1984 + $0x210] sm:$0xff]
    %v2052 = vld [vmem:[%s1984 + $0x218] sm:$0xff]
    %v2053 = vld [vmem:[%s1984 + $0x220] sm:$0xff]
    %v2054 = vld [vmem:[%s1984 + $0x228] sm:$0xff]
    %v2055 = vld [vmem:[%s1984 + $0x230] sm:$0xff]
    %v2056 = vld [vmem:[%s1984 + $0x238] sm:$0xff]
    %v2057 = vld [vmem:[%s1984 + $0x240] sm:$0xff]
    %v2058 = vld [vmem:[%s1984 + $0x248] sm:$0xff]
    %v2059 = vld [vmem:[%s1984 + $0x250] sm:$0xff]
    %v2060 = vld [vmem:[%s1984 + $0x258] sm:$0xff]
    %v2061 = vld [vmem:[%s1984 + $0x260] sm:$0xff]
    %v2062 = vld [vmem:[%s1984 + $0x268] sm:$0xff]
    %v2063 = vld [vmem:[%s1984 + $0x270] sm:$0xff]
    %v2064 = vld [vmem:[%s1984 + $0x278] sm:$0xff]
    %v2065 = vld [vmem:[%s1984 + $0x280] sm:$0xff]
    %v2066 = vld [vmem:[%s1984 + $0x288] sm:$0xff]
    %v2067 = vld [vmem:[%s1984 + $0x290] sm:$0xff]
    %v2068 = vld [vmem:[%s1984 + $0x298] sm:$0xff]
    %v2069 = vld [vmem:[%s1984 + $0x2a0] sm:$0xff]
    %v2070 = vld [vmem:[%s1984 + $0x2a8] sm:$0xff]
    %v2071 = vld [vmem:[%s1984 + $0x2b0] sm:$0xff]
    %v2072 = vld [vmem:[%s1984 + $0x2b8] sm:$0xff]
    %v2073 = vld [vmem:[%s1984 + $0x2c0] sm:$0xff]
    %v2074 = vld [vmem:[%s1984 + $0x2c8] sm:$0xff]
    %v2075 = vld [vmem:[%s1984 + $0x2d0] sm:$0xff]
    %v2076 = vld [vmem:[%s1984 + $0x2d8] sm:$0xff]
    %v2077 = vld [vmem:[%s1984 + $0x2e0] sm:$0xff]
    %v2078 = vld [vmem:[%s1984 + $0x2e8] sm:$0xff]
    %v2079 = vld [vmem:[%s1984 + $0x2f0] sm:$0xff]
    %v2080 = vld [vmem:[%s1984 + $0x2f8] sm:$0xff]
    %v2081 = vld [vmem:[%s1984 + $0x300] sm:$0xff]
    %v2082 = vld [vmem:[%s1984 + $0x308] sm:$0xff]
    %v2083 = vld [vmem:[%s1984 + $0x310] sm:$0xff]
    %v2084 = vld [vmem:[%s1984 + $0x318] sm:$0xff]
    %v2085 = vld [vmem:[%s1984 + $0x320] sm:$0xff]
    %v2086 = vld [vmem:[%s1984 + $0x328] sm:$0xff]
    %v2087 = vld [vmem:[%s1984 + $0x330] sm:$0xff]
    %v2088 = vld [vmem:[%s1984 + $0x338] sm:$0xff]
    %v2089 = vld [vmem:[%s1984 + $0x340] sm:$0xff]
    %v2090 = vld [vmem:[%s1984 + $0x348] sm:$0xff]
    %v2091 = vld [vmem:[%s1984 + $0x350] sm:$0xff]
    %v2092 = vld [vmem:[%s1984 + $0x358] sm:$0xff]
    %v2093 = vld [vmem:[%s1984 + $0x360] sm:$0xff]
    %v2094 = vld [vmem:[%s1984 + $0x368] sm:$0xff]
    %v2095 = vld [vmem:[%s1984 + $0x370] sm:$0xff]
    %v2096 = vld [vmem:[%s1984 + $0x378] sm:$0xff]
    %v2097 = vld [vmem:[%s1984 + $0x380] sm:$0xff]
    %v2098 = vld [vmem:[%s1984 + $0x388] sm:$0xff]
    %v2099 = vld [vmem:[%s1984 + $0x390] sm:$0xff]
    %v2100 = vld [vmem:[%s1984 + $0x398] sm:$0xff]
    %v2101 = vld [vmem:[%s1984 + $0x3a0] sm:$0xff]
    %v2102 = vld [vmem:[%s1984 + $0x3a8] sm:$0xff]
    %v2103 = vld [vmem:[%s1984 + $0x3b0] sm:$0xff]
    %v2104 = vld [vmem:[%s1984 + $0x3b8] sm:$0xff]
    %v2105 = vld [vmem:[%s1984 + $0x3c0] sm:$0xff]
    %v2106 = vld [vmem:[%s1984 + $0x3c8] sm:$0xff]
    %v2107 = vld [vmem:[%s1984 + $0x3d0] sm:$0xff]
    %v2108 = vld [vmem:[%s1984 + $0x3d8] sm:$0xff]
    %v2109 = vld [vmem:[%s1984 + $0x3e0] sm:$0xff]
    %v2110 = vld [vmem:[%s1984 + $0x3e8] sm:$0xff]
    %v2111 = vld [vmem:[%s1984 + $0x3f0] sm:$0xff]
    %v2112 = vld [vmem:[%s1984 + $0x3f8] sm:$0xff]
    %s2113 = scalar_lea.vmem [#allocation4], 8
    %v2114 = vld [vmem:[%s2113] sm:$0xf]
    %v2116 = vlaneseq
    %v2117 = vshrl.u32 %v2116, 7
    %v2118 = vsub.s32 0, %v2117
    %v2119 = vrot.slane %v2114, %v2118
    %v2120 = vlaneseq
    %v2121 = vshrl.u32 %v2120, 7
    %v2122 = vsub.s32 1, %v2121
    %v2123 = vrot.slane %v2114, %v2122
    %v2124 = vlaneseq
    %v2125 = vshrl.u32 %v2124, 7
    %v2126 = vsub.s32 2, %v2125
    %v2127 = vrot.slane %v2114, %v2126
    %v2128 = vlaneseq
    %v2129 = vshrl.u32 %v2128, 7
    %v2130 = vsub.s32 3, %v2129
    %v2131 = vrot.slane %v2114, %v2130
    %v2264 = vunpack.c.l.b16 %v1985
    %v2265 = vunpack.c.h.b16 %v1985
    %v2266 = vunpack.c.l.b16 %v1986
    %v2267 = vunpack.c.h.b16 %v1986
    %v2268 = vunpack.c.l.b16 %v1987
    %v2269 = vunpack.c.h.b16 %v1987
    %v2270 = vunpack.c.l.b16 %v1988
    %v2271 = vunpack.c.h.b16 %v1988
    %v2272 = vunpack.c.l.b16 %v1989
    %v2273 = vunpack.c.h.b16 %v1989
    %v2274 = vunpack.c.l.b16 %v1990
    %v2275 = vunpack.c.h.b16 %v1990
    %v2276 = vunpack.c.l.b16 %v1991
    %v2277 = vunpack.c.h.b16 %v1991
    %v2278 = vunpack.c.l.b16 %v1992
    %v2279 = vunpack.c.h.b16 %v1992
    %v2280 = vunpack.c.l.b16 %v1993
    %v2281 = vunpack.c.h.b16 %v1993
    %v2282 = vunpack.c.l.b16 %v1994
    %v2283 = vunpack.c.h.b16 %v1994
    %v2284 = vunpack.c.l.b16 %v1995
    %v2285 = vunpack.c.h.b16 %v1995
    %v2286 = vunpack.c.l.b16 %v1996
    %v2287 = vunpack.c.h.b16 %v1996
    %v2288 = vunpack.c.l.b16 %v1997
    %v2289 = vunpack.c.h.b16 %v1997
    %v2290 = vunpack.c.l.b16 %v1998
    %v2291 = vunpack.c.h.b16 %v1998
    %v2292 = vunpack.c.l.b16 %v1999
    %v2293 = vunpack.c.h.b16 %v1999
    %v2294 = vunpack.c.l.b16 %v2000
    %v2295 = vunpack.c.h.b16 %v2000
    %v2296 = vunpack.c.l.b16 %v2001
    %v2297 = vunpack.c.h.b16 %v2001
    %v2298 = vunpack.c.l.b16 %v2002
    %v2299 = vunpack.c.h.b16 %v2002
    %v2300 = vunpack.c.l.b16 %v2003
    %v2301 = vunpack.c.h.b16 %v2003
    %v2302 = vunpack.c.l.b16 %v2004
    %v2303 = vunpack.c.h.b16 %v2004
    %v2304 = vunpack.c.l.b16 %v2005
    %v2305 = vunpack.c.h.b16 %v2005
    %v2306 = vunpack.c.l.b16 %v2006
    %v2307 = vunpack.c.h.b16 %v2006
    %v2308 = vunpack.c.l.b16 %v2007
    %v2309 = vunpack.c.h.b16 %v2007
    %v2310 = vunpack.c.l.b16 %v2008
    %v2311 = vunpack.c.h.b16 %v2008
    %v2312 = vunpack.c.l.b16 %v2009
    %v2313 = vunpack.c.h.b16 %v2009
    %v2314 = vunpack.c.l.b16 %v2010
    %v2315 = vunpack.c.h.b16 %v2010
    %v2316 = vunpack.c.l.b16 %v2011
    %v2317 = vunpack.c.h.b16 %v2011
    %v2318 = vunpack.c.l.b16 %v2012
    %v2319 = vunpack.c.h.b16 %v2012
    %v2320 = vunpack.c.l.b16 %v2013
    %v2321 = vunpack.c.h.b16 %v2013
    %v2322 = vunpack.c.l.b16 %v2014
    %v2323 = vunpack.c.h.b16 %v2014
    %v2324 = vunpack.c.l.b16 %v2015
    %v2325 = vunpack.c.h.b16 %v2015
    %v2326 = vunpack.c.l.b16 %v2016
    %v2327 = vunpack.c.h.b16 %v2016
    %v2328 = vunpack.c.l.b16 %v2017
    %v2329 = vunpack.c.h.b16 %v2017
    %v2330 = vunpack.c.l.b16 %v2018
    %v2331 = vunpack.c.h.b16 %v2018
    %v2332 = vunpack.c.l.b16 %v2019
    %v2333 = vunpack.c.h.b16 %v2019
    %v2334 = vunpack.c.l.b16 %v2020
    %v2335 = vunpack.c.h.b16 %v2020
    %v2336 = vunpack.c.l.b16 %v2021
    %v2337 = vunpack.c.h.b16 %v2021
    %v2338 = vunpack.c.l.b16 %v2022
    %v2339 = vunpack.c.h.b16 %v2022
    %v2340 = vunpack.c.l.b16 %v2023
    %v2341 = vunpack.c.h.b16 %v2023
    %v2342 = vunpack.c.l.b16 %v2024
    %v2343 = vunpack.c.h.b16 %v2024
    %v2344 = vunpack.c.l.b16 %v2025
    %v2345 = vunpack.c.h.b16 %v2025
    %v2346 = vunpack.c.l.b16 %v2026
    %v2347 = vunpack.c.h.b16 %v2026
    %v2348 = vunpack.c.l.b16 %v2027
    %v2349 = vunpack.c.h.b16 %v2027
    %v2350 = vunpack.c.l.b16 %v2028
    %v2351 = vunpack.c.h.b16 %v2028
    %v2352 = vunpack.c.l.b16 %v2029
    %v2353 = vunpack.c.h.b16 %v2029
    %v2354 = vunpack.c.l.b16 %v2030
    %v2355 = vunpack.c.h.b16 %v2030
    %v2356 = vunpack.c.l.b16 %v2031
    %v2357 = vunpack.c.h.b16 %v2031
    %v2358 = vunpack.c.l.b16 %v2032
    %v2359 = vunpack.c.h.b16 %v2032
    %v2360 = vunpack.c.l.b16 %v2033
    %v2361 = vunpack.c.h.b16 %v2033
    %v2362 = vunpack.c.l.b16 %v2034
    %v2363 = vunpack.c.h.b16 %v2034
    %v2364 = vunpack.c.l.b16 %v2035
    %v2365 = vunpack.c.h.b16 %v2035
    %v2366 = vunpack.c.l.b16 %v2036
    %v2367 = vunpack.c.h.b16 %v2036
    %v2368 = vunpack.c.l.b16 %v2037
    %v2369 = vunpack.c.h.b16 %v2037
    %v2370 = vunpack.c.l.b16 %v2038
    %v2371 = vunpack.c.h.b16 %v2038
    %v2372 = vunpack.c.l.b16 %v2039
    %v2373 = vunpack.c.h.b16 %v2039
    %v2374 = vunpack.c.l.b16 %v2040
    %v2375 = vunpack.c.h.b16 %v2040
    %v2376 = vunpack.c.l.b16 %v2041
    %v2377 = vunpack.c.h.b16 %v2041
    %v2378 = vunpack.c.l.b16 %v2042
    %v2379 = vunpack.c.h.b16 %v2042
    %v2380 = vunpack.c.l.b16 %v2043
    %v2381 = vunpack.c.h.b16 %v2043
    %v2382 = vunpack.c.l.b16 %v2044
    %v2383 = vunpack.c.h.b16 %v2044
    %v2384 = vunpack.c.l.b16 %v2045
    %v2385 = vunpack.c.h.b16 %v2045
    %v2386 = vunpack.c.l.b16 %v2046
    %v2387 = vunpack.c.h.b16 %v2046
    %v2388 = vunpack.c.l.b16 %v2047
    %v2389 = vunpack.c.h.b16 %v2047
    %v2390 = vunpack.c.l.b16 %v2048
    %v2391 = vunpack.c.h.b16 %v2048
    %v2392 = vunpack.c.l.b16 %v2049
    %v2393 = vunpack.c.h.b16 %v2049
    %v2394 = vunpack.c.l.b16 %v2050
    %v2395 = vunpack.c.h.b16 %v2050
    %v2396 = vunpack.c.l.b16 %v2051
    %v2397 = vunpack.c.h.b16 %v2051
    %v2398 = vunpack.c.l.b16 %v2052
    %v2399 = vunpack.c.h.b16 %v2052
    %v2400 = vunpack.c.l.b16 %v2053
    %v2401 = vunpack.c.h.b16 %v2053
    %v2402 = vunpack.c.l.b16 %v2054
    %v2403 = vunpack.c.h.b16 %v2054
    %v2404 = vunpack.c.l.b16 %v2055
    %v2405 = vunpack.c.h.b16 %v2055
    %v2406 = vunpack.c.l.b16 %v2056
    %v2407 = vunpack.c.h.b16 %v2056
    %v2408 = vunpack.c.l.b16 %v2057
    %v2409 = vunpack.c.h.b16 %v2057
    %v2410 = vunpack.c.l.b16 %v2058
    %v2411 = vunpack.c.h.b16 %v2058
    %v2412 = vunpack.c.l.b16 %v2059
    %v2413 = vunpack.c.h.b16 %v2059
    %v2414 = vunpack.c.l.b16 %v2060
    %v2415 = vunpack.c.h.b16 %v2060
    %v2416 = vunpack.c.l.b16 %v2061
    %v2417 = vunpack.c.h.b16 %v2061
    %v2418 = vunpack.c.l.b16 %v2062
    %v2419 = vunpack.c.h.b16 %v2062
    %v2420 = vunpack.c.l.b16 %v2063
    %v2421 = vunpack.c.h.b16 %v2063
    %v2422 = vunpack.c.l.b16 %v2064
    %v2423 = vunpack.c.h.b16 %v2064
    %v2424 = vunpack.c.l.b16 %v2065
    %v2425 = vunpack.c.h.b16 %v2065
    %v2426 = vunpack.c.l.b16 %v2066
    %v2427 = vunpack.c.h.b16 %v2066
    %v2428 = vunpack.c.l.b16 %v2067
    %v2429 = vunpack.c.h.b16 %v2067
    %v2430 = vunpack.c.l.b16 %v2068
    %v2431 = vunpack.c.h.b16 %v2068
    %v2432 = vunpack.c.l.b16 %v2069
    %v2433 = vunpack.c.h.b16 %v2069
    %v2434 = vunpack.c.l.b16 %v2070
    %v2435 = vunpack.c.h.b16 %v2070
    %v2436 = vunpack.c.l.b16 %v2071
    %v2437 = vunpack.c.h.b16 %v2071
    %v2438 = vunpack.c.l.b16 %v2072
    %v2439 = vunpack.c.h.b16 %v2072
    %v2440 = vunpack.c.l.b16 %v2073
    %v2441 = vunpack.c.h.b16 %v2073
    %v2442 = vunpack.c.l.b16 %v2074
    %v2443 = vunpack.c.h.b16 %v2074
    %v2444 = vunpack.c.l.b16 %v2075
    %v2445 = vunpack.c.h.b16 %v2075
    %v2446 = vunpack.c.l.b16 %v2076
    %v2447 = vunpack.c.h.b16 %v2076
    %v2448 = vunpack.c.l.b16 %v2077
    %v2449 = vunpack.c.h.b16 %v2077
    %v2450 = vunpack.c.l.b16 %v2078
    %v2451 = vunpack.c.h.b16 %v2078
    %v2452 = vunpack.c.l.b16 %v2079
    %v2453 = vunpack.c.h.b16 %v2079
    %v2454 = vunpack.c.l.b16 %v2080
    %v2455 = vunpack.c.h.b16 %v2080
    %v2456 = vunpack.c.l.b16 %v2081
    %v2457 = vunpack.c.h.b16 %v2081
    %v2458 = vunpack.c.l.b16 %v2082
    %v2459 = vunpack.c.h.b16 %v2082
    %v2460 = vunpack.c.l.b16 %v2083
    %v2461 = vunpack.c.h.b16 %v2083
    %v2462 = vunpack.c.l.b16 %v2084
    %v2463 = vunpack.c.h.b16 %v2084
    %v2464 = vunpack.c.l.b16 %v2085
    %v2465 = vunpack.c.h.b16 %v2085
    %v2466 = vunpack.c.l.b16 %v2086
    %v2467 = vunpack.c.h.b16 %v2086
    %v2468 = vunpack.c.l.b16 %v2087
    %v2469 = vunpack.c.h.b16 %v2087
    %v2470 = vunpack.c.l.b16 %v2088
    %v2471 = vunpack.c.h.b16 %v2088
    %v2472 = vunpack.c.l.b16 %v2089
    %v2473 = vunpack.c.h.b16 %v2089
    %v2474 = vunpack.c.l.b16 %v2090
    %v2475 = vunpack.c.h.b16 %v2090
    %v2476 = vunpack.c.l.b16 %v2091
    %v2477 = vunpack.c.h.b16 %v2091
    %v2478 = vunpack.c.l.b16 %v2092
    %v2479 = vunpack.c.h.b16 %v2092
    %v2480 = vunpack.c.l.b16 %v2093
    %v2481 = vunpack.c.h.b16 %v2093
    %v2482 = vunpack.c.l.b16 %v2094
    %v2483 = vunpack.c.h.b16 %v2094
    %v2484 = vunpack.c.l.b16 %v2095
    %v2485 = vunpack.c.h.b16 %v2095
    %v2486 = vunpack.c.l.b16 %v2096
    %v2487 = vunpack.c.h.b16 %v2096
    %v2488 = vunpack.c.l.b16 %v2097
    %v2489 = vunpack.c.h.b16 %v2097
    %v2490 = vunpack.c.l.b16 %v2098
    %v2491 = vunpack.c.h.b16 %v2098
    %v2492 = vunpack.c.l.b16 %v2099
    %v2493 = vunpack.c.h.b16 %v2099
    %v2494 = vunpack.c.l.b16 %v2100
    %v2495 = vunpack.c.h.b16 %v2100
    %v2496 = vunpack.c.l.b16 %v2101
    %v2497 = vunpack.c.h.b16 %v2101
    %v2498 = vunpack.c.l.b16 %v2102
    %v2499 = vunpack.c.h.b16 %v2102
    %v2500 = vunpack.c.l.b16 %v2103
    %v2501 = vunpack.c.h.b16 %v2103
    %v2502 = vunpack.c.l.b16 %v2104
    %v2503 = vunpack.c.h.b16 %v2104
    %v2504 = vunpack.c.l.b16 %v2105
    %v2505 = vunpack.c.h.b16 %v2105
    %v2506 = vunpack.c.l.b16 %v2106
    %v2507 = vunpack.c.h.b16 %v2106
    %v2508 = vunpack.c.l.b16 %v2107
    %v2509 = vunpack.c.h.b16 %v2107
    %v2510 = vunpack.c.l.b16 %v2108
    %v2511 = vunpack.c.h.b16 %v2108
    %v2512 = vunpack.c.l.b16 %v2109
    %v2513 = vunpack.c.h.b16 %v2109
    %v2514 = vunpack.c.l.b16 %v2110
    %v2515 = vunpack.c.h.b16 %v2110
    %v2516 = vunpack.c.l.b16 %v2111
    %v2517 = vunpack.c.h.b16 %v2111
    %v2518 = vunpack.c.l.b16 %v2112
    %v2519 = vunpack.c.h.b16 %v2112
    %v2520 = vpack.c.b16 %v2268, %v2264
    %v2521 = vpack.c.b16 %v2269, %v2265
    %v2522 = vpack.c.b16 %v2270, %v2266
    %v2523 = vpack.c.b16 %v2271, %v2267
    %v2524 = vpack.c.b16 %v2276, %v2272
    %v2525 = vpack.c.b16 %v2277, %v2273
    %v2526 = vpack.c.b16 %v2278, %v2274
    %v2527 = vpack.c.b16 %v2279, %v2275
    %v2528 = vpack.c.b16 %v2284, %v2280
    %v2529 = vpack.c.b16 %v2285, %v2281
    %v2530 = vpack.c.b16 %v2286, %v2282
    %v2531 = vpack.c.b16 %v2287, %v2283
    %v2532 = vpack.c.b16 %v2292, %v2288
    %v2533 = vpack.c.b16 %v2293, %v2289
    %v2534 = vpack.c.b16 %v2294, %v2290
    %v2535 = vpack.c.b16 %v2295, %v2291
    %v2536 = vpack.c.b16 %v2300, %v2296
    %v2537 = vpack.c.b16 %v2301, %v2297
    %v2538 = vpack.c.b16 %v2302, %v2298
    %v2539 = vpack.c.b16 %v2303, %v2299
    %v2540 = vpack.c.b16 %v2308, %v2304
    %v2541 = vpack.c.b16 %v2309, %v2305
    %v2542 = vpack.c.b16 %v2310, %v2306
    %v2543 = vpack.c.b16 %v2311, %v2307
    %v2544 = vpack.c.b16 %v2316, %v2312
    %v2545 = vpack.c.b16 %v2317, %v2313
    %v2546 = vpack.c.b16 %v2318, %v2314
    %v2547 = vpack.c.b16 %v2319, %v2315
    %v2548 = vpack.c.b16 %v2324, %v2320
    %v2549 = vpack.c.b16 %v2325, %v2321
    %v2550 = vpack.c.b16 %v2326, %v2322
    %v2551 = vpack.c.b16 %v2327, %v2323
    %v2552 = vpack.c.b16 %v2332, %v2328
    %v2553 = vpack.c.b16 %v2333, %v2329
    %v2554 = vpack.c.b16 %v2334, %v2330
    %v2555 = vpack.c.b16 %v2335, %v2331
    %v2556 = vpack.c.b16 %v2340, %v2336
    %v2557 = vpack.c.b16 %v2341, %v2337
    %v2558 = vpack.c.b16 %v2342, %v2338
    %v2559 = vpack.c.b16 %v2343, %v2339
    %v2560 = vpack.c.b16 %v2348, %v2344
    %v2561 = vpack.c.b16 %v2349, %v2345
    %v2562 = vpack.c.b16 %v2350, %v2346
    %v2563 = vpack.c.b16 %v2351, %v2347
    %v2564 = vpack.c.b16 %v2356, %v2352
    %v2565 = vpack.c.b16 %v2357, %v2353
    %v2566 = vpack.c.b16 %v2358, %v2354
    %v2567 = vpack.c.b16 %v2359, %v2355
    %v2568 = vpack.c.b16 %v2364, %v2360
    %v2569 = vpack.c.b16 %v2365, %v2361
    %v2570 = vpack.c.b16 %v2366, %v2362
    %v2571 = vpack.c.b16 %v2367, %v2363
    %v2572 = vpack.c.b16 %v2372, %v2368
    %v2573 = vpack.c.b16 %v2373, %v2369
    %v2574 = vpack.c.b16 %v2374, %v2370
    %v2575 = vpack.c.b16 %v2375, %v2371
    %v2576 = vpack.c.b16 %v2380, %v2376
    %v2577 = vpack.c.b16 %v2381, %v2377
    %v2578 = vpack.c.b16 %v2382, %v2378
    %v2579 = vpack.c.b16 %v2383, %v2379
    %v2580 = vpack.c.b16 %v2388, %v2384
    %v2581 = vpack.c.b16 %v2389, %v2385
    %v2582 = vpack.c.b16 %v2390, %v2386
    %v2583 = vpack.c.b16 %v2391, %v2387
    %v2584 = vpack.c.b16 %v2396, %v2392
    %v2585 = vpack.c.b16 %v2397, %v2393
    %v2586 = vpack.c.b16 %v2398, %v2394
    %v2587 = vpack.c.b16 %v2399, %v2395
    %v2588 = vpack.c.b16 %v2404, %v2400
    %v2589 = vpack.c.b16 %v2405, %v2401
    %v2590 = vpack.c.b16 %v2406, %v2402
    %v2591 = vpack.c.b16 %v2407, %v2403
    %v2592 = vpack.c.b16 %v2412, %v2408
    %v2593 = vpack.c.b16 %v2413, %v2409
    %v2594 = vpack.c.b16 %v2414, %v2410
    %v2595 = vpack.c.b16 %v2415, %v2411
    %v2596 = vpack.c.b16 %v2420, %v2416
    %v2597 = vpack.c.b16 %v2421, %v2417
    %v2598 = vpack.c.b16 %v2422, %v2418
    %v2599 = vpack.c.b16 %v2423, %v2419
    %v2600 = vpack.c.b16 %v2428, %v2424
    %v2601 = vpack.c.b16 %v2429, %v2425
    %v2602 = vpack.c.b16 %v2430, %v2426
    %v2603 = vpack.c.b16 %v2431, %v2427
    %v2604 = vpack.c.b16 %v2436, %v2432
    %v2605 = vpack.c.b16 %v2437, %v2433
    %v2606 = vpack.c.b16 %v2438, %v2434
    %v2607 = vpack.c.b16 %v2439, %v2435
    %v2608 = vpack.c.b16 %v2444, %v2440
    %v2609 = vpack.c.b16 %v2445, %v2441
    %v2610 = vpack.c.b16 %v2446, %v2442
    %v2611 = vpack.c.b16 %v2447, %v2443
    %v2612 = vpack.c.b16 %v2452, %v2448
    %v2613 = vpack.c.b16 %v2453, %v2449
    %v2614 = vpack.c.b16 %v2454, %v2450
    %v2615 = vpack.c.b16 %v2455, %v2451
    %v2616 = vpack.c.b16 %v2460, %v2456
    %v2617 = vpack.c.b16 %v2461, %v2457
    %v2618 = vpack.c.b16 %v2462, %v2458
    %v2619 = vpack.c.b16 %v2463, %v2459
    %v2620 = vpack.c.b16 %v2468, %v2464
    %v2621 = vpack.c.b16 %v2469, %v2465
    %v2622 = vpack.c.b16 %v2470, %v2466
    %v2623 = vpack.c.b16 %v2471, %v2467
    %v2624 = vpack.c.b16 %v2476, %v2472
    %v2625 = vpack.c.b16 %v2477, %v2473
    %v2626 = vpack.c.b16 %v2478, %v2474
    %v2627 = vpack.c.b16 %v2479, %v2475
    %v2628 = vpack.c.b16 %v2484, %v2480
    %v2629 = vpack.c.b16 %v2485, %v2481
    %v2630 = vpack.c.b16 %v2486, %v2482
    %v2631 = vpack.c.b16 %v2487, %v2483
    %v2632 = vpack.c.b16 %v2492, %v2488
    %v2633 = vpack.c.b16 %v2493, %v2489
    %v2634 = vpack.c.b16 %v2494, %v2490
    %v2635 = vpack.c.b16 %v2495, %v2491
    %v2636 = vpack.c.b16 %v2500, %v2496
    %v2637 = vpack.c.b16 %v2501, %v2497
    %v2638 = vpack.c.b16 %v2502, %v2498
    %v2639 = vpack.c.b16 %v2503, %v2499
    %v2640 = vpack.c.b16 %v2508, %v2504
    %v2641 = vpack.c.b16 %v2509, %v2505
    %v2642 = vpack.c.b16 %v2510, %v2506
    %v2643 = vpack.c.b16 %v2511, %v2507
    %v2644 = vpack.c.b16 %v2516, %v2512
    %v2645 = vpack.c.b16 %v2517, %v2513
    %v2646 = vpack.c.b16 %v2518, %v2514
    %v2647 = vpack.c.b16 %v2519, %v2515
    %2776 = vmatprep.subr.bf16.mxu0 %v2521
    %2777 = vmatpush1.bf16.msra.mxu0 %v2520
    %2778 = vmatprep.subr.bf16.mxu0 %v2525
    %2779 = vmatpush1.bf16.msra.mxu0 %v2524
    %2780 = vmatprep.subr.bf16.mxu0 %v2529
    %2781 = vmatpush1.bf16.msra.mxu0 %v2528
    %2782 = vmatprep.subr.bf16.mxu0 %v2533
    %2783 = vmatpush1.bf16.msra.mxu0 %v2532
    %2784 = vmatprep.subr.bf16.mxu0 %v2537
    %2785 = vmatpush1.bf16.msra.mxu0 %v2536
    %2786 = vmatprep.subr.bf16.mxu0 %v2541
    %2787 = vmatpush1.bf16.msra.mxu0 %v2540
    %2788 = vmatprep.subr.bf16.mxu0 %v2545
    %2789 = vmatpush1.bf16.msra.mxu0 %v2544
    %2790 = vmatprep.subr.bf16.mxu0 %v2549
    %2791 = vmatpush1.bf16.msra.mxu0 %v2548
    %2792 = vmatprep.subr.bf16.mxu0 %v2553
    %2793 = vmatpush1.bf16.msra.mxu0 %v2552
    %2794 = vmatprep.subr.bf16.mxu0 %v2557
    %2795 = vmatpush1.bf16.msra.mxu0 %v2556
    %2796 = vmatprep.subr.bf16.mxu0 %v2561
    %2797 = vmatpush1.bf16.msra.mxu0 %v2560
    %2798 = vmatprep.subr.bf16.mxu0 %v2565
    %2799 = vmatpush1.bf16.msra.mxu0 %v2564
    %2800 = vmatprep.subr.bf16.mxu0 %v2569
    %2801 = vmatpush1.bf16.msra.mxu0 %v2568
    %2802 = vmatprep.subr.bf16.mxu0 %v2573
    %2803 = vmatpush1.bf16.msra.mxu0 %v2572
    %2804 = vmatprep.subr.bf16.mxu0 %v2577
    %2805 = vmatpush1.bf16.msra.mxu0 %v2576
    %2806 = vmatprep.subr.bf16.mxu0 %v2581
    %2807 = vmatpush1.bf16.msra.mxu0 %v2580
    %2808 = vmatprep.mubr.bf16.mxu0 %v1981
    %2809 = vmatmul.mubr.bf16.gmra.mrb[0].mxu0 %v1980
    %v2810 = vpop.f32.mrb[0].mxu0
    %v2811 = vadd.f32 %v2119, %v2810
    %v2812 = vpop.f32.mrb[0].mxu0
    %v2813 = vadd.f32 %v2123, %v2812
    %v2814 = vpop.f32.mrb[0].mxu0
    %v2815 = vpop.f32.mrb[0].mxu0
    %2816 = vdwg.mxu0
    %2817 = vmatprep.subr.bf16.mxu0 %v2585
    %2818 = vmatpush1.bf16.msra.mxu0 %v2584
    %2819 = vmatprep.subr.bf16.mxu0 %v2589
    %2820 = vmatpush1.bf16.msra.mxu0 %v2588
    %2821 = vmatprep.subr.bf16.mxu0 %v2593
    %2822 = vmatpush1.bf16.msra.mxu0 %v2592
    %2823 = vmatprep.subr.bf16.mxu0 %v2597
    %2824 = vmatpush1.bf16.msra.mxu0 %v2596
    %2825 = vmatprep.subr.bf16.mxu0 %v2601
    %2826 = vmatpush1.bf16.msra.mxu0 %v2600
    %2827 = vmatprep.subr.bf16.mxu0 %v2605
    %2828 = vmatpush1.bf16.msra.mxu0 %v2604
    %2829 = vmatprep.subr.bf16.mxu0 %v2609
    %2830 = vmatpush1.bf16.msra.mxu0 %v2608
    %2831 = vmatprep.subr.bf16.mxu0 %v2613
    %2832 = vmatpush1.bf16.msra.mxu0 %v2612
    %2833 = vmatprep.subr.bf16.mxu0 %v2617
    %2834 = vmatpush1.bf16.msra.mxu0 %v2616
    %2835 = vmatprep.subr.bf16.mxu0 %v2621
    %2836 = vmatpush1.bf16.msra.mxu0 %v2620
    %2837 = vmatprep.subr.bf16.mxu0 %v2625
    %2838 = vmatpush1.bf16.msra.mxu0 %v2624
    %2839 = vmatprep.subr.bf16.mxu0 %v2629
    %2840 = vmatpush1.bf16.msra.mxu0 %v2628
    %2841 = vmatprep.subr.bf16.mxu0 %v2633
    %2842 = vmatpush1.bf16.msra.mxu0 %v2632
    %2843 = vmatprep.subr.bf16.mxu0 %v2637
    %2844 = vmatpush1.bf16.msra.mxu0 %v2636
    %2845 = vmatprep.subr.bf16.mxu0 %v2641
    %2846 = vmatpush1.bf16.msra.mxu0 %v2640
    %2847 = vmatprep.subr.bf16.mxu0 %v2645
    %2848 = vmatpush1.bf16.msra.mxu0 %v2644
    %2849 = vmatprep.mubr.bf16.mxu0 %v1983
    %2850 = vmatmul.mubr.bf16.gmra.mrb[0].mxu0 %v1982
    %v2851 = vpop.f32.mrb[0].mxu0
    %v2852 = vadd.f32 %v2811, %v2851
    %v2853 = vpop.f32.mrb[0].mxu0
    %v2854 = vadd.f32 %v2813, %v2853
    %v2855 = vpop.f32.mrb[0].mxu0
    %v2856 = vpop.f32.mrb[0].mxu0
    %2857 = vdwg.mxu0
    %2858 = vmatprep.subr.bf16.mxu0 %v2523
    %2859 = vmatpush1.bf16.msra.mxu0 %v2522
    %2860 = vmatprep.subr.bf16.mxu0 %v2527
    %2861 = vmatpush1.bf16.msra.mxu0 %v2526
    %2862 = vmatprep.subr.bf16.mxu0 %v2531
    %2863 = vmatpush1.bf16.msra.mxu0 %v2530
    %2864 = vmatprep.subr.bf16.mxu0 %v2535
    %2865 = vmatpush1.bf16.msra.mxu0 %v2534
    %2866 = vmatprep.subr.bf16.mxu0 %v2539
    %2867 = vmatpush1.bf16.msra.mxu0 %v2538
    %2868 = vmatprep.subr.bf16.mxu0 %v2543
    %2869 = vmatpush1.bf16.msra.mxu0 %v2542
    %2870 = vmatprep.subr.bf16.mxu0 %v2547
    %2871 = vmatpush1.bf16.msra.mxu0 %v2546
    %2872 = vmatprep.subr.bf16.mxu0 %v2551
    %2873 = vmatpush1.bf16.msra.mxu0 %v2550
    %2874 = vmatprep.subr.bf16.mxu0 %v2555
    %2875 = vmatpush1.bf16.msra.mxu0 %v2554
    %2876 = vmatprep.subr.bf16.mxu0 %v2559
    %2877 = vmatpush1.bf16.msra.mxu0 %v2558
    %2878 = vmatprep.subr.bf16.mxu0 %v2563
    %2879 = vmatpush1.bf16.msra.mxu0 %v2562
    %2880 = vmatprep.subr.bf16.mxu0 %v2567
    %2881 = vmatpush1.bf16.msra.mxu0 %v2566
    %2882 = vmatprep.subr.bf16.mxu0 %v2571
    %2883 = vmatpush1.bf16.msra.mxu0 %v2570
    %2884 = vmatprep.subr.bf16.mxu0 %v2575
    %2885 = vmatpush1.bf16.msra.mxu0 %v2574
    %2886 = vmatprep.subr.bf16.mxu0 %v2579
    %2887 = vmatpush1.bf16.msra.mxu0 %v2578
    %2888 = vmatprep.subr.bf16.mxu0 %v2583
    %2889 = vmatpush1.bf16.msra.mxu0 %v2582
    %2890 = vmatprep.mubr.bf16.mxu0 %v1981
    %2891 = vmatmul.mubr.bf16.gmra.mrb[0].mxu0 %v1980
    %v2892 = vpop.f32.mrb[0].mxu0
    %v2893 = vadd.f32 %v2127, %v2892
    %v2894 = vpop.f32.mrb[0].mxu0
    %v2895 = vadd.f32 %v2131, %v2894
    %v2896 = vpop.f32.mrb[0].mxu0
    %v2897 = vpop.f32.mrb[0].mxu0
    %2898 = vdwg.mxu0
    %2899 = vmatprep.subr.bf16.mxu0 %v2587
    %2900 = vmatpush1.bf16.msra.mxu0 %v2586
    %2901 = vmatprep.subr.bf16.mxu0 %v2591
    %2902 = vmatpush1.bf16.msra.mxu0 %v2590
    %2903 = vmatprep.subr.bf16.mxu0 %v2595
    %2904 = vmatpush1.bf16.msra.mxu0 %v2594
    %2905 = vmatprep.subr.bf16.mxu0 %v2599
    %2906 = vmatpush1.bf16.msra.mxu0 %v2598
    %2907 = vmatprep.subr.bf16.mxu0 %v2603
    %2908 = vmatpush1.bf16.msra.mxu0 %v2602
    %2909 = vmatprep.subr.bf16.mxu0 %v2607
    %2910 = vmatpush1.bf16.msra.mxu0 %v2606
    %2911 = vmatprep.subr.bf16.mxu0 %v2611
    %2912 = vmatpush1.bf16.msra.mxu0 %v2610
    %2913 = vmatprep.subr.bf16.mxu0 %v2615
    %2914 = vmatpush1.bf16.msra.mxu0 %v2614
    %2915 = vmatprep.subr.bf16.mxu0 %v2619
    %2916 = vmatpush1.bf16.msra.mxu0 %v2618
    %2917 = vmatprep.subr.bf16.mxu0 %v2623
    %2918 = vmatpush1.bf16.msra.mxu0 %v2622
    %2919 = vmatprep.subr.bf16.mxu0 %v2627
    %2920 = vmatpush1.bf16.msra.mxu0 %v2626
    %2921 = vmatprep.subr.bf16.mxu0 %v2631
    %2922 = vmatpush1.bf16.msra.mxu0 %v2630
    %2923 = vmatprep.subr.bf16.mxu0 %v2635
    %2924 = vmatpush1.bf16.msra.mxu0 %v2634
    %2925 = vmatprep.subr.bf16.mxu0 %v2639
    %2926 = vmatpush1.bf16.msra.mxu0 %v2638
    %2927 = vmatprep.subr.bf16.mxu0 %v2643
    %2928 = vmatpush1.bf16.msra.mxu0 %v2642
    %2929 = vmatprep.subr.bf16.mxu0 %v2647
    %2930 = vmatpush1.bf16.msra.mxu0 %v2646
    %2931 = vmatprep.mubr.bf16.mxu0 %v1983
    %2932 = vmatmul.mubr.bf16.gmra.mrb[0].mxu0 %v1982
    %v2933 = vpop.f32.mrb[0].mxu0
    %v2934 = vadd.f32 %v2893, %v2933
    %v2935 = vpop.f32.mrb[0].mxu0
    %v2936 = vadd.f32 %v2895, %v2935
    %v2937 = vpop.f32.mrb[0].mxu0
    %v2938 = vpop.f32.mrb[0].mxu0
    %2939 = vdwg.mxu0
    %v2940 = vmax.f32 %v2852, 0.0
    %v2941 = vmax.f32 %v2854, 0.0
    %v2942 = vmax.f32 %v2934, 0.0
    %v2943 = vmax.f32 %v2936, 0.0
    %v2944 = vadd.f32 %v2940, %v1012
    %v2945 = vadd.f32 %v2941, %v1013
    %v2946 = vadd.f32 %v2942, %v1014
    %v2947 = vadd.f32 %v2943, %v1015
    %v2948 = vpack.c.bf16 %v2944, %v2944
    %v2949 = vpack.c.bf16 %v2945, %v2945
    %v2950 = vpack.c.bf16 %v2946, %v2946
    %v2951 = vpack.c.bf16 %v2947, %v2947
    %s2952 = scalar_lea.vmem [#allocation2], 3072
    %v2953 = vld [vmem:[%s2952] sm:$0xff]
    %v2954 = vld [vmem:[%s2952 + $0x8] sm:$0xff]
    %v2955 = vld [vmem:[%s2952 + $0x10] sm:$0xff]
    %v2956 = vld [vmem:[%s2952 + $0x18] sm:$0xff]
    %v2957 = vld [vmem:[%s2952 + $0x20] sm:$0xff]
    %v2958 = vld [vmem:[%s2952 + $0x28] sm:$0xff]
    %v2959 = vld [vmem:[%s2952 + $0x30] sm:$0xff]
    %v2960 = vld [vmem:[%s2952 + $0x38] sm:$0xff]
    %v2961 = vld [vmem:[%s2952 + $0x40] sm:$0xff]
    %v2962 = vld [vmem:[%s2952 + $0x48] sm:$0xff]
    %v2963 = vld [vmem:[%s2952 + $0x50] sm:$0xff]
    %v2964 = vld [vmem:[%s2952 + $0x58] sm:$0xff]
    %v2965 = vld [vmem:[%s2952 + $0x60] sm:$0xff]
    %v2966 = vld [vmem:[%s2952 + $0x68] sm:$0xff]
    %v2967 = vld [vmem:[%s2952 + $0x70] sm:$0xff]
    %v2968 = vld [vmem:[%s2952 + $0x78] sm:$0xff]
    %v2969 = vld [vmem:[%s2952 + $0x80] sm:$0xff]
    %v2970 = vld [vmem:[%s2952 + $0x88] sm:$0xff]
    %v2971 = vld [vmem:[%s2952 + $0x90] sm:$0xff]
    %v2972 = vld [vmem:[%s2952 + $0x98] sm:$0xff]
    %v2973 = vld [vmem:[%s2952 + $0xa0] sm:$0xff]
    %v2974 = vld [vmem:[%s2952 + $0xa8] sm:$0xff]
    %v2975 = vld [vmem:[%s2952 + $0xb0] sm:$0xff]
    %v2976 = vld [vmem:[%s2952 + $0xb8] sm:$0xff]
    %v2977 = vld [vmem:[%s2952 + $0xc0] sm:$0xff]
    %v2978 = vld [vmem:[%s2952 + $0xc8] sm:$0xff]
    %v2979 = vld [vmem:[%s2952 + $0xd0] sm:$0xff]
    %v2980 = vld [vmem:[%s2952 + $0xd8] sm:$0xff]
    %v2981 = vld [vmem:[%s2952 + $0xe0] sm:$0xff]
    %v2982 = vld [vmem:[%s2952 + $0xe8] sm:$0xff]
    %v2983 = vld [vmem:[%s2952 + $0xf0] sm:$0xff]
    %v2984 = vld [vmem:[%s2952 + $0xf8] sm:$0xff]
    %v2985 = vld [vmem:[%s2952 + $0x100] sm:$0xff]
    %v2986 = vld [vmem:[%s2952 + $0x108] sm:$0xff]
    %v2987 = vld [vmem:[%s2952 + $0x110] sm:$0xff]
    %v2988 = vld [vmem:[%s2952 + $0x118] sm:$0xff]
    %v2989 = vld [vmem:[%s2952 + $0x120] sm:$0xff]
    %v2990 = vld [vmem:[%s2952 + $0x128] sm:$0xff]
    %v2991 = vld [vmem:[%s2952 + $0x130] sm:$0xff]
    %v2992 = vld [vmem:[%s2952 + $0x138] sm:$0xff]
    %v2993 = vld [vmem:[%s2952 + $0x140] sm:$0xff]
    %v2994 = vld [vmem:[%s2952 + $0x148] sm:$0xff]
    %v2995 = vld [vmem:[%s2952 + $0x150] sm:$0xff]
    %v2996 = vld [vmem:[%s2952 + $0x158] sm:$0xff]
    %v2997 = vld [vmem:[%s2952 + $0x160] sm:$0xff]
    %v2998 = vld [vmem:[%s2952 + $0x168] sm:$0xff]
    %v2999 = vld [vmem:[%s2952 + $0x170] sm:$0xff]
    %v3000 = vld [vmem:[%s2952 + $0x178] sm:$0xff]
    %v3001 = vld [vmem:[%s2952 + $0x180] sm:$0xff]
    %v3002 = vld [vmem:[%s2952 + $0x188] sm:$0xff]
    %v3003 = vld [vmem:[%s2952 + $0x190] sm:$0xff]
    %v3004 = vld [vmem:[%s2952 + $0x198] sm:$0xff]
    %v3005 = vld [vmem:[%s2952 + $0x1a0] sm:$0xff]
    %v3006 = vld [vmem:[%s2952 + $0x1a8] sm:$0xff]
    %v3007 = vld [vmem:[%s2952 + $0x1b0] sm:$0xff]
    %v3008 = vld [vmem:[%s2952 + $0x1b8] sm:$0xff]
    %v3009 = vld [vmem:[%s2952 + $0x1c0] sm:$0xff]
    %v3010 = vld [vmem:[%s2952 + $0x1c8] sm:$0xff]
    %v3011 = vld [vmem:[%s2952 + $0x1d0] sm:$0xff]
    %v3012 = vld [vmem:[%s2952 + $0x1d8] sm:$0xff]
    %v3013 = vld [vmem:[%s2952 + $0x1e0] sm:$0xff]
    %v3014 = vld [vmem:[%s2952 + $0x1e8] sm:$0xff]
    %v3015 = vld [vmem:[%s2952 + $0x1f0] sm:$0xff]
    %v3016 = vld [vmem:[%s2952 + $0x1f8] sm:$0xff]
    %v3017 = vld [vmem:[%s2952 + $0x200] sm:$0xff]
    %v3018 = vld [vmem:[%s2952 + $0x208] sm:$0xff]
    %v3019 = vld [vmem:[%s2952 + $0x210] sm:$0xff]
    %v3020 = vld [vmem:[%s2952 + $0x218] sm:$0xff]
    %v3021 = vld [vmem:[%s2952 + $0x220] sm:$0xff]
    %v3022 = vld [vmem:[%s2952 + $0x228] sm:$0xff]
    %v3023 = vld [vmem:[%s2952 + $0x230] sm:$0xff]
    %v3024 = vld [vmem:[%s2952 + $0x238] sm:$0xff]
    %v3025 = vld [vmem:[%s2952 + $0x240] sm:$0xff]
    %v3026 = vld [vmem:[%s2952 + $0x248] sm:$0xff]
    %v3027 = vld [vmem:[%s2952 + $0x250] sm:$0xff]
    %v3028 = vld [vmem:[%s2952 + $0x258] sm:$0xff]
    %v3029 = vld [vmem:[%s2952 + $0x260] sm:$0xff]
    %v3030 = vld [vmem:[%s2952 + $0x268] sm:$0xff]
    %v3031 = vld [vmem:[%s2952 + $0x270] sm:$0xff]
    %v3032 = vld [vmem:[%s2952 + $0x278] sm:$0xff]
    %v3033 = vld [vmem:[%s2952 + $0x280] sm:$0xff]
    %v3034 = vld [vmem:[%s2952 + $0x288] sm:$0xff]
    %v3035 = vld [vmem:[%s2952 + $0x290] sm:$0xff]
    %v3036 = vld [vmem:[%s2952 + $0x298] sm:$0xff]
    %v3037 = vld [vmem:[%s2952 + $0x2a0] sm:$0xff]
    %v3038 = vld [vmem:[%s2952 + $0x2a8] sm:$0xff]
    %v3039 = vld [vmem:[%s2952 + $0x2b0] sm:$0xff]
    %v3040 = vld [vmem:[%s2952 + $0x2b8] sm:$0xff]
    %v3041 = vld [vmem:[%s2952 + $0x2c0] sm:$0xff]
    %v3042 = vld [vmem:[%s2952 + $0x2c8] sm:$0xff]
    %v3043 = vld [vmem:[%s2952 + $0x2d0] sm:$0xff]
    %v3044 = vld [vmem:[%s2952 + $0x2d8] sm:$0xff]
    %v3045 = vld [vmem:[%s2952 + $0x2e0] sm:$0xff]
    %v3046 = vld [vmem:[%s2952 + $0x2e8] sm:$0xff]
    %v3047 = vld [vmem:[%s2952 + $0x2f0] sm:$0xff]
    %v3048 = vld [vmem:[%s2952 + $0x2f8] sm:$0xff]
    %v3049 = vld [vmem:[%s2952 + $0x300] sm:$0xff]
    %v3050 = vld [vmem:[%s2952 + $0x308] sm:$0xff]
    %v3051 = vld [vmem:[%s2952 + $0x310] sm:$0xff]
    %v3052 = vld [vmem:[%s2952 + $0x318] sm:$0xff]
    %v3053 = vld [vmem:[%s2952 + $0x320] sm:$0xff]
    %v3054 = vld [vmem:[%s2952 + $0x328] sm:$0xff]
    %v3055 = vld [vmem:[%s2952 + $0x330] sm:$0xff]
    %v3056 = vld [vmem:[%s2952 + $0x338] sm:$0xff]
    %v3057 = vld [vmem:[%s2952 + $0x340] sm:$0xff]
    %v3058 = vld [vmem:[%s2952 + $0x348] sm:$0xff]
    %v3059 = vld [vmem:[%s2952 + $0x350] sm:$0xff]
    %v3060 = vld [vmem:[%s2952 + $0x358] sm:$0xff]
    %v3061 = vld [vmem:[%s2952 + $0x360] sm:$0xff]
    %v3062 = vld [vmem:[%s2952 + $0x368] sm:$0xff]
    %v3063 = vld [vmem:[%s2952 + $0x370] sm:$0xff]
    %v3064 = vld [vmem:[%s2952 + $0x378] sm:$0xff]
    %v3065 = vld [vmem:[%s2952 + $0x380] sm:$0xff]
    %v3066 = vld [vmem:[%s2952 + $0x388] sm:$0xff]
    %v3067 = vld [vmem:[%s2952 + $0x390] sm:$0xff]
    %v3068 = vld [vmem:[%s2952 + $0x398] sm:$0xff]
    %v3069 = vld [vmem:[%s2952 + $0x3a0] sm:$0xff]
    %v3070 = vld [vmem:[%s2952 + $0x3a8] sm:$0xff]
    %v3071 = vld [vmem:[%s2952 + $0x3b0] sm:$0xff]
    %v3072 = vld [vmem:[%s2952 + $0x3b8] sm:$0xff]
    %v3073 = vld [vmem:[%s2952 + $0x3c0] sm:$0xff]
    %v3074 = vld [vmem:[%s2952 + $0x3c8] sm:$0xff]
    %v3075 = vld [vmem:[%s2952 + $0x3d0] sm:$0xff]
    %v3076 = vld [vmem:[%s2952 + $0x3d8] sm:$0xff]
    %v3077 = vld [vmem:[%s2952 + $0x3e0] sm:$0xff]
    %v3078 = vld [vmem:[%s2952 + $0x3e8] sm:$0xff]
    %v3079 = vld [vmem:[%s2952 + $0x3f0] sm:$0xff]
    %v3080 = vld [vmem:[%s2952 + $0x3f8] sm:$0xff]
    %s3081 = scalar_lea.vmem [#allocation4], 12
    %v3082 = vld [vmem:[%s3081] sm:$0xf]
    %v3084 = vlaneseq
    %v3085 = vshrl.u32 %v3084, 7
    %v3086 = vsub.s32 0, %v3085
    %v3087 = vrot.slane %v3082, %v3086
    %v3088 = vlaneseq
    %v3089 = vshrl.u32 %v3088, 7
    %v3090 = vsub.s32 1, %v3089
    %v3091 = vrot.slane %v3082, %v3090
    %v3092 = vlaneseq
    %v3093 = vshrl.u32 %v3092, 7
    %v3094 = vsub.s32 2, %v3093
    %v3095 = vrot.slane %v3082, %v3094
    %v3096 = vlaneseq
    %v3097 = vshrl.u32 %v3096, 7
    %v3098 = vsub.s32 3, %v3097
    %v3099 = vrot.slane %v3082, %v3098
    %v3232 = vunpack.c.l.b16 %v2953
    %v3233 = vunpack.c.h.b16 %v2953
    %v3234 = vunpack.c.l.b16 %v2954
    %v3235 = vunpack.c.h.b16 %v2954
    %v3236 = vunpack.c.l.b16 %v2955
    %v3237 = vunpack.c.h.b16 %v2955
    %v3238 = vunpack.c.l.b16 %v2956
    %v3239 = vunpack.c.h.b16 %v2956
    %v3240 = vunpack.c.l.b16 %v2957
    %v3241 = vunpack.c.h.b16 %v2957
    %v3242 = vunpack.c.l.b16 %v2958
    %v3243 = vunpack.c.h.b16 %v2958
    %v3244 = vunpack.c.l.b16 %v2959
    %v3245 = vunpack.c.h.b16 %v2959
    %v3246 = vunpack.c.l.b16 %v2960
    %v3247 = vunpack.c.h.b16 %v2960
    %v3248 = vunpack.c.l.b16 %v2961
    %v3249 = vunpack.c.h.b16 %v2961
    %v3250 = vunpack.c.l.b16 %v2962
    %v3251 = vunpack.c.h.b16 %v2962
    %v3252 = vunpack.c.l.b16 %v2963
    %v3253 = vunpack.c.h.b16 %v2963
    %v3254 = vunpack.c.l.b16 %v2964
    %v3255 = vunpack.c.h.b16 %v2964
    %v3256 = vunpack.c.l.b16 %v2965
    %v3257 = vunpack.c.h.b16 %v2965
    %v3258 = vunpack.c.l.b16 %v2966
    %v3259 = vunpack.c.h.b16 %v2966
    %v3260 = vunpack.c.l.b16 %v2967
    %v3261 = vunpack.c.h.b16 %v2967
    %v3262 = vunpack.c.l.b16 %v2968
    %v3263 = vunpack.c.h.b16 %v2968
    %v3264 = vunpack.c.l.b16 %v2969
    %v3265 = vunpack.c.h.b16 %v2969
    %v3266 = vunpack.c.l.b16 %v2970
    %v3267 = vunpack.c.h.b16 %v2970
    %v3268 = vunpack.c.l.b16 %v2971
    %v3269 = vunpack.c.h.b16 %v2971
    %v3270 = vunpack.c.l.b16 %v2972
    %v3271 = vunpack.c.h.b16 %v2972
    %v3272 = vunpack.c.l.b16 %v2973
    %v3273 = vunpack.c.h.b16 %v2973
    %v3274 = vunpack.c.l.b16 %v2974
    %v3275 = vunpack.c.h.b16 %v2974
    %v3276 = vunpack.c.l.b16 %v2975
    %v3277 = vunpack.c.h.b16 %v2975
    %v3278 = vunpack.c.l.b16 %v2976
    %v3279 = vunpack.c.h.b16 %v2976
    %v3280 = vunpack.c.l.b16 %v2977
    %v3281 = vunpack.c.h.b16 %v2977
    %v3282 = vunpack.c.l.b16 %v2978
    %v3283 = vunpack.c.h.b16 %v2978
    %v3284 = vunpack.c.l.b16 %v2979
    %v3285 = vunpack.c.h.b16 %v2979
    %v3286 = vunpack.c.l.b16 %v2980
    %v3287 = vunpack.c.h.b16 %v2980
    %v3288 = vunpack.c.l.b16 %v2981
    %v3289 = vunpack.c.h.b16 %v2981
    %v3290 = vunpack.c.l.b16 %v2982
    %v3291 = vunpack.c.h.b16 %v2982
    %v3292 = vunpack.c.l.b16 %v2983
    %v3293 = vunpack.c.h.b16 %v2983
    %v3294 = vunpack.c.l.b16 %v2984
    %v3295 = vunpack.c.h.b16 %v2984
    %v3296 = vunpack.c.l.b16 %v2985
    %v3297 = vunpack.c.h.b16 %v2985
    %v3298 = vunpack.c.l.b16 %v2986
    %v3299 = vunpack.c.h.b16 %v2986
    %v3300 = vunpack.c.l.b16 %v2987
    %v3301 = vunpack.c.h.b16 %v2987
    %v3302 = vunpack.c.l.b16 %v2988
    %v3303 = vunpack.c.h.b16 %v2988
    %v3304 = vunpack.c.l.b16 %v2989
    %v3305 = vunpack.c.h.b16 %v2989
    %v3306 = vunpack.c.l.b16 %v2990
    %v3307 = vunpack.c.h.b16 %v2990
    %v3308 = vunpack.c.l.b16 %v2991
    %v3309 = vunpack.c.h.b16 %v2991
    %v3310 = vunpack.c.l.b16 %v2992
    %v3311 = vunpack.c.h.b16 %v2992
    %v3312 = vunpack.c.l.b16 %v2993
    %v3313 = vunpack.c.h.b16 %v2993
    %v3314 = vunpack.c.l.b16 %v2994
    %v3315 = vunpack.c.h.b16 %v2994
    %v3316 = vunpack.c.l.b16 %v2995
    %v3317 = vunpack.c.h.b16 %v2995
    %v3318 = vunpack.c.l.b16 %v2996
    %v3319 = vunpack.c.h.b16 %v2996
    %v3320 = vunpack.c.l.b16 %v2997
    %v3321 = vunpack.c.h.b16 %v2997
    %v3322 = vunpack.c.l.b16 %v2998
    %v3323 = vunpack.c.h.b16 %v2998
    %v3324 = vunpack.c.l.b16 %v2999
    %v3325 = vunpack.c.h.b16 %v2999
    %v3326 = vunpack.c.l.b16 %v3000
    %v3327 = vunpack.c.h.b16 %v3000
    %v3328 = vunpack.c.l.b16 %v3001
    %v3329 = vunpack.c.h.b16 %v3001
    %v3330 = vunpack.c.l.b16 %v3002
    %v3331 = vunpack.c.h.b16 %v3002
    %v3332 = vunpack.c.l.b16 %v3003
    %v3333 = vunpack.c.h.b16 %v3003
    %v3334 = vunpack.c.l.b16 %v3004
    %v3335 = vunpack.c.h.b16 %v3004
    %v3336 = vunpack.c.l.b16 %v3005
    %v3337 = vunpack.c.h.b16 %v3005
    %v3338 = vunpack.c.l.b16 %v3006
    %v3339 = vunpack.c.h.b16 %v3006
    %v3340 = vunpack.c.l.b16 %v3007
    %v3341 = vunpack.c.h.b16 %v3007
    %v3342 = vunpack.c.l.b16 %v3008
    %v3343 = vunpack.c.h.b16 %v3008
    %v3344 = vunpack.c.l.b16 %v3009
    %v3345 = vunpack.c.h.b16 %v3009
    %v3346 = vunpack.c.l.b16 %v3010
    %v3347 = vunpack.c.h.b16 %v3010
    %v3348 = vunpack.c.l.b16 %v3011
    %v3349 = vunpack.c.h.b16 %v3011
    %v3350 = vunpack.c.l.b16 %v3012
    %v3351 = vunpack.c.h.b16 %v3012
    %v3352 = vunpack.c.l.b16 %v3013
    %v3353 = vunpack.c.h.b16 %v3013
    %v3354 = vunpack.c.l.b16 %v3014
    %v3355 = vunpack.c.h.b16 %v3014
    %v3356 = vunpack.c.l.b16 %v3015
    %v3357 = vunpack.c.h.b16 %v3015
    %v3358 = vunpack.c.l.b16 %v3016
    %v3359 = vunpack.c.h.b16 %v3016
    %v3360 = vunpack.c.l.b16 %v3017
    %v3361 = vunpack.c.h.b16 %v3017
    %v3362 = vunpack.c.l.b16 %v3018
    %v3363 = vunpack.c.h.b16 %v3018
    %v3364 = vunpack.c.l.b16 %v3019
    %v3365 = vunpack.c.h.b16 %v3019
    %v3366 = vunpack.c.l.b16 %v3020
    %v3367 = vunpack.c.h.b16 %v3020
    %v3368 = vunpack.c.l.b16 %v3021
    %v3369 = vunpack.c.h.b16 %v3021
    %v3370 = vunpack.c.l.b16 %v3022
    %v3371 = vunpack.c.h.b16 %v3022
    %v3372 = vunpack.c.l.b16 %v3023
    %v3373 = vunpack.c.h.b16 %v3023
    %v3374 = vunpack.c.l.b16 %v3024
    %v3375 = vunpack.c.h.b16 %v3024
    %v3376 = vunpack.c.l.b16 %v3025
    %v3377 = vunpack.c.h.b16 %v3025
    %v3378 = vunpack.c.l.b16 %v3026
    %v3379 = vunpack.c.h.b16 %v3026
    %v3380 = vunpack.c.l.b16 %v3027
    %v3381 = vunpack.c.h.b16 %v3027
    %v3382 = vunpack.c.l.b16 %v3028
    %v3383 = vunpack.c.h.b16 %v3028
    %v3384 = vunpack.c.l.b16 %v3029
    %v3385 = vunpack.c.h.b16 %v3029
    %v3386 = vunpack.c.l.b16 %v3030
    %v3387 = vunpack.c.h.b16 %v3030
    %v3388 = vunpack.c.l.b16 %v3031
    %v3389 = vunpack.c.h.b16 %v3031
    %v3390 = vunpack.c.l.b16 %v3032
    %v3391 = vunpack.c.h.b16 %v3032
    %v3392 = vunpack.c.l.b16 %v3033
    %v3393 = vunpack.c.h.b16 %v3033
    %v3394 = vunpack.c.l.b16 %v3034
    %v3395 = vunpack.c.h.b16 %v3034
    %v3396 = vunpack.c.l.b16 %v3035
    %v3397 = vunpack.c.h.b16 %v3035
    %v3398 = vunpack.c.l.b16 %v3036
    %v3399 = vunpack.c.h.b16 %v3036
    %v3400 = vunpack.c.l.b16 %v3037
    %v3401 = vunpack.c.h.b16 %v3037
    %v3402 = vunpack.c.l.b16 %v3038
    %v3403 = vunpack.c.h.b16 %v3038
    %v3404 = vunpack.c.l.b16 %v3039
    %v3405 = vunpack.c.h.b16 %v3039
    %v3406 = vunpack.c.l.b16 %v3040
    %v3407 = vunpack.c.h.b16 %v3040
    %v3408 = vunpack.c.l.b16 %v3041
    %v3409 = vunpack.c.h.b16 %v3041
    %v3410 = vunpack.c.l.b16 %v3042
    %v3411 = vunpack.c.h.b16 %v3042
    %v3412 = vunpack.c.l.b16 %v3043
    %v3413 = vunpack.c.h.b16 %v3043
    %v3414 = vunpack.c.l.b16 %v3044
    %v3415 = vunpack.c.h.b16 %v3044
    %v3416 = vunpack.c.l.b16 %v3045
    %v3417 = vunpack.c.h.b16 %v3045
    %v3418 = vunpack.c.l.b16 %v3046
    %v3419 = vunpack.c.h.b16 %v3046
    %v3420 = vunpack.c.l.b16 %v3047
    %v3421 = vunpack.c.h.b16 %v3047
    %v3422 = vunpack.c.l.b16 %v3048
    %v3423 = vunpack.c.h.b16 %v3048
    %v3424 = vunpack.c.l.b16 %v3049
    %v3425 = vunpack.c.h.b16 %v3049
    %v3426 = vunpack.c.l.b16 %v3050
    %v3427 = vunpack.c.h.b16 %v3050
    %v3428 = vunpack.c.l.b16 %v3051
    %v3429 = vunpack.c.h.b16 %v3051
    %v3430 = vunpack.c.l.b16 %v3052
    %v3431 = vunpack.c.h.b16 %v3052
    %v3432 = vunpack.c.l.b16 %v3053
    %v3433 = vunpack.c.h.b16 %v3053
    %v3434 = vunpack.c.l.b16 %v3054
    %v3435 = vunpack.c.h.b16 %v3054
    %v3436 = vunpack.c.l.b16 %v3055
    %v3437 = vunpack.c.h.b16 %v3055
    %v3438 = vunpack.c.l.b16 %v3056
    %v3439 = vunpack.c.h.b16 %v3056
    %v3440 = vunpack.c.l.b16 %v3057
    %v3441 = vunpack.c.h.b16 %v3057
    %v3442 = vunpack.c.l.b16 %v3058
    %v3443 = vunpack.c.h.b16 %v3058
    %v3444 = vunpack.c.l.b16 %v3059
    %v3445 = vunpack.c.h.b16 %v3059
    %v3446 = vunpack.c.l.b16 %v3060
    %v3447 = vunpack.c.h.b16 %v3060
    %v3448 = vunpack.c.l.b16 %v3061
    %v3449 = vunpack.c.h.b16 %v3061
    %v3450 = vunpack.c.l.b16 %v3062
    %v3451 = vunpack.c.h.b16 %v3062
    %v3452 = vunpack.c.l.b16 %v3063
    %v3453 = vunpack.c.h.b16 %v3063
    %v3454 = vunpack.c.l.b16 %v3064
    %v3455 = vunpack.c.h.b16 %v3064
    %v3456 = vunpack.c.l.b16 %v3065
    %v3457 = vunpack.c.h.b16 %v3065
    %v3458 = vunpack.c.l.b16 %v3066
    %v3459 = vunpack.c.h.b16 %v3066
    %v3460 = vunpack.c.l.b16 %v3067
    %v3461 = vunpack.c.h.b16 %v3067
    %v3462 = vunpack.c.l.b16 %v3068
    %v3463 = vunpack.c.h.b16 %v3068
    %v3464 = vunpack.c.l.b16 %v3069
    %v3465 = vunpack.c.h.b16 %v3069
    %v3466 = vunpack.c.l.b16 %v3070
    %v3467 = vunpack.c.h.b16 %v3070
    %v3468 = vunpack.c.l.b16 %v3071
    %v3469 = vunpack.c.h.b16 %v3071
    %v3470 = vunpack.c.l.b16 %v3072
    %v3471 = vunpack.c.h.b16 %v3072
    %v3472 = vunpack.c.l.b16 %v3073
    %v3473 = vunpack.c.h.b16 %v3073
    %v3474 = vunpack.c.l.b16 %v3074
    %v3475 = vunpack.c.h.b16 %v3074
    %v3476 = vunpack.c.l.b16 %v3075
    %v3477 = vunpack.c.h.b16 %v3075
    %v3478 = vunpack.c.l.b16 %v3076
    %v3479 = vunpack.c.h.b16 %v3076
    %v3480 = vunpack.c.l.b16 %v3077
    %v3481 = vunpack.c.h.b16 %v3077
    %v3482 = vunpack.c.l.b16 %v3078
    %v3483 = vunpack.c.h.b16 %v3078
    %v3484 = vunpack.c.l.b16 %v3079
    %v3485 = vunpack.c.h.b16 %v3079
    %v3486 = vunpack.c.l.b16 %v3080
    %v3487 = vunpack.c.h.b16 %v3080
    %v3488 = vpack.c.b16 %v3236, %v3232
    %v3489 = vpack.c.b16 %v3237, %v3233
    %v3490 = vpack.c.b16 %v3238, %v3234
    %v3491 = vpack.c.b16 %v3239, %v3235
    %v3492 = vpack.c.b16 %v3244, %v3240
    %v3493 = vpack.c.b16 %v3245, %v3241
    %v3494 = vpack.c.b16 %v3246, %v3242
    %v3495 = vpack.c.b16 %v3247, %v3243
    %v3496 = vpack.c.b16 %v3252, %v3248
    %v3497 = vpack.c.b16 %v3253, %v3249
    %v3498 = vpack.c.b16 %v3254, %v3250
    %v3499 = vpack.c.b16 %v3255, %v3251
    %v3500 = vpack.c.b16 %v3260, %v3256
    %v3501 = vpack.c.b16 %v3261, %v3257
    %v3502 = vpack.c.b16 %v3262, %v3258
    %v3503 = vpack.c.b16 %v3263, %v3259
    %v3504 = vpack.c.b16 %v3268, %v3264
    %v3505 = vpack.c.b16 %v3269, %v3265
    %v3506 = vpack.c.b16 %v3270, %v3266
    %v3507 = vpack.c.b16 %v3271, %v3267
    %v3508 = vpack.c.b16 %v3276, %v3272
    %v3509 = vpack.c.b16 %v3277, %v3273
    %v3510 = vpack.c.b16 %v3278, %v3274
    %v3511 = vpack.c.b16 %v3279, %v3275
    %v3512 = vpack.c.b16 %v3284, %v3280
    %v3513 = vpack.c.b16 %v3285, %v3281
    %v3514 = vpack.c.b16 %v3286, %v3282
    %v3515 = vpack.c.b16 %v3287, %v3283
    %v3516 = vpack.c.b16 %v3292, %v3288
    %v3517 = vpack.c.b16 %v3293, %v3289
    %v3518 = vpack.c.b16 %v3294, %v3290
    %v3519 = vpack.c.b16 %v3295, %v3291
    %v3520 = vpack.c.b16 %v3300, %v3296
    %v3521 = vpack.c.b16 %v3301, %v3297
    %v3522 = vpack.c.b16 %v3302, %v3298
    %v3523 = vpack.c.b16 %v3303, %v3299
    %v3524 = vpack.c.b16 %v3308, %v3304
    %v3525 = vpack.c.b16 %v3309, %v3305
    %v3526 = vpack.c.b16 %v3310, %v3306
    %v3527 = vpack.c.b16 %v3311, %v3307
    %v3528 = vpack.c.b16 %v3316, %v3312
    %v3529 = vpack.c.b16 %v3317, %v3313
    %v3530 = vpack.c.b16 %v3318, %v3314
    %v3531 = vpack.c.b16 %v3319, %v3315
    %v3532 = vpack.c.b16 %v3324, %v3320
    %v3533 = vpack.c.b16 %v3325, %v3321
    %v3534 = vpack.c.b16 %v3326, %v3322
    %v3535 = vpack.c.b16 %v3327, %v3323
    %v3536 = vpack.c.b16 %v3332, %v3328
    %v3537 = vpack.c.b16 %v3333, %v3329
    %v3538 = vpack.c.b16 %v3334, %v3330
    %v3539 = vpack.c.b16 %v3335, %v3331
    %v3540 = vpack.c.b16 %v3340, %v3336
    %v3541 = vpack.c.b16 %v3341, %v3337
    %v3542 = vpack.c.b16 %v3342, %v3338
    %v3543 = vpack.c.b16 %v3343, %v3339
    %v3544 = vpack.c.b16 %v3348, %v3344
    %v3545 = vpack.c.b16 %v3349, %v3345
    %v3546 = vpack.c.b16 %v3350, %v3346
    %v3547 = vpack.c.b16 %v3351, %v3347
    %v3548 = vpack.c.b16 %v3356, %v3352
    %v3549 = vpack.c.b16 %v3357, %v3353
    %v3550 = vpack.c.b16 %v3358, %v3354
    %v3551 = vpack.c.b16 %v3359, %v3355
    %v3552 = vpack.c.b16 %v3364, %v3360
    %v3553 = vpack.c.b16 %v3365, %v3361
    %v3554 = vpack.c.b16 %v3366, %v3362
    %v3555 = vpack.c.b16 %v3367, %v3363
    %v3556 = vpack.c.b16 %v3372, %v3368
    %v3557 = vpack.c.b16 %v3373, %v3369
    %v3558 = vpack.c.b16 %v3374, %v3370
    %v3559 = vpack.c.b16 %v3375, %v3371
    %v3560 = vpack.c.b16 %v3380, %v3376
    %v3561 = vpack.c.b16 %v3381, %v3377
    %v3562 = vpack.c.b16 %v3382, %v3378
    %v3563 = vpack.c.b16 %v3383, %v3379
    %v3564 = vpack.c.b16 %v3388, %v3384
    %v3565 = vpack.c.b16 %v3389, %v3385
    %v3566 = vpack.c.b16 %v3390, %v3386
    %v3567 = vpack.c.b16 %v3391, %v3387
    %v3568 = vpack.c.b16 %v3396, %v3392
    %v3569 = vpack.c.b16 %v3397, %v3393
    %v3570 = vpack.c.b16 %v3398, %v3394
    %v3571 = vpack.c.b16 %v3399, %v3395
    %v3572 = vpack.c.b16 %v3404, %v3400
    %v3573 = vpack.c.b16 %v3405, %v3401
    %v3574 = vpack.c.b16 %v3406, %v3402
    %v3575 = vpack.c.b16 %v3407, %v3403
    %v3576 = vpack.c.b16 %v3412, %v3408
    %v3577 = vpack.c.b16 %v3413, %v3409
    %v3578 = vpack.c.b16 %v3414, %v3410
    %v3579 = vpack.c.b16 %v3415, %v3411
    %v3580 = vpack.c.b16 %v3420, %v3416
    %v3581 = vpack.c.b16 %v3421, %v3417
    %v3582 = vpack.c.b16 %v3422, %v3418
    %v3583 = vpack.c.b16 %v3423, %v3419
    %v3584 = vpack.c.b16 %v3428, %v3424
    %v3585 = vpack.c.b16 %v3429, %v3425
    %v3586 = vpack.c.b16 %v3430, %v3426
    %v3587 = vpack.c.b16 %v3431, %v3427
    %v3588 = vpack.c.b16 %v3436, %v3432
    %v3589 = vpack.c.b16 %v3437, %v3433
    %v3590 = vpack.c.b16 %v3438, %v3434
    %v3591 = vpack.c.b16 %v3439, %v3435
    %v3592 = vpack.c.b16 %v3444, %v3440
    %v3593 = vpack.c.b16 %v3445, %v3441
    %v3594 = vpack.c.b16 %v3446, %v3442
    %v3595 = vpack.c.b16 %v3447, %v3443
    %v3596 = vpack.c.b16 %v3452, %v3448
    %v3597 = vpack.c.b16 %v3453, %v3449
    %v3598 = vpack.c.b16 %v3454, %v3450
    %v3599 = vpack.c.b16 %v3455, %v3451
    %v3600 = vpack.c.b16 %v3460, %v3456
    %v3601 = vpack.c.b16 %v3461, %v3457
    %v3602 = vpack.c.b16 %v3462, %v3458
    %v3603 = vpack.c.b16 %v3463, %v3459
    %v3604 = vpack.c.b16 %v3468, %v3464
    %v3605 = vpack.c.b16 %v3469, %v3465
    %v3606 = vpack.c.b16 %v3470, %v3466
    %v3607 = vpack.c.b16 %v3471, %v3467
    %v3608 = vpack.c.b16 %v3476, %v3472
    %v3609 = vpack.c.b16 %v3477, %v3473
    %v3610 = vpack.c.b16 %v3478, %v3474
    %v3611 = vpack.c.b16 %v3479, %v3475
    %v3612 = vpack.c.b16 %v3484, %v3480
    %v3613 = vpack.c.b16 %v3485, %v3481
    %v3614 = vpack.c.b16 %v3486, %v3482
    %v3615 = vpack.c.b16 %v3487, %v3483
    %3744 = vmatprep.subr.bf16.mxu0 %v3489
    %3745 = vmatpush1.bf16.msra.mxu0 %v3488
    %3746 = vmatprep.subr.bf16.mxu0 %v3493
    %3747 = vmatpush1.bf16.msra.mxu0 %v3492
    %3748 = vmatprep.subr.bf16.mxu0 %v3497
    %3749 = vmatpush1.bf16.msra.mxu0 %v3496
    %3750 = vmatprep.subr.bf16.mxu0 %v3501
    %3751 = vmatpush1.bf16.msra.mxu0 %v3500
    %3752 = vmatprep.subr.bf16.mxu0 %v3505
    %3753 = vmatpush1.bf16.msra.mxu0 %v3504
    %3754 = vmatprep.subr.bf16.mxu0 %v3509
    %3755 = vmatpush1.bf16.msra.mxu0 %v3508
    %3756 = vmatprep.subr.bf16.mxu0 %v3513
    %3757 = vmatpush1.bf16.msra.mxu0 %v3512
    %3758 = vmatprep.subr.bf16.mxu0 %v3517
    %3759 = vmatpush1.bf16.msra.mxu0 %v3516
    %3760 = vmatprep.subr.bf16.mxu0 %v3521
    %3761 = vmatpush1.bf16.msra.mxu0 %v3520
    %3762 = vmatprep.subr.bf16.mxu0 %v3525
    %3763 = vmatpush1.bf16.msra.mxu0 %v3524
    %3764 = vmatprep.subr.bf16.mxu0 %v3529
    %3765 = vmatpush1.bf16.msra.mxu0 %v3528
    %3766 = vmatprep.subr.bf16.mxu0 %v3533
    %3767 = vmatpush1.bf16.msra.mxu0 %v3532
    %3768 = vmatprep.subr.bf16.mxu0 %v3537
    %3769 = vmatpush1.bf16.msra.mxu0 %v3536
    %3770 = vmatprep.subr.bf16.mxu0 %v3541
    %3771 = vmatpush1.bf16.msra.mxu0 %v3540
    %3772 = vmatprep.subr.bf16.mxu0 %v3545
    %3773 = vmatpush1.bf16.msra.mxu0 %v3544
    %3774 = vmatprep.subr.bf16.mxu0 %v3549
    %3775 = vmatpush1.bf16.msra.mxu0 %v3548
    %3776 = vmatprep.mubr.bf16.mxu0 %v2949
    %3777 = vmatmul.mubr.bf16.gmra.mrb[0].mxu0 %v2948
    %v3778 = vpop.f32.mrb[0].mxu0
    %v3779 = vadd.f32 %v3087, %v3778
    %v3780 = vpop.f32.mrb[0].mxu0
    %v3781 = vadd.f32 %v3091, %v3780
    %v3782 = vpop.f32.mrb[0].mxu0
    %v3783 = vpop.f32.mrb[0].mxu0
    %3784 = vdwg.mxu0
    %3785 = vmatprep.subr.bf16.mxu0 %v3553
    %3786 = vmatpush1.bf16.msra.mxu0 %v3552
    %3787 = vmatprep.subr.bf16.mxu0 %v3557
    %3788 = vmatpush1.bf16.msra.mxu0 %v3556
    %3789 = vmatprep.subr.bf16.mxu0 %v3561
    %3790 = vmatpush1.bf16.msra.mxu0 %v3560
    %3791 = vmatprep.subr.bf16.mxu0 %v3565
    %3792 = vmatpush1.bf16.msra.mxu0 %v3564
    %3793 = vmatprep.subr.bf16.mxu0 %v3569
    %3794 = vmatpush1.bf16.msra.mxu0 %v3568
    %3795 = vmatprep.subr.bf16.mxu0 %v3573
    %3796 = vmatpush1.bf16.msra.mxu0 %v3572
    %3797 = vmatprep.subr.bf16.mxu0 %v3577
    %3798 = vmatpush1.bf16.msra.mxu0 %v3576
    %3799 = vmatprep.subr.bf16.mxu0 %v3581
    %3800 = vmatpush1.bf16.msra.mxu0 %v3580
    %3801 = vmatprep.subr.bf16.mxu0 %v3585
    %3802 = vmatpush1.bf16.msra.mxu0 %v3584
    %3803 = vmatprep.subr.bf16.mxu0 %v3589
    %3804 = vmatpush1.bf16.msra.mxu0 %v3588
    %3805 = vmatprep.subr.bf16.mxu0 %v3593
    %3806 = vmatpush1.bf16.msra.mxu0 %v3592
    %3807 = vmatprep.subr.bf16.mxu0 %v3597
    %3808 = vmatpush1.bf16.msra.mxu0 %v3596
    %3809 = vmatprep.subr.bf16.mxu0 %v3601
    %3810 = vmatpush1.bf16.msra.mxu0 %v3600
    %3811 = vmatprep.subr.bf16.mxu0 %v3605
    %3812 = vmatpush1.bf16.msra.mxu0 %v3604
    %3813 = vmatprep.subr.bf16.mxu0 %v3609
    %3814 = vmatpush1.bf16.msra.mxu0 %v3608
    %3815 = vmatprep.subr.bf16.mxu0 %v3613
    %3816 = vmatpush1.bf16.msra.mxu0 %v3612
    %3817 = vmatprep.mubr.bf16.mxu0 %v2951
    %3818 = vmatmul.mubr.bf16.gmra.mrb[0].mxu0 %v2950
    %v3819 = vpop.f32.mrb[0].mxu0
    %v3820 = vadd.f32 %v3779, %v3819
    %v3821 = vpop.f32.mrb[0].mxu0
    %v3822 = vadd.f32 %v3781, %v3821
    %v3823 = vpop.f32.mrb[0].mxu0
    %v3824 = vpop.f32.mrb[0].mxu0
    %3825 = vdwg.mxu0
    %3826 = vmatprep.subr.bf16.mxu0 %v3491
    %3827 = vmatpush1.bf16.msra.mxu0 %v3490
    %3828 = vmatprep.subr.bf16.mxu0 %v3495
    %3829 = vmatpush1.bf16.msra.mxu0 %v3494
    %3830 = vmatprep.subr.bf16.mxu0 %v3499
    %3831 = vmatpush1.bf16.msra.mxu0 %v3498
    %3832 = vmatprep.subr.bf16.mxu0 %v3503
    %3833 = vmatpush1.bf16.msra.mxu0 %v3502
    %3834 = vmatprep.subr.bf16.mxu0 %v3507
    %3835 = vmatpush1.bf16.msra.mxu0 %v3506
    %3836 = vmatprep.subr.bf16.mxu0 %v3511
    %3837 = vmatpush1.bf16.msra.mxu0 %v3510
    %3838 = vmatprep.subr.bf16.mxu0 %v3515
    %3839 = vmatpush1.bf16.msra.mxu0 %v3514
    %3840 = vmatprep.subr.bf16.mxu0 %v3519
    %3841 = vmatpush1.bf16.msra.mxu0 %v3518
    %3842 = vmatprep.subr.bf16.mxu0 %v3523
    %3843 = vmatpush1.bf16.msra.mxu0 %v3522
    %3844 = vmatprep.subr.bf16.mxu0 %v3527
    %3845 = vmatpush1.bf16.msra.mxu0 %v3526
    %3846 = vmatprep.subr.bf16.mxu0 %v3531
    %3847 = vmatpush1.bf16.msra.mxu0 %v3530
    %3848 = vmatprep.subr.bf16.mxu0 %v3535
    %3849 = vmatpush1.bf16.msra.mxu0 %v3534
    %3850 = vmatprep.subr.bf16.mxu0 %v3539
    %3851 = vmatpush1.bf16.msra.mxu0 %v3538
    %3852 = vmatprep.subr.bf16.mxu0 %v3543
    %3853 = vmatpush1.bf16.msra.mxu0 %v3542
    %3854 = vmatprep.subr.bf16.mxu0 %v3547
    %3855 = vmatpush1.bf16.msra.mxu0 %v3546
    %3856 = vmatprep.subr.bf16.mxu0 %v3551
    %3857 = vmatpush1.bf16.msra.mxu0 %v3550
    %3858 = vmatprep.mubr.bf16.mxu0 %v2949
    %3859 = vmatmul.mubr.bf16.gmra.mrb[0].mxu0 %v2948
    %v3860 = vpop.f32.mrb[0].mxu0
    %v3861 = vadd.f32 %v3095, %v3860
    %v3862 = vpop.f32.mrb[0].mxu0
    %v3863 = vadd.f32 %v3099, %v3862
    %v3864 = vpop.f32.mrb[0].mxu0
    %v3865 = vpop.f32.mrb[0].mxu0
    %3866 = vdwg.mxu0
    %3867 = vmatprep.subr.bf16.mxu0 %v3555
    %3868 = vmatpush1.bf16.msra.mxu0 %v3554
    %3869 = vmatprep.subr.bf16.mxu0 %v3559
    %3870 = vmatpush1.bf16.msra.mxu0 %v3558
    %3871 = vmatprep.subr.bf16.mxu0 %v3563
    %3872 = vmatpush1.bf16.msra.mxu0 %v3562
    %3873 = vmatprep.subr.bf16.mxu0 %v3567
    %3874 = vmatpush1.bf16.msra.mxu0 %v3566
    %3875 = vmatprep.subr.bf16.mxu0 %v3571
    %3876 = vmatpush1.bf16.msra.mxu0 %v3570
    %3877 = vmatprep.subr.bf16.mxu0 %v3575
    %3878 = vmatpush1.bf16.msra.mxu0 %v3574
    %3879 = vmatprep.subr.bf16.mxu0 %v3579
    %3880 = vmatpush1.bf16.msra.mxu0 %v3578
    %3881 = vmatprep.subr.bf16.mxu0 %v3583
    %3882 = vmatpush1.bf16.msra.mxu0 %v3582
    %3883 = vmatprep.subr.bf16.mxu0 %v3587
    %3884 = vmatpush1.bf16.msra.mxu0 %v3586
    %3885 = vmatprep.subr.bf16.mxu0 %v3591
    %3886 = vmatpush1.bf16.msra.mxu0 %v3590
    %3887 = vmatprep.subr.bf16.mxu0 %v3595
    %3888 = vmatpush1.bf16.msra.mxu0 %v3594
    %3889 = vmatprep.subr.bf16.mxu0 %v3599
    %3890 = vmatpush1.bf16.msra.mxu0 %v3598
    %3891 = vmatprep.subr.bf16.mxu0 %v3603
    %3892 = vmatpush1.bf16.msra.mxu0 %v3602
    %3893 = vmatprep.subr.bf16.mxu0 %v3607
    %3894 = vmatpush1.bf16.msra.mxu0 %v3606
    %3895 = vmatprep.subr.bf16.mxu0 %v3611
    %3896 = vmatpush1.bf16.msra.mxu0 %v3610
    %3897 = vmatprep.subr.bf16.mxu0 %v3615
    %3898 = vmatpush1.bf16.msra.mxu0 %v3614
    %3899 = vmatprep.mubr.bf16.mxu0 %v2951
    %3900 = vmatmul.mubr.bf16.gmra.mrb[0].mxu0 %v2950
    %v3901 = vpop.f32.mrb[0].mxu0
    %v3902 = vadd.f32 %v3861, %v3901
    %v3903 = vpop.f32.mrb[0].mxu0
    %v3904 = vadd.f32 %v3863, %v3903
    %v3905 = vpop.f32.mrb[0].mxu0
    %v3906 = vpop.f32.mrb[0].mxu0
    %3907 = vdwg.mxu0
    %v3908 = vmax.f32 %v3820, 0.0
    %v3909 = vmax.f32 %v3822, 0.0
    %v3910 = vmax.f32 %v3902, 0.0
    %v3911 = vmax.f32 %v3904, 0.0
    %v3912 = vpack.c.bf16 %v3908, %v3908
    %v3913 = vpack.c.bf16 %v3909, %v3909
    %v3914 = vpack.c.bf16 %v3910, %v3910
    %v3915 = vpack.c.bf16 %v3911, %v3911
    %s3916 = scalar_lea.vmem [#allocation2], 4096
    %v3917 = vld [vmem:[%s3916] sm:$0xff]
    %v3918 = vld [vmem:[%s3916 + $0x8] sm:$0xff]
    %v3919 = vld [vmem:[%s3916 + $0x10] sm:$0xff]
    %v3920 = vld [vmem:[%s3916 + $0x18] sm:$0xff]
    %v3921 = vld [vmem:[%s3916 + $0x20] sm:$0xff]
    %v3922 = vld [vmem:[%s3916 + $0x28] sm:$0xff]
    %v3923 = vld [vmem:[%s3916 + $0x30] sm:$0xff]
    %v3924 = vld [vmem:[%s3916 + $0x38] sm:$0xff]
    %v3925 = vld [vmem:[%s3916 + $0x40] sm:$0xff]
    %v3926 = vld [vmem:[%s3916 + $0x48] sm:$0xff]
    %v3927 = vld [vmem:[%s3916 + $0x50] sm:$0xff]
    %v3928 = vld [vmem:[%s3916 + $0x58] sm:$0xff]
    %v3929 = vld [vmem:[%s3916 + $0x60] sm:$0xff]
    %v3930 = vld [vmem:[%s3916 + $0x68] sm:$0xff]
    %v3931 = vld [vmem:[%s3916 + $0x70] sm:$0xff]
    %v3932 = vld [vmem:[%s3916 + $0x78] sm:$0xff]
    %v3933 = vld [vmem:[%s3916 + $0x80] sm:$0xff]
    %v3934 = vld [vmem:[%s3916 + $0x88] sm:$0xff]
    %v3935 = vld [vmem:[%s3916 + $0x90] sm:$0xff]
    %v3936 = vld [vmem:[%s3916 + $0x98] sm:$0xff]
    %v3937 = vld [vmem:[%s3916 + $0xa0] sm:$0xff]
    %v3938 = vld [vmem:[%s3916 + $0xa8] sm:$0xff]
    %v3939 = vld [vmem:[%s3916 + $0xb0] sm:$0xff]
    %v3940 = vld [vmem:[%s3916 + $0xb8] sm:$0xff]
    %v3941 = vld [vmem:[%s3916 + $0xc0] sm:$0xff]
    %v3942 = vld [vmem:[%s3916 + $0xc8] sm:$0xff]
    %v3943 = vld [vmem:[%s3916 + $0xd0] sm:$0xff]
    %v3944 = vld [vmem:[%s3916 + $0xd8] sm:$0xff]
    %v3945 = vld [vmem:[%s3916 + $0xe0] sm:$0xff]
    %v3946 = vld [vmem:[%s3916 + $0xe8] sm:$0xff]
    %v3947 = vld [vmem:[%s3916 + $0xf0] sm:$0xff]
    %v3948 = vld [vmem:[%s3916 + $0xf8] sm:$0xff]
    %v3949 = vld [vmem:[%s3916 + $0x100] sm:$0xff]
    %v3950 = vld [vmem:[%s3916 + $0x108] sm:$0xff]
    %v3951 = vld [vmem:[%s3916 + $0x110] sm:$0xff]
    %v3952 = vld [vmem:[%s3916 + $0x118] sm:$0xff]
    %v3953 = vld [vmem:[%s3916 + $0x120] sm:$0xff]
    %v3954 = vld [vmem:[%s3916 + $0x128] sm:$0xff]
    %v3955 = vld [vmem:[%s3916 + $0x130] sm:$0xff]
    %v3956 = vld [vmem:[%s3916 + $0x138] sm:$0xff]
    %v3957 = vld [vmem:[%s3916 + $0x140] sm:$0xff]
    %v3958 = vld [vmem:[%s3916 + $0x148] sm:$0xff]
    %v3959 = vld [vmem:[%s3916 + $0x150] sm:$0xff]
    %v3960 = vld [vmem:[%s3916 + $0x158] sm:$0xff]
    %v3961 = vld [vmem:[%s3916 + $0x160] sm:$0xff]
    %v3962 = vld [vmem:[%s3916 + $0x168] sm:$0xff]
    %v3963 = vld [vmem:[%s3916 + $0x170] sm:$0xff]
    %v3964 = vld [vmem:[%s3916 + $0x178] sm:$0xff]
    %v3965 = vld [vmem:[%s3916 + $0x180] sm:$0xff]
    %v3966 = vld [vmem:[%s3916 + $0x188] sm:$0xff]
    %v3967 = vld [vmem:[%s3916 + $0x190] sm:$0xff]
    %v3968 = vld [vmem:[%s3916 + $0x198] sm:$0xff]
    %v3969 = vld [vmem:[%s3916 + $0x1a0] sm:$0xff]
    %v3970 = vld [vmem:[%s3916 + $0x1a8] sm:$0xff]
    %v3971 = vld [vmem:[%s3916 + $0x1b0] sm:$0xff]
    %v3972 = vld [vmem:[%s3916 + $0x1b8] sm:$0xff]
    %v3973 = vld [vmem:[%s3916 + $0x1c0] sm:$0xff]
    %v3974 = vld [vmem:[%s3916 + $0x1c8] sm:$0xff]
    %v3975 = vld [vmem:[%s3916 + $0x1d0] sm:$0xff]
    %v3976 = vld [vmem:[%s3916 + $0x1d8] sm:$0xff]
    %v3977 = vld [vmem:[%s3916 + $0x1e0] sm:$0xff]
    %v3978 = vld [vmem:[%s3916 + $0x1e8] sm:$0xff]
    %v3979 = vld [vmem:[%s3916 + $0x1f0] sm:$0xff]
    %v3980 = vld [vmem:[%s3916 + $0x1f8] sm:$0xff]
    %v3981 = vld [vmem:[%s3916 + $0x200] sm:$0xff]
    %v3982 = vld [vmem:[%s3916 + $0x208] sm:$0xff]
    %v3983 = vld [vmem:[%s3916 + $0x210] sm:$0xff]
    %v3984 = vld [vmem:[%s3916 + $0x218] sm:$0xff]
    %v3985 = vld [vmem:[%s3916 + $0x220] sm:$0xff]
    %v3986 = vld [vmem:[%s3916 + $0x228] sm:$0xff]
    %v3987 = vld [vmem:[%s3916 + $0x230] sm:$0xff]
    %v3988 = vld [vmem:[%s3916 + $0x238] sm:$0xff]
    %v3989 = vld [vmem:[%s3916 + $0x240] sm:$0xff]
    %v3990 = vld [vmem:[%s3916 + $0x248] sm:$0xff]
    %v3991 = vld [vmem:[%s3916 + $0x250] sm:$0xff]
    %v3992 = vld [vmem:[%s3916 + $0x258] sm:$0xff]
    %v3993 = vld [vmem:[%s3916 + $0x260] sm:$0xff]
    %v3994 = vld [vmem:[%s3916 + $0x268] sm:$0xff]
    %v3995 = vld [vmem:[%s3916 + $0x270] sm:$0xff]
    %v3996 = vld [vmem:[%s3916 + $0x278] sm:$0xff]
    %v3997 = vld [vmem:[%s3916 + $0x280] sm:$0xff]
    %v3998 = vld [vmem:[%s3916 + $0x288] sm:$0xff]
    %v3999 = vld [vmem:[%s3916 + $0x290] sm:$0xff]
    %v4000 = vld [vmem:[%s3916 + $0x298] sm:$0xff]
    %v4001 = vld [vmem:[%s3916 + $0x2a0] sm:$0xff]
    %v4002 = vld [vmem:[%s3916 + $0x2a8] sm:$0xff]
    %v4003 = vld [vmem:[%s3916 + $0x2b0] sm:$0xff]
    %v4004 = vld [vmem:[%s3916 + $0x2b8] sm:$0xff]
    %v4005 = vld [vmem:[%s3916 + $0x2c0] sm:$0xff]
    %v4006 = vld [vmem:[%s3916 + $0x2c8] sm:$0xff]
    %v4007 = vld [vmem:[%s3916 + $0x2d0] sm:$0xff]
    %v4008 = vld [vmem:[%s3916 + $0x2d8] sm:$0xff]
    %v4009 = vld [vmem:[%s3916 + $0x2e0] sm:$0xff]
    %v4010 = vld [vmem:[%s3916 + $0x2e8] sm:$0xff]
    %v4011 = vld [vmem:[%s3916 + $0x2f0] sm:$0xff]
    %v4012 = vld [vmem:[%s3916 + $0x2f8] sm:$0xff]
    %v4013 = vld [vmem:[%s3916 + $0x300] sm:$0xff]
    %v4014 = vld [vmem:[%s3916 + $0x308] sm:$0xff]
    %v4015 = vld [vmem:[%s3916 + $0x310] sm:$0xff]
    %v4016 = vld [vmem:[%s3916 + $0x318] sm:$0xff]
    %v4017 = vld [vmem:[%s3916 + $0x320] sm:$0xff]
    %v4018 = vld [vmem:[%s3916 + $0x328] sm:$0xff]
    %v4019 = vld [vmem:[%s3916 + $0x330] sm:$0xff]
    %v4020 = vld [vmem:[%s3916 + $0x338] sm:$0xff]
    %v4021 = vld [vmem:[%s3916 + $0x340] sm:$0xff]
    %v4022 = vld [vmem:[%s3916 + $0x348] sm:$0xff]
    %v4023 = vld [vmem:[%s3916 + $0x350] sm:$0xff]
    %v4024 = vld [vmem:[%s3916 + $0x358] sm:$0xff]
    %v4025 = vld [vmem:[%s3916 + $0x360] sm:$0xff]
    %v4026 = vld [vmem:[%s3916 + $0x368] sm:$0xff]
    %v4027 = vld [vmem:[%s3916 + $0x370] sm:$0xff]
    %v4028 = vld [vmem:[%s3916 + $0x378] sm:$0xff]
    %v4029 = vld [vmem:[%s3916 + $0x380] sm:$0xff]
    %v4030 = vld [vmem:[%s3916 + $0x388] sm:$0xff]
    %v4031 = vld [vmem:[%s3916 + $0x390] sm:$0xff]
    %v4032 = vld [vmem:[%s3916 + $0x398] sm:$0xff]
    %v4033 = vld [vmem:[%s3916 + $0x3a0] sm:$0xff]
    %v4034 = vld [vmem:[%s3916 + $0x3a8] sm:$0xff]
    %v4035 = vld [vmem:[%s3916 + $0x3b0] sm:$0xff]
    %v4036 = vld [vmem:[%s3916 + $0x3b8] sm:$0xff]
    %v4037 = vld [vmem:[%s3916 + $0x3c0] sm:$0xff]
    %v4038 = vld [vmem:[%s3916 + $0x3c8] sm:$0xff]
    %v4039 = vld [vmem:[%s3916 + $0x3d0] sm:$0xff]
    %v4040 = vld [vmem:[%s3916 + $0x3d8] sm:$0xff]
    %v4041 = vld [vmem:[%s3916 + $0x3e0] sm:$0xff]
    %v4042 = vld [vmem:[%s3916 + $0x3e8] sm:$0xff]
    %v4043 = vld [vmem:[%s3916 + $0x3f0] sm:$0xff]
    %v4044 = vld [vmem:[%s3916 + $0x3f8] sm:$0xff]
    %s4045 = scalar_lea.vmem [#allocation4], 16
    %v4046 = vld [vmem:[%s4045] sm:$0xf]
    %v4048 = vlaneseq
    %v4049 = vshrl.u32 %v4048, 7
    %v4050 = vsub.s32 0, %v4049
    %v4051 = vrot.slane %v4046, %v4050
    %v4052 = vlaneseq
    %v4053 = vshrl.u32 %v4052, 7
    %v4054 = vsub.s32 1, %v4053
    %v4055 = vrot.slane %v4046, %v4054
    %v4056 = vlaneseq
    %v4057 = vshrl.u32 %v4056, 7
    %v4058 = vsub.s32 2, %v4057
    %v4059 = vrot.slane %v4046, %v4058
    %v4060 = vlaneseq
    %v4061 = vshrl.u32 %v4060, 7
    %v4062 = vsub.s32 3, %v4061
    %v4063 = vrot.slane %v4046, %v4062
    %v4196 = vunpack.c.l.b16 %v3917
    %v4197 = vunpack.c.h.b16 %v3917
    %v4198 = vunpack.c.l.b16 %v3918
    %v4199 = vunpack.c.h.b16 %v3918
    %v4200 = vunpack.c.l.b16 %v3919
    %v4201 = vunpack.c.h.b16 %v3919
    %v4202 = vunpack.c.l.b16 %v3920
    %v4203 = vunpack.c.h.b16 %v3920
    %v4204 = vunpack.c.l.b16 %v3921
    %v4205 = vunpack.c.h.b16 %v3921
    %v4206 = vunpack.c.l.b16 %v3922
    %v4207 = vunpack.c.h.b16 %v3922
    %v4208 = vunpack.c.l.b16 %v3923
    %v4209 = vunpack.c.h.b16 %v3923
    %v4210 = vunpack.c.l.b16 %v3924
    %v4211 = vunpack.c.h.b16 %v3924
    %v4212 = vunpack.c.l.b16 %v3925
    %v4213 = vunpack.c.h.b16 %v3925
    %v4214 = vunpack.c.l.b16 %v3926
    %v4215 = vunpack.c.h.b16 %v3926
    %v4216 = vunpack.c.l.b16 %v3927
    %v4217 = vunpack.c.h.b16 %v3927
    %v4218 = vunpack.c.l.b16 %v3928
    %v4219 = vunpack.c.h.b16 %v3928
    %v4220 = vunpack.c.l.b16 %v3929
    %v4221 = vunpack.c.h.b16 %v3929
    %v4222 = vunpack.c.l.b16 %v3930
    %v4223 = vunpack.c.h.b16 %v3930
    %v4224 = vunpack.c.l.b16 %v3931
    %v4225 = vunpack.c.h.b16 %v3931
    %v4226 = vunpack.c.l.b16 %v3932
    %v4227 = vunpack.c.h.b16 %v3932
    %v4228 = vunpack.c.l.b16 %v3933
    %v4229 = vunpack.c.h.b16 %v3933
    %v4230 = vunpack.c.l.b16 %v3934
    %v4231 = vunpack.c.h.b16 %v3934
    %v4232 = vunpack.c.l.b16 %v3935
    %v4233 = vunpack.c.h.b16 %v3935
    %v4234 = vunpack.c.l.b16 %v3936
    %v4235 = vunpack.c.h.b16 %v3936
    %v4236 = vunpack.c.l.b16 %v3937
    %v4237 = vunpack.c.h.b16 %v3937
    %v4238 = vunpack.c.l.b16 %v3938
    %v4239 = vunpack.c.h.b16 %v3938
    %v4240 = vunpack.c.l.b16 %v3939
    %v4241 = vunpack.c.h.b16 %v3939
    %v4242 = vunpack.c.l.b16 %v3940
    %v4243 = vunpack.c.h.b16 %v3940
    %v4244 = vunpack.c.l.b16 %v3941
    %v4245 = vunpack.c.h.b16 %v3941
    %v4246 = vunpack.c.l.b16 %v3942
    %v4247 = vunpack.c.h.b16 %v3942
    %v4248 = vunpack.c.l.b16 %v3943
    %v4249 = vunpack.c.h.b16 %v3943
    %v4250 = vunpack.c.l.b16 %v3944
    %v4251 = vunpack.c.h.b16 %v3944
    %v4252 = vunpack.c.l.b16 %v3945
    %v4253 = vunpack.c.h.b16 %v3945
    %v4254 = vunpack.c.l.b16 %v3946
    %v4255 = vunpack.c.h.b16 %v3946
    %v4256 = vunpack.c.l.b16 %v3947
    %v4257 = vunpack.c.h.b16 %v3947
    %v4258 = vunpack.c.l.b16 %v3948
    %v4259 = vunpack.c.h.b16 %v3948
    %v4260 = vunpack.c.l.b16 %v3949
    %v4261 = vunpack.c.h.b16 %v3949
    %v4262 = vunpack.c.l.b16 %v3950
    %v4263 = vunpack.c.h.b16 %v3950
    %v4264 = vunpack.c.l.b16 %v3951
    %v4265 = vunpack.c.h.b16 %v3951
    %v4266 = vunpack.c.l.b16 %v3952
    %v4267 = vunpack.c.h.b16 %v3952
    %v4268 = vunpack.c.l.b16 %v3953
    %v4269 = vunpack.c.h.b16 %v3953
    %v4270 = vunpack.c.l.b16 %v3954
    %v4271 = vunpack.c.h.b16 %v3954
    %v4272 = vunpack.c.l.b16 %v3955
    %v4273 = vunpack.c.h.b16 %v3955
    %v4274 = vunpack.c.l.b16 %v3956
    %v4275 = vunpack.c.h.b16 %v3956
    %v4276 = vunpack.c.l.b16 %v3957
    %v4277 = vunpack.c.h.b16 %v3957
    %v4278 = vunpack.c.l.b16 %v3958
    %v4279 = vunpack.c.h.b16 %v3958
    %v4280 = vunpack.c.l.b16 %v3959
    %v4281 = vunpack.c.h.b16 %v3959
    %v4282 = vunpack.c.l.b16 %v3960
    %v4283 = vunpack.c.h.b16 %v3960
    %v4284 = vunpack.c.l.b16 %v3961
    %v4285 = vunpack.c.h.b16 %v3961
    %v4286 = vunpack.c.l.b16 %v3962
    %v4287 = vunpack.c.h.b16 %v3962
    %v4288 = vunpack.c.l.b16 %v3963
    %v4289 = vunpack.c.h.b16 %v3963
    %v4290 = vunpack.c.l.b16 %v3964
    %v4291 = vunpack.c.h.b16 %v3964
    %v4292 = vunpack.c.l.b16 %v3965
    %v4293 = vunpack.c.h.b16 %v3965
    %v4294 = vunpack.c.l.b16 %v3966
    %v4295 = vunpack.c.h.b16 %v3966
    %v4296 = vunpack.c.l.b16 %v3967
    %v4297 = vunpack.c.h.b16 %v3967
    %v4298 = vunpack.c.l.b16 %v3968
    %v4299 = vunpack.c.h.b16 %v3968
    %v4300 = vunpack.c.l.b16 %v3969
    %v4301 = vunpack.c.h.b16 %v3969
    %v4302 = vunpack.c.l.b16 %v3970
    %v4303 = vunpack.c.h.b16 %v3970
    %v4304 = vunpack.c.l.b16 %v3971
    %v4305 = vunpack.c.h.b16 %v3971
    %v4306 = vunpack.c.l.b16 %v3972
    %v4307 = vunpack.c.h.b16 %v3972
    %v4308 = vunpack.c.l.b16 %v3973
    %v4309 = vunpack.c.h.b16 %v3973
    %v4310 = vunpack.c.l.b16 %v3974
    %v4311 = vunpack.c.h.b16 %v3974
    %v4312 = vunpack.c.l.b16 %v3975
    %v4313 = vunpack.c.h.b16 %v3975
    %v4314 = vunpack.c.l.b16 %v3976
    %v4315 = vunpack.c.h.b16 %v3976
    %v4316 = vunpack.c.l.b16 %v3977
    %v4317 = vunpack.c.h.b16 %v3977
    %v4318 = vunpack.c.l.b16 %v3978
    %v4319 = vunpack.c.h.b16 %v3978
    %v4320 = vunpack.c.l.b16 %v3979
    %v4321 = vunpack.c.h.b16 %v3979
    %v4322 = vunpack.c.l.b16 %v3980
    %v4323 = vunpack.c.h.b16 %v3980
    %v4324 = vunpack.c.l.b16 %v3981
    %v4325 = vunpack.c.h.b16 %v3981
    %v4326 = vunpack.c.l.b16 %v3982
    %v4327 = vunpack.c.h.b16 %v3982
    %v4328 = vunpack.c.l.b16 %v3983
    %v4329 = vunpack.c.h.b16 %v3983
    %v4330 = vunpack.c.l.b16 %v3984
    %v4331 = vunpack.c.h.b16 %v3984
    %v4332 = vunpack.c.l.b16 %v3985
    %v4333 = vunpack.c.h.b16 %v3985
    %v4334 = vunpack.c.l.b16 %v3986
    %v4335 = vunpack.c.h.b16 %v3986
    %v4336 = vunpack.c.l.b16 %v3987
    %v4337 = vunpack.c.h.b16 %v3987
    %v4338 = vunpack.c.l.b16 %v3988
    %v4339 = vunpack.c.h.b16 %v3988
    %v4340 = vunpack.c.l.b16 %v3989
    %v4341 = vunpack.c.h.b16 %v3989
    %v4342 = vunpack.c.l.b16 %v3990
    %v4343 = vunpack.c.h.b16 %v3990
    %v4344 = vunpack.c.l.b16 %v3991
    %v4345 = vunpack.c.h.b16 %v3991
    %v4346 = vunpack.c.l.b16 %v3992
    %v4347 = vunpack.c.h.b16 %v3992
    %v4348 = vunpack.c.l.b16 %v3993
    %v4349 = vunpack.c.h.b16 %v3993
    %v4350 = vunpack.c.l.b16 %v3994
    %v4351 = vunpack.c.h.b16 %v3994
    %v4352 = vunpack.c.l.b16 %v3995
    %v4353 = vunpack.c.h.b16 %v3995
    %v4354 = vunpack.c.l.b16 %v3996
    %v4355 = vunpack.c.h.b16 %v3996
    %v4356 = vunpack.c.l.b16 %v3997
    %v4357 = vunpack.c.h.b16 %v3997
    %v4358 = vunpack.c.l.b16 %v3998
    %v4359 = vunpack.c.h.b16 %v3998
    %v4360 = vunpack.c.l.b16 %v3999
    %v4361 = vunpack.c.h.b16 %v3999
    %v4362 = vunpack.c.l.b16 %v4000
    %v4363 = vunpack.c.h.b16 %v4000
    %v4364 = vunpack.c.l.b16 %v4001
    %v4365 = vunpack.c.h.b16 %v4001
    %v4366 = vunpack.c.l.b16 %v4002
    %v4367 = vunpack.c.h.b16 %v4002
    %v4368 = vunpack.c.l.b16 %v4003
    %v4369 = vunpack.c.h.b16 %v4003
    %v4370 = vunpack.c.l.b16 %v4004
    %v4371 = vunpack.c.h.b16 %v4004
    %v4372 = vunpack.c.l.b16 %v4005
    %v4373 = vunpack.c.h.b16 %v4005
    %v4374 = vunpack.c.l.b16 %v4006
    %v4375 = vunpack.c.h.b16 %v4006
    %v4376 = vunpack.c.l.b16 %v4007
    %v4377 = vunpack.c.h.b16 %v4007
    %v4378 = vunpack.c.l.b16 %v4008
    %v4379 = vunpack.c.h.b16 %v4008
    %v4380 = vunpack.c.l.b16 %v4009
    %v4381 = vunpack.c.h.b16 %v4009
    %v4382 = vunpack.c.l.b16 %v4010
    %v4383 = vunpack.c.h.b16 %v4010
    %v4384 = vunpack.c.l.b16 %v4011
    %v4385 = vunpack.c.h.b16 %v4011
    %v4386 = vunpack.c.l.b16 %v4012
    %v4387 = vunpack.c.h.b16 %v4012
    %v4388 = vunpack.c.l.b16 %v4013
    %v4389 = vunpack.c.h.b16 %v4013
    %v4390 = vunpack.c.l.b16 %v4014
    %v4391 = vunpack.c.h.b16 %v4014
    %v4392 = vunpack.c.l.b16 %v4015
    %v4393 = vunpack.c.h.b16 %v4015
    %v4394 = vunpack.c.l.b16 %v4016
    %v4395 = vunpack.c.h.b16 %v4016
    %v4396 = vunpack.c.l.b16 %v4017
    %v4397 = vunpack.c.h.b16 %v4017
    %v4398 = vunpack.c.l.b16 %v4018
    %v4399 = vunpack.c.h.b16 %v4018
    %v4400 = vunpack.c.l.b16 %v4019
    %v4401 = vunpack.c.h.b16 %v4019
    %v4402 = vunpack.c.l.b16 %v4020
    %v4403 = vunpack.c.h.b16 %v4020
    %v4404 = vunpack.c.l.b16 %v4021
    %v4405 = vunpack.c.h.b16 %v4021
    %v4406 = vunpack.c.l.b16 %v4022
    %v4407 = vunpack.c.h.b16 %v4022
    %v4408 = vunpack.c.l.b16 %v4023
    %v4409 = vunpack.c.h.b16 %v4023
    %v4410 = vunpack.c.l.b16 %v4024
    %v4411 = vunpack.c.h.b16 %v4024
    %v4412 = vunpack.c.l.b16 %v4025
    %v4413 = vunpack.c.h.b16 %v4025
    %v4414 = vunpack.c.l.b16 %v4026
    %v4415 = vunpack.c.h.b16 %v4026
    %v4416 = vunpack.c.l.b16 %v4027
    %v4417 = vunpack.c.h.b16 %v4027
    %v4418 = vunpack.c.l.b16 %v4028
    %v4419 = vunpack.c.h.b16 %v4028
    %v4420 = vunpack.c.l.b16 %v4029
    %v4421 = vunpack.c.h.b16 %v4029
    %v4422 = vunpack.c.l.b16 %v4030
    %v4423 = vunpack.c.h.b16 %v4030
    %v4424 = vunpack.c.l.b16 %v4031
    %v4425 = vunpack.c.h.b16 %v4031
    %v4426 = vunpack.c.l.b16 %v4032
    %v4427 = vunpack.c.h.b16 %v4032
    %v4428 = vunpack.c.l.b16 %v4033
    %v4429 = vunpack.c.h.b16 %v4033
    %v4430 = vunpack.c.l.b16 %v4034
    %v4431 = vunpack.c.h.b16 %v4034
    %v4432 = vunpack.c.l.b16 %v4035
    %v4433 = vunpack.c.h.b16 %v4035
    %v4434 = vunpack.c.l.b16 %v4036
    %v4435 = vunpack.c.h.b16 %v4036
    %v4436 = vunpack.c.l.b16 %v4037
    %v4437 = vunpack.c.h.b16 %v4037
    %v4438 = vunpack.c.l.b16 %v4038
    %v4439 = vunpack.c.h.b16 %v4038
    %v4440 = vunpack.c.l.b16 %v4039
    %v4441 = vunpack.c.h.b16 %v4039
    %v4442 = vunpack.c.l.b16 %v4040
    %v4443 = vunpack.c.h.b16 %v4040
    %v4444 = vunpack.c.l.b16 %v4041
    %v4445 = vunpack.c.h.b16 %v4041
    %v4446 = vunpack.c.l.b16 %v4042
    %v4447 = vunpack.c.h.b16 %v4042
    %v4448 = vunpack.c.l.b16 %v4043
    %v4449 = vunpack.c.h.b16 %v4043
    %v4450 = vunpack.c.l.b16 %v4044
    %v4451 = vunpack.c.h.b16 %v4044
    %v4452 = vpack.c.b16 %v4200, %v4196
    %v4453 = vpack.c.b16 %v4201, %v4197
    %v4454 = vpack.c.b16 %v4202, %v4198
    %v4455 = vpack.c.b16 %v4203, %v4199
    %v4456 = vpack.c.b16 %v4208, %v4204
    %v4457 = vpack.c.b16 %v4209, %v4205
    %v4458 = vpack.c.b16 %v4210, %v4206
    %v4459 = vpack.c.b16 %v4211, %v4207
    %v4460 = vpack.c.b16 %v4216, %v4212
    %v4461 = vpack.c.b16 %v4217, %v4213
    %v4462 = vpack.c.b16 %v4218, %v4214
    %v4463 = vpack.c.b16 %v4219, %v4215
    %v4464 = vpack.c.b16 %v4224, %v4220
    %v4465 = vpack.c.b16 %v4225, %v4221
    %v4466 = vpack.c.b16 %v4226, %v4222
    %v4467 = vpack.c.b16 %v4227, %v4223
    %v4468 = vpack.c.b16 %v4232, %v4228
    %v4469 = vpack.c.b16 %v4233, %v4229
    %v4470 = vpack.c.b16 %v4234, %v4230
    %v4471 = vpack.c.b16 %v4235, %v4231
    %v4472 = vpack.c.b16 %v4240, %v4236
    %v4473 = vpack.c.b16 %v4241, %v4237
    %v4474 = vpack.c.b16 %v4242, %v4238
    %v4475 = vpack.c.b16 %v4243, %v4239
    %v4476 = vpack.c.b16 %v4248, %v4244
    %v4477 = vpack.c.b16 %v4249, %v4245
    %v4478 = vpack.c.b16 %v4250, %v4246
    %v4479 = vpack.c.b16 %v4251, %v4247
    %v4480 = vpack.c.b16 %v4256, %v4252
    %v4481 = vpack.c.b16 %v4257, %v4253
    %v4482 = vpack.c.b16 %v4258, %v4254
    %v4483 = vpack.c.b16 %v4259, %v4255
    %v4484 = vpack.c.b16 %v4264, %v4260
    %v4485 = vpack.c.b16 %v4265, %v4261
    %v4486 = vpack.c.b16 %v4266, %v4262
    %v4487 = vpack.c.b16 %v4267, %v4263
    %v4488 = vpack.c.b16 %v4272, %v4268
    %v4489 = vpack.c.b16 %v4273, %v4269
    %v4490 = vpack.c.b16 %v4274, %v4270
    %v4491 = vpack.c.b16 %v4275, %v4271
    %v4492 = vpack.c.b16 %v4280, %v4276
    %v4493 = vpack.c.b16 %v4281, %v4277
    %v4494 = vpack.c.b16 %v4282, %v4278
    %v4495 = vpack.c.b16 %v4283, %v4279
    %v4496 = vpack.c.b16 %v4288, %v4284
    %v4497 = vpack.c.b16 %v4289, %v4285
    %v4498 = vpack.c.b16 %v4290, %v4286
    %v4499 = vpack.c.b16 %v4291, %v4287
    %v4500 = vpack.c.b16 %v4296, %v4292
    %v4501 = vpack.c.b16 %v4297, %v4293
    %v4502 = vpack.c.b16 %v4298, %v4294
    %v4503 = vpack.c.b16 %v4299, %v4295
    %v4504 = vpack.c.b16 %v4304, %v4300
    %v4505 = vpack.c.b16 %v4305, %v4301
    %v4506 = vpack.c.b16 %v4306, %v4302
    %v4507 = vpack.c.b16 %v4307, %v4303
    %v4508 = vpack.c.b16 %v4312, %v4308
    %v4509 = vpack.c.b16 %v4313, %v4309
    %v4510 = vpack.c.b16 %v4314, %v4310
    %v4511 = vpack.c.b16 %v4315, %v4311
    %v4512 = vpack.c.b16 %v4320, %v4316
    %v4513 = vpack.c.b16 %v4321, %v4317
    %v4514 = vpack.c.b16 %v4322, %v4318
    %v4515 = vpack.c.b16 %v4323, %v4319
    %v4516 = vpack.c.b16 %v4328, %v4324
    %v4517 = vpack.c.b16 %v4329, %v4325
    %v4518 = vpack.c.b16 %v4330, %v4326
    %v4519 = vpack.c.b16 %v4331, %v4327
    %v4520 = vpack.c.b16 %v4336, %v4332
    %v4521 = vpack.c.b16 %v4337, %v4333
    %v4522 = vpack.c.b16 %v4338, %v4334
    %v4523 = vpack.c.b16 %v4339, %v4335
    %v4524 = vpack.c.b16 %v4344, %v4340
    %v4525 = vpack.c.b16 %v4345, %v4341
    %v4526 = vpack.c.b16 %v4346, %v4342
    %v4527 = vpack.c.b16 %v4347, %v4343
    %v4528 = vpack.c.b16 %v4352, %v4348
    %v4529 = vpack.c.b16 %v4353, %v4349
    %v4530 = vpack.c.b16 %v4354, %v4350
    %v4531 = vpack.c.b16 %v4355, %v4351
    %v4532 = vpack.c.b16 %v4360, %v4356
    %v4533 = vpack.c.b16 %v4361, %v4357
    %v4534 = vpack.c.b16 %v4362, %v4358
    %v4535 = vpack.c.b16 %v4363, %v4359
    %v4536 = vpack.c.b16 %v4368, %v4364
    %v4537 = vpack.c.b16 %v4369, %v4365
    %v4538 = vpack.c.b16 %v4370, %v4366
    %v4539 = vpack.c.b16 %v4371, %v4367
    %v4540 = vpack.c.b16 %v4376, %v4372
    %v4541 = vpack.c.b16 %v4377, %v4373
    %v4542 = vpack.c.b16 %v4378, %v4374
    %v4543 = vpack.c.b16 %v4379, %v4375
    %v4544 = vpack.c.b16 %v4384, %v4380
    %v4545 = vpack.c.b16 %v4385, %v4381
    %v4546 = vpack.c.b16 %v4386, %v4382
    %v4547 = vpack.c.b16 %v4387, %v4383
    %v4548 = vpack.c.b16 %v4392, %v4388
    %v4549 = vpack.c.b16 %v4393, %v4389
    %v4550 = vpack.c.b16 %v4394, %v4390
    %v4551 = vpack.c.b16 %v4395, %v4391
    %v4552 = vpack.c.b16 %v4400, %v4396
    %v4553 = vpack.c.b16 %v4401, %v4397
    %v4554 = vpack.c.b16 %v4402, %v4398
    %v4555 = vpack.c.b16 %v4403, %v4399
    %v4556 = vpack.c.b16 %v4408, %v4404
    %v4557 = vpack.c.b16 %v4409, %v4405
    %v4558 = vpack.c.b16 %v4410, %v4406
    %v4559 = vpack.c.b16 %v4411, %v4407
    %v4560 = vpack.c.b16 %v4416, %v4412
    %v4561 = vpack.c.b16 %v4417, %v4413
    %v4562 = vpack.c.b16 %v4418, %v4414
    %v4563 = vpack.c.b16 %v4419, %v4415
    %v4564 = vpack.c.b16 %v4424, %v4420
    %v4565 = vpack.c.b16 %v4425, %v4421
    %v4566 = vpack.c.b16 %v4426, %v4422
    %v4567 = vpack.c.b16 %v4427, %v4423
    %v4568 = vpack.c.b16 %v4432, %v4428
    %v4569 = vpack.c.b16 %v4433, %v4429
    %v4570 = vpack.c.b16 %v4434, %v4430
    %v4571 = vpack.c.b16 %v4435, %v4431
    %v4572 = vpack.c.b16 %v4440, %v4436
    %v4573 = vpack.c.b16 %v4441, %v4437
    %v4574 = vpack.c.b16 %v4442, %v4438
    %v4575 = vpack.c.b16 %v4443, %v4439
    %v4576 = vpack.c.b16 %v4448, %v4444
    %v4577 = vpack.c.b16 %v4449, %v4445
    %v4578 = vpack.c.b16 %v4450, %v4446
    %v4579 = vpack.c.b16 %v4451, %v4447
    %4708 = vmatprep.subr.bf16.mxu0 %v4453
    %4709 = vmatpush1.bf16.msra.mxu0 %v4452
    %4710 = vmatprep.subr.bf16.mxu0 %v4457
    %4711 = vmatpush1.bf16.msra.mxu0 %v4456
    %4712 = vmatprep.subr.bf16.mxu0 %v4461
    %4713 = vmatpush1.bf16.msra.mxu0 %v4460
    %4714 = vmatprep.subr.bf16.mxu0 %v4465
    %4715 = vmatpush1.bf16.msra.mxu0 %v4464
    %4716 = vmatprep.subr.bf16.mxu0 %v4469
    %4717 = vmatpush1.bf16.msra.mxu0 %v4468
    %4718 = vmatprep.subr.bf16.mxu0 %v4473
    %4719 = vmatpush1.bf16.msra.mxu0 %v4472
    %4720 = vmatprep.subr.bf16.mxu0 %v4477
    %4721 = vmatpush1.bf16.msra.mxu0 %v4476
    %4722 = vmatprep.subr.bf16.mxu0 %v4481
    %4723 = vmatpush1.bf16.msra.mxu0 %v4480
    %4724 = vmatprep.subr.bf16.mxu0 %v4485
    %4725 = vmatpush1.bf16.msra.mxu0 %v4484
    %4726 = vmatprep.subr.bf16.mxu0 %v4489
    %4727 = vmatpush1.bf16.msra.mxu0 %v4488
    %4728 = vmatprep.subr.bf16.mxu0 %v4493
    %4729 = vmatpush1.bf16.msra.mxu0 %v4492
    %4730 = vmatprep.subr.bf16.mxu0 %v4497
    %4731 = vmatpush1.bf16.msra.mxu0 %v4496
    %4732 = vmatprep.subr.bf16.mxu0 %v4501
    %4733 = vmatpush1.bf16.msra.mxu0 %v4500
    %4734 = vmatprep.subr.bf16.mxu0 %v4505
    %4735 = vmatpush1.bf16.msra.mxu0 %v4504
    %4736 = vmatprep.subr.bf16.mxu0 %v4509
    %4737 = vmatpush1.bf16.msra.mxu0 %v4508
    %4738 = vmatprep.subr.bf16.mxu0 %v4513
    %4739 = vmatpush1.bf16.msra.mxu0 %v4512
    %4740 = vmatprep.mubr.bf16.mxu0 %v3913
    %4741 = vmatmul.mubr.bf16.gmra.mrb[0].mxu0 %v3912
    %v4742 = vpop.f32.mrb[0].mxu0
    %v4743 = vadd.f32 %v4051, %v4742
    %v4744 = vpop.f32.mrb[0].mxu0
    %v4745 = vadd.f32 %v4055, %v4744
    %v4746 = vpop.f32.mrb[0].mxu0
    %v4747 = vpop.f32.mrb[0].mxu0
    %4748 = vdwg.mxu0
    %4749 = vmatprep.subr.bf16.mxu0 %v4517
    %4750 = vmatpush1.bf16.msra.mxu0 %v4516
    %4751 = vmatprep.subr.bf16.mxu0 %v4521
    %4752 = vmatpush1.bf16.msra.mxu0 %v4520
    %4753 = vmatprep.subr.bf16.mxu0 %v4525
    %4754 = vmatpush1.bf16.msra.mxu0 %v4524
    %4755 = vmatprep.subr.bf16.mxu0 %v4529
    %4756 = vmatpush1.bf16.msra.mxu0 %v4528
    %4757 = vmatprep.subr.bf16.mxu0 %v4533
    %4758 = vmatpush1.bf16.msra.mxu0 %v4532
    %4759 = vmatprep.subr.bf16.mxu0 %v4537
    %4760 = vmatpush1.bf16.msra.mxu0 %v4536
    %4761 = vmatprep.subr.bf16.mxu0 %v4541
    %4762 = vmatpush1.bf16.msra.mxu0 %v4540
    %4763 = vmatprep.subr.bf16.mxu0 %v4545
    %4764 = vmatpush1.bf16.msra.mxu0 %v4544
    %4765 = vmatprep.subr.bf16.mxu0 %v4549
    %4766 = vmatpush1.bf16.msra.mxu0 %v4548
    %4767 = vmatprep.subr.bf16.mxu0 %v4553
    %4768 = vmatpush1.bf16.msra.mxu0 %v4552
    %4769 = vmatprep.subr.bf16.mxu0 %v4557
    %4770 = vmatpush1.bf16.msra.mxu0 %v4556
    %4771 = vmatprep.subr.bf16.mxu0 %v4561
    %4772 = vmatpush1.bf16.msra.mxu0 %v4560
    %4773 = vmatprep.subr.bf16.mxu0 %v4565
    %4774 = vmatpush1.bf16.msra.mxu0 %v4564
    %4775 = vmatprep.subr.bf16.mxu0 %v4569
    %4776 = vmatpush1.bf16.msra.mxu0 %v4568
    %4777 = vmatprep.subr.bf16.mxu0 %v4573
    %4778 = vmatpush1.bf16.msra.mxu0 %v4572
    %4779 = vmatprep.subr.bf16.mxu0 %v4577
    %4780 = vmatpush1.bf16.msra.mxu0 %v4576
    %4781 = vmatprep.mubr.bf16.mxu0 %v3915
    %4782 = vmatmul.mubr.bf16.gmra.mrb[0].mxu0 %v3914
    %v4783 = vpop.f32.mrb[0].mxu0
    %v4784 = vadd.f32 %v4743, %v4783
    %v4785 = vpop.f32.mrb[0].mxu0
    %v4786 = vadd.f32 %v4745, %v4785
    %v4787 = vpop.f32.mrb[0].mxu0
    %v4788 = vpop.f32.mrb[0].mxu0
    %4789 = vdwg.mxu0
    %4790 = vmatprep.subr.bf16.mxu0 %v4455
    %4791 = vmatpush1.bf16.msra.mxu0 %v4454
    %4792 = vmatprep.subr.bf16.mxu0 %v4459
    %4793 = vmatpush1.bf16.msra.mxu0 %v4458
    %4794 = vmatprep.subr.bf16.mxu0 %v4463
    %4795 = vmatpush1.bf16.msra.mxu0 %v4462
    %4796 = vmatprep.subr.bf16.mxu0 %v4467
    %4797 = vmatpush1.bf16.msra.mxu0 %v4466
    %4798 = vmatprep.subr.bf16.mxu0 %v4471
    %4799 = vmatpush1.bf16.msra.mxu0 %v4470
    %4800 = vmatprep.subr.bf16.mxu0 %v4475
    %4801 = vmatpush1.bf16.msra.mxu0 %v4474
    %4802 = vmatprep.subr.bf16.mxu0 %v4479
    %4803 = vmatpush1.bf16.msra.mxu0 %v4478
    %4804 = vmatprep.subr.bf16.mxu0 %v4483
    %4805 = vmatpush1.bf16.msra.mxu0 %v4482
    %4806 = vmatprep.subr.bf16.mxu0 %v4487
    %4807 = vmatpush1.bf16.msra.mxu0 %v4486
    %4808 = vmatprep.subr.bf16.mxu0 %v4491
    %4809 = vmatpush1.bf16.msra.mxu0 %v4490
    %4810 = vmatprep.subr.bf16.mxu0 %v4495
    %4811 = vmatpush1.bf16.msra.mxu0 %v4494
    %4812 = vmatprep.subr.bf16.mxu0 %v4499
    %4813 = vmatpush1.bf16.msra.mxu0 %v4498
    %4814 = vmatprep.subr.bf16.mxu0 %v4503
    %4815 = vmatpush1.bf16.msra.mxu0 %v4502
    %4816 = vmatprep.subr.bf16.mxu0 %v4507
    %4817 = vmatpush1.bf16.msra.mxu0 %v4506
    %4818 = vmatprep.subr.bf16.mxu0 %v4511
    %4819 = vmatpush1.bf16.msra.mxu0 %v4510
    %4820 = vmatprep.subr.bf16.mxu0 %v4515
    %4821 = vmatpush1.bf16.msra.mxu0 %v4514
    %4822 = vmatprep.mubr.bf16.mxu0 %v3913
    %4823 = vmatmul.mubr.bf16.gmra.mrb[0].mxu0 %v3912
    %v4824 = vpop.f32.mrb[0].mxu0
    %v4825 = vadd.f32 %v4059, %v4824
    %v4826 = vpop.f32.mrb[0].mxu0
    %v4827 = vadd.f32 %v4063, %v4826
    %v4828 = vpop.f32.mrb[0].mxu0
    %v4829 = vpop.f32.mrb[0].mxu0
    %4830 = vdwg.mxu0
    %4831 = vmatprep.subr.bf16.mxu0 %v4519
    %4832 = vmatpush1.bf16.msra.mxu0 %v4518
    %4833 = vmatprep.subr.bf16.mxu0 %v4523
    %4834 = vmatpush1.bf16.msra.mxu0 %v4522
    %4835 = vmatprep.subr.bf16.mxu0 %v4527
    %4836 = vmatpush1.bf16.msra.mxu0 %v4526
    %4837 = vmatprep.subr.bf16.mxu0 %v4531
    %4838 = vmatpush1.bf16.msra.mxu0 %v4530
    %4839 = vmatprep.subr.bf16.mxu0 %v4535
    %4840 = vmatpush1.bf16.msra.mxu0 %v4534
    %4841 = vmatprep.subr.bf16.mxu0 %v4539
    %4842 = vmatpush1.bf16.msra.mxu0 %v4538
    %4843 = vmatprep.subr.bf16.mxu0 %v4543
    %4844 = vmatpush1.bf16.msra.mxu0 %v4542
    %4845 = vmatprep.subr.bf16.mxu0 %v4547
    %4846 = vmatpush1.bf16.msra.mxu0 %v4546
    %4847 = vmatprep.subr.bf16.mxu0 %v4551
    %4848 = vmatpush1.bf16.msra.mxu0 %v4550
    %4849 = vmatprep.subr.bf16.mxu0 %v4555
    %4850 = vmatpush1.bf16.msra.mxu0 %v4554
    %4851 = vmatprep.subr.bf16.mxu0 %v4559
    %4852 = vmatpush1.bf16.msra.mxu0 %v4558
    %4853 = vmatprep.subr.bf16.mxu0 %v4563
    %4854 = vmatpush1.bf16.msra.mxu0 %v4562
    %4855 = vmatprep.subr.bf16.mxu0 %v4567
    %4856 = vmatpush1.bf16.msra.mxu0 %v4566
    %4857 = vmatprep.subr.bf16.mxu0 %v4571
    %4858 = vmatpush1.bf16.msra.mxu0 %v4570
    %4859 = vmatprep.subr.bf16.mxu0 %v4575
    %4860 = vmatpush1.bf16.msra.mxu0 %v4574
    %4861 = vmatprep.subr.bf16.mxu0 %v4579
    %4862 = vmatpush1.bf16.msra.mxu0 %v4578
    %4863 = vmatprep.mubr.bf16.mxu0 %v3915
    %4864 = vmatmul.mubr.bf16.gmra.mrb[0].mxu0 %v3914
    %v4865 = vpop.f32.mrb[0].mxu0
    %v4866 = vadd.f32 %v4825, %v4865
    %v4867 = vpop.f32.mrb[0].mxu0
    %v4868 = vadd.f32 %v4827, %v4867
    %v4869 = vpop.f32.mrb[0].mxu0
    %v4870 = vpop.f32.mrb[0].mxu0
    %4871 = vdwg.mxu0
    %v4872 = vmax.f32 %v4784, 0.0
    %v4873 = vmax.f32 %v4786, 0.0
    %v4874 = vmax.f32 %v4866, 0.0
    %v4875 = vmax.f32 %v4868, 0.0
    %v4876 = vadd.f32 %v4872, %v2944
    %v4877 = vadd.f32 %v4873, %v2945
    %v4878 = vadd.f32 %v4874, %v2946
    %v4879 = vadd.f32 %v4875, %v2947
    %v4880 = vpack.c.bf16 %v4876, %v4876
    %v4881 = vpack.c.bf16 %v4877, %v4877
    %v4882 = vpack.c.bf16 %v4878, %v4878
    %v4883 = vpack.c.bf16 %v4879, %v4879
    %s4884 = scalar_lea.vmem [#allocation2], 5120
    %v4885 = vld [vmem:[%s4884] sm:$0xff]
    %v4886 = vld [vmem:[%s4884 + $0x8] sm:$0xff]
    %v4887 = vld [vmem:[%s4884 + $0x10] sm:$0xff]
    %v4888 = vld [vmem:[%s4884 + $0x18] sm:$0xff]
    %v4889 = vld [vmem:[%s4884 + $0x20] sm:$0xff]
    %v4890 = vld [vmem:[%s4884 + $0x28] sm:$0xff]
    %v4891 = vld [vmem:[%s4884 + $0x30] sm:$0xff]
    %v4892 = vld [vmem:[%s4884 + $0x38] sm:$0xff]
    %v4893 = vld [vmem:[%s4884 + $0x40] sm:$0xff]
    %v4894 = vld [vmem:[%s4884 + $0x48] sm:$0xff]
    %v4895 = vld [vmem:[%s4884 + $0x50] sm:$0xff]
    %v4896 = vld [vmem:[%s4884 + $0x58] sm:$0xff]
    %v4897 = vld [vmem:[%s4884 + $0x60] sm:$0xff]
    %v4898 = vld [vmem:[%s4884 + $0x68] sm:$0xff]
    %v4899 = vld [vmem:[%s4884 + $0x70] sm:$0xff]
    %v4900 = vld [vmem:[%s4884 + $0x78] sm:$0xff]
    %v4901 = vld [vmem:[%s4884 + $0x80] sm:$0xff]
    %v4902 = vld [vmem:[%s4884 + $0x88] sm:$0xff]
    %v4903 = vld [vmem:[%s4884 + $0x90] sm:$0xff]
    %v4904 = vld [vmem:[%s4884 + $0x98] sm:$0xff]
    %v4905 = vld [vmem:[%s4884 + $0xa0] sm:$0xff]
    %v4906 = vld [vmem:[%s4884 + $0xa8] sm:$0xff]
    %v4907 = vld [vmem:[%s4884 + $0xb0] sm:$0xff]
    %v4908 = vld [vmem:[%s4884 + $0xb8] sm:$0xff]
    %v4909 = vld [vmem:[%s4884 + $0xc0] sm:$0xff]
    %v4910 = vld [vmem:[%s4884 + $0xc8] sm:$0xff]
    %v4911 = vld [vmem:[%s4884 + $0xd0] sm:$0xff]
    %v4912 = vld [vmem:[%s4884 + $0xd8] sm:$0xff]
    %v4913 = vld [vmem:[%s4884 + $0xe0] sm:$0xff]
    %v4914 = vld [vmem:[%s4884 + $0xe8] sm:$0xff]
    %v4915 = vld [vmem:[%s4884 + $0xf0] sm:$0xff]
    %v4916 = vld [vmem:[%s4884 + $0xf8] sm:$0xff]
    %v4917 = vld [vmem:[%s4884 + $0x100] sm:$0xff]
    %v4918 = vld [vmem:[%s4884 + $0x108] sm:$0xff]
    %v4919 = vld [vmem:[%s4884 + $0x110] sm:$0xff]
    %v4920 = vld [vmem:[%s4884 + $0x118] sm:$0xff]
    %v4921 = vld [vmem:[%s4884 + $0x120] sm:$0xff]
    %v4922 = vld [vmem:[%s4884 + $0x128] sm:$0xff]
    %v4923 = vld [vmem:[%s4884 + $0x130] sm:$0xff]
    %v4924 = vld [vmem:[%s4884 + $0x138] sm:$0xff]
    %v4925 = vld [vmem:[%s4884 + $0x140] sm:$0xff]
    %v4926 = vld [vmem:[%s4884 + $0x148] sm:$0xff]
    %v4927 = vld [vmem:[%s4884 + $0x150] sm:$0xff]
    %v4928 = vld [vmem:[%s4884 + $0x158] sm:$0xff]
    %v4929 = vld [vmem:[%s4884 + $0x160] sm:$0xff]
    %v4930 = vld [vmem:[%s4884 + $0x168] sm:$0xff]
    %v4931 = vld [vmem:[%s4884 + $0x170] sm:$0xff]
    %v4932 = vld [vmem:[%s4884 + $0x178] sm:$0xff]
    %v4933 = vld [vmem:[%s4884 + $0x180] sm:$0xff]
    %v4934 = vld [vmem:[%s4884 + $0x188] sm:$0xff]
    %v4935 = vld [vmem:[%s4884 + $0x190] sm:$0xff]
    %v4936 = vld [vmem:[%s4884 + $0x198] sm:$0xff]
    %v4937 = vld [vmem:[%s4884 + $0x1a0] sm:$0xff]
    %v4938 = vld [vmem:[%s4884 + $0x1a8] sm:$0xff]
    %v4939 = vld [vmem:[%s4884 + $0x1b0] sm:$0xff]
    %v4940 = vld [vmem:[%s4884 + $0x1b8] sm:$0xff]
    %v4941 = vld [vmem:[%s4884 + $0x1c0] sm:$0xff]
    %v4942 = vld [vmem:[%s4884 + $0x1c8] sm:$0xff]
    %v4943 = vld [vmem:[%s4884 + $0x1d0] sm:$0xff]
    %v4944 = vld [vmem:[%s4884 + $0x1d8] sm:$0xff]
    %v4945 = vld [vmem:[%s4884 + $0x1e0] sm:$0xff]
    %v4946 = vld [vmem:[%s4884 + $0x1e8] sm:$0xff]
    %v4947 = vld [vmem:[%s4884 + $0x1f0] sm:$0xff]
    %v4948 = vld [vmem:[%s4884 + $0x1f8] sm:$0xff]
    %v4949 = vld [vmem:[%s4884 + $0x200] sm:$0xff]
    %v4950 = vld [vmem:[%s4884 + $0x208] sm:$0xff]
    %v4951 = vld [vmem:[%s4884 + $0x210] sm:$0xff]
    %v4952 = vld [vmem:[%s4884 + $0x218] sm:$0xff]
    %v4953 = vld [vmem:[%s4884 + $0x220] sm:$0xff]
    %v4954 = vld [vmem:[%s4884 + $0x228] sm:$0xff]
    %v4955 = vld [vmem:[%s4884 + $0x230] sm:$0xff]
    %v4956 = vld [vmem:[%s4884 + $0x238] sm:$0xff]
    %v4957 = vld [vmem:[%s4884 + $0x240] sm:$0xff]
    %v4958 = vld [vmem:[%s4884 + $0x248] sm:$0xff]
    %v4959 = vld [vmem:[%s4884 + $0x250] sm:$0xff]
    %v4960 = vld [vmem:[%s4884 + $0x258] sm:$0xff]
    %v4961 = vld [vmem:[%s4884 + $0x260] sm:$0xff]
    %v4962 = vld [vmem:[%s4884 + $0x268] sm:$0xff]
    %v4963 = vld [vmem:[%s4884 + $0x270] sm:$0xff]
    %v4964 = vld [vmem:[%s4884 + $0x278] sm:$0xff]
    %v4965 = vld [vmem:[%s4884 + $0x280] sm:$0xff]
    %v4966 = vld [vmem:[%s4884 + $0x288] sm:$0xff]
    %v4967 = vld [vmem:[%s4884 + $0x290] sm:$0xff]
    %v4968 = vld [vmem:[%s4884 + $0x298] sm:$0xff]
    %v4969 = vld [vmem:[%s4884 + $0x2a0] sm:$0xff]
    %v4970 = vld [vmem:[%s4884 + $0x2a8] sm:$0xff]
    %v4971 = vld [vmem:[%s4884 + $0x2b0] sm:$0xff]
    %v4972 = vld [vmem:[%s4884 + $0x2b8] sm:$0xff]
    %v4973 = vld [vmem:[%s4884 + $0x2c0] sm:$0xff]
    %v4974 = vld [vmem:[%s4884 + $0x2c8] sm:$0xff]
    %v4975 = vld [vmem:[%s4884 + $0x2d0] sm:$0xff]
    %v4976 = vld [vmem:[%s4884 + $0x2d8] sm:$0xff]
    %v4977 = vld [vmem:[%s4884 + $0x2e0] sm:$0xff]
    %v4978 = vld [vmem:[%s4884 + $0x2e8] sm:$0xff]
    %v4979 = vld [vmem:[%s4884 + $0x2f0] sm:$0xff]
    %v4980 = vld [vmem:[%s4884 + $0x2f8] sm:$0xff]
    %v4981 = vld [vmem:[%s4884 + $0x300] sm:$0xff]
    %v4982 = vld [vmem:[%s4884 + $0x308] sm:$0xff]
    %v4983 = vld [vmem:[%s4884 + $0x310] sm:$0xff]
    %v4984 = vld [vmem:[%s4884 + $0x318] sm:$0xff]
    %v4985 = vld [vmem:[%s4884 + $0x320] sm:$0xff]
    %v4986 = vld [vmem:[%s4884 + $0x328] sm:$0xff]
    %v4987 = vld [vmem:[%s4884 + $0x330] sm:$0xff]
    %v4988 = vld [vmem:[%s4884 + $0x338] sm:$0xff]
    %v4989 = vld [vmem:[%s4884 + $0x340] sm:$0xff]
    %v4990 = vld [vmem:[%s4884 + $0x348] sm:$0xff]
    %v4991 = vld [vmem:[%s4884 + $0x350] sm:$0xff]
    %v4992 = vld [vmem:[%s4884 + $0x358] sm:$0xff]
    %v4993 = vld [vmem:[%s4884 + $0x360] sm:$0xff]
    %v4994 = vld [vmem:[%s4884 + $0x368] sm:$0xff]
    %v4995 = vld [vmem:[%s4884 + $0x370] sm:$0xff]
    %v4996 = vld [vmem:[%s4884 + $0x378] sm:$0xff]
    %v4997 = vld [vmem:[%s4884 + $0x380] sm:$0xff]
    %v4998 = vld [vmem:[%s4884 + $0x388] sm:$0xff]
    %v4999 = vld [vmem:[%s4884 + $0x390] sm:$0xff]
    %v5000 = vld [vmem:[%s4884 + $0x398] sm:$0xff]
    %v5001 = vld [vmem:[%s4884 + $0x3a0] sm:$0xff]
    %v5002 = vld [vmem:[%s4884 + $0x3a8] sm:$0xff]
    %v5003 = vld [vmem:[%s4884 + $0x3b0] sm:$0xff]
    %v5004 = vld [vmem:[%s4884 + $0x3b8] sm:$0xff]
    %v5005 = vld [vmem:[%s4884 + $0x3c0] sm:$0xff]
    %v5006 = vld [vmem:[%s4884 + $0x3c8] sm:$0xff]
    %v5007 = vld [vmem:[%s4884 + $0x3d0] sm:$0xff]
    %v5008 = vld [vmem:[%s4884 + $0x3d8] sm:$0xff]
    %v5009 = vld [vmem:[%s4884 + $0x3e0] sm:$0xff]
    %v5010 = vld [vmem:[%s4884 + $0x3e8] sm:$0xff]
    %v5011 = vld [vmem:[%s4884 + $0x3f0] sm:$0xff]
    %v5012 = vld [vmem:[%s4884 + $0x3f8] sm:$0xff]
    %s5013 = scalar_lea.vmem [#allocation4], 20
    %v5014 = vld [vmem:[%s5013] sm:$0xf]
    %v5016 = vlaneseq
    %v5017 = vshrl.u32 %v5016, 7
    %v5018 = vsub.s32 0, %v5017
    %v5019 = vrot.slane %v5014, %v5018
    %v5020 = vlaneseq
    %v5021 = vshrl.u32 %v5020, 7
    %v5022 = vsub.s32 1, %v5021
    %v5023 = vrot.slane %v5014, %v5022
    %v5024 = vlaneseq
    %v5025 = vshrl.u32 %v5024, 7
    %v5026 = vsub.s32 2, %v5025
    %v5027 = vrot.slane %v5014, %v5026
    %v5028 = vlaneseq
    %v5029 = vshrl.u32 %v5028, 7
    %v5030 = vsub.s32 3, %v5029
    %v5031 = vrot.slane %v5014, %v5030
    %v5164 = vunpack.c.l.b16 %v4885
    %v5165 = vunpack.c.h.b16 %v4885
    %v5166 = vunpack.c.l.b16 %v4886
    %v5167 = vunpack.c.h.b16 %v4886
    %v5168 = vunpack.c.l.b16 %v4887
    %v5169 = vunpack.c.h.b16 %v4887
    %v5170 = vunpack.c.l.b16 %v4888
    %v5171 = vunpack.c.h.b16 %v4888
    %v5172 = vunpack.c.l.b16 %v4889
    %v5173 = vunpack.c.h.b16 %v4889
    %v5174 = vunpack.c.l.b16 %v4890
    %v5175 = vunpack.c.h.b16 %v4890
    %v5176 = vunpack.c.l.b16 %v4891
    %v5177 = vunpack.c.h.b16 %v4891
    %v5178 = vunpack.c.l.b16 %v4892
    %v5179 = vunpack.c.h.b16 %v4892
    %v5180 = vunpack.c.l.b16 %v4893
    %v5181 = vunpack.c.h.b16 %v4893
    %v5182 = vunpack.c.l.b16 %v4894
    %v5183 = vunpack.c.h.b16 %v4894
    %v5184 = vunpack.c.l.b16 %v4895
    %v5185 = vunpack.c.h.b16 %v4895
    %v5186 = vunpack.c.l.b16 %v4896
    %v5187 = vunpack.c.h.b16 %v4896
    %v5188 = vunpack.c.l.b16 %v4897
    %v5189 = vunpack.c.h.b16 %v4897
    %v5190 = vunpack.c.l.b16 %v4898
    %v5191 = vunpack.c.h.b16 %v4898
    %v5192 = vunpack.c.l.b16 %v4899
    %v5193 = vunpack.c.h.b16 %v4899
    %v5194 = vunpack.c.l.b16 %v4900
    %v5195 = vunpack.c.h.b16 %v4900
    %v5196 = vunpack.c.l.b16 %v4901
    %v5197 = vunpack.c.h.b16 %v4901
    %v5198 = vunpack.c.l.b16 %v4902
    %v5199 = vunpack.c.h.b16 %v4902
    %v5200 = vunpack.c.l.b16 %v4903
    %v5201 = vunpack.c.h.b16 %v4903
    %v5202 = vunpack.c.l.b16 %v4904
    %v5203 = vunpack.c.h.b16 %v4904
    %v5204 = vunpack.c.l.b16 %v4905
    %v5205 = vunpack.c.h.b16 %v4905
    %v5206 = vunpack.c.l.b16 %v4906
    %v5207 = vunpack.c.h.b16 %v4906
    %v5208 = vunpack.c.l.b16 %v4907
    %v5209 = vunpack.c.h.b16 %v4907
    %v5210 = vunpack.c.l.b16 %v4908
    %v5211 = vunpack.c.h.b16 %v4908
    %v5212 = vunpack.c.l.b16 %v4909
    %v5213 = vunpack.c.h.b16 %v4909
    %v5214 = vunpack.c.l.b16 %v4910
    %v5215 = vunpack.c.h.b16 %v4910
    %v5216 = vunpack.c.l.b16 %v4911
    %v5217 = vunpack.c.h.b16 %v4911
    %v5218 = vunpack.c.l.b16 %v4912
    %v5219 = vunpack.c.h.b16 %v4912
    %v5220 = vunpack.c.l.b16 %v4913
    %v5221 = vunpack.c.h.b16 %v4913
    %v5222 = vunpack.c.l.b16 %v4914
    %v5223 = vunpack.c.h.b16 %v4914
    %v5224 = vunpack.c.l.b16 %v4915
    %v5225 = vunpack.c.h.b16 %v4915
    %v5226 = vunpack.c.l.b16 %v4916
    %v5227 = vunpack.c.h.b16 %v4916
    %v5228 = vunpack.c.l.b16 %v4917
    %v5229 = vunpack.c.h.b16 %v4917
    %v5230 = vunpack.c.l.b16 %v4918
    %v5231 = vunpack.c.h.b16 %v4918
    %v5232 = vunpack.c.l.b16 %v4919
    %v5233 = vunpack.c.h.b16 %v4919
    %v5234 = vunpack.c.l.b16 %v4920
    %v5235 = vunpack.c.h.b16 %v4920
    %v5236 = vunpack.c.l.b16 %v4921
    %v5237 = vunpack.c.h.b16 %v4921
    %v5238 = vunpack.c.l.b16 %v4922
    %v5239 = vunpack.c.h.b16 %v4922
    %v5240 = vunpack.c.l.b16 %v4923
    %v5241 = vunpack.c.h.b16 %v4923
    %v5242 = vunpack.c.l.b16 %v4924
    %v5243 = vunpack.c.h.b16 %v4924
    %v5244 = vunpack.c.l.b16 %v4925
    %v5245 = vunpack.c.h.b16 %v4925
    %v5246 = vunpack.c.l.b16 %v4926
    %v5247 = vunpack.c.h.b16 %v4926
    %v5248 = vunpack.c.l.b16 %v4927
    %v5249 = vunpack.c.h.b16 %v4927
    %v5250 = vunpack.c.l.b16 %v4928
    %v5251 = vunpack.c.h.b16 %v4928
    %v5252 = vunpack.c.l.b16 %v4929
    %v5253 = vunpack.c.h.b16 %v4929
    %v5254 = vunpack.c.l.b16 %v4930
    %v5255 = vunpack.c.h.b16 %v4930
    %v5256 = vunpack.c.l.b16 %v4931
    %v5257 = vunpack.c.h.b16 %v4931
    %v5258 = vunpack.c.l.b16 %v4932
    %v5259 = vunpack.c.h.b16 %v4932
    %v5260 = vunpack.c.l.b16 %v4933
    %v5261 = vunpack.c.h.b16 %v4933
    %v5262 = vunpack.c.l.b16 %v4934
    %v5263 = vunpack.c.h.b16 %v4934
    %v5264 = vunpack.c.l.b16 %v4935
    %v5265 = vunpack.c.h.b16 %v4935
    %v5266 = vunpack.c.l.b16 %v4936
    %v5267 = vunpack.c.h.b16 %v4936
    %v5268 = vunpack.c.l.b16 %v4937
    %v5269 = vunpack.c.h.b16 %v4937
    %v5270 = vunpack.c.l.b16 %v4938
    %v5271 = vunpack.c.h.b16 %v4938
    %v5272 = vunpack.c.l.b16 %v4939
    %v5273 = vunpack.c.h.b16 %v4939
    %v5274 = vunpack.c.l.b16 %v4940
    %v5275 = vunpack.c.h.b16 %v4940
    %v5276 = vunpack.c.l.b16 %v4941
    %v5277 = vunpack.c.h.b16 %v4941
    %v5278 = vunpack.c.l.b16 %v4942
    %v5279 = vunpack.c.h.b16 %v4942
    %v5280 = vunpack.c.l.b16 %v4943
    %v5281 = vunpack.c.h.b16 %v4943
    %v5282 = vunpack.c.l.b16 %v4944
    %v5283 = vunpack.c.h.b16 %v4944
    %v5284 = vunpack.c.l.b16 %v4945
    %v5285 = vunpack.c.h.b16 %v4945
    %v5286 = vunpack.c.l.b16 %v4946
    %v5287 = vunpack.c.h.b16 %v4946
    %v5288 = vunpack.c.l.b16 %v4947
    %v5289 = vunpack.c.h.b16 %v4947
    %v5290 = vunpack.c.l.b16 %v4948
    %v5291 = vunpack.c.h.b16 %v4948
    %v5292 = vunpack.c.l.b16 %v4949
    %v5293 = vunpack.c.h.b16 %v4949
    %v5294 = vunpack.c.l.b16 %v4950
    %v5295 = vunpack.c.h.b16 %v4950
    %v5296 = vunpack.c.l.b16 %v4951
    %v5297 = vunpack.c.h.b16 %v4951
    %v5298 = vunpack.c.l.b16 %v4952
    %v5299 = vunpack.c.h.b16 %v4952
    %v5300 = vunpack.c.l.b16 %v4953
    %v5301 = vunpack.c.h.b16 %v4953
    %v5302 = vunpack.c.l.b16 %v4954
    %v5303 = vunpack.c.h.b16 %v4954
    %v5304 = vunpack.c.l.b16 %v4955
    %v5305 = vunpack.c.h.b16 %v4955
    %v5306 = vunpack.c.l.b16 %v4956
    %v5307 = vunpack.c.h.b16 %v4956
    %v5308 = vunpack.c.l.b16 %v4957
    %v5309 = vunpack.c.h.b16 %v4957
    %v5310 = vunpack.c.l.b16 %v4958
    %v5311 = vunpack.c.h.b16 %v4958
    %v5312 = vunpack.c.l.b16 %v4959
    %v5313 = vunpack.c.h.b16 %v4959
    %v5314 = vunpack.c.l.b16 %v4960
    %v5315 = vunpack.c.h.b16 %v4960
    %v5316 = vunpack.c.l.b16 %v4961
    %v5317 = vunpack.c.h.b16 %v4961
    %v5318 = vunpack.c.l.b16 %v4962
    %v5319 = vunpack.c.h.b16 %v4962
    %v5320 = vunpack.c.l.b16 %v4963
    %v5321 = vunpack.c.h.b16 %v4963
    %v5322 = vunpack.c.l.b16 %v4964
    %v5323 = vunpack.c.h.b16 %v4964
    %v5324 = vunpack.c.l.b16 %v4965
    %v5325 = vunpack.c.h.b16 %v4965
    %v5326 = vunpack.c.l.b16 %v4966
    %v5327 = vunpack.c.h.b16 %v4966
    %v5328 = vunpack.c.l.b16 %v4967
    %v5329 = vunpack.c.h.b16 %v4967
    %v5330 = vunpack.c.l.b16 %v4968
    %v5331 = vunpack.c.h.b16 %v4968
    %v5332 = vunpack.c.l.b16 %v4969
    %v5333 = vunpack.c.h.b16 %v4969
    %v5334 = vunpack.c.l.b16 %v4970
    %v5335 = vunpack.c.h.b16 %v4970
    %v5336 = vunpack.c.l.b16 %v4971
    %v5337 = vunpack.c.h.b16 %v4971
    %v5338 = vunpack.c.l.b16 %v4972
    %v5339 = vunpack.c.h.b16 %v4972
    %v5340 = vunpack.c.l.b16 %v4973
    %v5341 = vunpack.c.h.b16 %v4973
    %v5342 = vunpack.c.l.b16 %v4974
    %v5343 = vunpack.c.h.b16 %v4974
    %v5344 = vunpack.c.l.b16 %v4975
    %v5345 = vunpack.c.h.b16 %v4975
    %v5346 = vunpack.c.l.b16 %v4976
    %v5347 = vunpack.c.h.b16 %v4976
    %v5348 = vunpack.c.l.b16 %v4977
    %v5349 = vunpack.c.h.b16 %v4977
    %v5350 = vunpack.c.l.b16 %v4978
    %v5351 = vunpack.c.h.b16 %v4978
    %v5352 = vunpack.c.l.b16 %v4979
    %v5353 = vunpack.c.h.b16 %v4979
    %v5354 = vunpack.c.l.b16 %v4980
    %v5355 = vunpack.c.h.b16 %v4980
    %v5356 = vunpack.c.l.b16 %v4981
    %v5357 = vunpack.c.h.b16 %v4981
    %v5358 = vunpack.c.l.b16 %v4982
    %v5359 = vunpack.c.h.b16 %v4982
    %v5360 = vunpack.c.l.b16 %v4983
    %v5361 = vunpack.c.h.b16 %v4983
    %v5362 = vunpack.c.l.b16 %v4984
    %v5363 = vunpack.c.h.b16 %v4984
    %v5364 = vunpack.c.l.b16 %v4985
    %v5365 = vunpack.c.h.b16 %v4985
    %v5366 = vunpack.c.l.b16 %v4986
    %v5367 = vunpack.c.h.b16 %v4986
    %v5368 = vunpack.c.l.b16 %v4987
    %v5369 = vunpack.c.h.b16 %v4987
    %v5370 = vunpack.c.l.b16 %v4988
    %v5371 = vunpack.c.h.b16 %v4988
    %v5372 = vunpack.c.l.b16 %v4989
    %v5373 = vunpack.c.h.b16 %v4989
    %v5374 = vunpack.c.l.b16 %v4990
    %v5375 = vunpack.c.h.b16 %v4990
    %v5376 = vunpack.c.l.b16 %v4991
    %v5377 = vunpack.c.h.b16 %v4991
    %v5378 = vunpack.c.l.b16 %v4992
    %v5379 = vunpack.c.h.b16 %v4992
    %v5380 = vunpack.c.l.b16 %v4993
    %v5381 = vunpack.c.h.b16 %v4993
    %v5382 = vunpack.c.l.b16 %v4994
    %v5383 = vunpack.c.h.b16 %v4994
    %v5384 = vunpack.c.l.b16 %v4995
    %v5385 = vunpack.c.h.b16 %v4995
    %v5386 = vunpack.c.l.b16 %v4996
    %v5387 = vunpack.c.h.b16 %v4996
    %v5388 = vunpack.c.l.b16 %v4997
    %v5389 = vunpack.c.h.b16 %v4997
    %v5390 = vunpack.c.l.b16 %v4998
    %v5391 = vunpack.c.h.b16 %v4998
    %v5392 = vunpack.c.l.b16 %v4999
    %v5393 = vunpack.c.h.b16 %v4999
    %v5394 = vunpack.c.l.b16 %v5000
    %v5395 = vunpack.c.h.b16 %v5000
    %v5396 = vunpack.c.l.b16 %v5001
    %v5397 = vunpack.c.h.b16 %v5001
    %v5398 = vunpack.c.l.b16 %v5002
    %v5399 = vunpack.c.h.b16 %v5002
    %v5400 = vunpack.c.l.b16 %v5003
    %v5401 = vunpack.c.h.b16 %v5003
    %v5402 = vunpack.c.l.b16 %v5004
    %v5403 = vunpack.c.h.b16 %v5004
    %v5404 = vunpack.c.l.b16 %v5005
    %v5405 = vunpack.c.h.b16 %v5005
    %v5406 = vunpack.c.l.b16 %v5006
    %v5407 = vunpack.c.h.b16 %v5006
    %v5408 = vunpack.c.l.b16 %v5007
    %v5409 = vunpack.c.h.b16 %v5007
    %v5410 = vunpack.c.l.b16 %v5008
    %v5411 = vunpack.c.h.b16 %v5008
    %v5412 = vunpack.c.l.b16 %v5009
    %v5413 = vunpack.c.h.b16 %v5009
    %v5414 = vunpack.c.l.b16 %v5010
    %v5415 = vunpack.c.h.b16 %v5010
    %v5416 = vunpack.c.l.b16 %v5011
    %v5417 = vunpack.c.h.b16 %v5011
    %v5418 = vunpack.c.l.b16 %v5012
    %v5419 = vunpack.c.h.b16 %v5012
    %v5420 = vpack.c.b16 %v5168, %v5164
    %v5421 = vpack.c.b16 %v5169, %v5165
    %v5422 = vpack.c.b16 %v5170, %v5166
    %v5423 = vpack.c.b16 %v5171, %v5167
    %v5424 = vpack.c.b16 %v5176, %v5172
    %v5425 = vpack.c.b16 %v5177, %v5173
    %v5426 = vpack.c.b16 %v5178, %v5174
    %v5427 = vpack.c.b16 %v5179, %v5175
    %v5428 = vpack.c.b16 %v5184, %v5180
    %v5429 = vpack.c.b16 %v5185, %v5181
    %v5430 = vpack.c.b16 %v5186, %v5182
    %v5431 = vpack.c.b16 %v5187, %v5183
    %v5432 = vpack.c.b16 %v5192, %v5188
    %v5433 = vpack.c.b16 %v5193, %v5189
    %v5434 = vpack.c.b16 %v5194, %v5190
    %v5435 = vpack.c.b16 %v5195, %v5191
    %v5436 = vpack.c.b16 %v5200, %v5196
    %v5437 = vpack.c.b16 %v5201, %v5197
    %v5438 = vpack.c.b16 %v5202, %v5198
    %v5439 = vpack.c.b16 %v5203, %v5199
    %v5440 = vpack.c.b16 %v5208, %v5204
    %v5441 = vpack.c.b16 %v5209, %v5205
    %v5442 = vpack.c.b16 %v5210, %v5206
    %v5443 = vpack.c.b16 %v5211, %v5207
    %v5444 = vpack.c.b16 %v5216, %v5212
    %v5445 = vpack.c.b16 %v5217, %v5213
    %v5446 = vpack.c.b16 %v5218, %v5214
    %v5447 = vpack.c.b16 %v5219, %v5215
    %v5448 = vpack.c.b16 %v5224, %v5220
    %v5449 = vpack.c.b16 %v5225, %v5221
    %v5450 = vpack.c.b16 %v5226, %v5222
    %v5451 = vpack.c.b16 %v5227, %v5223
    %v5452 = vpack.c.b16 %v5232, %v5228
    %v5453 = vpack.c.b16 %v5233, %v5229
    %v5454 = vpack.c.b16 %v5234, %v5230
    %v5455 = vpack.c.b16 %v5235, %v5231
    %v5456 = vpack.c.b16 %v5240, %v5236
    %v5457 = vpack.c.b16 %v5241, %v5237
    %v5458 = vpack.c.b16 %v5242, %v5238
    %v5459 = vpack.c.b16 %v5243, %v5239
    %v5460 = vpack.c.b16 %v5248, %v5244
    %v5461 = vpack.c.b16 %v5249, %v5245
    %v5462 = vpack.c.b16 %v5250, %v5246
    %v5463 = vpack.c.b16 %v5251, %v5247
    %v5464 = vpack.c.b16 %v5256, %v5252
    %v5465 = vpack.c.b16 %v5257, %v5253
    %v5466 = vpack.c.b16 %v5258, %v5254
    %v5467 = vpack.c.b16 %v5259, %v5255
    %v5468 = vpack.c.b16 %v5264, %v5260
    %v5469 = vpack.c.b16 %v5265, %v5261
    %v5470 = vpack.c.b16 %v5266, %v5262
    %v5471 = vpack.c.b16 %v5267, %v5263
    %v5472 = vpack.c.b16 %v5272, %v5268
    %v5473 = vpack.c.b16 %v5273, %v5269
    %v5474 = vpack.c.b16 %v5274, %v5270
    %v5475 = vpack.c.b16 %v5275, %v5271
    %v5476 = vpack.c.b16 %v5280, %v5276
    %v5477 = vpack.c.b16 %v5281, %v5277
    %v5478 = vpack.c.b16 %v5282, %v5278
    %v5479 = vpack.c.b16 %v5283, %v5279
    %v5480 = vpack.c.b16 %v5288, %v5284
    %v5481 = vpack.c.b16 %v5289, %v5285
    %v5482 = vpack.c.b16 %v5290, %v5286
    %v5483 = vpack.c.b16 %v5291, %v5287
    %v5484 = vpack.c.b16 %v5296, %v5292
    %v5485 = vpack.c.b16 %v5297, %v5293
    %v5486 = vpack.c.b16 %v5298, %v5294
    %v5487 = vpack.c.b16 %v5299, %v5295
    %v5488 = vpack.c.b16 %v5304, %v5300
    %v5489 = vpack.c.b16 %v5305, %v5301
    %v5490 = vpack.c.b16 %v5306, %v5302
    %v5491 = vpack.c.b16 %v5307, %v5303
    %v5492 = vpack.c.b16 %v5312, %v5308
    %v5493 = vpack.c.b16 %v5313, %v5309
    %v5494 = vpack.c.b16 %v5314, %v5310
    %v5495 = vpack.c.b16 %v5315, %v5311
    %v5496 = vpack.c.b16 %v5320, %v5316
    %v5497 = vpack.c.b16 %v5321, %v5317
    %v5498 = vpack.c.b16 %v5322, %v5318
    %v5499 = vpack.c.b16 %v5323, %v5319
    %v5500 = vpack.c.b16 %v5328, %v5324
    %v5501 = vpack.c.b16 %v5329, %v5325
    %v5502 = vpack.c.b16 %v5330, %v5326
    %v5503 = vpack.c.b16 %v5331, %v5327
    %v5504 = vpack.c.b16 %v5336, %v5332
    %v5505 = vpack.c.b16 %v5337, %v5333
    %v5506 = vpack.c.b16 %v5338, %v5334
    %v5507 = vpack.c.b16 %v5339, %v5335
    %v5508 = vpack.c.b16 %v5344, %v5340
    %v5509 = vpack.c.b16 %v5345, %v5341
    %v5510 = vpack.c.b16 %v5346, %v5342
    %v5511 = vpack.c.b16 %v5347, %v5343
    %v5512 = vpack.c.b16 %v5352, %v5348
    %v5513 = vpack.c.b16 %v5353, %v5349
    %v5514 = vpack.c.b16 %v5354, %v5350
    %v5515 = vpack.c.b16 %v5355, %v5351
    %v5516 = vpack.c.b16 %v5360, %v5356
    %v5517 = vpack.c.b16 %v5361, %v5357
    %v5518 = vpack.c.b16 %v5362, %v5358
    %v5519 = vpack.c.b16 %v5363, %v5359
    %v5520 = vpack.c.b16 %v5368, %v5364
    %v5521 = vpack.c.b16 %v5369, %v5365
    %v5522 = vpack.c.b16 %v5370, %v5366
    %v5523 = vpack.c.b16 %v5371, %v5367
    %v5524 = vpack.c.b16 %v5376, %v5372
    %v5525 = vpack.c.b16 %v5377, %v5373
    %v5526 = vpack.c.b16 %v5378, %v5374
    %v5527 = vpack.c.b16 %v5379, %v5375
    %v5528 = vpack.c.b16 %v5384, %v5380
    %v5529 = vpack.c.b16 %v5385, %v5381
    %v5530 = vpack.c.b16 %v5386, %v5382
    %v5531 = vpack.c.b16 %v5387, %v5383
    %v5532 = vpack.c.b16 %v5392, %v5388
    %v5533 = vpack.c.b16 %v5393, %v5389
    %v5534 = vpack.c.b16 %v5394, %v5390
    %v5535 = vpack.c.b16 %v5395, %v5391
    %v5536 = vpack.c.b16 %v5400, %v5396
    %v5537 = vpack.c.b16 %v5401, %v5397
    %v5538 = vpack.c.b16 %v5402, %v5398
    %v5539 = vpack.c.b16 %v5403, %v5399
    %v5540 = vpack.c.b16 %v5408, %v5404
    %v5541 = vpack.c.b16 %v5409, %v5405
    %v5542 = vpack.c.b16 %v5410, %v5406
    %v5543 = vpack.c.b16 %v5411, %v5407
    %v5544 = vpack.c.b16 %v5416, %v5412
    %v5545 = vpack.c.b16 %v5417, %v5413
    %v5546 = vpack.c.b16 %v5418, %v5414
    %v5547 = vpack.c.b16 %v5419, %v5415
    %5676 = vmatprep.subr.bf16.mxu0 %v5421
    %5677 = vmatpush1.bf16.msra.mxu0 %v5420
    %5678 = vmatprep.subr.bf16.mxu0 %v5425
    %5679 = vmatpush1.bf16.msra.mxu0 %v5424
    %5680 = vmatprep.subr.bf16.mxu0 %v5429
    %5681 = vmatpush1.bf16.msra.mxu0 %v5428
    %5682 = vmatprep.subr.bf16.mxu0 %v5433
    %5683 = vmatpush1.bf16.msra.mxu0 %v5432
    %5684 = vmatprep.subr.bf16.mxu0 %v5437
    %5685 = vmatpush1.bf16.msra.mxu0 %v5436
    %5686 = vmatprep.subr.bf16.mxu0 %v5441
    %5687 = vmatpush1.bf16.msra.mxu0 %v5440
    %5688 = vmatprep.subr.bf16.mxu0 %v5445
    %5689 = vmatpush1.bf16.msra.mxu0 %v5444
    %5690 = vmatprep.subr.bf16.mxu0 %v5449
    %5691 = vmatpush1.bf16.msra.mxu0 %v5448
    %5692 = vmatprep.subr.bf16.mxu0 %v5453
    %5693 = vmatpush1.bf16.msra.mxu0 %v5452
    %5694 = vmatprep.subr.bf16.mxu0 %v5457
    %5695 = vmatpush1.bf16.msra.mxu0 %v5456
    %5696 = vmatprep.subr.bf16.mxu0 %v5461
    %5697 = vmatpush1.bf16.msra.mxu0 %v5460
    %5698 = vmatprep.subr.bf16.mxu0 %v5465
    %5699 = vmatpush1.bf16.msra.mxu0 %v5464
    %5700 = vmatprep.subr.bf16.mxu0 %v5469
    %5701 = vmatpush1.bf16.msra.mxu0 %v5468
    %5702 = vmatprep.subr.bf16.mxu0 %v5473
    %5703 = vmatpush1.bf16.msra.mxu0 %v5472
    %5704 = vmatprep.subr.bf16.mxu0 %v5477
    %5705 = vmatpush1.bf16.msra.mxu0 %v5476
    %5706 = vmatprep.subr.bf16.mxu0 %v5481
    %5707 = vmatpush1.bf16.msra.mxu0 %v5480
    %5708 = vmatprep.mubr.bf16.mxu0 %v4881
    %5709 = vmatmul.mubr.bf16.gmra.mrb[0].mxu0 %v4880
    %v5710 = vpop.f32.mrb[0].mxu0
    %v5711 = vadd.f32 %v5019, %v5710
    %v5712 = vpop.f32.mrb[0].mxu0
    %v5713 = vadd.f32 %v5023, %v5712
    %v5714 = vpop.f32.mrb[0].mxu0
    %v5715 = vpop.f32.mrb[0].mxu0
    %5716 = vdwg.mxu0
    %5717 = vmatprep.subr.bf16.mxu0 %v5485
    %5718 = vmatpush1.bf16.msra.mxu0 %v5484
    %5719 = vmatprep.subr.bf16.mxu0 %v5489
    %5720 = vmatpush1.bf16.msra.mxu0 %v5488
    %5721 = vmatprep.subr.bf16.mxu0 %v5493
    %5722 = vmatpush1.bf16.msra.mxu0 %v5492
    %5723 = vmatprep.subr.bf16.mxu0 %v5497
    %5724 = vmatpush1.bf16.msra.mxu0 %v5496
    %5725 = vmatprep.subr.bf16.mxu0 %v5501
    %5726 = vmatpush1.bf16.msra.mxu0 %v5500
    %5727 = vmatprep.subr.bf16.mxu0 %v5505
    %5728 = vmatpush1.bf16.msra.mxu0 %v5504
    %5729 = vmatprep.subr.bf16.mxu0 %v5509
    %5730 = vmatpush1.bf16.msra.mxu0 %v5508
    %5731 = vmatprep.subr.bf16.mxu0 %v5513
    %5732 = vmatpush1.bf16.msra.mxu0 %v5512
    %5733 = vmatprep.subr.bf16.mxu0 %v5517
    %5734 = vmatpush1.bf16.msra.mxu0 %v5516
    %5735 = vmatprep.subr.bf16.mxu0 %v5521
    %5736 = vmatpush1.bf16.msra.mxu0 %v5520
    %5737 = vmatprep.subr.bf16.mxu0 %v5525
    %5738 = vmatpush1.bf16.msra.mxu0 %v5524
    %5739 = vmatprep.subr.bf16.mxu0 %v5529
    %5740 = vmatpush1.bf16.msra.mxu0 %v5528
    %5741 = vmatprep.subr.bf16.mxu0 %v5533
    %5742 = vmatpush1.bf16.msra.mxu0 %v5532
    %5743 = vmatprep.subr.bf16.mxu0 %v5537
    %5744 = vmatpush1.bf16.msra.mxu0 %v5536
    %5745 = vmatprep.subr.bf16.mxu0 %v5541
    %5746 = vmatpush1.bf16.msra.mxu0 %v5540
    %5747 = vmatprep.subr.bf16.mxu0 %v5545
    %5748 = vmatpush1.bf16.msra.mxu0 %v5544
    %5749 = vmatprep.mubr.bf16.mxu0 %v4883
    %5750 = vmatmul.mubr.bf16.gmra.mrb[0].mxu0 %v4882
    %v5751 = vpop.f32.mrb[0].mxu0
    %v5752 = vadd.f32 %v5711, %v5751
    %v5753 = vpop.f32.mrb[0].mxu0
    %v5754 = vadd.f32 %v5713, %v5753
    %v5755 = vpop.f32.mrb[0].mxu0
    %v5756 = vpop.f32.mrb[0].mxu0
    %5757 = vdwg.mxu0
    %5758 = vmatprep.subr.bf16.mxu0 %v5423
    %5759 = vmatpush1.bf16.msra.mxu0 %v5422
    %5760 = vmatprep.subr.bf16.mxu0 %v5427
    %5761 = vmatpush1.bf16.msra.mxu0 %v5426
    %5762 = vmatprep.subr.bf16.mxu0 %v5431
    %5763 = vmatpush1.bf16.msra.mxu0 %v5430
    %5764 = vmatprep.subr.bf16.mxu0 %v5435
    %5765 = vmatpush1.bf16.msra.mxu0 %v5434
    %5766 = vmatprep.subr.bf16.mxu0 %v5439
    %5767 = vmatpush1.bf16.msra.mxu0 %v5438
    %5768 = vmatprep.subr.bf16.mxu0 %v5443
    %5769 = vmatpush1.bf16.msra.mxu0 %v5442
    %5770 = vmatprep.subr.bf16.mxu0 %v5447
    %5771 = vmatpush1.bf16.msra.mxu0 %v5446
    %5772 = vmatprep.subr.bf16.mxu0 %v5451
    %5773 = vmatpush1.bf16.msra.mxu0 %v5450
    %5774 = vmatprep.subr.bf16.mxu0 %v5455
    %5775 = vmatpush1.bf16.msra.mxu0 %v5454
    %5776 = vmatprep.subr.bf16.mxu0 %v5459
    %5777 = vmatpush1.bf16.msra.mxu0 %v5458
    %5778 = vmatprep.subr.bf16.mxu0 %v5463
    %5779 = vmatpush1.bf16.msra.mxu0 %v5462
    %5780 = vmatprep.subr.bf16.mxu0 %v5467
    %5781 = vmatpush1.bf16.msra.mxu0 %v5466
    %5782 = vmatprep.subr.bf16.mxu0 %v5471
    %5783 = vmatpush1.bf16.msra.mxu0 %v5470
    %5784 = vmatprep.subr.bf16.mxu0 %v5475
    %5785 = vmatpush1.bf16.msra.mxu0 %v5474
    %5786 = vmatprep.subr.bf16.mxu0 %v5479
    %5787 = vmatpush1.bf16.msra.mxu0 %v5478
    %5788 = vmatprep.subr.bf16.mxu0 %v5483
    %5789 = vmatpush1.bf16.msra.mxu0 %v5482
    %5790 = vmatprep.mubr.bf16.mxu0 %v4881
    %5791 = vmatmul.mubr.bf16.gmra.mrb[0].mxu0 %v4880
    %v5792 = vpop.f32.mrb[0].mxu0
    %v5793 = vadd.f32 %v5027, %v5792
    %v5794 = vpop.f32.mrb[0].mxu0
    %v5795 = vadd.f32 %v5031, %v5794
    %v5796 = vpop.f32.mrb[0].mxu0
    %v5797 = vpop.f32.mrb[0].mxu0
    %5798 = vdwg.mxu0
    %5799 = vmatprep.subr.bf16.mxu0 %v5487
    %5800 = vmatpush1.bf16.msra.mxu0 %v5486
    %5801 = vmatprep.subr.bf16.mxu0 %v5491
    %5802 = vmatpush1.bf16.msra.mxu0 %v5490
    %5803 = vmatprep.subr.bf16.mxu0 %v5495
    %5804 = vmatpush1.bf16.msra.mxu0 %v5494
    %5805 = vmatprep.subr.bf16.mxu0 %v5499
    %5806 = vmatpush1.bf16.msra.mxu0 %v5498
    %5807 = vmatprep.subr.bf16.mxu0 %v5503
    %5808 = vmatpush1.bf16.msra.mxu0 %v5502
    %5809 = vmatprep.subr.bf16.mxu0 %v5507
    %5810 = vmatpush1.bf16.msra.mxu0 %v5506
    %5811 = vmatprep.subr.bf16.mxu0 %v5511
    %5812 = vmatpush1.bf16.msra.mxu0 %v5510
    %5813 = vmatprep.subr.bf16.mxu0 %v5515
    %5814 = vmatpush1.bf16.msra.mxu0 %v5514
    %5815 = vmatprep.subr.bf16.mxu0 %v5519
    %5816 = vmatpush1.bf16.msra.mxu0 %v5518
    %5817 = vmatprep.subr.bf16.mxu0 %v5523
    %5818 = vmatpush1.bf16.msra.mxu0 %v5522
    %5819 = vmatprep.subr.bf16.mxu0 %v5527
    %5820 = vmatpush1.bf16.msra.mxu0 %v5526
    %5821 = vmatprep.subr.bf16.mxu0 %v5531
    %5822 = vmatpush1.bf16.msra.mxu0 %v5530
    %5823 = vmatprep.subr.bf16.mxu0 %v5535
    %5824 = vmatpush1.bf16.msra.mxu0 %v5534
    %5825 = vmatprep.subr.bf16.mxu0 %v5539
    %5826 = vmatpush1.bf16.msra.mxu0 %v5538
    %5827 = vmatprep.subr.bf16.mxu0 %v5543
    %5828 = vmatpush1.bf16.msra.mxu0 %v5542
    %5829 = vmatprep.subr.bf16.mxu0 %v5547
    %5830 = vmatpush1.bf16.msra.mxu0 %v5546
    %5831 = vmatprep.mubr.bf16.mxu0 %v4883
    %5832 = vmatmul.mubr.bf16.gmra.mrb[0].mxu0 %v4882
    %v5833 = vpop.f32.mrb[0].mxu0
    %v5834 = vadd.f32 %v5793, %v5833
    %v5835 = vpop.f32.mrb[0].mxu0
    %v5836 = vadd.f32 %v5795, %v5835
    %v5837 = vpop.f32.mrb[0].mxu0
    %v5838 = vpop.f32.mrb[0].mxu0
    %5839 = vdwg.mxu0
    %v5840 = vmax.f32 %v5752, 0.0
    %v5841 = vmax.f32 %v5754, 0.0
    %v5842 = vmax.f32 %v5834, 0.0
    %v5843 = vmax.f32 %v5836, 0.0
    %v5844 = vpack.c.bf16 %v5840, %v5840
    %v5845 = vpack.c.bf16 %v5841, %v5841
    %v5846 = vpack.c.bf16 %v5842, %v5842
    %v5847 = vpack.c.bf16 %v5843, %v5843
    %s5848 = scalar_lea.vmem [#allocation2], 6144
    %v5849 = vld [vmem:[%s5848] sm:$0xff]
    %v5850 = vld [vmem:[%s5848 + $0x8] sm:$0xff]
    %v5851 = vld [vmem:[%s5848 + $0x10] sm:$0xff]
    %v5852 = vld [vmem:[%s5848 + $0x18] sm:$0xff]
    %v5853 = vld [vmem:[%s5848 + $0x20] sm:$0xff]
    %v5854 = vld [vmem:[%s5848 + $0x28] sm:$0xff]
    %v5855 = vld [vmem:[%s5848 + $0x30] sm:$0xff]
    %v5856 = vld [vmem:[%s5848 + $0x38] sm:$0xff]
    %v5857 = vld [vmem:[%s5848 + $0x40] sm:$0xff]
    %v5858 = vld [vmem:[%s5848 + $0x48] sm:$0xff]
    %v5859 = vld [vmem:[%s5848 + $0x50] sm:$0xff]
    %v5860 = vld [vmem:[%s5848 + $0x58] sm:$0xff]
    %v5861 = vld [vmem:[%s5848 + $0x60] sm:$0xff]
    %v5862 = vld [vmem:[%s5848 + $0x68] sm:$0xff]
    %v5863 = vld [vmem:[%s5848 + $0x70] sm:$0xff]
    %v5864 = vld [vmem:[%s5848 + $0x78] sm:$0xff]
    %v5865 = vld [vmem:[%s5848 + $0x80] sm:$0xff]
    %v5866 = vld [vmem:[%s5848 + $0x88] sm:$0xff]
    %v5867 = vld [vmem:[%s5848 + $0x90] sm:$0xff]
    %v5868 = vld [vmem:[%s5848 + $0x98] sm:$0xff]
    %v5869 = vld [vmem:[%s5848 + $0xa0] sm:$0xff]
    %v5870 = vld [vmem:[%s5848 + $0xa8] sm:$0xff]
    %v5871 = vld [vmem:[%s5848 + $0xb0] sm:$0xff]
    %v5872 = vld [vmem:[%s5848 + $0xb8] sm:$0xff]
    %v5873 = vld [vmem:[%s5848 + $0xc0] sm:$0xff]
    %v5874 = vld [vmem:[%s5848 + $0xc8] sm:$0xff]
    %v5875 = vld [vmem:[%s5848 + $0xd0] sm:$0xff]
    %v5876 = vld [vmem:[%s5848 + $0xd8] sm:$0xff]
    %v5877 = vld [vmem:[%s5848 + $0xe0] sm:$0xff]
    %v5878 = vld [vmem:[%s5848 + $0xe8] sm:$0xff]
    %v5879 = vld [vmem:[%s5848 + $0xf0] sm:$0xff]
    %v5880 = vld [vmem:[%s5848 + $0xf8] sm:$0xff]
    %v5881 = vld [vmem:[%s5848 + $0x100] sm:$0xff]
    %v5882 = vld [vmem:[%s5848 + $0x108] sm:$0xff]
    %v5883 = vld [vmem:[%s5848 + $0x110] sm:$0xff]
    %v5884 = vld [vmem:[%s5848 + $0x118] sm:$0xff]
    %v5885 = vld [vmem:[%s5848 + $0x120] sm:$0xff]
    %v5886 = vld [vmem:[%s5848 + $0x128] sm:$0xff]
    %v5887 = vld [vmem:[%s5848 + $0x130] sm:$0xff]
    %v5888 = vld [vmem:[%s5848 + $0x138] sm:$0xff]
    %v5889 = vld [vmem:[%s5848 + $0x140] sm:$0xff]
    %v5890 = vld [vmem:[%s5848 + $0x148] sm:$0xff]
    %v5891 = vld [vmem:[%s5848 + $0x150] sm:$0xff]
    %v5892 = vld [vmem:[%s5848 + $0x158] sm:$0xff]
    %v5893 = vld [vmem:[%s5848 + $0x160] sm:$0xff]
    %v5894 = vld [vmem:[%s5848 + $0x168] sm:$0xff]
    %v5895 = vld [vmem:[%s5848 + $0x170] sm:$0xff]
    %v5896 = vld [vmem:[%s5848 + $0x178] sm:$0xff]
    %v5897 = vld [vmem:[%s5848 + $0x180] sm:$0xff]
    %v5898 = vld [vmem:[%s5848 + $0x188] sm:$0xff]
    %v5899 = vld [vmem:[%s5848 + $0x190] sm:$0xff]
    %v5900 = vld [vmem:[%s5848 + $0x198] sm:$0xff]
    %v5901 = vld [vmem:[%s5848 + $0x1a0] sm:$0xff]
    %v5902 = vld [vmem:[%s5848 + $0x1a8] sm:$0xff]
    %v5903 = vld [vmem:[%s5848 + $0x1b0] sm:$0xff]
    %v5904 = vld [vmem:[%s5848 + $0x1b8] sm:$0xff]
    %v5905 = vld [vmem:[%s5848 + $0x1c0] sm:$0xff]
    %v5906 = vld [vmem:[%s5848 + $0x1c8] sm:$0xff]
    %v5907 = vld [vmem:[%s5848 + $0x1d0] sm:$0xff]
    %v5908 = vld [vmem:[%s5848 + $0x1d8] sm:$0xff]
    %v5909 = vld [vmem:[%s5848 + $0x1e0] sm:$0xff]
    %v5910 = vld [vmem:[%s5848 + $0x1e8] sm:$0xff]
    %v5911 = vld [vmem:[%s5848 + $0x1f0] sm:$0xff]
    %v5912 = vld [vmem:[%s5848 + $0x1f8] sm:$0xff]
    %v5913 = vld [vmem:[%s5848 + $0x200] sm:$0xff]
    %v5914 = vld [vmem:[%s5848 + $0x208] sm:$0xff]
    %v5915 = vld [vmem:[%s5848 + $0x210] sm:$0xff]
    %v5916 = vld [vmem:[%s5848 + $0x218] sm:$0xff]
    %v5917 = vld [vmem:[%s5848 + $0x220] sm:$0xff]
    %v5918 = vld [vmem:[%s5848 + $0x228] sm:$0xff]
    %v5919 = vld [vmem:[%s5848 + $0x230] sm:$0xff]
    %v5920 = vld [vmem:[%s5848 + $0x238] sm:$0xff]
    %v5921 = vld [vmem:[%s5848 + $0x240] sm:$0xff]
    %v5922 = vld [vmem:[%s5848 + $0x248] sm:$0xff]
    %v5923 = vld [vmem:[%s5848 + $0x250] sm:$0xff]
    %v5924 = vld [vmem:[%s5848 + $0x258] sm:$0xff]
    %v5925 = vld [vmem:[%s5848 + $0x260] sm:$0xff]
    %v5926 = vld [vmem:[%s5848 + $0x268] sm:$0xff]
    %v5927 = vld [vmem:[%s5848 + $0x270] sm:$0xff]
    %v5928 = vld [vmem:[%s5848 + $0x278] sm:$0xff]
    %v5929 = vld [vmem:[%s5848 + $0x280] sm:$0xff]
    %v5930 = vld [vmem:[%s5848 + $0x288] sm:$0xff]
    %v5931 = vld [vmem:[%s5848 + $0x290] sm:$0xff]
    %v5932 = vld [vmem:[%s5848 + $0x298] sm:$0xff]
    %v5933 = vld [vmem:[%s5848 + $0x2a0] sm:$0xff]
    %v5934 = vld [vmem:[%s5848 + $0x2a8] sm:$0xff]
    %v5935 = vld [vmem:[%s5848 + $0x2b0] sm:$0xff]
    %v5936 = vld [vmem:[%s5848 + $0x2b8] sm:$0xff]
    %v5937 = vld [vmem:[%s5848 + $0x2c0] sm:$0xff]
    %v5938 = vld [vmem:[%s5848 + $0x2c8] sm:$0xff]
    %v5939 = vld [vmem:[%s5848 + $0x2d0] sm:$0xff]
    %v5940 = vld [vmem:[%s5848 + $0x2d8] sm:$0xff]
    %v5941 = vld [vmem:[%s5848 + $0x2e0] sm:$0xff]
    %v5942 = vld [vmem:[%s5848 + $0x2e8] sm:$0xff]
    %v5943 = vld [vmem:[%s5848 + $0x2f0] sm:$0xff]
    %v5944 = vld [vmem:[%s5848 + $0x2f8] sm:$0xff]
    %v5945 = vld [vmem:[%s5848 + $0x300] sm:$0xff]
    %v5946 = vld [vmem:[%s5848 + $0x308] sm:$0xff]
    %v5947 = vld [vmem:[%s5848 + $0x310] sm:$0xff]
    %v5948 = vld [vmem:[%s5848 + $0x318] sm:$0xff]
    %v5949 = vld [vmem:[%s5848 + $0x320] sm:$0xff]
    %v5950 = vld [vmem:[%s5848 + $0x328] sm:$0xff]
    %v5951 = vld [vmem:[%s5848 + $0x330] sm:$0xff]
    %v5952 = vld [vmem:[%s5848 + $0x338] sm:$0xff]
    %v5953 = vld [vmem:[%s5848 + $0x340] sm:$0xff]
    %v5954 = vld [vmem:[%s5848 + $0x348] sm:$0xff]
    %v5955 = vld [vmem:[%s5848 + $0x350] sm:$0xff]
    %v5956 = vld [vmem:[%s5848 + $0x358] sm:$0xff]
    %v5957 = vld [vmem:[%s5848 + $0x360] sm:$0xff]
    %v5958 = vld [vmem:[%s5848 + $0x368] sm:$0xff]
    %v5959 = vld [vmem:[%s5848 + $0x370] sm:$0xff]
    %v5960 = vld [vmem:[%s5848 + $0x378] sm:$0xff]
    %v5961 = vld [vmem:[%s5848 + $0x380] sm:$0xff]
    %v5962 = vld [vmem:[%s5848 + $0x388] sm:$0xff]
    %v5963 = vld [vmem:[%s5848 + $0x390] sm:$0xff]
    %v5964 = vld [vmem:[%s5848 + $0x398] sm:$0xff]
    %v5965 = vld [vmem:[%s5848 + $0x3a0] sm:$0xff]
    %v5966 = vld [vmem:[%s5848 + $0x3a8] sm:$0xff]
    %v5967 = vld [vmem:[%s5848 + $0x3b0] sm:$0xff]
    %v5968 = vld [vmem:[%s5848 + $0x3b8] sm:$0xff]
    %v5969 = vld [vmem:[%s5848 + $0x3c0] sm:$0xff]
    %v5970 = vld [vmem:[%s5848 + $0x3c8] sm:$0xff]
    %v5971 = vld [vmem:[%s5848 + $0x3d0] sm:$0xff]
    %v5972 = vld [vmem:[%s5848 + $0x3d8] sm:$0xff]
    %v5973 = vld [vmem:[%s5848 + $0x3e0] sm:$0xff]
    %v5974 = vld [vmem:[%s5848 + $0x3e8] sm:$0xff]
    %v5975 = vld [vmem:[%s5848 + $0x3f0] sm:$0xff]
    %v5976 = vld [vmem:[%s5848 + $0x3f8] sm:$0xff]
    %s5977 = scalar_lea.vmem [#allocation4], 24
    %v5978 = vld [vmem:[%s5977] sm:$0xf]
    %v5980 = vlaneseq
    %v5981 = vshrl.u32 %v5980, 7
    %v5982 = vsub.s32 0, %v5981
    %v5983 = vrot.slane %v5978, %v5982
    %v5984 = vlaneseq
    %v5985 = vshrl.u32 %v5984, 7
    %v5986 = vsub.s32 1, %v5985
    %v5987 = vrot.slane %v5978, %v5986
    %v5988 = vlaneseq
    %v5989 = vshrl.u32 %v5988, 7
    %v5990 = vsub.s32 2, %v5989
    %v5991 = vrot.slane %v5978, %v5990
    %v5992 = vlaneseq
    %v5993 = vshrl.u32 %v5992, 7
    %v5994 = vsub.s32 3, %v5993
    %v5995 = vrot.slane %v5978, %v5994
    %v6128 = vunpack.c.l.b16 %v5849
    %v6129 = vunpack.c.h.b16 %v5849
    %v6130 = vunpack.c.l.b16 %v5850
    %v6131 = vunpack.c.h.b16 %v5850
    %v6132 = vunpack.c.l.b16 %v5851
    %v6133 = vunpack.c.h.b16 %v5851
    %v6134 = vunpack.c.l.b16 %v5852
    %v6135 = vunpack.c.h.b16 %v5852
    %v6136 = vunpack.c.l.b16 %v5853
    %v6137 = vunpack.c.h.b16 %v5853
    %v6138 = vunpack.c.l.b16 %v5854
    %v6139 = vunpack.c.h.b16 %v5854
    %v6140 = vunpack.c.l.b16 %v5855
    %v6141 = vunpack.c.h.b16 %v5855
    %v6142 = vunpack.c.l.b16 %v5856
    %v6143 = vunpack.c.h.b16 %v5856
    %v6144 = vunpack.c.l.b16 %v5857
    %v6145 = vunpack.c.h.b16 %v5857
    %v6146 = vunpack.c.l.b16 %v5858
    %v6147 = vunpack.c.h.b16 %v5858
    %v6148 = vunpack.c.l.b16 %v5859
    %v6149 = vunpack.c.h.b16 %v5859
    %v6150 = vunpack.c.l.b16 %v5860
    %v6151 = vunpack.c.h.b16 %v5860
    %v6152 = vunpack.c.l.b16 %v5861
    %v6153 = vunpack.c.h.b16 %v5861
    %v6154 = vunpack.c.l.b16 %v5862
    %v6155 = vunpack.c.h.b16 %v5862
    %v6156 = vunpack.c.l.b16 %v5863
    %v6157 = vunpack.c.h.b16 %v5863
    %v6158 = vunpack.c.l.b16 %v5864
    %v6159 = vunpack.c.h.b16 %v5864
    %v6160 = vunpack.c.l.b16 %v5865
    %v6161 = vunpack.c.h.b16 %v5865
    %v6162 = vunpack.c.l.b16 %v5866
    %v6163 = vunpack.c.h.b16 %v5866
    %v6164 = vunpack.c.l.b16 %v5867
    %v6165 = vunpack.c.h.b16 %v5867
    %v6166 = vunpack.c.l.b16 %v5868
    %v6167 = vunpack.c.h.b16 %v5868
    %v6168 = vunpack.c.l.b16 %v5869
    %v6169 = vunpack.c.h.b16 %v5869
    %v6170 = vunpack.c.l.b16 %v5870
    %v6171 = vunpack.c.h.b16 %v5870
    %v6172 = vunpack.c.l.b16 %v5871
    %v6173 = vunpack.c.h.b16 %v5871
    %v6174 = vunpack.c.l.b16 %v5872
    %v6175 = vunpack.c.h.b16 %v5872
    %v6176 = vunpack.c.l.b16 %v5873
    %v6177 = vunpack.c.h.b16 %v5873
    %v6178 = vunpack.c.l.b16 %v5874
    %v6179 = vunpack.c.h.b16 %v5874
    %v6180 = vunpack.c.l.b16 %v5875
    %v6181 = vunpack.c.h.b16 %v5875
    %v6182 = vunpack.c.l.b16 %v5876
    %v6183 = vunpack.c.h.b16 %v5876
    %v6184 = vunpack.c.l.b16 %v5877
    %v6185 = vunpack.c.h.b16 %v5877
    %v6186 = vunpack.c.l.b16 %v5878
    %v6187 = vunpack.c.h.b16 %v5878
    %v6188 = vunpack.c.l.b16 %v5879
    %v6189 = vunpack.c.h.b16 %v5879
    %v6190 = vunpack.c.l.b16 %v5880
    %v6191 = vunpack.c.h.b16 %v5880
    %v6192 = vunpack.c.l.b16 %v5881
    %v6193 = vunpack.c.h.b16 %v5881
    %v6194 = vunpack.c.l.b16 %v5882
    %v6195 = vunpack.c.h.b16 %v5882
    %v6196 = vunpack.c.l.b16 %v5883
    %v6197 = vunpack.c.h.b16 %v5883
    %v6198 = vunpack.c.l.b16 %v5884
    %v6199 = vunpack.c.h.b16 %v5884
    %v6200 = vunpack.c.l.b16 %v5885
    %v6201 = vunpack.c.h.b16 %v5885
    %v6202 = vunpack.c.l.b16 %v5886
    %v6203 = vunpack.c.h.b16 %v5886
    %v6204 = vunpack.c.l.b16 %v5887
    %v6205 = vunpack.c.h.b16 %v5887
    %v6206 = vunpack.c.l.b16 %v5888
    %v6207 = vunpack.c.h.b16 %v5888
    %v6208 = vunpack.c.l.b16 %v5889
    %v6209 = vunpack.c.h.b16 %v5889
    %v6210 = vunpack.c.l.b16 %v5890
    %v6211 = vunpack.c.h.b16 %v5890
    %v6212 = vunpack.c.l.b16 %v5891
    %v6213 = vunpack.c.h.b16 %v5891
    %v6214 = vunpack.c.l.b16 %v5892
    %v6215 = vunpack.c.h.b16 %v5892
    %v6216 = vunpack.c.l.b16 %v5893
    %v6217 = vunpack.c.h.b16 %v5893
    %v6218 = vunpack.c.l.b16 %v5894
    %v6219 = vunpack.c.h.b16 %v5894
    %v6220 = vunpack.c.l.b16 %v5895
    %v6221 = vunpack.c.h.b16 %v5895
    %v6222 = vunpack.c.l.b16 %v5896
    %v6223 = vunpack.c.h.b16 %v5896
    %v6224 = vunpack.c.l.b16 %v5897
    %v6225 = vunpack.c.h.b16 %v5897
    %v6226 = vunpack.c.l.b16 %v5898
    %v6227 = vunpack.c.h.b16 %v5898
    %v6228 = vunpack.c.l.b16 %v5899
    %v6229 = vunpack.c.h.b16 %v5899
    %v6230 = vunpack.c.l.b16 %v5900
    %v6231 = vunpack.c.h.b16 %v5900
    %v6232 = vunpack.c.l.b16 %v5901
    %v6233 = vunpack.c.h.b16 %v5901
    %v6234 = vunpack.c.l.b16 %v5902
    %v6235 = vunpack.c.h.b16 %v5902
    %v6236 = vunpack.c.l.b16 %v5903
    %v6237 = vunpack.c.h.b16 %v5903
    %v6238 = vunpack.c.l.b16 %v5904
    %v6239 = vunpack.c.h.b16 %v5904
    %v6240 = vunpack.c.l.b16 %v5905
    %v6241 = vunpack.c.h.b16 %v5905
    %v6242 = vunpack.c.l.b16 %v5906
    %v6243 = vunpack.c.h.b16 %v5906
    %v6244 = vunpack.c.l.b16 %v5907
    %v6245 = vunpack.c.h.b16 %v5907
    %v6246 = vunpack.c.l.b16 %v5908
    %v6247 = vunpack.c.h.b16 %v5908
    %v6248 = vunpack.c.l.b16 %v5909
    %v6249 = vunpack.c.h.b16 %v5909
    %v6250 = vunpack.c.l.b16 %v5910
    %v6251 = vunpack.c.h.b16 %v5910
    %v6252 = vunpack.c.l.b16 %v5911
    %v6253 = vunpack.c.h.b16 %v5911
    %v6254 = vunpack.c.l.b16 %v5912
    %v6255 = vunpack.c.h.b16 %v5912
    %v6256 = vunpack.c.l.b16 %v5913
    %v6257 = vunpack.c.h.b16 %v5913
    %v6258 = vunpack.c.l.b16 %v5914
    %v6259 = vunpack.c.h.b16 %v5914
    %v6260 = vunpack.c.l.b16 %v5915
    %v6261 = vunpack.c.h.b16 %v5915
    %v6262 = vunpack.c.l.b16 %v5916
    %v6263 = vunpack.c.h.b16 %v5916
    %v6264 = vunpack.c.l.b16 %v5917
    %v6265 = vunpack.c.h.b16 %v5917
    %v6266 = vunpack.c.l.b16 %v5918
    %v6267 = vunpack.c.h.b16 %v5918
    %v6268 = vunpack.c.l.b16 %v5919
    %v6269 = vunpack.c.h.b16 %v5919
    %v6270 = vunpack.c.l.b16 %v5920
    %v6271 = vunpack.c.h.b16 %v5920
    %v6272 = vunpack.c.l.b16 %v5921
    %v6273 = vunpack.c.h.b16 %v5921
    %v6274 = vunpack.c.l.b16 %v5922
    %v6275 = vunpack.c.h.b16 %v5922
    %v6276 = vunpack.c.l.b16 %v5923
    %v6277 = vunpack.c.h.b16 %v5923
    %v6278 = vunpack.c.l.b16 %v5924
    %v6279 = vunpack.c.h.b16 %v5924
    %v6280 = vunpack.c.l.b16 %v5925
    %v6281 = vunpack.c.h.b16 %v5925
    %v6282 = vunpack.c.l.b16 %v5926
    %v6283 = vunpack.c.h.b16 %v5926
    %v6284 = vunpack.c.l.b16 %v5927
    %v6285 = vunpack.c.h.b16 %v5927
    %v6286 = vunpack.c.l.b16 %v5928
    %v6287 = vunpack.c.h.b16 %v5928
    %v6288 = vunpack.c.l.b16 %v5929
    %v6289 = vunpack.c.h.b16 %v5929
    %v6290 = vunpack.c.l.b16 %v5930
    %v6291 = vunpack.c.h.b16 %v5930
    %v6292 = vunpack.c.l.b16 %v5931
    %v6293 = vunpack.c.h.b16 %v5931
    %v6294 = vunpack.c.l.b16 %v5932
    %v6295 = vunpack.c.h.b16 %v5932
    %v6296 = vunpack.c.l.b16 %v5933
    %v6297 = vunpack.c.h.b16 %v5933
    %v6298 = vunpack.c.l.b16 %v5934
    %v6299 = vunpack.c.h.b16 %v5934
    %v6300 = vunpack.c.l.b16 %v5935
    %v6301 = vunpack.c.h.b16 %v5935
    %v6302 = vunpack.c.l.b16 %v5936
    %v6303 = vunpack.c.h.b16 %v5936
    %v6304 = vunpack.c.l.b16 %v5937
    %v6305 = vunpack.c.h.b16 %v5937
    %v6306 = vunpack.c.l.b16 %v5938
    %v6307 = vunpack.c.h.b16 %v5938
    %v6308 = vunpack.c.l.b16 %v5939
    %v6309 = vunpack.c.h.b16 %v5939
    %v6310 = vunpack.c.l.b16 %v5940
    %v6311 = vunpack.c.h.b16 %v5940
    %v6312 = vunpack.c.l.b16 %v5941
    %v6313 = vunpack.c.h.b16 %v5941
    %v6314 = vunpack.c.l.b16 %v5942
    %v6315 = vunpack.c.h.b16 %v5942
    %v6316 = vunpack.c.l.b16 %v5943
    %v6317 = vunpack.c.h.b16 %v5943
    %v6318 = vunpack.c.l.b16 %v5944
    %v6319 = vunpack.c.h.b16 %v5944
    %v6320 = vunpack.c.l.b16 %v5945
    %v6321 = vunpack.c.h.b16 %v5945
    %v6322 = vunpack.c.l.b16 %v5946
    %v6323 = vunpack.c.h.b16 %v5946
    %v6324 = vunpack.c.l.b16 %v5947
    %v6325 = vunpack.c.h.b16 %v5947
    %v6326 = vunpack.c.l.b16 %v5948
    %v6327 = vunpack.c.h.b16 %v5948
    %v6328 = vunpack.c.l.b16 %v5949
    %v6329 = vunpack.c.h.b16 %v5949
    %v6330 = vunpack.c.l.b16 %v5950
    %v6331 = vunpack.c.h.b16 %v5950
    %v6332 = vunpack.c.l.b16 %v5951
    %v6333 = vunpack.c.h.b16 %v5951
    %v6334 = vunpack.c.l.b16 %v5952
    %v6335 = vunpack.c.h.b16 %v5952
    %v6336 = vunpack.c.l.b16 %v5953
    %v6337 = vunpack.c.h.b16 %v5953
    %v6338 = vunpack.c.l.b16 %v5954
    %v6339 = vunpack.c.h.b16 %v5954
    %v6340 = vunpack.c.l.b16 %v5955
    %v6341 = vunpack.c.h.b16 %v5955
    %v6342 = vunpack.c.l.b16 %v5956
    %v6343 = vunpack.c.h.b16 %v5956
    %v6344 = vunpack.c.l.b16 %v5957
    %v6345 = vunpack.c.h.b16 %v5957
    %v6346 = vunpack.c.l.b16 %v5958
    %v6347 = vunpack.c.h.b16 %v5958
    %v6348 = vunpack.c.l.b16 %v5959
    %v6349 = vunpack.c.h.b16 %v5959
    %v6350 = vunpack.c.l.b16 %v5960
    %v6351 = vunpack.c.h.b16 %v5960
    %v6352 = vunpack.c.l.b16 %v5961
    %v6353 = vunpack.c.h.b16 %v5961
    %v6354 = vunpack.c.l.b16 %v5962
    %v6355 = vunpack.c.h.b16 %v5962
    %v6356 = vunpack.c.l.b16 %v5963
    %v6357 = vunpack.c.h.b16 %v5963
    %v6358 = vunpack.c.l.b16 %v5964
    %v6359 = vunpack.c.h.b16 %v5964
    %v6360 = vunpack.c.l.b16 %v5965
    %v6361 = vunpack.c.h.b16 %v5965
    %v6362 = vunpack.c.l.b16 %v5966
    %v6363 = vunpack.c.h.b16 %v5966
    %v6364 = vunpack.c.l.b16 %v5967
    %v6365 = vunpack.c.h.b16 %v5967
    %v6366 = vunpack.c.l.b16 %v5968
    %v6367 = vunpack.c.h.b16 %v5968
    %v6368 = vunpack.c.l.b16 %v5969
    %v6369 = vunpack.c.h.b16 %v5969
    %v6370 = vunpack.c.l.b16 %v5970
    %v6371 = vunpack.c.h.b16 %v5970
    %v6372 = vunpack.c.l.b16 %v5971
    %v6373 = vunpack.c.h.b16 %v5971
    %v6374 = vunpack.c.l.b16 %v5972
    %v6375 = vunpack.c.h.b16 %v5972
    %v6376 = vunpack.c.l.b16 %v5973
    %v6377 = vunpack.c.h.b16 %v5973
    %v6378 = vunpack.c.l.b16 %v5974
    %v6379 = vunpack.c.h.b16 %v5974
    %v6380 = vunpack.c.l.b16 %v5975
    %v6381 = vunpack.c.h.b16 %v5975
    %v6382 = vunpack.c.l.b16 %v5976
    %v6383 = vunpack.c.h.b16 %v5976
    %v6384 = vpack.c.b16 %v6132, %v6128
    %v6385 = vpack.c.b16 %v6133, %v6129
    %v6386 = vpack.c.b16 %v6134, %v6130
    %v6387 = vpack.c.b16 %v6135, %v6131
    %v6388 = vpack.c.b16 %v6140, %v6136
    %v6389 = vpack.c.b16 %v6141, %v6137
    %v6390 = vpack.c.b16 %v6142, %v6138
    %v6391 = vpack.c.b16 %v6143, %v6139
    %v6392 = vpack.c.b16 %v6148, %v6144
    %v6393 = vpack.c.b16 %v6149, %v6145
    %v6394 = vpack.c.b16 %v6150, %v6146
    %v6395 = vpack.c.b16 %v6151, %v6147
    %v6396 = vpack.c.b16 %v6156, %v6152
    %v6397 = vpack.c.b16 %v6157, %v6153
    %v6398 = vpack.c.b16 %v6158, %v6154
    %v6399 = vpack.c.b16 %v6159, %v6155
    %v6400 = vpack.c.b16 %v6164, %v6160
    %v6401 = vpack.c.b16 %v6165, %v6161
    %v6402 = vpack.c.b16 %v6166, %v6162
    %v6403 = vpack.c.b16 %v6167, %v6163
    %v6404 = vpack.c.b16 %v6172, %v6168
    %v6405 = vpack.c.b16 %v6173, %v6169
    %v6406 = vpack.c.b16 %v6174, %v6170
    %v6407 = vpack.c.b16 %v6175, %v6171
    %v6408 = vpack.c.b16 %v6180, %v6176
    %v6409 = vpack.c.b16 %v6181, %v6177
    %v6410 = vpack.c.b16 %v6182, %v6178
    %v6411 = vpack.c.b16 %v6183, %v6179
    %v6412 = vpack.c.b16 %v6188, %v6184
    %v6413 = vpack.c.b16 %v6189, %v6185
    %v6414 = vpack.c.b16 %v6190, %v6186
    %v6415 = vpack.c.b16 %v6191, %v6187
    %v6416 = vpack.c.b16 %v6196, %v6192
    %v6417 = vpack.c.b16 %v6197, %v6193
    %v6418 = vpack.c.b16 %v6198, %v6194
    %v6419 = vpack.c.b16 %v6199, %v6195
    %v6420 = vpack.c.b16 %v6204, %v6200
    %v6421 = vpack.c.b16 %v6205, %v6201
    %v6422 = vpack.c.b16 %v6206, %v6202
    %v6423 = vpack.c.b16 %v6207, %v6203
    %v6424 = vpack.c.b16 %v6212, %v6208
    %v6425 = vpack.c.b16 %v6213, %v6209
    %v6426 = vpack.c.b16 %v6214, %v6210
    %v6427 = vpack.c.b16 %v6215, %v6211
    %v6428 = vpack.c.b16 %v6220, %v6216
    %v6429 = vpack.c.b16 %v6221, %v6217
    %v6430 = vpack.c.b16 %v6222, %v6218
    %v6431 = vpack.c.b16 %v6223, %v6219
    %v6432 = vpack.c.b16 %v6228, %v6224
    %v6433 = vpack.c.b16 %v6229, %v6225
    %v6434 = vpack.c.b16 %v6230, %v6226
    %v6435 = vpack.c.b16 %v6231, %v6227
    %v6436 = vpack.c.b16 %v6236, %v6232
    %v6437 = vpack.c.b16 %v6237, %v6233
    %v6438 = vpack.c.b16 %v6238, %v6234
    %v6439 = vpack.c.b16 %v6239, %v6235
    %v6440 = vpack.c.b16 %v6244, %v6240
    %v6441 = vpack.c.b16 %v6245, %v6241
    %v6442 = vpack.c.b16 %v6246, %v6242
    %v6443 = vpack.c.b16 %v6247, %v6243
    %v6444 = vpack.c.b16 %v6252, %v6248
    %v6445 = vpack.c.b16 %v6253, %v6249
    %v6446 = vpack.c.b16 %v6254, %v6250
    %v6447 = vpack.c.b16 %v6255, %v6251
    %v6448 = vpack.c.b16 %v6260, %v6256
    %v6449 = vpack.c.b16 %v6261, %v6257
    %v6450 = vpack.c.b16 %v6262, %v6258
    %v6451 = vpack.c.b16 %v6263, %v6259
    %v6452 = vpack.c.b16 %v6268, %v6264
    %v6453 = vpack.c.b16 %v6269, %v6265
    %v6454 = vpack.c.b16 %v6270, %v6266
    %v6455 = vpack.c.b16 %v6271, %v6267
    %v6456 = vpack.c.b16 %v6276, %v6272
    %v6457 = vpack.c.b16 %v6277, %v6273
    %v6458 = vpack.c.b16 %v6278, %v6274
    %v6459 = vpack.c.b16 %v6279, %v6275
    %v6460 = vpack.c.b16 %v6284, %v6280
    %v6461 = vpack.c.b16 %v6285, %v6281
    %v6462 = vpack.c.b16 %v6286, %v6282
    %v6463 = vpack.c.b16 %v6287, %v6283
    %v6464 = vpack.c.b16 %v6292, %v6288
    %v6465 = vpack.c.b16 %v6293, %v6289
    %v6466 = vpack.c.b16 %v6294, %v6290
    %v6467 = vpack.c.b16 %v6295, %v6291
    %v6468 = vpack.c.b16 %v6300, %v6296
    %v6469 = vpack.c.b16 %v6301, %v6297
    %v6470 = vpack.c.b16 %v6302, %v6298
    %v6471 = vpack.c.b16 %v6303, %v6299
    %v6472 = vpack.c.b16 %v6308, %v6304
    %v6473 = vpack.c.b16 %v6309, %v6305
    %v6474 = vpack.c.b16 %v6310, %v6306
    %v6475 = vpack.c.b16 %v6311, %v6307
    %v6476 = vpack.c.b16 %v6316, %v6312
    %v6477 = vpack.c.b16 %v6317, %v6313
    %v6478 = vpack.c.b16 %v6318, %v6314
    %v6479 = vpack.c.b16 %v6319, %v6315
    %v6480 = vpack.c.b16 %v6324, %v6320
    %v6481 = vpack.c.b16 %v6325, %v6321
    %v6482 = vpack.c.b16 %v6326, %v6322
    %v6483 = vpack.c.b16 %v6327, %v6323
    %v6484 = vpack.c.b16 %v6332, %v6328
    %v6485 = vpack.c.b16 %v6333, %v6329
    %v6486 = vpack.c.b16 %v6334, %v6330
    %v6487 = vpack.c.b16 %v6335, %v6331
    %v6488 = vpack.c.b16 %v6340, %v6336
    %v6489 = vpack.c.b16 %v6341, %v6337
    %v6490 = vpack.c.b16 %v6342, %v6338
    %v6491 = vpack.c.b16 %v6343, %v6339
    %v6492 = vpack.c.b16 %v6348, %v6344
    %v6493 = vpack.c.b16 %v6349, %v6345
    %v6494 = vpack.c.b16 %v6350, %v6346
    %v6495 = vpack.c.b16 %v6351, %v6347
    %v6496 = vpack.c.b16 %v6356, %v6352
    %v6497 = vpack.c.b16 %v6357, %v6353
    %v6498 = vpack.c.b16 %v6358, %v6354
    %v6499 = vpack.c.b16 %v6359, %v6355
    %v6500 = vpack.c.b16 %v6364, %v6360
    %v6501 = vpack.c.b16 %v6365, %v6361
    %v6502 = vpack.c.b16 %v6366, %v6362
    %v6503 = vpack.c.b16 %v6367, %v6363
    %v6504 = vpack.c.b16 %v6372, %v6368
    %v6505 = vpack.c.b16 %v6373, %v6369
    %v6506 = vpack.c.b16 %v6374, %v6370
    %v6507 = vpack.c.b16 %v6375, %v6371
    %v6508 = vpack.c.b16 %v6380, %v6376
    %v6509 = vpack.c.b16 %v6381, %v6377
    %v6510 = vpack.c.b16 %v6382, %v6378
    %v6511 = vpack.c.b16 %v6383, %v6379
    %6640 = vmatprep.subr.bf16.mxu0 %v6385
    %6641 = vmatpush1.bf16.msra.mxu0 %v6384
    %6642 = vmatprep.subr.bf16.mxu0 %v6389
    %6643 = vmatpush1.bf16.msra.mxu0 %v6388
    %6644 = vmatprep.subr.bf16.mxu0 %v6393
    %6645 = vmatpush1.bf16.msra.mxu0 %v6392
    %6646 = vmatprep.subr.bf16.mxu0 %v6397
    %6647 = vmatpush1.bf16.msra.mxu0 %v6396
    %6648 = vmatprep.subr.bf16.mxu0 %v6401
    %6649 = vmatpush1.bf16.msra.mxu0 %v6400
    %6650 = vmatprep.subr.bf16.mxu0 %v6405
    %6651 = vmatpush1.bf16.msra.mxu0 %v6404
    %6652 = vmatprep.subr.bf16.mxu0 %v6409
    %6653 = vmatpush1.bf16.msra.mxu0 %v6408
    %6654 = vmatprep.subr.bf16.mxu0 %v6413
    %6655 = vmatpush1.bf16.msra.mxu0 %v6412
    %6656 = vmatprep.subr.bf16.mxu0 %v6417
    %6657 = vmatpush1.bf16.msra.mxu0 %v6416
    %6658 = vmatprep.subr.bf16.mxu0 %v6421
    %6659 = vmatpush1.bf16.msra.mxu0 %v6420
    %6660 = vmatprep.subr.bf16.mxu0 %v6425
    %6661 = vmatpush1.bf16.msra.mxu0 %v6424
    %6662 = vmatprep.subr.bf16.mxu0 %v6429
    %6663 = vmatpush1.bf16.msra.mxu0 %v6428
    %6664 = vmatprep.subr.bf16.mxu0 %v6433
    %6665 = vmatpush1.bf16.msra.mxu0 %v6432
    %6666 = vmatprep.subr.bf16.mxu0 %v6437
    %6667 = vmatpush1.bf16.msra.mxu0 %v6436
    %6668 = vmatprep.subr.bf16.mxu0 %v6441
    %6669 = vmatpush1.bf16.msra.mxu0 %v6440
    %6670 = vmatprep.subr.bf16.mxu0 %v6445
    %6671 = vmatpush1.bf16.msra.mxu0 %v6444
    %6672 = vmatprep.mubr.bf16.mxu0 %v5845
    %6673 = vmatmul.mubr.bf16.gmra.mrb[0].mxu0 %v5844
    %v6674 = vpop.f32.mrb[0].mxu0
    %v6675 = vadd.f32 %v5983, %v6674
    %v6676 = vpop.f32.mrb[0].mxu0
    %v6677 = vadd.f32 %v5987, %v6676
    %v6678 = vpop.f32.mrb[0].mxu0
    %v6679 = vpop.f32.mrb[0].mxu0
    %6680 = vdwg.mxu0
    %6681 = vmatprep.subr.bf16.mxu0 %v6449
    %6682 = vmatpush1.bf16.msra.mxu0 %v6448
    %6683 = vmatprep.subr.bf16.mxu0 %v6453
    %6684 = vmatpush1.bf16.msra.mxu0 %v6452
    %6685 = vmatprep.subr.bf16.mxu0 %v6457
    %6686 = vmatpush1.bf16.msra.mxu0 %v6456
    %6687 = vmatprep.subr.bf16.mxu0 %v6461
    %6688 = vmatpush1.bf16.msra.mxu0 %v6460
    %6689 = vmatprep.subr.bf16.mxu0 %v6465
    %6690 = vmatpush1.bf16.msra.mxu0 %v6464
    %6691 = vmatprep.subr.bf16.mxu0 %v6469
    %6692 = vmatpush1.bf16.msra.mxu0 %v6468
    %6693 = vmatprep.subr.bf16.mxu0 %v6473
    %6694 = vmatpush1.bf16.msra.mxu0 %v6472
    %6695 = vmatprep.subr.bf16.mxu0 %v6477
    %6696 = vmatpush1.bf16.msra.mxu0 %v6476
    %6697 = vmatprep.subr.bf16.mxu0 %v6481
    %6698 = vmatpush1.bf16.msra.mxu0 %v6480
    %6699 = vmatprep.subr.bf16.mxu0 %v6485
    %6700 = vmatpush1.bf16.msra.mxu0 %v6484
    %6701 = vmatprep.subr.bf16.mxu0 %v6489
    %6702 = vmatpush1.bf16.msra.mxu0 %v6488
    %6703 = vmatprep.subr.bf16.mxu0 %v6493
    %6704 = vmatpush1.bf16.msra.mxu0 %v6492
    %6705 = vmatprep.subr.bf16.mxu0 %v6497
    %6706 = vmatpush1.bf16.msra.mxu0 %v6496
    %6707 = vmatprep.subr.bf16.mxu0 %v6501
    %6708 = vmatpush1.bf16.msra.mxu0 %v6500
    %6709 = vmatprep.subr.bf16.mxu0 %v6505
    %6710 = vmatpush1.bf16.msra.mxu0 %v6504
    %6711 = vmatprep.subr.bf16.mxu0 %v6509
    %6712 = vmatpush1.bf16.msra.mxu0 %v6508
    %6713 = vmatprep.mubr.bf16.mxu0 %v5847
    %6714 = vmatmul.mubr.bf16.gmra.mrb[0].mxu0 %v5846
    %v6715 = vpop.f32.mrb[0].mxu0
    %v6716 = vadd.f32 %v6675, %v6715
    %v6717 = vpop.f32.mrb[0].mxu0
    %v6718 = vadd.f32 %v6677, %v6717
    %v6719 = vpop.f32.mrb[0].mxu0
    %v6720 = vpop.f32.mrb[0].mxu0
    %6721 = vdwg.mxu0
    %6722 = vmatprep.subr.bf16.mxu0 %v6387
    %6723 = vmatpush1.bf16.msra.mxu0 %v6386
    %6724 = vmatprep.subr.bf16.mxu0 %v6391
    %6725 = vmatpush1.bf16.msra.mxu0 %v6390
    %6726 = vmatprep.subr.bf16.mxu0 %v6395
    %6727 = vmatpush1.bf16.msra.mxu0 %v6394
    %6728 = vmatprep.subr.bf16.mxu0 %v6399
    %6729 = vmatpush1.bf16.msra.mxu0 %v6398
    %6730 = vmatprep.subr.bf16.mxu0 %v6403
    %6731 = vmatpush1.bf16.msra.mxu0 %v6402
    %6732 = vmatprep.subr.bf16.mxu0 %v6407
    %6733 = vmatpush1.bf16.msra.mxu0 %v6406
    %6734 = vmatprep.subr.bf16.mxu0 %v6411
    %6735 = vmatpush1.bf16.msra.mxu0 %v6410
    %6736 = vmatprep.subr.bf16.mxu0 %v6415
    %6737 = vmatpush1.bf16.msra.mxu0 %v6414
    %6738 = vmatprep.subr.bf16.mxu0 %v6419
    %6739 = vmatpush1.bf16.msra.mxu0 %v6418
    %6740 = vmatprep.subr.bf16.mxu0 %v6423
    %6741 = vmatpush1.bf16.msra.mxu0 %v6422
    %6742 = vmatprep.subr.bf16.mxu0 %v6427
    %6743 = vmatpush1.bf16.msra.mxu0 %v6426
    %6744 = vmatprep.subr.bf16.mxu0 %v6431
    %6745 = vmatpush1.bf16.msra.mxu0 %v6430
    %6746 = vmatprep.subr.bf16.mxu0 %v6435
    %6747 = vmatpush1.bf16.msra.mxu0 %v6434
    %6748 = vmatprep.subr.bf16.mxu0 %v6439
    %6749 = vmatpush1.bf16.msra.mxu0 %v6438
    %6750 = vmatprep.subr.bf16.mxu0 %v6443
    %6751 = vmatpush1.bf16.msra.mxu0 %v6442
    %6752 = vmatprep.subr.bf16.mxu0 %v6447
    %6753 = vmatpush1.bf16.msra.mxu0 %v6446
    %6754 = vmatprep.mubr.bf16.mxu0 %v5845
    %6755 = vmatmul.mubr.bf16.gmra.mrb[0].mxu0 %v5844
    %v6756 = vpop.f32.mrb[0].mxu0
    %v6757 = vadd.f32 %v5991, %v6756
    %v6758 = vpop.f32.mrb[0].mxu0
    %v6759 = vadd.f32 %v5995, %v6758
    %v6760 = vpop.f32.mrb[0].mxu0
    %v6761 = vpop.f32.mrb[0].mxu0
    %6762 = vdwg.mxu0
    %6763 = vmatprep.subr.bf16.mxu0 %v6451
    %6764 = vmatpush1.bf16.msra.mxu0 %v6450
    %6765 = vmatprep.subr.bf16.mxu0 %v6455
    %6766 = vmatpush1.bf16.msra.mxu0 %v6454
    %6767 = vmatprep.subr.bf16.mxu0 %v6459
    %6768 = vmatpush1.bf16.msra.mxu0 %v6458
    %6769 = vmatprep.subr.bf16.mxu0 %v6463
    %6770 = vmatpush1.bf16.msra.mxu0 %v6462
    %6771 = vmatprep.subr.bf16.mxu0 %v6467
    %6772 = vmatpush1.bf16.msra.mxu0 %v6466
    %6773 = vmatprep.subr.bf16.mxu0 %v6471
    %6774 = vmatpush1.bf16.msra.mxu0 %v6470
    %6775 = vmatprep.subr.bf16.mxu0 %v6475
    %6776 = vmatpush1.bf16.msra.mxu0 %v6474
    %6777 = vmatprep.subr.bf16.mxu0 %v6479
    %6778 = vmatpush1.bf16.msra.mxu0 %v6478
    %6779 = vmatprep.subr.bf16.mxu0 %v6483
    %6780 = vmatpush1.bf16.msra.mxu0 %v6482
    %6781 = vmatprep.subr.bf16.mxu0 %v6487
    %6782 = vmatpush1.bf16.msra.mxu0 %v6486
    %6783 = vmatprep.subr.bf16.mxu0 %v6491
    %6784 = vmatpush1.bf16.msra.mxu0 %v6490
    %6785 = vmatprep.subr.bf16.mxu0 %v6495
    %6786 = vmatpush1.bf16.msra.mxu0 %v6494
    %6787 = vmatprep.subr.bf16.mxu0 %v6499
    %6788 = vmatpush1.bf16.msra.mxu0 %v6498
    %6789 = vmatprep.subr.bf16.mxu0 %v6503
    %6790 = vmatpush1.bf16.msra.mxu0 %v6502
    %6791 = vmatprep.subr.bf16.mxu0 %v6507
    %6792 = vmatpush1.bf16.msra.mxu0 %v6506
    %6793 = vmatprep.subr.bf16.mxu0 %v6511
    %6794 = vmatpush1.bf16.msra.mxu0 %v6510
    %6795 = vmatprep.mubr.bf16.mxu0 %v5847
    %6796 = vmatmul.mubr.bf16.gmra.mrb[0].mxu0 %v5846
    %v6797 = vpop.f32.mrb[0].mxu0
    %v6798 = vadd.f32 %v6757, %v6797
    %v6799 = vpop.f32.mrb[0].mxu0
    %v6800 = vadd.f32 %v6759, %v6799
    %v6801 = vpop.f32.mrb[0].mxu0
    %v6802 = vpop.f32.mrb[0].mxu0
    %6803 = vdwg.mxu0
    %v6804 = vmax.f32 %v6716, 0.0
    %v6805 = vmax.f32 %v6718, 0.0
    %v6806 = vmax.f32 %v6798, 0.0
    %v6807 = vmax.f32 %v6800, 0.0
    %v6808 = vadd.f32 %v6804, %v4876
    %v6809 = vadd.f32 %v6805, %v4877
    %v6810 = vadd.f32 %v6806, %v4878
    %v6811 = vadd.f32 %v6807, %v4879
    %v6812 = vpack.c.bf16 %v6808, %v6808
    %v6813 = vpack.c.bf16 %v6809, %v6809
    %v6814 = vpack.c.bf16 %v6810, %v6810
    %v6815 = vpack.c.bf16 %v6811, %v6811
    %s6816 = scalar_lea.vmem [#allocation2], 7168
    %v6817 = vld [vmem:[%s6816] sm:$0xff]
    %v6818 = vld [vmem:[%s6816 + $0x8] sm:$0xff]
    %v6819 = vld [vmem:[%s6816 + $0x10] sm:$0xff]
    %v6820 = vld [vmem:[%s6816 + $0x18] sm:$0xff]
    %v6821 = vld [vmem:[%s6816 + $0x20] sm:$0xff]
    %v6822 = vld [vmem:[%s6816 + $0x28] sm:$0xff]
    %v6823 = vld [vmem:[%s6816 + $0x30] sm:$0xff]
    %v6824 = vld [vmem:[%s6816 + $0x38] sm:$0xff]
    %v6825 = vld [vmem:[%s6816 + $0x40] sm:$0xff]
    %v6826 = vld [vmem:[%s6816 + $0x48] sm:$0xff]
    %v6827 = vld [vmem:[%s6816 + $0x50] sm:$0xff]
    %v6828 = vld [vmem:[%s6816 + $0x58] sm:$0xff]
    %v6829 = vld [vmem:[%s6816 + $0x60] sm:$0xff]
    %v6830 = vld [vmem:[%s6816 + $0x68] sm:$0xff]
    %v6831 = vld [vmem:[%s6816 + $0x70] sm:$0xff]
    %v6832 = vld [vmem:[%s6816 + $0x78] sm:$0xff]
    %v6833 = vld [vmem:[%s6816 + $0x80] sm:$0xff]
    %v6834 = vld [vmem:[%s6816 + $0x88] sm:$0xff]
    %v6835 = vld [vmem:[%s6816 + $0x90] sm:$0xff]
    %v6836 = vld [vmem:[%s6816 + $0x98] sm:$0xff]
    %v6837 = vld [vmem:[%s6816 + $0xa0] sm:$0xff]
    %v6838 = vld [vmem:[%s6816 + $0xa8] sm:$0xff]
    %v6839 = vld [vmem:[%s6816 + $0xb0] sm:$0xff]
    %v6840 = vld [vmem:[%s6816 + $0xb8] sm:$0xff]
    %v6841 = vld [vmem:[%s6816 + $0xc0] sm:$0xff]
    %v6842 = vld [vmem:[%s6816 + $0xc8] sm:$0xff]
    %v6843 = vld [vmem:[%s6816 + $0xd0] sm:$0xff]
    %v6844 = vld [vmem:[%s6816 + $0xd8] sm:$0xff]
    %v6845 = vld [vmem:[%s6816 + $0xe0] sm:$0xff]
    %v6846 = vld [vmem:[%s6816 + $0xe8] sm:$0xff]
    %v6847 = vld [vmem:[%s6816 + $0xf0] sm:$0xff]
    %v6848 = vld [vmem:[%s6816 + $0xf8] sm:$0xff]
    %v6849 = vld [vmem:[%s6816 + $0x100] sm:$0xff]
    %v6850 = vld [vmem:[%s6816 + $0x108] sm:$0xff]
    %v6851 = vld [vmem:[%s6816 + $0x110] sm:$0xff]
    %v6852 = vld [vmem:[%s6816 + $0x118] sm:$0xff]
    %v6853 = vld [vmem:[%s6816 + $0x120] sm:$0xff]
    %v6854 = vld [vmem:[%s6816 + $0x128] sm:$0xff]
    %v6855 = vld [vmem:[%s6816 + $0x130] sm:$0xff]
    %v6856 = vld [vmem:[%s6816 + $0x138] sm:$0xff]
    %v6857 = vld [vmem:[%s6816 + $0x140] sm:$0xff]
    %v6858 = vld [vmem:[%s6816 + $0x148] sm:$0xff]
    %v6859 = vld [vmem:[%s6816 + $0x150] sm:$0xff]
    %v6860 = vld [vmem:[%s6816 + $0x158] sm:$0xff]
    %v6861 = vld [vmem:[%s6816 + $0x160] sm:$0xff]
    %v6862 = vld [vmem:[%s6816 + $0x168] sm:$0xff]
    %v6863 = vld [vmem:[%s6816 + $0x170] sm:$0xff]
    %v6864 = vld [vmem:[%s6816 + $0x178] sm:$0xff]
    %v6865 = vld [vmem:[%s6816 + $0x180] sm:$0xff]
    %v6866 = vld [vmem:[%s6816 + $0x188] sm:$0xff]
    %v6867 = vld [vmem:[%s6816 + $0x190] sm:$0xff]
    %v6868 = vld [vmem:[%s6816 + $0x198] sm:$0xff]
    %v6869 = vld [vmem:[%s6816 + $0x1a0] sm:$0xff]
    %v6870 = vld [vmem:[%s6816 + $0x1a8] sm:$0xff]
    %v6871 = vld [vmem:[%s6816 + $0x1b0] sm:$0xff]
    %v6872 = vld [vmem:[%s6816 + $0x1b8] sm:$0xff]
    %v6873 = vld [vmem:[%s6816 + $0x1c0] sm:$0xff]
    %v6874 = vld [vmem:[%s6816 + $0x1c8] sm:$0xff]
    %v6875 = vld [vmem:[%s6816 + $0x1d0] sm:$0xff]
    %v6876 = vld [vmem:[%s6816 + $0x1d8] sm:$0xff]
    %v6877 = vld [vmem:[%s6816 + $0x1e0] sm:$0xff]
    %v6878 = vld [vmem:[%s6816 + $0x1e8] sm:$0xff]
    %v6879 = vld [vmem:[%s6816 + $0x1f0] sm:$0xff]
    %v6880 = vld [vmem:[%s6816 + $0x1f8] sm:$0xff]
    %v6881 = vld [vmem:[%s6816 + $0x200] sm:$0xff]
    %v6882 = vld [vmem:[%s6816 + $0x208] sm:$0xff]
    %v6883 = vld [vmem:[%s6816 + $0x210] sm:$0xff]
    %v6884 = vld [vmem:[%s6816 + $0x218] sm:$0xff]
    %v6885 = vld [vmem:[%s6816 + $0x220] sm:$0xff]
    %v6886 = vld [vmem:[%s6816 + $0x228] sm:$0xff]
    %v6887 = vld [vmem:[%s6816 + $0x230] sm:$0xff]
    %v6888 = vld [vmem:[%s6816 + $0x238] sm:$0xff]
    %v6889 = vld [vmem:[%s6816 + $0x240] sm:$0xff]
    %v6890 = vld [vmem:[%s6816 + $0x248] sm:$0xff]
    %v6891 = vld [vmem:[%s6816 + $0x250] sm:$0xff]
    %v6892 = vld [vmem:[%s6816 + $0x258] sm:$0xff]
    %v6893 = vld [vmem:[%s6816 + $0x260] sm:$0xff]
    %v6894 = vld [vmem:[%s6816 + $0x268] sm:$0xff]
    %v6895 = vld [vmem:[%s6816 + $0x270] sm:$0xff]
    %v6896 = vld [vmem:[%s6816 + $0x278] sm:$0xff]
    %v6897 = vld [vmem:[%s6816 + $0x280] sm:$0xff]
    %v6898 = vld [vmem:[%s6816 + $0x288] sm:$0xff]
    %v6899 = vld [vmem:[%s6816 + $0x290] sm:$0xff]
    %v6900 = vld [vmem:[%s6816 + $0x298] sm:$0xff]
    %v6901 = vld [vmem:[%s6816 + $0x2a0] sm:$0xff]
    %v6902 = vld [vmem:[%s6816 + $0x2a8] sm:$0xff]
    %v6903 = vld [vmem:[%s6816 + $0x2b0] sm:$0xff]
    %v6904 = vld [vmem:[%s6816 + $0x2b8] sm:$0xff]
    %v6905 = vld [vmem:[%s6816 + $0x2c0] sm:$0xff]
    %v6906 = vld [vmem:[%s6816 + $0x2c8] sm:$0xff]
    %v6907 = vld [vmem:[%s6816 + $0x2d0] sm:$0xff]
    %v6908 = vld [vmem:[%s6816 + $0x2d8] sm:$0xff]
    %v6909 = vld [vmem:[%s6816 + $0x2e0] sm:$0xff]
    %v6910 = vld [vmem:[%s6816 + $0x2e8] sm:$0xff]
    %v6911 = vld [vmem:[%s6816 + $0x2f0] sm:$0xff]
    %v6912 = vld [vmem:[%s6816 + $0x2f8] sm:$0xff]
    %v6913 = vld [vmem:[%s6816 + $0x300] sm:$0xff]
    %v6914 = vld [vmem:[%s6816 + $0x308] sm:$0xff]
    %v6915 = vld [vmem:[%s6816 + $0x310] sm:$0xff]
    %v6916 = vld [vmem:[%s6816 + $0x318] sm:$0xff]
    %v6917 = vld [vmem:[%s6816 + $0x320] sm:$0xff]
    %v6918 = vld [vmem:[%s6816 + $0x328] sm:$0xff]
    %v6919 = vld [vmem:[%s6816 + $0x330] sm:$0xff]
    %v6920 = vld [vmem:[%s6816 + $0x338] sm:$0xff]
    %v6921 = vld [vmem:[%s6816 + $0x340] sm:$0xff]
    %v6922 = vld [vmem:[%s6816 + $0x348] sm:$0xff]
    %v6923 = vld [vmem:[%s6816 + $0x350] sm:$0xff]
    %v6924 = vld [vmem:[%s6816 + $0x358] sm:$0xff]
    %v6925 = vld [vmem:[%s6816 + $0x360] sm:$0xff]
    %v6926 = vld [vmem:[%s6816 + $0x368] sm:$0xff]
    %v6927 = vld [vmem:[%s6816 + $0x370] sm:$0xff]
    %v6928 = vld [vmem:[%s6816 + $0x378] sm:$0xff]
    %v6929 = vld [vmem:[%s6816 + $0x380] sm:$0xff]
    %v6930 = vld [vmem:[%s6816 + $0x388] sm:$0xff]
    %v6931 = vld [vmem:[%s6816 + $0x390] sm:$0xff]
    %v6932 = vld [vmem:[%s6816 + $0x398] sm:$0xff]
    %v6933 = vld [vmem:[%s6816 + $0x3a0] sm:$0xff]
    %v6934 = vld [vmem:[%s6816 + $0x3a8] sm:$0xff]
    %v6935 = vld [vmem:[%s6816 + $0x3b0] sm:$0xff]
    %v6936 = vld [vmem:[%s6816 + $0x3b8] sm:$0xff]
    %v6937 = vld [vmem:[%s6816 + $0x3c0] sm:$0xff]
    %v6938 = vld [vmem:[%s6816 + $0x3c8] sm:$0xff]
    %v6939 = vld [vmem:[%s6816 + $0x3d0] sm:$0xff]
    %v6940 = vld [vmem:[%s6816 + $0x3d8] sm:$0xff]
    %v6941 = vld [vmem:[%s6816 + $0x3e0] sm:$0xff]
    %v6942 = vld [vmem:[%s6816 + $0x3e8] sm:$0xff]
    %v6943 = vld [vmem:[%s6816 + $0x3f0] sm:$0xff]
    %v6944 = vld [vmem:[%s6816 + $0x3f8] sm:$0xff]
    %s6945 = scalar_lea.vmem [#allocation4], 28
    %v6946 = vld [vmem:[%s6945] sm:$0xf]
    %v6948 = vlaneseq
    %v6949 = vshrl.u32 %v6948, 7
    %v6950 = vsub.s32 0, %v6949
    %v6951 = vrot.slane %v6946, %v6950
    %v6952 = vlaneseq
    %v6953 = vshrl.u32 %v6952, 7
    %v6954 = vsub.s32 1, %v6953
    %v6955 = vrot.slane %v6946, %v6954
    %v6956 = vlaneseq
    %v6957 = vshrl.u32 %v6956, 7
    %v6958 = vsub.s32 2, %v6957
    %v6959 = vrot.slane %v6946, %v6958
    %v6960 = vlaneseq
    %v6961 = vshrl.u32 %v6960, 7
    %v6962 = vsub.s32 3, %v6961
    %v6963 = vrot.slane %v6946, %v6962
    %v7096 = vunpack.c.l.b16 %v6817
    %v7097 = vunpack.c.h.b16 %v6817
    %v7098 = vunpack.c.l.b16 %v6818
    %v7099 = vunpack.c.h.b16 %v6818
    %v7100 = vunpack.c.l.b16 %v6819
    %v7101 = vunpack.c.h.b16 %v6819
    %v7102 = vunpack.c.l.b16 %v6820
    %v7103 = vunpack.c.h.b16 %v6820
    %v7104 = vunpack.c.l.b16 %v6821
    %v7105 = vunpack.c.h.b16 %v6821
    %v7106 = vunpack.c.l.b16 %v6822
    %v7107 = vunpack.c.h.b16 %v6822
    %v7108 = vunpack.c.l.b16 %v6823
    %v7109 = vunpack.c.h.b16 %v6823
    %v7110 = vunpack.c.l.b16 %v6824
    %v7111 = vunpack.c.h.b16 %v6824
    %v7112 = vunpack.c.l.b16 %v6825
    %v7113 = vunpack.c.h.b16 %v6825
    %v7114 = vunpack.c.l.b16 %v6826
    %v7115 = vunpack.c.h.b16 %v6826
    %v7116 = vunpack.c.l.b16 %v6827
    %v7117 = vunpack.c.h.b16 %v6827
    %v7118 = vunpack.c.l.b16 %v6828
    %v7119 = vunpack.c.h.b16 %v6828
    %v7120 = vunpack.c.l.b16 %v6829
    %v7121 = vunpack.c.h.b16 %v6829
    %v7122 = vunpack.c.l.b16 %v6830
    %v7123 = vunpack.c.h.b16 %v6830
    %v7124 = vunpack.c.l.b16 %v6831
    %v7125 = vunpack.c.h.b16 %v6831
    %v7126 = vunpack.c.l.b16 %v6832
    %v7127 = vunpack.c.h.b16 %v6832
    %v7128 = vunpack.c.l.b16 %v6833
    %v7129 = vunpack.c.h.b16 %v6833
    %v7130 = vunpack.c.l.b16 %v6834
    %v7131 = vunpack.c.h.b16 %v6834
    %v7132 = vunpack.c.l.b16 %v6835
    %v7133 = vunpack.c.h.b16 %v6835
    %v7134 = vunpack.c.l.b16 %v6836
    %v7135 = vunpack.c.h.b16 %v6836
    %v7136 = vunpack.c.l.b16 %v6837
    %v7137 = vunpack.c.h.b16 %v6837
    %v7138 = vunpack.c.l.b16 %v6838
    %v7139 = vunpack.c.h.b16 %v6838
    %v7140 = vunpack.c.l.b16 %v6839
    %v7141 = vunpack.c.h.b16 %v6839
    %v7142 = vunpack.c.l.b16 %v6840
    %v7143 = vunpack.c.h.b16 %v6840
    %v7144 = vunpack.c.l.b16 %v6841
    %v7145 = vunpack.c.h.b16 %v6841
    %v7146 = vunpack.c.l.b16 %v6842
    %v7147 = vunpack.c.h.b16 %v6842
    %v7148 = vunpack.c.l.b16 %v6843
    %v7149 = vunpack.c.h.b16 %v6843
    %v7150 = vunpack.c.l.b16 %v6844
    %v7151 = vunpack.c.h.b16 %v6844
    %v7152 = vunpack.c.l.b16 %v6845
    %v7153 = vunpack.c.h.b16 %v6845
    %v7154 = vunpack.c.l.b16 %v6846
    %v7155 = vunpack.c.h.b16 %v6846
    %v7156 = vunpack.c.l.b16 %v6847
    %v7157 = vunpack.c.h.b16 %v6847
    %v7158 = vunpack.c.l.b16 %v6848
    %v7159 = vunpack.c.h.b16 %v6848
    %v7160 = vunpack.c.l.b16 %v6849
    %v7161 = vunpack.c.h.b16 %v6849
    %v7162 = vunpack.c.l.b16 %v6850
    %v7163 = vunpack.c.h.b16 %v6850
    %v7164 = vunpack.c.l.b16 %v6851
    %v7165 = vunpack.c.h.b16 %v6851
    %v7166 = vunpack.c.l.b16 %v6852
    %v7167 = vunpack.c.h.b16 %v6852
    %v7168 = vunpack.c.l.b16 %v6853
    %v7169 = vunpack.c.h.b16 %v6853
    %v7170 = vunpack.c.l.b16 %v6854
    %v7171 = vunpack.c.h.b16 %v6854
    %v7172 = vunpack.c.l.b16 %v6855
    %v7173 = vunpack.c.h.b16 %v6855
    %v7174 = vunpack.c.l.b16 %v6856
    %v7175 = vunpack.c.h.b16 %v6856
    %v7176 = vunpack.c.l.b16 %v6857
    %v7177 = vunpack.c.h.b16 %v6857
    %v7178 = vunpack.c.l.b16 %v6858
    %v7179 = vunpack.c.h.b16 %v6858
    %v7180 = vunpack.c.l.b16 %v6859
    %v7181 = vunpack.c.h.b16 %v6859
    %v7182 = vunpack.c.l.b16 %v6860
    %v7183 = vunpack.c.h.b16 %v6860
    %v7184 = vunpack.c.l.b16 %v6861
    %v7185 = vunpack.c.h.b16 %v6861
    %v7186 = vunpack.c.l.b16 %v6862
    %v7187 = vunpack.c.h.b16 %v6862
    %v7188 = vunpack.c.l.b16 %v6863
    %v7189 = vunpack.c.h.b16 %v6863
    %v7190 = vunpack.c.l.b16 %v6864
    %v7191 = vunpack.c.h.b16 %v6864
    %v7192 = vunpack.c.l.b16 %v6865
    %v7193 = vunpack.c.h.b16 %v6865
    %v7194 = vunpack.c.l.b16 %v6866
    %v7195 = vunpack.c.h.b16 %v6866
    %v7196 = vunpack.c.l.b16 %v6867
    %v7197 = vunpack.c.h.b16 %v6867
    %v7198 = vunpack.c.l.b16 %v6868
    %v7199 = vunpack.c.h.b16 %v6868
    %v7200 = vunpack.c.l.b16 %v6869
    %v7201 = vunpack.c.h.b16 %v6869
    %v7202 = vunpack.c.l.b16 %v6870
    %v7203 = vunpack.c.h.b16 %v6870
    %v7204 = vunpack.c.l.b16 %v6871
    %v7205 = vunpack.c.h.b16 %v6871
    %v7206 = vunpack.c.l.b16 %v6872
    %v7207 = vunpack.c.h.b16 %v6872
    %v7208 = vunpack.c.l.b16 %v6873
    %v7209 = vunpack.c.h.b16 %v6873
    %v7210 = vunpack.c.l.b16 %v6874
    %v7211 = vunpack.c.h.b16 %v6874
    %v7212 = vunpack.c.l.b16 %v6875
    %v7213 = vunpack.c.h.b16 %v6875
    %v7214 = vunpack.c.l.b16 %v6876
    %v7215 = vunpack.c.h.b16 %v6876
    %v7216 = vunpack.c.l.b16 %v6877
    %v7217 = vunpack.c.h.b16 %v6877
    %v7218 = vunpack.c.l.b16 %v6878
    %v7219 = vunpack.c.h.b16 %v6878
    %v7220 = vunpack.c.l.b16 %v6879
    %v7221 = vunpack.c.h.b16 %v6879
    %v7222 = vunpack.c.l.b16 %v6880
    %v7223 = vunpack.c.h.b16 %v6880
    %v7224 = vunpack.c.l.b16 %v6881
    %v7225 = vunpack.c.h.b16 %v6881
    %v7226 = vunpack.c.l.b16 %v6882
    %v7227 = vunpack.c.h.b16 %v6882
    %v7228 = vunpack.c.l.b16 %v6883
    %v7229 = vunpack.c.h.b16 %v6883
    %v7230 = vunpack.c.l.b16 %v6884
    %v7231 = vunpack.c.h.b16 %v6884
    %v7232 = vunpack.c.l.b16 %v6885
    %v7233 = vunpack.c.h.b16 %v6885
    %v7234 = vunpack.c.l.b16 %v6886
    %v7235 = vunpack.c.h.b16 %v6886
    %v7236 = vunpack.c.l.b16 %v6887
    %v7237 = vunpack.c.h.b16 %v6887
    %v7238 = vunpack.c.l.b16 %v6888
    %v7239 = vunpack.c.h.b16 %v6888
    %v7240 = vunpack.c.l.b16 %v6889
    %v7241 = vunpack.c.h.b16 %v6889
    %v7242 = vunpack.c.l.b16 %v6890
    %v7243 = vunpack.c.h.b16 %v6890
    %v7244 = vunpack.c.l.b16 %v6891
    %v7245 = vunpack.c.h.b16 %v6891
    %v7246 = vunpack.c.l.b16 %v6892
    %v7247 = vunpack.c.h.b16 %v6892
    %v7248 = vunpack.c.l.b16 %v6893
    %v7249 = vunpack.c.h.b16 %v6893
    %v7250 = vunpack.c.l.b16 %v6894
    %v7251 = vunpack.c.h.b16 %v6894
    %v7252 = vunpack.c.l.b16 %v6895
    %v7253 = vunpack.c.h.b16 %v6895
    %v7254 = vunpack.c.l.b16 %v6896
    %v7255 = vunpack.c.h.b16 %v6896
    %v7256 = vunpack.c.l.b16 %v6897
    %v7257 = vunpack.c.h.b16 %v6897
    %v7258 = vunpack.c.l.b16 %v6898
    %v7259 = vunpack.c.h.b16 %v6898
    %v7260 = vunpack.c.l.b16 %v6899
    %v7261 = vunpack.c.h.b16 %v6899
    %v7262 = vunpack.c.l.b16 %v6900
    %v7263 = vunpack.c.h.b16 %v6900
    %v7264 = vunpack.c.l.b16 %v6901
    %v7265 = vunpack.c.h.b16 %v6901
    %v7266 = vunpack.c.l.b16 %v6902
    %v7267 = vunpack.c.h.b16 %v6902
    %v7268 = vunpack.c.l.b16 %v6903
    %v7269 = vunpack.c.h.b16 %v6903
    %v7270 = vunpack.c.l.b16 %v6904
    %v7271 = vunpack.c.h.b16 %v6904
    %v7272 = vunpack.c.l.b16 %v6905
    %v7273 = vunpack.c.h.b16 %v6905
    %v7274 = vunpack.c.l.b16 %v6906
    %v7275 = vunpack.c.h.b16 %v6906
    %v7276 = vunpack.c.l.b16 %v6907
    %v7277 = vunpack.c.h.b16 %v6907
    %v7278 = vunpack.c.l.b16 %v6908
    %v7279 = vunpack.c.h.b16 %v6908
    %v7280 = vunpack.c.l.b16 %v6909
    %v7281 = vunpack.c.h.b16 %v6909
    %v7282 = vunpack.c.l.b16 %v6910
    %v7283 = vunpack.c.h.b16 %v6910
    %v7284 = vunpack.c.l.b16 %v6911
    %v7285 = vunpack.c.h.b16 %v6911
    %v7286 = vunpack.c.l.b16 %v6912
    %v7287 = vunpack.c.h.b16 %v6912
    %v7288 = vunpack.c.l.b16 %v6913
    %v7289 = vunpack.c.h.b16 %v6913
    %v7290 = vunpack.c.l.b16 %v6914
    %v7291 = vunpack.c.h.b16 %v6914
    %v7292 = vunpack.c.l.b16 %v6915
    %v7293 = vunpack.c.h.b16 %v6915
    %v7294 = vunpack.c.l.b16 %v6916
    %v7295 = vunpack.c.h.b16 %v6916
    %v7296 = vunpack.c.l.b16 %v6917
    %v7297 = vunpack.c.h.b16 %v6917
    %v7298 = vunpack.c.l.b16 %v6918
    %v7299 = vunpack.c.h.b16 %v6918
    %v7300 = vunpack.c.l.b16 %v6919
    %v7301 = vunpack.c.h.b16 %v6919
    %v7302 = vunpack.c.l.b16 %v6920
    %v7303 = vunpack.c.h.b16 %v6920
    %v7304 = vunpack.c.l.b16 %v6921
    %v7305 = vunpack.c.h.b16 %v6921
    %v7306 = vunpack.c.l.b16 %v6922
    %v7307 = vunpack.c.h.b16 %v6922
    %v7308 = vunpack.c.l.b16 %v6923
    %v7309 = vunpack.c.h.b16 %v6923
    %v7310 = vunpack.c.l.b16 %v6924
    %v7311 = vunpack.c.h.b16 %v6924
    %v7312 = vunpack.c.l.b16 %v6925
    %v7313 = vunpack.c.h.b16 %v6925
    %v7314 = vunpack.c.l.b16 %v6926
    %v7315 = vunpack.c.h.b16 %v6926
    %v7316 = vunpack.c.l.b16 %v6927
    %v7317 = vunpack.c.h.b16 %v6927
    %v7318 = vunpack.c.l.b16 %v6928
    %v7319 = vunpack.c.h.b16 %v6928
    %v7320 = vunpack.c.l.b16 %v6929
    %v7321 = vunpack.c.h.b16 %v6929
    %v7322 = vunpack.c.l.b16 %v6930
    %v7323 = vunpack.c.h.b16 %v6930
    %v7324 = vunpack.c.l.b16 %v6931
    %v7325 = vunpack.c.h.b16 %v6931
    %v7326 = vunpack.c.l.b16 %v6932
    %v7327 = vunpack.c.h.b16 %v6932
    %v7328 = vunpack.c.l.b16 %v6933
    %v7329 = vunpack.c.h.b16 %v6933
    %v7330 = vunpack.c.l.b16 %v6934
    %v7331 = vunpack.c.h.b16 %v6934
    %v7332 = vunpack.c.l.b16 %v6935
    %v7333 = vunpack.c.h.b16 %v6935
    %v7334 = vunpack.c.l.b16 %v6936
    %v7335 = vunpack.c.h.b16 %v6936
    %v7336 = vunpack.c.l.b16 %v6937
    %v7337 = vunpack.c.h.b16 %v6937
    %v7338 = vunpack.c.l.b16 %v6938
    %v7339 = vunpack.c.h.b16 %v6938
    %v7340 = vunpack.c.l.b16 %v6939
    %v7341 = vunpack.c.h.b16 %v6939
    %v7342 = vunpack.c.l.b16 %v6940
    %v7343 = vunpack.c.h.b16 %v6940
    %v7344 = vunpack.c.l.b16 %v6941
    %v7345 = vunpack.c.h.b16 %v6941
    %v7346 = vunpack.c.l.b16 %v6942
    %v7347 = vunpack.c.h.b16 %v6942
    %v7348 = vunpack.c.l.b16 %v6943
    %v7349 = vunpack.c.h.b16 %v6943
    %v7350 = vunpack.c.l.b16 %v6944
    %v7351 = vunpack.c.h.b16 %v6944
    %v7352 = vpack.c.b16 %v7100, %v7096
    %v7353 = vpack.c.b16 %v7101, %v7097
    %v7354 = vpack.c.b16 %v7102, %v7098
    %v7355 = vpack.c.b16 %v7103, %v7099
    %v7356 = vpack.c.b16 %v7108, %v7104
    %v7357 = vpack.c.b16 %v7109, %v7105
    %v7358 = vpack.c.b16 %v7110, %v7106
    %v7359 = vpack.c.b16 %v7111, %v7107
    %v7360 = vpack.c.b16 %v7116, %v7112
    %v7361 = vpack.c.b16 %v7117, %v7113
    %v7362 = vpack.c.b16 %v7118, %v7114
    %v7363 = vpack.c.b16 %v7119, %v7115
    %v7364 = vpack.c.b16 %v7124, %v7120
    %v7365 = vpack.c.b16 %v7125, %v7121
    %v7366 = vpack.c.b16 %v7126, %v7122
    %v7367 = vpack.c.b16 %v7127, %v7123
    %v7368 = vpack.c.b16 %v7132, %v7128
    %v7369 = vpack.c.b16 %v7133, %v7129
    %v7370 = vpack.c.b16 %v7134, %v7130
    %v7371 = vpack.c.b16 %v7135, %v7131
    %v7372 = vpack.c.b16 %v7140, %v7136
    %v7373 = vpack.c.b16 %v7141, %v7137
    %v7374 = vpack.c.b16 %v7142, %v7138
    %v7375 = vpack.c.b16 %v7143, %v7139
    %v7376 = vpack.c.b16 %v7148, %v7144
    %v7377 = vpack.c.b16 %v7149, %v7145
    %v7378 = vpack.c.b16 %v7150, %v7146
    %v7379 = vpack.c.b16 %v7151, %v7147
    %v7380 = vpack.c.b16 %v7156, %v7152
    %v7381 = vpack.c.b16 %v7157, %v7153
    %v7382 = vpack.c.b16 %v7158, %v7154
    %v7383 = vpack.c.b16 %v7159, %v7155
    %v7384 = vpack.c.b16 %v7164, %v7160
    %v7385 = vpack.c.b16 %v7165, %v7161
    %v7386 = vpack.c.b16 %v7166, %v7162
    %v7387 = vpack.c.b16 %v7167, %v7163
    %v7388 = vpack.c.b16 %v7172, %v7168
    %v7389 = vpack.c.b16 %v7173, %v7169
    %v7390 = vpack.c.b16 %v7174, %v7170
    %v7391 = vpack.c.b16 %v7175, %v7171
    %v7392 = vpack.c.b16 %v7180, %v7176
    %v7393 = vpack.c.b16 %v7181, %v7177
    %v7394 = vpack.c.b16 %v7182, %v7178
    %v7395 = vpack.c.b16 %v7183, %v7179
    %v7396 = vpack.c.b16 %v7188, %v7184
    %v7397 = vpack.c.b16 %v7189, %v7185
    %v7398 = vpack.c.b16 %v7190, %v7186
    %v7399 = vpack.c.b16 %v7191, %v7187
    %v7400 = vpack.c.b16 %v7196, %v7192
    %v7401 = vpack.c.b16 %v7197, %v7193
    %v7402 = vpack.c.b16 %v7198, %v7194
    %v7403 = vpack.c.b16 %v7199, %v7195
    %v7404 = vpack.c.b16 %v7204, %v7200
    %v7405 = vpack.c.b16 %v7205, %v7201
    %v7406 = vpack.c.b16 %v7206, %v7202
    %v7407 = vpack.c.b16 %v7207, %v7203
    %v7408 = vpack.c.b16 %v7212, %v7208
    %v7409 = vpack.c.b16 %v7213, %v7209
    %v7410 = vpack.c.b16 %v7214, %v7210
    %v7411 = vpack.c.b16 %v7215, %v7211
    %v7412 = vpack.c.b16 %v7220, %v7216
    %v7413 = vpack.c.b16 %v7221, %v7217
    %v7414 = vpack.c.b16 %v7222, %v7218
    %v7415 = vpack.c.b16 %v7223, %v7219
    %v7416 = vpack.c.b16 %v7228, %v7224
    %v7417 = vpack.c.b16 %v7229, %v7225
    %v7418 = vpack.c.b16 %v7230, %v7226
    %v7419 = vpack.c.b16 %v7231, %v7227
    %v7420 = vpack.c.b16 %v7236, %v7232
    %v7421 = vpack.c.b16 %v7237, %v7233
    %v7422 = vpack.c.b16 %v7238, %v7234
    %v7423 = vpack.c.b16 %v7239, %v7235
    %v7424 = vpack.c.b16 %v7244, %v7240
    %v7425 = vpack.c.b16 %v7245, %v7241
    %v7426 = vpack.c.b16 %v7246, %v7242
    %v7427 = vpack.c.b16 %v7247, %v7243
    %v7428 = vpack.c.b16 %v7252, %v7248
    %v7429 = vpack.c.b16 %v7253, %v7249
    %v7430 = vpack.c.b16 %v7254, %v7250
    %v7431 = vpack.c.b16 %v7255, %v7251
    %v7432 = vpack.c.b16 %v7260, %v7256
    %v7433 = vpack.c.b16 %v7261, %v7257
    %v7434 = vpack.c.b16 %v7262, %v7258
    %v7435 = vpack.c.b16 %v7263, %v7259
    %v7436 = vpack.c.b16 %v7268, %v7264
    %v7437 = vpack.c.b16 %v7269, %v7265
    %v7438 = vpack.c.b16 %v7270, %v7266
    %v7439 = vpack.c.b16 %v7271, %v7267
    %v7440 = vpack.c.b16 %v7276, %v7272
    %v7441 = vpack.c.b16 %v7277, %v7273
    %v7442 = vpack.c.b16 %v7278, %v7274
    %v7443 = vpack.c.b16 %v7279, %v7275
    %v7444 = vpack.c.b16 %v7284, %v7280
    %v7445 = vpack.c.b16 %v7285, %v7281
    %v7446 = vpack.c.b16 %v7286, %v7282
    %v7447 = vpack.c.b16 %v7287, %v7283
    %v7448 = vpack.c.b16 %v7292, %v7288
    %v7449 = vpack.c.b16 %v7293, %v7289
    %v7450 = vpack.c.b16 %v7294, %v7290
    %v7451 = vpack.c.b16 %v7295, %v7291
    %v7452 = vpack.c.b16 %v7300, %v7296
    %v7453 = vpack.c.b16 %v7301, %v7297
    %v7454 = vpack.c.b16 %v7302, %v7298
    %v7455 = vpack.c.b16 %v7303, %v7299
    %v7456 = vpack.c.b16 %v7308, %v7304
    %v7457 = vpack.c.b16 %v7309, %v7305
    %v7458 = vpack.c.b16 %v7310, %v7306
    %v7459 = vpack.c.b16 %v7311, %v7307
    %v7460 = vpack.c.b16 %v7316, %v7312
    %v7461 = vpack.c.b16 %v7317, %v7313
    %v7462 = vpack.c.b16 %v7318, %v7314
    %v7463 = vpack.c.b16 %v7319, %v7315
    %v7464 = vpack.c.b16 %v7324, %v7320
    %v7465 = vpack.c.b16 %v7325, %v7321
    %v7466 = vpack.c.b16 %v7326, %v7322
    %v7467 = vpack.c.b16 %v7327, %v7323
    %v7468 = vpack.c.b16 %v7332, %v7328
    %v7469 = vpack.c.b16 %v7333, %v7329
    %v7470 = vpack.c.b16 %v7334, %v7330
    %v7471 = vpack.c.b16 %v7335, %v7331
    %v7472 = vpack.c.b16 %v7340, %v7336
    %v7473 = vpack.c.b16 %v7341, %v7337
    %v7474 = vpack.c.b16 %v7342, %v7338
    %v7475 = vpack.c.b16 %v7343, %v7339
    %v7476 = vpack.c.b16 %v7348, %v7344
    %v7477 = vpack.c.b16 %v7349, %v7345
    %v7478 = vpack.c.b16 %v7350, %v7346
    %v7479 = vpack.c.b16 %v7351, %v7347
    %7608 = vmatprep.subr.bf16.mxu0 %v7353
    %7609 = vmatpush1.bf16.msra.mxu0 %v7352
    %7610 = vmatprep.subr.bf16.mxu0 %v7357
    %7611 = vmatpush1.bf16.msra.mxu0 %v7356
    %7612 = vmatprep.subr.bf16.mxu0 %v7361
    %7613 = vmatpush1.bf16.msra.mxu0 %v7360
    %7614 = vmatprep.subr.bf16.mxu0 %v7365
    %7615 = vmatpush1.bf16.msra.mxu0 %v7364
    %7616 = vmatprep.subr.bf16.mxu0 %v7369
    %7617 = vmatpush1.bf16.msra.mxu0 %v7368
    %7618 = vmatprep.subr.bf16.mxu0 %v7373
    %7619 = vmatpush1.bf16.msra.mxu0 %v7372
    %7620 = vmatprep.subr.bf16.mxu0 %v7377
    %7621 = vmatpush1.bf16.msra.mxu0 %v7376
    %7622 = vmatprep.subr.bf16.mxu0 %v7381
    %7623 = vmatpush1.bf16.msra.mxu0 %v7380
    %7624 = vmatprep.subr.bf16.mxu0 %v7385
    %7625 = vmatpush1.bf16.msra.mxu0 %v7384
    %7626 = vmatprep.subr.bf16.mxu0 %v7389
    %7627 = vmatpush1.bf16.msra.mxu0 %v7388
    %7628 = vmatprep.subr.bf16.mxu0 %v7393
    %7629 = vmatpush1.bf16.msra.mxu0 %v7392
    %7630 = vmatprep.subr.bf16.mxu0 %v7397
    %7631 = vmatpush1.bf16.msra.mxu0 %v7396
    %7632 = vmatprep.subr.bf16.mxu0 %v7401
    %7633 = vmatpush1.bf16.msra.mxu0 %v7400
    %7634 = vmatprep.subr.bf16.mxu0 %v7405
    %7635 = vmatpush1.bf16.msra.mxu0 %v7404
    %7636 = vmatprep.subr.bf16.mxu0 %v7409
    %7637 = vmatpush1.bf16.msra.mxu0 %v7408
    %7638 = vmatprep.subr.bf16.mxu0 %v7413
    %7639 = vmatpush1.bf16.msra.mxu0 %v7412
    %7640 = vmatprep.mubr.bf16.mxu0 %v6813
    %7641 = vmatmul.mubr.bf16.gmra.mrb[0].mxu0 %v6812
    %v7642 = vpop.f32.mrb[0].mxu0
    %v7643 = vadd.f32 %v6951, %v7642
    %v7644 = vpop.f32.mrb[0].mxu0
    %v7645 = vadd.f32 %v6955, %v7644
    %v7646 = vpop.f32.mrb[0].mxu0
    %v7647 = vpop.f32.mrb[0].mxu0
    %7648 = vdwg.mxu0
    %7649 = vmatprep.subr.bf16.mxu0 %v7417
    %7650 = vmatpush1.bf16.msra.mxu0 %v7416
    %7651 = vmatprep.subr.bf16.mxu0 %v7421
    %7652 = vmatpush1.bf16.msra.mxu0 %v7420
    %7653 = vmatprep.subr.bf16.mxu0 %v7425
    %7654 = vmatpush1.bf16.msra.mxu0 %v7424
    %7655 = vmatprep.subr.bf16.mxu0 %v7429
    %7656 = vmatpush1.bf16.msra.mxu0 %v7428
    %7657 = vmatprep.subr.bf16.mxu0 %v7433
    %7658 = vmatpush1.bf16.msra.mxu0 %v7432
    %7659 = vmatprep.subr.bf16.mxu0 %v7437
    %7660 = vmatpush1.bf16.msra.mxu0 %v7436
    %7661 = vmatprep.subr.bf16.mxu0 %v7441
    %7662 = vmatpush1.bf16.msra.mxu0 %v7440
    %7663 = vmatprep.subr.bf16.mxu0 %v7445
    %7664 = vmatpush1.bf16.msra.mxu0 %v7444
    %7665 = vmatprep.subr.bf16.mxu0 %v7449
    %7666 = vmatpush1.bf16.msra.mxu0 %v7448
    %7667 = vmatprep.subr.bf16.mxu0 %v7453
    %7668 = vmatpush1.bf16.msra.mxu0 %v7452
    %7669 = vmatprep.subr.bf16.mxu0 %v7457
    %7670 = vmatpush1.bf16.msra.mxu0 %v7456
    %7671 = vmatprep.subr.bf16.mxu0 %v7461
    %7672 = vmatpush1.bf16.msra.mxu0 %v7460
    %7673 = vmatprep.subr.bf16.mxu0 %v7465
    %7674 = vmatpush1.bf16.msra.mxu0 %v7464
    %7675 = vmatprep.subr.bf16.mxu0 %v7469
    %7676 = vmatpush1.bf16.msra.mxu0 %v7468
    %7677 = vmatprep.subr.bf16.mxu0 %v7473
    %7678 = vmatpush1.bf16.msra.mxu0 %v7472
    %7679 = vmatprep.subr.bf16.mxu0 %v7477
    %7680 = vmatpush1.bf16.msra.mxu0 %v7476
    %7681 = vmatprep.mubr.bf16.mxu0 %v6815
    %7682 = vmatmul.mubr.bf16.gmra.mrb[0].mxu0 %v6814
    %v7683 = vpop.f32.mrb[0].mxu0
    %v7684 = vadd.f32 %v7643, %v7683
    %v7685 = vpop.f32.mrb[0].mxu0
    %v7686 = vadd.f32 %v7645, %v7685
    %v7687 = vpop.f32.mrb[0].mxu0
    %v7688 = vpop.f32.mrb[0].mxu0
    %7689 = vdwg.mxu0
    %7690 = vmatprep.subr.bf16.mxu0 %v7355
    %7691 = vmatpush1.bf16.msra.mxu0 %v7354
    %7692 = vmatprep.subr.bf16.mxu0 %v7359
    %7693 = vmatpush1.bf16.msra.mxu0 %v7358
    %7694 = vmatprep.subr.bf16.mxu0 %v7363
    %7695 = vmatpush1.bf16.msra.mxu0 %v7362
    %7696 = vmatprep.subr.bf16.mxu0 %v7367
    %7697 = vmatpush1.bf16.msra.mxu0 %v7366
    %7698 = vmatprep.subr.bf16.mxu0 %v7371
    %7699 = vmatpush1.bf16.msra.mxu0 %v7370
    %7700 = vmatprep.subr.bf16.mxu0 %v7375
    %7701 = vmatpush1.bf16.msra.mxu0 %v7374
    %7702 = vmatprep.subr.bf16.mxu0 %v7379
    %7703 = vmatpush1.bf16.msra.mxu0 %v7378
    %7704 = vmatprep.subr.bf16.mxu0 %v7383
    %7705 = vmatpush1.bf16.msra.mxu0 %v7382
    %7706 = vmatprep.subr.bf16.mxu0 %v7387
    %7707 = vmatpush1.bf16.msra.mxu0 %v7386
    %7708 = vmatprep.subr.bf16.mxu0 %v7391
    %7709 = vmatpush1.bf16.msra.mxu0 %v7390
    %7710 = vmatprep.subr.bf16.mxu0 %v7395
    %7711 = vmatpush1.bf16.msra.mxu0 %v7394
    %7712 = vmatprep.subr.bf16.mxu0 %v7399
    %7713 = vmatpush1.bf16.msra.mxu0 %v7398
    %7714 = vmatprep.subr.bf16.mxu0 %v7403
    %7715 = vmatpush1.bf16.msra.mxu0 %v7402
    %7716 = vmatprep.subr.bf16.mxu0 %v7407
    %7717 = vmatpush1.bf16.msra.mxu0 %v7406
    %7718 = vmatprep.subr.bf16.mxu0 %v7411
    %7719 = vmatpush1.bf16.msra.mxu0 %v7410
    %7720 = vmatprep.subr.bf16.mxu0 %v7415
    %7721 = vmatpush1.bf16.msra.mxu0 %v7414
    %7722 = vmatprep.mubr.bf16.mxu0 %v6813
    %7723 = vmatmul.mubr.bf16.gmra.mrb[0].mxu0 %v6812
    %v7724 = vpop.f32.mrb[0].mxu0
    %v7725 = vadd.f32 %v6959, %v7724
    %v7726 = vpop.f32.mrb[0].mxu0
    %v7727 = vadd.f32 %v6963, %v7726
    %v7728 = vpop.f32.mrb[0].mxu0
    %v7729 = vpop.f32.mrb[0].mxu0
    %7730 = vdwg.mxu0
    %7731 = vmatprep.subr.bf16.mxu0 %v7419
    %7732 = vmatpush1.bf16.msra.mxu0 %v7418
    %7733 = vmatprep.subr.bf16.mxu0 %v7423
    %7734 = vmatpush1.bf16.msra.mxu0 %v7422
    %7735 = vmatprep.subr.bf16.mxu0 %v7427
    %7736 = vmatpush1.bf16.msra.mxu0 %v7426
    %7737 = vmatprep.subr.bf16.mxu0 %v7431
    %7738 = vmatpush1.bf16.msra.mxu0 %v7430
    %7739 = vmatprep.subr.bf16.mxu0 %v7435
    %7740 = vmatpush1.bf16.msra.mxu0 %v7434
    %7741 = vmatprep.subr.bf16.mxu0 %v7439
    %7742 = vmatpush1.bf16.msra.mxu0 %v7438
    %7743 = vmatprep.subr.bf16.mxu0 %v7443
    %7744 = vmatpush1.bf16.msra.mxu0 %v7442
    %7745 = vmatprep.subr.bf16.mxu0 %v7447
    %7746 = vmatpush1.bf16.msra.mxu0 %v7446
    %7747 = vmatprep.subr.bf16.mxu0 %v7451
    %7748 = vmatpush1.bf16.msra.mxu0 %v7450
    %7749 = vmatprep.subr.bf16.mxu0 %v7455
    %7750 = vmatpush1.bf16.msra.mxu0 %v7454
    %7751 = vmatprep.subr.bf16.mxu0 %v7459
    %7752 = vmatpush1.bf16.msra.mxu0 %v7458
    %7753 = vmatprep.subr.bf16.mxu0 %v7463
    %7754 = vmatpush1.bf16.msra.mxu0 %v7462
    %7755 = vmatprep.subr.bf16.mxu0 %v7467
    %7756 = vmatpush1.bf16.msra.mxu0 %v7466
    %7757 = vmatprep.subr.bf16.mxu0 %v7471
    %7758 = vmatpush1.bf16.msra.mxu0 %v7470
    %7759 = vmatprep.subr.bf16.mxu0 %v7475
    %7760 = vmatpush1.bf16.msra.mxu0 %v7474
    %7761 = vmatprep.subr.bf16.mxu0 %v7479
    %7762 = vmatpush1.bf16.msra.mxu0 %v7478
    %7763 = vmatprep.mubr.bf16.mxu0 %v6815
    %7764 = vmatmul.mubr.bf16.gmra.mrb[0].mxu0 %v6814
    %v7765 = vpop.f32.mrb[0].mxu0
    %v7766 = vadd.f32 %v7725, %v7765
    %v7767 = vpop.f32.mrb[0].mxu0
    %v7768 = vadd.f32 %v7727, %v7767
    %v7769 = vpop.f32.mrb[0].mxu0
    %v7770 = vpop.f32.mrb[0].mxu0
    %7771 = vdwg.mxu0
    %v7772 = vmax.f32 %v7684, 0.0
    %v7773 = vmax.f32 %v7686, 0.0
    %v7774 = vmax.f32 %v7766, 0.0
    %v7775 = vmax.f32 %v7768, 0.0
    %v7776 = vpack.c.bf16 %v7772, %v7772
    %v7777 = vpack.c.bf16 %v7773, %v7773
    %v7778 = vpack.c.bf16 %v7774, %v7774
    %v7779 = vpack.c.bf16 %v7775, %v7775
    %s7780 = scalar_lea.vmem [#allocation2], 8192
    %v7781 = vld [vmem:[%s7780] sm:$0xff]
    %v7782 = vld [vmem:[%s7780 + $0x8] sm:$0xff]
    %v7783 = vld [vmem:[%s7780 + $0x10] sm:$0xff]
    %v7784 = vld [vmem:[%s7780 + $0x18] sm:$0xff]
    %v7785 = vld [vmem:[%s7780 + $0x20] sm:$0xff]
    %v7786 = vld [vmem:[%s7780 + $0x28] sm:$0xff]
    %v7787 = vld [vmem:[%s7780 + $0x30] sm:$0xff]
    %v7788 = vld [vmem:[%s7780 + $0x38] sm:$0xff]
    %v7789 = vld [vmem:[%s7780 + $0x40] sm:$0xff]
    %v7790 = vld [vmem:[%s7780 + $0x48] sm:$0xff]
    %v7791 = vld [vmem:[%s7780 + $0x50] sm:$0xff]
    %v7792 = vld [vmem:[%s7780 + $0x58] sm:$0xff]
    %v7793 = vld [vmem:[%s7780 + $0x60] sm:$0xff]
    %v7794 = vld [vmem:[%s7780 + $0x68] sm:$0xff]
    %v7795 = vld [vmem:[%s7780 + $0x70] sm:$0xff]
    %v7796 = vld [vmem:[%s7780 + $0x78] sm:$0xff]
    %v7797 = vld [vmem:[%s7780 + $0x80] sm:$0xff]
    %v7798 = vld [vmem:[%s7780 + $0x88] sm:$0xff]
    %v7799 = vld [vmem:[%s7780 + $0x90] sm:$0xff]
    %v7800 = vld [vmem:[%s7780 + $0x98] sm:$0xff]
    %v7801 = vld [vmem:[%s7780 + $0xa0] sm:$0xff]
    %v7802 = vld [vmem:[%s7780 + $0xa8] sm:$0xff]
    %v7803 = vld [vmem:[%s7780 + $0xb0] sm:$0xff]
    %v7804 = vld [vmem:[%s7780 + $0xb8] sm:$0xff]
    %v7805 = vld [vmem:[%s7780 + $0xc0] sm:$0xff]
    %v7806 = vld [vmem:[%s7780 + $0xc8] sm:$0xff]
    %v7807 = vld [vmem:[%s7780 + $0xd0] sm:$0xff]
    %v7808 = vld [vmem:[%s7780 + $0xd8] sm:$0xff]
    %v7809 = vld [vmem:[%s7780 + $0xe0] sm:$0xff]
    %v7810 = vld [vmem:[%s7780 + $0xe8] sm:$0xff]
    %v7811 = vld [vmem:[%s7780 + $0xf0] sm:$0xff]
    %v7812 = vld [vmem:[%s7780 + $0xf8] sm:$0xff]
    %v7813 = vld [vmem:[%s7780 + $0x100] sm:$0xff]
    %v7814 = vld [vmem:[%s7780 + $0x108] sm:$0xff]
    %v7815 = vld [vmem:[%s7780 + $0x110] sm:$0xff]
    %v7816 = vld [vmem:[%s7780 + $0x118] sm:$0xff]
    %v7817 = vld [vmem:[%s7780 + $0x120] sm:$0xff]
    %v7818 = vld [vmem:[%s7780 + $0x128] sm:$0xff]
    %v7819 = vld [vmem:[%s7780 + $0x130] sm:$0xff]
    %v7820 = vld [vmem:[%s7780 + $0x138] sm:$0xff]
    %v7821 = vld [vmem:[%s7780 + $0x140] sm:$0xff]
    %v7822 = vld [vmem:[%s7780 + $0x148] sm:$0xff]
    %v7823 = vld [vmem:[%s7780 + $0x150] sm:$0xff]
    %v7824 = vld [vmem:[%s7780 + $0x158] sm:$0xff]
    %v7825 = vld [vmem:[%s7780 + $0x160] sm:$0xff]
    %v7826 = vld [vmem:[%s7780 + $0x168] sm:$0xff]
    %v7827 = vld [vmem:[%s7780 + $0x170] sm:$0xff]
    %v7828 = vld [vmem:[%s7780 + $0x178] sm:$0xff]
    %v7829 = vld [vmem:[%s7780 + $0x180] sm:$0xff]
    %v7830 = vld [vmem:[%s7780 + $0x188] sm:$0xff]
    %v7831 = vld [vmem:[%s7780 + $0x190] sm:$0xff]
    %v7832 = vld [vmem:[%s7780 + $0x198] sm:$0xff]
    %v7833 = vld [vmem:[%s7780 + $0x1a0] sm:$0xff]
    %v7834 = vld [vmem:[%s7780 + $0x1a8] sm:$0xff]
    %v7835 = vld [vmem:[%s7780 + $0x1b0] sm:$0xff]
    %v7836 = vld [vmem:[%s7780 + $0x1b8] sm:$0xff]
    %v7837 = vld [vmem:[%s7780 + $0x1c0] sm:$0xff]
    %v7838 = vld [vmem:[%s7780 + $0x1c8] sm:$0xff]
    %v7839 = vld [vmem:[%s7780 + $0x1d0] sm:$0xff]
    %v7840 = vld [vmem:[%s7780 + $0x1d8] sm:$0xff]
    %v7841 = vld [vmem:[%s7780 + $0x1e0] sm:$0xff]
    %v7842 = vld [vmem:[%s7780 + $0x1e8] sm:$0xff]
    %v7843 = vld [vmem:[%s7780 + $0x1f0] sm:$0xff]
    %v7844 = vld [vmem:[%s7780 + $0x1f8] sm:$0xff]
    %v7845 = vld [vmem:[%s7780 + $0x200] sm:$0xff]
    %v7846 = vld [vmem:[%s7780 + $0x208] sm:$0xff]
    %v7847 = vld [vmem:[%s7780 + $0x210] sm:$0xff]
    %v7848 = vld [vmem:[%s7780 + $0x218] sm:$0xff]
    %v7849 = vld [vmem:[%s7780 + $0x220] sm:$0xff]
    %v7850 = vld [vmem:[%s7780 + $0x228] sm:$0xff]
    %v7851 = vld [vmem:[%s7780 + $0x230] sm:$0xff]
    %v7852 = vld [vmem:[%s7780 + $0x238] sm:$0xff]
    %v7853 = vld [vmem:[%s7780 + $0x240] sm:$0xff]
    %v7854 = vld [vmem:[%s7780 + $0x248] sm:$0xff]
    %v7855 = vld [vmem:[%s7780 + $0x250] sm:$0xff]
    %v7856 = vld [vmem:[%s7780 + $0x258] sm:$0xff]
    %v7857 = vld [vmem:[%s7780 + $0x260] sm:$0xff]
    %v7858 = vld [vmem:[%s7780 + $0x268] sm:$0xff]
    %v7859 = vld [vmem:[%s7780 + $0x270] sm:$0xff]
    %v7860 = vld [vmem:[%s7780 + $0x278] sm:$0xff]
    %v7861 = vld [vmem:[%s7780 + $0x280] sm:$0xff]
    %v7862 = vld [vmem:[%s7780 + $0x288] sm:$0xff]
    %v7863 = vld [vmem:[%s7780 + $0x290] sm:$0xff]
    %v7864 = vld [vmem:[%s7780 + $0x298] sm:$0xff]
    %v7865 = vld [vmem:[%s7780 + $0x2a0] sm:$0xff]
    %v7866 = vld [vmem:[%s7780 + $0x2a8] sm:$0xff]
    %v7867 = vld [vmem:[%s7780 + $0x2b0] sm:$0xff]
    %v7868 = vld [vmem:[%s7780 + $0x2b8] sm:$0xff]
    %v7869 = vld [vmem:[%s7780 + $0x2c0] sm:$0xff]
    %v7870 = vld [vmem:[%s7780 + $0x2c8] sm:$0xff]
    %v7871 = vld [vmem:[%s7780 + $0x2d0] sm:$0xff]
    %v7872 = vld [vmem:[%s7780 + $0x2d8] sm:$0xff]
    %v7873 = vld [vmem:[%s7780 + $0x2e0] sm:$0xff]
    %v7874 = vld [vmem:[%s7780 + $0x2e8] sm:$0xff]
    %v7875 = vld [vmem:[%s7780 + $0x2f0] sm:$0xff]
    %v7876 = vld [vmem:[%s7780 + $0x2f8] sm:$0xff]
    %v7877 = vld [vmem:[%s7780 + $0x300] sm:$0xff]
    %v7878 = vld [vmem:[%s7780 + $0x308] sm:$0xff]
    %v7879 = vld [vmem:[%s7780 + $0x310] sm:$0xff]
    %v7880 = vld [vmem:[%s7780 + $0x318] sm:$0xff]
    %v7881 = vld [vmem:[%s7780 + $0x320] sm:$0xff]
    %v7882 = vld [vmem:[%s7780 + $0x328] sm:$0xff]
    %v7883 = vld [vmem:[%s7780 + $0x330] sm:$0xff]
    %v7884 = vld [vmem:[%s7780 + $0x338] sm:$0xff]
    %v7885 = vld [vmem:[%s7780 + $0x340] sm:$0xff]
    %v7886 = vld [vmem:[%s7780 + $0x348] sm:$0xff]
    %v7887 = vld [vmem:[%s7780 + $0x350] sm:$0xff]
    %v7888 = vld [vmem:[%s7780 + $0x358] sm:$0xff]
    %v7889 = vld [vmem:[%s7780 + $0x360] sm:$0xff]
    %v7890 = vld [vmem:[%s7780 + $0x368] sm:$0xff]
    %v7891 = vld [vmem:[%s7780 + $0x370] sm:$0xff]
    %v7892 = vld [vmem:[%s7780 + $0x378] sm:$0xff]
    %v7893 = vld [vmem:[%s7780 + $0x380] sm:$0xff]
    %v7894 = vld [vmem:[%s7780 + $0x388] sm:$0xff]
    %v7895 = vld [vmem:[%s7780 + $0x390] sm:$0xff]
    %v7896 = vld [vmem:[%s7780 + $0x398] sm:$0xff]
    %v7897 = vld [vmem:[%s7780 + $0x3a0] sm:$0xff]
    %v7898 = vld [vmem:[%s7780 + $0x3a8] sm:$0xff]
    %v7899 = vld [vmem:[%s7780 + $0x3b0] sm:$0xff]
    %v7900 = vld [vmem:[%s7780 + $0x3b8] sm:$0xff]
    %v7901 = vld [vmem:[%s7780 + $0x3c0] sm:$0xff]
    %v7902 = vld [vmem:[%s7780 + $0x3c8] sm:$0xff]
    %v7903 = vld [vmem:[%s7780 + $0x3d0] sm:$0xff]
    %v7904 = vld [vmem:[%s7780 + $0x3d8] sm:$0xff]
    %v7905 = vld [vmem:[%s7780 + $0x3e0] sm:$0xff]
    %v7906 = vld [vmem:[%s7780 + $0x3e8] sm:$0xff]
    %v7907 = vld [vmem:[%s7780 + $0x3f0] sm:$0xff]
    %v7908 = vld [vmem:[%s7780 + $0x3f8] sm:$0xff]
    %s7909 = scalar_lea.vmem [#allocation4], 32
    %v7910 = vld [vmem:[%s7909] sm:$0xf]
    %v7912 = vlaneseq
    %v7913 = vshrl.u32 %v7912, 7
    %v7914 = vsub.s32 0, %v7913
    %v7915 = vrot.slane %v7910, %v7914
    %v7916 = vlaneseq
    %v7917 = vshrl.u32 %v7916, 7
    %v7918 = vsub.s32 1, %v7917
    %v7919 = vrot.slane %v7910, %v7918
    %v7920 = vlaneseq
    %v7921 = vshrl.u32 %v7920, 7
    %v7922 = vsub.s32 2, %v7921
    %v7923 = vrot.slane %v7910, %v7922
    %v7924 = vlaneseq
    %v7925 = vshrl.u32 %v7924, 7
    %v7926 = vsub.s32 3, %v7925
    %v7927 = vrot.slane %v7910, %v7926
    %v8060 = vunpack.c.l.b16 %v7781
    %v8061 = vunpack.c.h.b16 %v7781
    %v8062 = vunpack.c.l.b16 %v7782
    %v8063 = vunpack.c.h.b16 %v7782
    %v8064 = vunpack.c.l.b16 %v7783
    %v8065 = vunpack.c.h.b16 %v7783
    %v8066 = vunpack.c.l.b16 %v7784
    %v8067 = vunpack.c.h.b16 %v7784
    %v8068 = vunpack.c.l.b16 %v7785
    %v8069 = vunpack.c.h.b16 %v7785
    %v8070 = vunpack.c.l.b16 %v7786
    %v8071 = vunpack.c.h.b16 %v7786
    %v8072 = vunpack.c.l.b16 %v7787
    %v8073 = vunpack.c.h.b16 %v7787
    %v8074 = vunpack.c.l.b16 %v7788
    %v8075 = vunpack.c.h.b16 %v7788
    %v8076 = vunpack.c.l.b16 %v7789
    %v8077 = vunpack.c.h.b16 %v7789
    %v8078 = vunpack.c.l.b16 %v7790
    %v8079 = vunpack.c.h.b16 %v7790
    %v8080 = vunpack.c.l.b16 %v7791
    %v8081 = vunpack.c.h.b16 %v7791
    %v8082 = vunpack.c.l.b16 %v7792
    %v8083 = vunpack.c.h.b16 %v7792
    %v8084 = vunpack.c.l.b16 %v7793
    %v8085 = vunpack.c.h.b16 %v7793
    %v8086 = vunpack.c.l.b16 %v7794
    %v8087 = vunpack.c.h.b16 %v7794
    %v8088 = vunpack.c.l.b16 %v7795
    %v8089 = vunpack.c.h.b16 %v7795
    %v8090 = vunpack.c.l.b16 %v7796
    %v8091 = vunpack.c.h.b16 %v7796
    %v8092 = vunpack.c.l.b16 %v7797
    %v8093 = vunpack.c.h.b16 %v7797
    %v8094 = vunpack.c.l.b16 %v7798
    %v8095 = vunpack.c.h.b16 %v7798
    %v8096 = vunpack.c.l.b16 %v7799
    %v8097 = vunpack.c.h.b16 %v7799
    %v8098 = vunpack.c.l.b16 %v7800
    %v8099 = vunpack.c.h.b16 %v7800
    %v8100 = vunpack.c.l.b16 %v7801
    %v8101 = vunpack.c.h.b16 %v7801
    %v8102 = vunpack.c.l.b16 %v7802
    %v8103 = vunpack.c.h.b16 %v7802
    %v8104 = vunpack.c.l.b16 %v7803
    %v8105 = vunpack.c.h.b16 %v7803
    %v8106 = vunpack.c.l.b16 %v7804
    %v8107 = vunpack.c.h.b16 %v7804
    %v8108 = vunpack.c.l.b16 %v7805
    %v8109 = vunpack.c.h.b16 %v7805
    %v8110 = vunpack.c.l.b16 %v7806
    %v8111 = vunpack.c.h.b16 %v7806
    %v8112 = vunpack.c.l.b16 %v7807
    %v8113 = vunpack.c.h.b16 %v7807
    %v8114 = vunpack.c.l.b16 %v7808
    %v8115 = vunpack.c.h.b16 %v7808
    %v8116 = vunpack.c.l.b16 %v7809
    %v8117 = vunpack.c.h.b16 %v7809
    %v8118 = vunpack.c.l.b16 %v7810
    %v8119 = vunpack.c.h.b16 %v7810
    %v8120 = vunpack.c.l.b16 %v7811
    %v8121 = vunpack.c.h.b16 %v7811
    %v8122 = vunpack.c.l.b16 %v7812
    %v8123 = vunpack.c.h.b16 %v7812
    %v8124 = vunpack.c.l.b16 %v7813
    %v8125 = vunpack.c.h.b16 %v7813
    %v8126 = vunpack.c.l.b16 %v7814
    %v8127 = vunpack.c.h.b16 %v7814
    %v8128 = vunpack.c.l.b16 %v7815
    %v8129 = vunpack.c.h.b16 %v7815
    %v8130 = vunpack.c.l.b16 %v7816
    %v8131 = vunpack.c.h.b16 %v7816
    %v8132 = vunpack.c.l.b16 %v7817
    %v8133 = vunpack.c.h.b16 %v7817
    %v8134 = vunpack.c.l.b16 %v7818
    %v8135 = vunpack.c.h.b16 %v7818
    %v8136 = vunpack.c.l.b16 %v7819
    %v8137 = vunpack.c.h.b16 %v7819
    %v8138 = vunpack.c.l.b16 %v7820
    %v8139 = vunpack.c.h.b16 %v7820
    %v8140 = vunpack.c.l.b16 %v7821
    %v8141 = vunpack.c.h.b16 %v7821
    %v8142 = vunpack.c.l.b16 %v7822
    %v8143 = vunpack.c.h.b16 %v7822
    %v8144 = vunpack.c.l.b16 %v7823
    %v8145 = vunpack.c.h.b16 %v7823
    %v8146 = vunpack.c.l.b16 %v7824
    %v8147 = vunpack.c.h.b16 %v7824
    %v8148 = vunpack.c.l.b16 %v7825
    %v8149 = vunpack.c.h.b16 %v7825
    %v8150 = vunpack.c.l.b16 %v7826
    %v8151 = vunpack.c.h.b16 %v7826
    %v8152 = vunpack.c.l.b16 %v7827
    %v8153 = vunpack.c.h.b16 %v7827
    %v8154 = vunpack.c.l.b16 %v7828
    %v8155 = vunpack.c.h.b16 %v7828
    %v8156 = vunpack.c.l.b16 %v7829
    %v8157 = vunpack.c.h.b16 %v7829
    %v8158 = vunpack.c.l.b16 %v7830
    %v8159 = vunpack.c.h.b16 %v7830
    %v8160 = vunpack.c.l.b16 %v7831
    %v8161 = vunpack.c.h.b16 %v7831
    %v8162 = vunpack.c.l.b16 %v7832
    %v8163 = vunpack.c.h.b16 %v7832
    %v8164 = vunpack.c.l.b16 %v7833
    %v8165 = vunpack.c.h.b16 %v7833
    %v8166 = vunpack.c.l.b16 %v7834
    %v8167 = vunpack.c.h.b16 %v7834
    %v8168 = vunpack.c.l.b16 %v7835
    %v8169 = vunpack.c.h.b16 %v7835
    %v8170 = vunpack.c.l.b16 %v7836
    %v8171 = vunpack.c.h.b16 %v7836
    %v8172 = vunpack.c.l.b16 %v7837
    %v8173 = vunpack.c.h.b16 %v7837
    %v8174 = vunpack.c.l.b16 %v7838
    %v8175 = vunpack.c.h.b16 %v7838
    %v8176 = vunpack.c.l.b16 %v7839
    %v8177 = vunpack.c.h.b16 %v7839
    %v8178 = vunpack.c.l.b16 %v7840
    %v8179 = vunpack.c.h.b16 %v7840
    %v8180 = vunpack.c.l.b16 %v7841
    %v8181 = vunpack.c.h.b16 %v7841
    %v8182 = vunpack.c.l.b16 %v7842
    %v8183 = vunpack.c.h.b16 %v7842
    %v8184 = vunpack.c.l.b16 %v7843
    %v8185 = vunpack.c.h.b16 %v7843
    %v8186 = vunpack.c.l.b16 %v7844
    %v8187 = vunpack.c.h.b16 %v7844
    %v8188 = vunpack.c.l.b16 %v7845
    %v8189 = vunpack.c.h.b16 %v7845
    %v8190 = vunpack.c.l.b16 %v7846
    %v8191 = vunpack.c.h.b16 %v7846
    %v8192 = vunpack.c.l.b16 %v7847
    %v8193 = vunpack.c.h.b16 %v7847
    %v8194 = vunpack.c.l.b16 %v7848
    %v8195 = vunpack.c.h.b16 %v7848
    %v8196 = vunpack.c.l.b16 %v7849
    %v8197 = vunpack.c.h.b16 %v7849
    %v8198 = vunpack.c.l.b16 %v7850
    %v8199 = vunpack.c.h.b16 %v7850
    %v8200 = vunpack.c.l.b16 %v7851
    %v8201 = vunpack.c.h.b16 %v7851
    %v8202 = vunpack.c.l.b16 %v7852
    %v8203 = vunpack.c.h.b16 %v7852
    %v8204 = vunpack.c.l.b16 %v7853
    %v8205 = vunpack.c.h.b16 %v7853
    %v8206 = vunpack.c.l.b16 %v7854
    %v8207 = vunpack.c.h.b16 %v7854
    %v8208 = vunpack.c.l.b16 %v7855
    %v8209 = vunpack.c.h.b16 %v7855
    %v8210 = vunpack.c.l.b16 %v7856
    %v8211 = vunpack.c.h.b16 %v7856
    %v8212 = vunpack.c.l.b16 %v7857
    %v8213 = vunpack.c.h.b16 %v7857
    %v8214 = vunpack.c.l.b16 %v7858
    %v8215 = vunpack.c.h.b16 %v7858
    %v8216 = vunpack.c.l.b16 %v7859
    %v8217 = vunpack.c.h.b16 %v7859
    %v8218 = vunpack.c.l.b16 %v7860
    %v8219 = vunpack.c.h.b16 %v7860
    %v8220 = vunpack.c.l.b16 %v7861
    %v8221 = vunpack.c.h.b16 %v7861
    %v8222 = vunpack.c.l.b16 %v7862
    %v8223 = vunpack.c.h.b16 %v7862
    %v8224 = vunpack.c.l.b16 %v7863
    %v8225 = vunpack.c.h.b16 %v7863
    %v8226 = vunpack.c.l.b16 %v7864
    %v8227 = vunpack.c.h.b16 %v7864
    %v8228 = vunpack.c.l.b16 %v7865
    %v8229 = vunpack.c.h.b16 %v7865
    %v8230 = vunpack.c.l.b16 %v7866
    %v8231 = vunpack.c.h.b16 %v7866
    %v8232 = vunpack.c.l.b16 %v7867
    %v8233 = vunpack.c.h.b16 %v7867
    %v8234 = vunpack.c.l.b16 %v7868
    %v8235 = vunpack.c.h.b16 %v7868
    %v8236 = vunpack.c.l.b16 %v7869
    %v8237 = vunpack.c.h.b16 %v7869
    %v8238 = vunpack.c.l.b16 %v7870
    %v8239 = vunpack.c.h.b16 %v7870
    %v8240 = vunpack.c.l.b16 %v7871
    %v8241 = vunpack.c.h.b16 %v7871
    %v8242 = vunpack.c.l.b16 %v7872
    %v8243 = vunpack.c.h.b16 %v7872
    %v8244 = vunpack.c.l.b16 %v7873
    %v8245 = vunpack.c.h.b16 %v7873
    %v8246 = vunpack.c.l.b16 %v7874
    %v8247 = vunpack.c.h.b16 %v7874
    %v8248 = vunpack.c.l.b16 %v7875
    %v8249 = vunpack.c.h.b16 %v7875
    %v8250 = vunpack.c.l.b16 %v7876
    %v8251 = vunpack.c.h.b16 %v7876
    %v8252 = vunpack.c.l.b16 %v7877
    %v8253 = vunpack.c.h.b16 %v7877
    %v8254 = vunpack.c.l.b16 %v7878
    %v8255 = vunpack.c.h.b16 %v7878
    %v8256 = vunpack.c.l.b16 %v7879
    %v8257 = vunpack.c.h.b16 %v7879
    %v8258 = vunpack.c.l.b16 %v7880
    %v8259 = vunpack.c.h.b16 %v7880
    %v8260 = vunpack.c.l.b16 %v7881
    %v8261 = vunpack.c.h.b16 %v7881
    %v8262 = vunpack.c.l.b16 %v7882
    %v8263 = vunpack.c.h.b16 %v7882
    %v8264 = vunpack.c.l.b16 %v7883
    %v8265 = vunpack.c.h.b16 %v7883
    %v8266 = vunpack.c.l.b16 %v7884
    %v8267 = vunpack.c.h.b16 %v7884
    %v8268 = vunpack.c.l.b16 %v7885
    %v8269 = vunpack.c.h.b16 %v7885
    %v8270 = vunpack.c.l.b16 %v7886
    %v8271 = vunpack.c.h.b16 %v7886
    %v8272 = vunpack.c.l.b16 %v7887
    %v8273 = vunpack.c.h.b16 %v7887
    %v8274 = vunpack.c.l.b16 %v7888
    %v8275 = vunpack.c.h.b16 %v7888
    %v8276 = vunpack.c.l.b16 %v7889
    %v8277 = vunpack.c.h.b16 %v7889
    %v8278 = vunpack.c.l.b16 %v7890
    %v8279 = vunpack.c.h.b16 %v7890
    %v8280 = vunpack.c.l.b16 %v7891
    %v8281 = vunpack.c.h.b16 %v7891
    %v8282 = vunpack.c.l.b16 %v7892
    %v8283 = vunpack.c.h.b16 %v7892
    %v8284 = vunpack.c.l.b16 %v7893
    %v8285 = vunpack.c.h.b16 %v7893
    %v8286 = vunpack.c.l.b16 %v7894
    %v8287 = vunpack.c.h.b16 %v7894
    %v8288 = vunpack.c.l.b16 %v7895
    %v8289 = vunpack.c.h.b16 %v7895
    %v8290 = vunpack.c.l.b16 %v7896
    %v8291 = vunpack.c.h.b16 %v7896
    %v8292 = vunpack.c.l.b16 %v7897
    %v8293 = vunpack.c.h.b16 %v7897
    %v8294 = vunpack.c.l.b16 %v7898
    %v8295 = vunpack.c.h.b16 %v7898
    %v8296 = vunpack.c.l.b16 %v7899
    %v8297 = vunpack.c.h.b16 %v7899
    %v8298 = vunpack.c.l.b16 %v7900
    %v8299 = vunpack.c.h.b16 %v7900
    %v8300 = vunpack.c.l.b16 %v7901
    %v8301 = vunpack.c.h.b16 %v7901
    %v8302 = vunpack.c.l.b16 %v7902
    %v8303 = vunpack.c.h.b16 %v7902
    %v8304 = vunpack.c.l.b16 %v7903
    %v8305 = vunpack.c.h.b16 %v7903
    %v8306 = vunpack.c.l.b16 %v7904
    %v8307 = vunpack.c.h.b16 %v7904
    %v8308 = vunpack.c.l.b16 %v7905
    %v8309 = vunpack.c.h.b16 %v7905
    %v8310 = vunpack.c.l.b16 %v7906
    %v8311 = vunpack.c.h.b16 %v7906
    %v8312 = vunpack.c.l.b16 %v7907
    %v8313 = vunpack.c.h.b16 %v7907
    %v8314 = vunpack.c.l.b16 %v7908
    %v8315 = vunpack.c.h.b16 %v7908
    %v8316 = vpack.c.b16 %v8064, %v8060
    %v8317 = vpack.c.b16 %v8065, %v8061
    %v8318 = vpack.c.b16 %v8066, %v8062
    %v8319 = vpack.c.b16 %v8067, %v8063
    %v8320 = vpack.c.b16 %v8072, %v8068
    %v8321 = vpack.c.b16 %v8073, %v8069
    %v8322 = vpack.c.b16 %v8074, %v8070
    %v8323 = vpack.c.b16 %v8075, %v8071
    %v8324 = vpack.c.b16 %v8080, %v8076
    %v8325 = vpack.c.b16 %v8081, %v8077
    %v8326 = vpack.c.b16 %v8082, %v8078
    %v8327 = vpack.c.b16 %v8083, %v8079
    %v8328 = vpack.c.b16 %v8088, %v8084
    %v8329 = vpack.c.b16 %v8089, %v8085
    %v8330 = vpack.c.b16 %v8090, %v8086
    %v8331 = vpack.c.b16 %v8091, %v8087
    %v8332 = vpack.c.b16 %v8096, %v8092
    %v8333 = vpack.c.b16 %v8097, %v8093
    %v8334 = vpack.c.b16 %v8098, %v8094
    %v8335 = vpack.c.b16 %v8099, %v8095
    %v8336 = vpack.c.b16 %v8104, %v8100
    %v8337 = vpack.c.b16 %v8105, %v8101
    %v8338 = vpack.c.b16 %v8106, %v8102
    %v8339 = vpack.c.b16 %v8107, %v8103
    %v8340 = vpack.c.b16 %v8112, %v8108
    %v8341 = vpack.c.b16 %v8113, %v8109
    %v8342 = vpack.c.b16 %v8114, %v8110
    %v8343 = vpack.c.b16 %v8115, %v8111
    %v8344 = vpack.c.b16 %v8120, %v8116
    %v8345 = vpack.c.b16 %v8121, %v8117
    %v8346 = vpack.c.b16 %v8122, %v8118
    %v8347 = vpack.c.b16 %v8123, %v8119
    %v8348 = vpack.c.b16 %v8128, %v8124
    %v8349 = vpack.c.b16 %v8129, %v8125
    %v8350 = vpack.c.b16 %v8130, %v8126
    %v8351 = vpack.c.b16 %v8131, %v8127
    %v8352 = vpack.c.b16 %v8136, %v8132
    %v8353 = vpack.c.b16 %v8137, %v8133
    %v8354 = vpack.c.b16 %v8138, %v8134
    %v8355 = vpack.c.b16 %v8139, %v8135
    %v8356 = vpack.c.b16 %v8144, %v8140
    %v8357 = vpack.c.b16 %v8145, %v8141
    %v8358 = vpack.c.b16 %v8146, %v8142
    %v8359 = vpack.c.b16 %v8147, %v8143
    %v8360 = vpack.c.b16 %v8152, %v8148
    %v8361 = vpack.c.b16 %v8153, %v8149
    %v8362 = vpack.c.b16 %v8154, %v8150
    %v8363 = vpack.c.b16 %v8155, %v8151
    %v8364 = vpack.c.b16 %v8160, %v8156
    %v8365 = vpack.c.b16 %v8161, %v8157
    %v8366 = vpack.c.b16 %v8162, %v8158
    %v8367 = vpack.c.b16 %v8163, %v8159
    %v8368 = vpack.c.b16 %v8168, %v8164
    %v8369 = vpack.c.b16 %v8169, %v8165
    %v8370 = vpack.c.b16 %v8170, %v8166
    %v8371 = vpack.c.b16 %v8171, %v8167
    %v8372 = vpack.c.b16 %v8176, %v8172
    %v8373 = vpack.c.b16 %v8177, %v8173
    %v8374 = vpack.c.b16 %v8178, %v8174
    %v8375 = vpack.c.b16 %v8179, %v8175
    %v8376 = vpack.c.b16 %v8184, %v8180
    %v8377 = vpack.c.b16 %v8185, %v8181
    %v8378 = vpack.c.b16 %v8186, %v8182
    %v8379 = vpack.c.b16 %v8187, %v8183
    %v8380 = vpack.c.b16 %v8192, %v8188
    %v8381 = vpack.c.b16 %v8193, %v8189
    %v8382 = vpack.c.b16 %v8194, %v8190
    %v8383 = vpack.c.b16 %v8195, %v8191
    %v8384 = vpack.c.b16 %v8200, %v8196
    %v8385 = vpack.c.b16 %v8201, %v8197
    %v8386 = vpack.c.b16 %v8202, %v8198
    %v8387 = vpack.c.b16 %v8203, %v8199
    %v8388 = vpack.c.b16 %v8208, %v8204
    %v8389 = vpack.c.b16 %v8209, %v8205
    %v8390 = vpack.c.b16 %v8210, %v8206
    %v8391 = vpack.c.b16 %v8211, %v8207
    %v8392 = vpack.c.b16 %v8216, %v8212
    %v8393 = vpack.c.b16 %v8217, %v8213
    %v8394 = vpack.c.b16 %v8218, %v8214
    %v8395 = vpack.c.b16 %v8219, %v8215
    %v8396 = vpack.c.b16 %v8224, %v8220
    %v8397 = vpack.c.b16 %v8225, %v8221
    %v8398 = vpack.c.b16 %v8226, %v8222
    %v8399 = vpack.c.b16 %v8227, %v8223
    %v8400 = vpack.c.b16 %v8232, %v8228
    %v8401 = vpack.c.b16 %v8233, %v8229
    %v8402 = vpack.c.b16 %v8234, %v8230
    %v8403 = vpack.c.b16 %v8235, %v8231
    %v8404 = vpack.c.b16 %v8240, %v8236
    %v8405 = vpack.c.b16 %v8241, %v8237
    %v8406 = vpack.c.b16 %v8242, %v8238
    %v8407 = vpack.c.b16 %v8243, %v8239
    %v8408 = vpack.c.b16 %v8248, %v8244
    %v8409 = vpack.c.b16 %v8249, %v8245
    %v8410 = vpack.c.b16 %v8250, %v8246
    %v8411 = vpack.c.b16 %v8251, %v8247
    %v8412 = vpack.c.b16 %v8256, %v8252
    %v8413 = vpack.c.b16 %v8257, %v8253
    %v8414 = vpack.c.b16 %v8258, %v8254
    %v8415 = vpack.c.b16 %v8259, %v8255
    %v8416 = vpack.c.b16 %v8264, %v8260
    %v8417 = vpack.c.b16 %v8265, %v8261
    %v8418 = vpack.c.b16 %v8266, %v8262
    %v8419 = vpack.c.b16 %v8267, %v8263
    %v8420 = vpack.c.b16 %v8272, %v8268
    %v8421 = vpack.c.b16 %v8273, %v8269
    %v8422 = vpack.c.b16 %v8274, %v8270
    %v8423 = vpack.c.b16 %v8275, %v8271
    %v8424 = vpack.c.b16 %v8280, %v8276
    %v8425 = vpack.c.b16 %v8281, %v8277
    %v8426 = vpack.c.b16 %v8282, %v8278
    %v8427 = vpack.c.b16 %v8283, %v8279
    %v8428 = vpack.c.b16 %v8288, %v8284
    %v8429 = vpack.c.b16 %v8289, %v8285
    %v8430 = vpack.c.b16 %v8290, %v8286
    %v8431 = vpack.c.b16 %v8291, %v8287
    %v8432 = vpack.c.b16 %v8296, %v8292
    %v8433 = vpack.c.b16 %v8297, %v8293
    %v8434 = vpack.c.b16 %v8298, %v8294
    %v8435 = vpack.c.b16 %v8299, %v8295
    %v8436 = vpack.c.b16 %v8304, %v8300
    %v8437 = vpack.c.b16 %v8305, %v8301
    %v8438 = vpack.c.b16 %v8306, %v8302
    %v8439 = vpack.c.b16 %v8307, %v8303
    %v8440 = vpack.c.b16 %v8312, %v8308
    %v8441 = vpack.c.b16 %v8313, %v8309
    %v8442 = vpack.c.b16 %v8314, %v8310
    %v8443 = vpack.c.b16 %v8315, %v8311
    %8572 = vmatprep.subr.bf16.mxu0 %v8317
    %8573 = vmatpush1.bf16.msra.mxu0 %v8316
    %8574 = vmatprep.subr.bf16.mxu0 %v8321
    %8575 = vmatpush1.bf16.msra.mxu0 %v8320
    %8576 = vmatprep.subr.bf16.mxu0 %v8325
    %8577 = vmatpush1.bf16.msra.mxu0 %v8324
    %8578 = vmatprep.subr.bf16.mxu0 %v8329
    %8579 = vmatpush1.bf16.msra.mxu0 %v8328
    %8580 = vmatprep.subr.bf16.mxu0 %v8333
    %8581 = vmatpush1.bf16.msra.mxu0 %v8332
    %8582 = vmatprep.subr.bf16.mxu0 %v8337
    %8583 = vmatpush1.bf16.msra.mxu0 %v8336
    %8584 = vmatprep.subr.bf16.mxu0 %v8341
    %8585 = vmatpush1.bf16.msra.mxu0 %v8340
    %8586 = vmatprep.subr.bf16.mxu0 %v8345
    %8587 = vmatpush1.bf16.msra.mxu0 %v8344
    %8588 = vmatprep.subr.bf16.mxu0 %v8349
    %8589 = vmatpush1.bf16.msra.mxu0 %v8348
    %8590 = vmatprep.subr.bf16.mxu0 %v8353
    %8591 = vmatpush1.bf16.msra.mxu0 %v8352
    %8592 = vmatprep.subr.bf16.mxu0 %v8357
    %8593 = vmatpush1.bf16.msra.mxu0 %v8356
    %8594 = vmatprep.subr.bf16.mxu0 %v8361
    %8595 = vmatpush1.bf16.msra.mxu0 %v8360
    %8596 = vmatprep.subr.bf16.mxu0 %v8365
    %8597 = vmatpush1.bf16.msra.mxu0 %v8364
    %8598 = vmatprep.subr.bf16.mxu0 %v8369
    %8599 = vmatpush1.bf16.msra.mxu0 %v8368
    %8600 = vmatprep.subr.bf16.mxu0 %v8373
    %8601 = vmatpush1.bf16.msra.mxu0 %v8372
    %8602 = vmatprep.subr.bf16.mxu0 %v8377
    %8603 = vmatpush1.bf16.msra.mxu0 %v8376
    %8604 = vmatprep.mubr.bf16.mxu0 %v7777
    %8605 = vmatmul.mubr.bf16.gmra.mrb[0].mxu0 %v7776
    %v8606 = vpop.f32.mrb[0].mxu0
    %v8607 = vadd.f32 %v7915, %v8606
    %v8608 = vpop.f32.mrb[0].mxu0
    %v8609 = vadd.f32 %v7919, %v8608
    %v8610 = vpop.f32.mrb[0].mxu0
    %v8611 = vpop.f32.mrb[0].mxu0
    %8612 = vdwg.mxu0
    %8613 = vmatprep.subr.bf16.mxu0 %v8381
    %8614 = vmatpush1.bf16.msra.mxu0 %v8380
    %8615 = vmatprep.subr.bf16.mxu0 %v8385
    %8616 = vmatpush1.bf16.msra.mxu0 %v8384
    %8617 = vmatprep.subr.bf16.mxu0 %v8389
    %8618 = vmatpush1.bf16.msra.mxu0 %v8388
    %8619 = vmatprep.subr.bf16.mxu0 %v8393
    %8620 = vmatpush1.bf16.msra.mxu0 %v8392
    %8621 = vmatprep.subr.bf16.mxu0 %v8397
    %8622 = vmatpush1.bf16.msra.mxu0 %v8396
    %8623 = vmatprep.subr.bf16.mxu0 %v8401
    %8624 = vmatpush1.bf16.msra.mxu0 %v8400
    %8625 = vmatprep.subr.bf16.mxu0 %v8405
    %8626 = vmatpush1.bf16.msra.mxu0 %v8404
    %8627 = vmatprep.subr.bf16.mxu0 %v8409
    %8628 = vmatpush1.bf16.msra.mxu0 %v8408
    %8629 = vmatprep.subr.bf16.mxu0 %v8413
    %8630 = vmatpush1.bf16.msra.mxu0 %v8412
    %8631 = vmatprep.subr.bf16.mxu0 %v8417
    %8632 = vmatpush1.bf16.msra.mxu0 %v8416
    %8633 = vmatprep.subr.bf16.mxu0 %v8421
    %8634 = vmatpush1.bf16.msra.mxu0 %v8420
    %8635 = vmatprep.subr.bf16.mxu0 %v8425
    %8636 = vmatpush1.bf16.msra.mxu0 %v8424
    %8637 = vmatprep.subr.bf16.mxu0 %v8429
    %8638 = vmatpush1.bf16.msra.mxu0 %v8428
    %8639 = vmatprep.subr.bf16.mxu0 %v8433
    %8640 = vmatpush1.bf16.msra.mxu0 %v8432
    %8641 = vmatprep.subr.bf16.mxu0 %v8437
    %8642 = vmatpush1.bf16.msra.mxu0 %v8436
    %8643 = vmatprep.subr.bf16.mxu0 %v8441
    %8644 = vmatpush1.bf16.msra.mxu0 %v8440
    %8645 = vmatprep.mubr.bf16.mxu0 %v7779
    %8646 = vmatmul.mubr.bf16.gmra.mrb[0].mxu0 %v7778
    %v8647 = vpop.f32.mrb[0].mxu0
    %v8648 = vadd.f32 %v8607, %v8647
    %v8649 = vpop.f32.mrb[0].mxu0
    %v8650 = vadd.f32 %v8609, %v8649
    %v8651 = vpop.f32.mrb[0].mxu0
    %v8652 = vpop.f32.mrb[0].mxu0
    %8653 = vdwg.mxu0
    %8654 = vmatprep.subr.bf16.mxu0 %v8319
    %8655 = vmatpush1.bf16.msra.mxu0 %v8318
    %8656 = vmatprep.subr.bf16.mxu0 %v8323
    %8657 = vmatpush1.bf16.msra.mxu0 %v8322
    %8658 = vmatprep.subr.bf16.mxu0 %v8327
    %8659 = vmatpush1.bf16.msra.mxu0 %v8326
    %8660 = vmatprep.subr.bf16.mxu0 %v8331
    %8661 = vmatpush1.bf16.msra.mxu0 %v8330
    %8662 = vmatprep.subr.bf16.mxu0 %v8335
    %8663 = vmatpush1.bf16.msra.mxu0 %v8334
    %8664 = vmatprep.subr.bf16.mxu0 %v8339
    %8665 = vmatpush1.bf16.msra.mxu0 %v8338
    %8666 = vmatprep.subr.bf16.mxu0 %v8343
    %8667 = vmatpush1.bf16.msra.mxu0 %v8342
    %8668 = vmatprep.subr.bf16.mxu0 %v8347
    %8669 = vmatpush1.bf16.msra.mxu0 %v8346
    %8670 = vmatprep.subr.bf16.mxu0 %v8351
    %8671 = vmatpush1.bf16.msra.mxu0 %v8350
    %8672 = vmatprep.subr.bf16.mxu0 %v8355
    %8673 = vmatpush1.bf16.msra.mxu0 %v8354
    %8674 = vmatprep.subr.bf16.mxu0 %v8359
    %8675 = vmatpush1.bf16.msra.mxu0 %v8358
    %8676 = vmatprep.subr.bf16.mxu0 %v8363
    %8677 = vmatpush1.bf16.msra.mxu0 %v8362
    %8678 = vmatprep.subr.bf16.mxu0 %v8367
    %8679 = vmatpush1.bf16.msra.mxu0 %v8366
    %8680 = vmatprep.subr.bf16.mxu0 %v8371
    %8681 = vmatpush1.bf16.msra.mxu0 %v8370
    %8682 = vmatprep.subr.bf16.mxu0 %v8375
    %8683 = vmatpush1.bf16.msra.mxu0 %v8374
    %8684 = vmatprep.subr.bf16.mxu0 %v8379
    %8685 = vmatpush1.bf16.msra.mxu0 %v8378
    %8686 = vmatprep.mubr.bf16.mxu0 %v7777
    %8687 = vmatmul.mubr.bf16.gmra.mrb[0].mxu0 %v7776
    %v8688 = vpop.f32.mrb[0].mxu0
    %v8689 = vadd.f32 %v7923, %v8688
    %v8690 = vpop.f32.mrb[0].mxu0
    %v8691 = vadd.f32 %v7927, %v8690
    %v8692 = vpop.f32.mrb[0].mxu0
    %v8693 = vpop.f32.mrb[0].mxu0
    %8694 = vdwg.mxu0
    %8695 = vmatprep.subr.bf16.mxu0 %v8383
    %8696 = vmatpush1.bf16.msra.mxu0 %v8382
    %8697 = vmatprep.subr.bf16.mxu0 %v8387
    %8698 = vmatpush1.bf16.msra.mxu0 %v8386
    %8699 = vmatprep.subr.bf16.mxu0 %v8391
    %8700 = vmatpush1.bf16.msra.mxu0 %v8390
    %8701 = vmatprep.subr.bf16.mxu0 %v8395
    %8702 = vmatpush1.bf16.msra.mxu0 %v8394
    %8703 = vmatprep.subr.bf16.mxu0 %v8399
    %8704 = vmatpush1.bf16.msra.mxu0 %v8398
    %8705 = vmatprep.subr.bf16.mxu0 %v8403
    %8706 = vmatpush1.bf16.msra.mxu0 %v8402
    %8707 = vmatprep.subr.bf16.mxu0 %v8407
    %8708 = vmatpush1.bf16.msra.mxu0 %v8406
    %8709 = vmatprep.subr.bf16.mxu0 %v8411
    %8710 = vmatpush1.bf16.msra.mxu0 %v8410
    %8711 = vmatprep.subr.bf16.mxu0 %v8415
    %8712 = vmatpush1.bf16.msra.mxu0 %v8414
    %8713 = vmatprep.subr.bf16.mxu0 %v8419
    %8714 = vmatpush1.bf16.msra.mxu0 %v8418
    %8715 = vmatprep.subr.bf16.mxu0 %v8423
    %8716 = vmatpush1.bf16.msra.mxu0 %v8422
    %8717 = vmatprep.subr.bf16.mxu0 %v8427
    %8718 = vmatpush1.bf16.msra.mxu0 %v8426
    %8719 = vmatprep.subr.bf16.mxu0 %v8431
    %8720 = vmatpush1.bf16.msra.mxu0 %v8430
    %8721 = vmatprep.subr.bf16.mxu0 %v8435
    %8722 = vmatpush1.bf16.msra.mxu0 %v8434
    %8723 = vmatprep.subr.bf16.mxu0 %v8439
    %8724 = vmatpush1.bf16.msra.mxu0 %v8438
    %8725 = vmatprep.subr.bf16.mxu0 %v8443
    %8726 = vmatpush1.bf16.msra.mxu0 %v8442
    %8727 = vmatprep.mubr.bf16.mxu0 %v7779
    %8728 = vmatmul.mubr.bf16.gmra.mrb[0].mxu0 %v7778
    %v8729 = vpop.f32.mrb[0].mxu0
    %v8730 = vadd.f32 %v8689, %v8729
    %v8731 = vpop.f32.mrb[0].mxu0
    %v8732 = vadd.f32 %v8691, %v8731
    %v8733 = vpop.f32.mrb[0].mxu0
    %v8734 = vpop.f32.mrb[0].mxu0
    %8735 = vdwg.mxu0
    %v8736 = vmax.f32 %v8648, 0.0
    %v8737 = vmax.f32 %v8650, 0.0
    %v8738 = vmax.f32 %v8730, 0.0
    %v8739 = vmax.f32 %v8732, 0.0
    %v8740 = vadd.f32 %v8736, %v6808
    %v8741 = vadd.f32 %v8737, %v6809
    %v8742 = vadd.f32 %v8738, %v6810
    %v8743 = vadd.f32 %v8739, %v6811
    %v8744 = vpack.c.bf16 %v8740, %v8740
    %v8745 = vpack.c.bf16 %v8741, %v8741
    %v8746 = vpack.c.bf16 %v8742, %v8742
    %v8747 = vpack.c.bf16 %v8743, %v8743
    %s8748 = scalar_lea.vmem [#allocation2], 9216
    %v8749 = vld [vmem:[%s8748] sm:$0xff]
    %v8750 = vld [vmem:[%s8748 + $0x8] sm:$0xff]
    %v8751 = vld [vmem:[%s8748 + $0x10] sm:$0xff]
    %v8752 = vld [vmem:[%s8748 + $0x18] sm:$0xff]
    %v8753 = vld [vmem:[%s8748 + $0x20] sm:$0xff]
    %v8754 = vld [vmem:[%s8748 + $0x28] sm:$0xff]
    %v8755 = vld [vmem:[%s8748 + $0x30] sm:$0xff]
    %v8756 = vld [vmem:[%s8748 + $0x38] sm:$0xff]
    %v8757 = vld [vmem:[%s8748 + $0x40] sm:$0xff]
    %v8758 = vld [vmem:[%s8748 + $0x48] sm:$0xff]
    %v8759 = vld [vmem:[%s8748 + $0x50] sm:$0xff]
    %v8760 = vld [vmem:[%s8748 + $0x58] sm:$0xff]
    %v8761 = vld [vmem:[%s8748 + $0x60] sm:$0xff]
    %v8762 = vld [vmem:[%s8748 + $0x68] sm:$0xff]
    %v8763 = vld [vmem:[%s8748 + $0x70] sm:$0xff]
    %v8764 = vld [vmem:[%s8748 + $0x78] sm:$0xff]
    %v8765 = vld [vmem:[%s8748 + $0x80] sm:$0xff]
    %v8766 = vld [vmem:[%s8748 + $0x88] sm:$0xff]
    %v8767 = vld [vmem:[%s8748 + $0x90] sm:$0xff]
    %v8768 = vld [vmem:[%s8748 + $0x98] sm:$0xff]
    %v8769 = vld [vmem:[%s8748 + $0xa0] sm:$0xff]
    %v8770 = vld [vmem:[%s8748 + $0xa8] sm:$0xff]
    %v8771 = vld [vmem:[%s8748 + $0xb0] sm:$0xff]
    %v8772 = vld [vmem:[%s8748 + $0xb8] sm:$0xff]
    %v8773 = vld [vmem:[%s8748 + $0xc0] sm:$0xff]
    %v8774 = vld [vmem:[%s8748 + $0xc8] sm:$0xff]
    %v8775 = vld [vmem:[%s8748 + $0xd0] sm:$0xff]
    %v8776 = vld [vmem:[%s8748 + $0xd8] sm:$0xff]
    %v8777 = vld [vmem:[%s8748 + $0xe0] sm:$0xff]
    %v8778 = vld [vmem:[%s8748 + $0xe8] sm:$0xff]
    %v8779 = vld [vmem:[%s8748 + $0xf0] sm:$0xff]
    %v8780 = vld [vmem:[%s8748 + $0xf8] sm:$0xff]
    %v8781 = vld [vmem:[%s8748 + $0x100] sm:$0xff]
    %v8782 = vld [vmem:[%s8748 + $0x108] sm:$0xff]
    %v8783 = vld [vmem:[%s8748 + $0x110] sm:$0xff]
    %v8784 = vld [vmem:[%s8748 + $0x118] sm:$0xff]
    %v8785 = vld [vmem:[%s8748 + $0x120] sm:$0xff]
    %v8786 = vld [vmem:[%s8748 + $0x128] sm:$0xff]
    %v8787 = vld [vmem:[%s8748 + $0x130] sm:$0xff]
    %v8788 = vld [vmem:[%s8748 + $0x138] sm:$0xff]
    %v8789 = vld [vmem:[%s8748 + $0x140] sm:$0xff]
    %v8790 = vld [vmem:[%s8748 + $0x148] sm:$0xff]
    %v8791 = vld [vmem:[%s8748 + $0x150] sm:$0xff]
    %v8792 = vld [vmem:[%s8748 + $0x158] sm:$0xff]
    %v8793 = vld [vmem:[%s8748 + $0x160] sm:$0xff]
    %v8794 = vld [vmem:[%s8748 + $0x168] sm:$0xff]
    %v8795 = vld [vmem:[%s8748 + $0x170] sm:$0xff]
    %v8796 = vld [vmem:[%s8748 + $0x178] sm:$0xff]
    %v8797 = vld [vmem:[%s8748 + $0x180] sm:$0xff]
    %v8798 = vld [vmem:[%s8748 + $0x188] sm:$0xff]
    %v8799 = vld [vmem:[%s8748 + $0x190] sm:$0xff]
    %v8800 = vld [vmem:[%s8748 + $0x198] sm:$0xff]
    %v8801 = vld [vmem:[%s8748 + $0x1a0] sm:$0xff]
    %v8802 = vld [vmem:[%s8748 + $0x1a8] sm:$0xff]
    %v8803 = vld [vmem:[%s8748 + $0x1b0] sm:$0xff]
    %v8804 = vld [vmem:[%s8748 + $0x1b8] sm:$0xff]
    %v8805 = vld [vmem:[%s8748 + $0x1c0] sm:$0xff]
    %v8806 = vld [vmem:[%s8748 + $0x1c8] sm:$0xff]
    %v8807 = vld [vmem:[%s8748 + $0x1d0] sm:$0xff]
    %v8808 = vld [vmem:[%s8748 + $0x1d8] sm:$0xff]
    %v8809 = vld [vmem:[%s8748 + $0x1e0] sm:$0xff]
    %v8810 = vld [vmem:[%s8748 + $0x1e8] sm:$0xff]
    %v8811 = vld [vmem:[%s8748 + $0x1f0] sm:$0xff]
    %v8812 = vld [vmem:[%s8748 + $0x1f8] sm:$0xff]
    %v8813 = vld [vmem:[%s8748 + $0x200] sm:$0xff]
    %v8814 = vld [vmem:[%s8748 + $0x208] sm:$0xff]
    %v8815 = vld [vmem:[%s8748 + $0x210] sm:$0xff]
    %v8816 = vld [vmem:[%s8748 + $0x218] sm:$0xff]
    %v8817 = vld [vmem:[%s8748 + $0x220] sm:$0xff]
    %v8818 = vld [vmem:[%s8748 + $0x228] sm:$0xff]
    %v8819 = vld [vmem:[%s8748 + $0x230] sm:$0xff]
    %v8820 = vld [vmem:[%s8748 + $0x238] sm:$0xff]
    %v8821 = vld [vmem:[%s8748 + $0x240] sm:$0xff]
    %v8822 = vld [vmem:[%s8748 + $0x248] sm:$0xff]
    %v8823 = vld [vmem:[%s8748 + $0x250] sm:$0xff]
    %v8824 = vld [vmem:[%s8748 + $0x258] sm:$0xff]
    %v8825 = vld [vmem:[%s8748 + $0x260] sm:$0xff]
    %v8826 = vld [vmem:[%s8748 + $0x268] sm:$0xff]
    %v8827 = vld [vmem:[%s8748 + $0x270] sm:$0xff]
    %v8828 = vld [vmem:[%s8748 + $0x278] sm:$0xff]
    %v8829 = vld [vmem:[%s8748 + $0x280] sm:$0xff]
    %v8830 = vld [vmem:[%s8748 + $0x288] sm:$0xff]
    %v8831 = vld [vmem:[%s8748 + $0x290] sm:$0xff]
    %v8832 = vld [vmem:[%s8748 + $0x298] sm:$0xff]
    %v8833 = vld [vmem:[%s8748 + $0x2a0] sm:$0xff]
    %v8834 = vld [vmem:[%s8748 + $0x2a8] sm:$0xff]
    %v8835 = vld [vmem:[%s8748 + $0x2b0] sm:$0xff]
    %v8836 = vld [vmem:[%s8748 + $0x2b8] sm:$0xff]
    %v8837 = vld [vmem:[%s8748 + $0x2c0] sm:$0xff]
    %v8838 = vld [vmem:[%s8748 + $0x2c8] sm:$0xff]
    %v8839 = vld [vmem:[%s8748 + $0x2d0] sm:$0xff]
    %v8840 = vld [vmem:[%s8748 + $0x2d8] sm:$0xff]
    %v8841 = vld [vmem:[%s8748 + $0x2e0] sm:$0xff]
    %v8842 = vld [vmem:[%s8748 + $0x2e8] sm:$0xff]
    %v8843 = vld [vmem:[%s8748 + $0x2f0] sm:$0xff]
    %v8844 = vld [vmem:[%s8748 + $0x2f8] sm:$0xff]
    %v8845 = vld [vmem:[%s8748 + $0x300] sm:$0xff]
    %v8846 = vld [vmem:[%s8748 + $0x308] sm:$0xff]
    %v8847 = vld [vmem:[%s8748 + $0x310] sm:$0xff]
    %v8848 = vld [vmem:[%s8748 + $0x318] sm:$0xff]
    %v8849 = vld [vmem:[%s8748 + $0x320] sm:$0xff]
    %v8850 = vld [vmem:[%s8748 + $0x328] sm:$0xff]
    %v8851 = vld [vmem:[%s8748 + $0x330] sm:$0xff]
    %v8852 = vld [vmem:[%s8748 + $0x338] sm:$0xff]
    %v8853 = vld [vmem:[%s8748 + $0x340] sm:$0xff]
    %v8854 = vld [vmem:[%s8748 + $0x348] sm:$0xff]
    %v8855 = vld [vmem:[%s8748 + $0x350] sm:$0xff]
    %v8856 = vld [vmem:[%s8748 + $0x358] sm:$0xff]
    %v8857 = vld [vmem:[%s8748 + $0x360] sm:$0xff]
    %v8858 = vld [vmem:[%s8748 + $0x368] sm:$0xff]
    %v8859 = vld [vmem:[%s8748 + $0x370] sm:$0xff]
    %v8860 = vld [vmem:[%s8748 + $0x378] sm:$0xff]
    %v8861 = vld [vmem:[%s8748 + $0x380] sm:$0xff]
    %v8862 = vld [vmem:[%s8748 + $0x388] sm:$0xff]
    %v8863 = vld [vmem:[%s8748 + $0x390] sm:$0xff]
    %v8864 = vld [vmem:[%s8748 + $0x398] sm:$0xff]
    %v8865 = vld [vmem:[%s8748 + $0x3a0] sm:$0xff]
    %v8866 = vld [vmem:[%s8748 + $0x3a8] sm:$0xff]
    %v8867 = vld [vmem:[%s8748 + $0x3b0] sm:$0xff]
    %v8868 = vld [vmem:[%s8748 + $0x3b8] sm:$0xff]
    %v8869 = vld [vmem:[%s8748 + $0x3c0] sm:$0xff]
    %v8870 = vld [vmem:[%s8748 + $0x3c8] sm:$0xff]
    %v8871 = vld [vmem:[%s8748 + $0x3d0] sm:$0xff]
    %v8872 = vld [vmem:[%s8748 + $0x3d8] sm:$0xff]
    %v8873 = vld [vmem:[%s8748 + $0x3e0] sm:$0xff]
    %v8874 = vld [vmem:[%s8748 + $0x3e8] sm:$0xff]
    %v8875 = vld [vmem:[%s8748 + $0x3f0] sm:$0xff]
    %v8876 = vld [vmem:[%s8748 + $0x3f8] sm:$0xff]
    %s8877 = scalar_lea.vmem [#allocation4], 36
    %v8878 = vld [vmem:[%s8877] sm:$0xf]
    %v8880 = vlaneseq
    %v8881 = vshrl.u32 %v8880, 7
    %v8882 = vsub.s32 0, %v8881
    %v8883 = vrot.slane %v8878, %v8882
    %v8884 = vlaneseq
    %v8885 = vshrl.u32 %v8884, 7
    %v8886 = vsub.s32 1, %v8885
    %v8887 = vrot.slane %v8878, %v8886
    %v8888 = vlaneseq
    %v8889 = vshrl.u32 %v8888, 7
    %v8890 = vsub.s32 2, %v8889
    %v8891 = vrot.slane %v8878, %v8890
    %v8892 = vlaneseq
    %v8893 = vshrl.u32 %v8892, 7
    %v8894 = vsub.s32 3, %v8893
    %v8895 = vrot.slane %v8878, %v8894
    %v9028 = vunpack.c.l.b16 %v8749
    %v9029 = vunpack.c.h.b16 %v8749
    %v9030 = vunpack.c.l.b16 %v8750
    %v9031 = vunpack.c.h.b16 %v8750
    %v9032 = vunpack.c.l.b16 %v8751
    %v9033 = vunpack.c.h.b16 %v8751
    %v9034 = vunpack.c.l.b16 %v8752
    %v9035 = vunpack.c.h.b16 %v8752
    %v9036 = vunpack.c.l.b16 %v8753
    %v9037 = vunpack.c.h.b16 %v8753
    %v9038 = vunpack.c.l.b16 %v8754
    %v9039 = vunpack.c.h.b16 %v8754
    %v9040 = vunpack.c.l.b16 %v8755
    %v9041 = vunpack.c.h.b16 %v8755
    %v9042 = vunpack.c.l.b16 %v8756
    %v9043 = vunpack.c.h.b16 %v8756
    %v9044 = vunpack.c.l.b16 %v8757
    %v9045 = vunpack.c.h.b16 %v8757
    %v9046 = vunpack.c.l.b16 %v8758
    %v9047 = vunpack.c.h.b16 %v8758
    %v9048 = vunpack.c.l.b16 %v8759
    %v9049 = vunpack.c.h.b16 %v8759
    %v9050 = vunpack.c.l.b16 %v8760
    %v9051 = vunpack.c.h.b16 %v8760
    %v9052 = vunpack.c.l.b16 %v8761
    %v9053 = vunpack.c.h.b16 %v8761
    %v9054 = vunpack.c.l.b16 %v8762
    %v9055 = vunpack.c.h.b16 %v8762
    %v9056 = vunpack.c.l.b16 %v8763
    %v9057 = vunpack.c.h.b16 %v8763
    %v9058 = vunpack.c.l.b16 %v8764
    %v9059 = vunpack.c.h.b16 %v8764
    %v9060 = vunpack.c.l.b16 %v8765
    %v9061 = vunpack.c.h.b16 %v8765
    %v9062 = vunpack.c.l.b16 %v8766
    %v9063 = vunpack.c.h.b16 %v8766
    %v9064 = vunpack.c.l.b16 %v8767
    %v9065 = vunpack.c.h.b16 %v8767
    %v9066 = vunpack.c.l.b16 %v8768
    %v9067 = vunpack.c.h.b16 %v8768
    %v9068 = vunpack.c.l.b16 %v8769
    %v9069 = vunpack.c.h.b16 %v8769
    %v9070 = vunpack.c.l.b16 %v8770
    %v9071 = vunpack.c.h.b16 %v8770
    %v9072 = vunpack.c.l.b16 %v8771
    %v9073 = vunpack.c.h.b16 %v8771
    %v9074 = vunpack.c.l.b16 %v8772
    %v9075 = vunpack.c.h.b16 %v8772
    %v9076 = vunpack.c.l.b16 %v8773
    %v9077 = vunpack.c.h.b16 %v8773
    %v9078 = vunpack.c.l.b16 %v8774
    %v9079 = vunpack.c.h.b16 %v8774
    %v9080 = vunpack.c.l.b16 %v8775
    %v9081 = vunpack.c.h.b16 %v8775
    %v9082 = vunpack.c.l.b16 %v8776
    %v9083 = vunpack.c.h.b16 %v8776
    %v9084 = vunpack.c.l.b16 %v8777
    %v9085 = vunpack.c.h.b16 %v8777
    %v9086 = vunpack.c.l.b16 %v8778
    %v9087 = vunpack.c.h.b16 %v8778
    %v9088 = vunpack.c.l.b16 %v8779
    %v9089 = vunpack.c.h.b16 %v8779
    %v9090 = vunpack.c.l.b16 %v8780
    %v9091 = vunpack.c.h.b16 %v8780
    %v9092 = vunpack.c.l.b16 %v8781
    %v9093 = vunpack.c.h.b16 %v8781
    %v9094 = vunpack.c.l.b16 %v8782
    %v9095 = vunpack.c.h.b16 %v8782
    %v9096 = vunpack.c.l.b16 %v8783
    %v9097 = vunpack.c.h.b16 %v8783
    %v9098 = vunpack.c.l.b16 %v8784
    %v9099 = vunpack.c.h.b16 %v8784
    %v9100 = vunpack.c.l.b16 %v8785
    %v9101 = vunpack.c.h.b16 %v8785
    %v9102 = vunpack.c.l.b16 %v8786
    %v9103 = vunpack.c.h.b16 %v8786
    %v9104 = vunpack.c.l.b16 %v8787
    %v9105 = vunpack.c.h.b16 %v8787
    %v9106 = vunpack.c.l.b16 %v8788
    %v9107 = vunpack.c.h.b16 %v8788
    %v9108 = vunpack.c.l.b16 %v8789
    %v9109 = vunpack.c.h.b16 %v8789
    %v9110 = vunpack.c.l.b16 %v8790
    %v9111 = vunpack.c.h.b16 %v8790
    %v9112 = vunpack.c.l.b16 %v8791
    %v9113 = vunpack.c.h.b16 %v8791
    %v9114 = vunpack.c.l.b16 %v8792
    %v9115 = vunpack.c.h.b16 %v8792
    %v9116 = vunpack.c.l.b16 %v8793
    %v9117 = vunpack.c.h.b16 %v8793
    %v9118 = vunpack.c.l.b16 %v8794
    %v9119 = vunpack.c.h.b16 %v8794
    %v9120 = vunpack.c.l.b16 %v8795
    %v9121 = vunpack.c.h.b16 %v8795
    %v9122 = vunpack.c.l.b16 %v8796
    %v9123 = vunpack.c.h.b16 %v8796
    %v9124 = vunpack.c.l.b16 %v8797
    %v9125 = vunpack.c.h.b16 %v8797
    %v9126 = vunpack.c.l.b16 %v8798
    %v9127 = vunpack.c.h.b16 %v8798
    %v9128 = vunpack.c.l.b16 %v8799
    %v9129 = vunpack.c.h.b16 %v8799
    %v9130 = vunpack.c.l.b16 %v8800
    %v9131 = vunpack.c.h.b16 %v8800
    %v9132 = vunpack.c.l.b16 %v8801
    %v9133 = vunpack.c.h.b16 %v8801
    %v9134 = vunpack.c.l.b16 %v8802
    %v9135 = vunpack.c.h.b16 %v8802
    %v9136 = vunpack.c.l.b16 %v8803
    %v9137 = vunpack.c.h.b16 %v8803
    %v9138 = vunpack.c.l.b16 %v8804
    %v9139 = vunpack.c.h.b16 %v8804
    %v9140 = vunpack.c.l.b16 %v8805
    %v9141 = vunpack.c.h.b16 %v8805
    %v9142 = vunpack.c.l.b16 %v8806
    %v9143 = vunpack.c.h.b16 %v8806
    %v9144 = vunpack.c.l.b16 %v8807
    %v9145 = vunpack.c.h.b16 %v8807
    %v9146 = vunpack.c.l.b16 %v8808
    %v9147 = vunpack.c.h.b16 %v8808
    %v9148 = vunpack.c.l.b16 %v8809
    %v9149 = vunpack.c.h.b16 %v8809
    %v9150 = vunpack.c.l.b16 %v8810
    %v9151 = vunpack.c.h.b16 %v8810
    %v9152 = vunpack.c.l.b16 %v8811
    %v9153 = vunpack.c.h.b16 %v8811
    %v9154 = vunpack.c.l.b16 %v8812
    %v9155 = vunpack.c.h.b16 %v8812
    %v9156 = vunpack.c.l.b16 %v8813
    %v9157 = vunpack.c.h.b16 %v8813
    %v9158 = vunpack.c.l.b16 %v8814
    %v9159 = vunpack.c.h.b16 %v8814
    %v9160 = vunpack.c.l.b16 %v8815
    %v9161 = vunpack.c.h.b16 %v8815
    %v9162 = vunpack.c.l.b16 %v8816
    %v9163 = vunpack.c.h.b16 %v8816
    %v9164 = vunpack.c.l.b16 %v8817
    %v9165 = vunpack.c.h.b16 %v8817
    %v9166 = vunpack.c.l.b16 %v8818
    %v9167 = vunpack.c.h.b16 %v8818
    %v9168 = vunpack.c.l.b16 %v8819
    %v9169 = vunpack.c.h.b16 %v8819
    %v9170 = vunpack.c.l.b16 %v8820
    %v9171 = vunpack.c.h.b16 %v8820
    %v9172 = vunpack.c.l.b16 %v8821
    %v9173 = vunpack.c.h.b16 %v8821
    %v9174 = vunpack.c.l.b16 %v8822
    %v9175 = vunpack.c.h.b16 %v8822
    %v9176 = vunpack.c.l.b16 %v8823
    %v9177 = vunpack.c.h.b16 %v8823
    %v9178 = vunpack.c.l.b16 %v8824
    %v9179 = vunpack.c.h.b16 %v8824
    %v9180 = vunpack.c.l.b16 %v8825
    %v9181 = vunpack.c.h.b16 %v8825
    %v9182 = vunpack.c.l.b16 %v8826
    %v9183 = vunpack.c.h.b16 %v8826
    %v9184 = vunpack.c.l.b16 %v8827
    %v9185 = vunpack.c.h.b16 %v8827
    %v9186 = vunpack.c.l.b16 %v8828
    %v9187 = vunpack.c.h.b16 %v8828
    %v9188 = vunpack.c.l.b16 %v8829
    %v9189 = vunpack.c.h.b16 %v8829
    %v9190 = vunpack.c.l.b16 %v8830
    %v9191 = vunpack.c.h.b16 %v8830
    %v9192 = vunpack.c.l.b16 %v8831
    %v9193 = vunpack.c.h.b16 %v8831
    %v9194 = vunpack.c.l.b16 %v8832
    %v9195 = vunpack.c.h.b16 %v8832
    %v9196 = vunpack.c.l.b16 %v8833
    %v9197 = vunpack.c.h.b16 %v8833
    %v9198 = vunpack.c.l.b16 %v8834
    %v9199 = vunpack.c.h.b16 %v8834
    %v9200 = vunpack.c.l.b16 %v8835
    %v9201 = vunpack.c.h.b16 %v8835
    %v9202 = vunpack.c.l.b16 %v8836
    %v9203 = vunpack.c.h.b16 %v8836
    %v9204 = vunpack.c.l.b16 %v8837
    %v9205 = vunpack.c.h.b16 %v8837
    %v9206 = vunpack.c.l.b16 %v8838
    %v9207 = vunpack.c.h.b16 %v8838
    %v9208 = vunpack.c.l.b16 %v8839
    %v9209 = vunpack.c.h.b16 %v8839
    %v9210 = vunpack.c.l.b16 %v8840
    %v9211 = vunpack.c.h.b16 %v8840
    %v9212 = vunpack.c.l.b16 %v8841
    %v9213 = vunpack.c.h.b16 %v8841
    %v9214 = vunpack.c.l.b16 %v8842
    %v9215 = vunpack.c.h.b16 %v8842
    %v9216 = vunpack.c.l.b16 %v8843
    %v9217 = vunpack.c.h.b16 %v8843
    %v9218 = vunpack.c.l.b16 %v8844
    %v9219 = vunpack.c.h.b16 %v8844
    %v9220 = vunpack.c.l.b16 %v8845
    %v9221 = vunpack.c.h.b16 %v8845
    %v9222 = vunpack.c.l.b16 %v8846
    %v9223 = vunpack.c.h.b16 %v8846
    %v9224 = vunpack.c.l.b16 %v8847
    %v9225 = vunpack.c.h.b16 %v8847
    %v9226 = vunpack.c.l.b16 %v8848
    %v9227 = vunpack.c.h.b16 %v8848
    %v9228 = vunpack.c.l.b16 %v8849
    %v9229 = vunpack.c.h.b16 %v8849
    %v9230 = vunpack.c.l.b16 %v8850
    %v9231 = vunpack.c.h.b16 %v8850
    %v9232 = vunpack.c.l.b16 %v8851
    %v9233 = vunpack.c.h.b16 %v8851
    %v9234 = vunpack.c.l.b16 %v8852
    %v9235 = vunpack.c.h.b16 %v8852
    %v9236 = vunpack.c.l.b16 %v8853
    %v9237 = vunpack.c.h.b16 %v8853
    %v9238 = vunpack.c.l.b16 %v8854
    %v9239 = vunpack.c.h.b16 %v8854
    %v9240 = vunpack.c.l.b16 %v8855
    %v9241 = vunpack.c.h.b16 %v8855
    %v9242 = vunpack.c.l.b16 %v8856
    %v9243 = vunpack.c.h.b16 %v8856
    %v9244 = vunpack.c.l.b16 %v8857
    %v9245 = vunpack.c.h.b16 %v8857
    %v9246 = vunpack.c.l.b16 %v8858
    %v9247 = vunpack.c.h.b16 %v8858
    %v9248 = vunpack.c.l.b16 %v8859
    %v9249 = vunpack.c.h.b16 %v8859
    %v9250 = vunpack.c.l.b16 %v8860
    %v9251 = vunpack.c.h.b16 %v8860
    %v9252 = vunpack.c.l.b16 %v8861
    %v9253 = vunpack.c.h.b16 %v8861
    %v9254 = vunpack.c.l.b16 %v8862
    %v9255 = vunpack.c.h.b16 %v8862
    %v9256 = vunpack.c.l.b16 %v8863
    %v9257 = vunpack.c.h.b16 %v8863
    %v9258 = vunpack.c.l.b16 %v8864
    %v9259 = vunpack.c.h.b16 %v8864
    %v9260 = vunpack.c.l.b16 %v8865
    %v9261 = vunpack.c.h.b16 %v8865
    %v9262 = vunpack.c.l.b16 %v8866
    %v9263 = vunpack.c.h.b16 %v8866
    %v9264 = vunpack.c.l.b16 %v8867
    %v9265 = vunpack.c.h.b16 %v8867
    %v9266 = vunpack.c.l.b16 %v8868
    %v9267 = vunpack.c.h.b16 %v8868
    %v9268 = vunpack.c.l.b16 %v8869
    %v9269 = vunpack.c.h.b16 %v8869
    %v9270 = vunpack.c.l.b16 %v8870
    %v9271 = vunpack.c.h.b16 %v8870
    %v9272 = vunpack.c.l.b16 %v8871
    %v9273 = vunpack.c.h.b16 %v8871
    %v9274 = vunpack.c.l.b16 %v8872
    %v9275 = vunpack.c.h.b16 %v8872
    %v9276 = vunpack.c.l.b16 %v8873
    %v9277 = vunpack.c.h.b16 %v8873
    %v9278 = vunpack.c.l.b16 %v8874
    %v9279 = vunpack.c.h.b16 %v8874
    %v9280 = vunpack.c.l.b16 %v8875
    %v9281 = vunpack.c.h.b16 %v8875
    %v9282 = vunpack.c.l.b16 %v8876
    %v9283 = vunpack.c.h.b16 %v8876
    %v9284 = vpack.c.b16 %v9032, %v9028
    %v9285 = vpack.c.b16 %v9033, %v9029
    %v9286 = vpack.c.b16 %v9034, %v9030
    %v9287 = vpack.c.b16 %v9035, %v9031
    %v9288 = vpack.c.b16 %v9040, %v9036
    %v9289 = vpack.c.b16 %v9041, %v9037
    %v9290 = vpack.c.b16 %v9042, %v9038
    %v9291 = vpack.c.b16 %v9043, %v9039
    %v9292 = vpack.c.b16 %v9048, %v9044
    %v9293 = vpack.c.b16 %v9049, %v9045
    %v9294 = vpack.c.b16 %v9050, %v9046
    %v9295 = vpack.c.b16 %v9051, %v9047
    %v9296 = vpack.c.b16 %v9056, %v9052
    %v9297 = vpack.c.b16 %v9057, %v9053
    %v9298 = vpack.c.b16 %v9058, %v9054
    %v9299 = vpack.c.b16 %v9059, %v9055
    %v9300 = vpack.c.b16 %v9064, %v9060
    %v9301 = vpack.c.b16 %v9065, %v9061
    %v9302 = vpack.c.b16 %v9066, %v9062
    %v9303 = vpack.c.b16 %v9067, %v9063
    %v9304 = vpack.c.b16 %v9072, %v9068
    %v9305 = vpack.c.b16 %v9073, %v9069
    %v9306 = vpack.c.b16 %v9074, %v9070
    %v9307 = vpack.c.b16 %v9075, %v9071
    %v9308 = vpack.c.b16 %v9080, %v9076
    %v9309 = vpack.c.b16 %v9081, %v9077
    %v9310 = vpack.c.b16 %v9082, %v9078
    %v9311 = vpack.c.b16 %v9083, %v9079
    %v9312 = vpack.c.b16 %v9088, %v9084
    %v9313 = vpack.c.b16 %v9089, %v9085
    %v9314 = vpack.c.b16 %v9090, %v9086
    %v9315 = vpack.c.b16 %v9091, %v9087
    %v9316 = vpack.c.b16 %v9096, %v9092
    %v9317 = vpack.c.b16 %v9097, %v9093
    %v9318 = vpack.c.b16 %v9098, %v9094
    %v9319 = vpack.c.b16 %v9099, %v9095
    %v9320 = vpack.c.b16 %v9104, %v9100
    %v9321 = vpack.c.b16 %v9105, %v9101
    %v9322 = vpack.c.b16 %v9106, %v9102
    %v9323 = vpack.c.b16 %v9107, %v9103
    %v9324 = vpack.c.b16 %v9112, %v9108
    %v9325 = vpack.c.b16 %v9113, %v9109
    %v9326 = vpack.c.b16 %v9114, %v9110
    %v9327 = vpack.c.b16 %v9115, %v9111
    %v9328 = vpack.c.b16 %v9120, %v9116
    %v9329 = vpack.c.b16 %v9121, %v9117
    %v9330 = vpack.c.b16 %v9122, %v9118
    %v9331 = vpack.c.b16 %v9123, %v9119
    %v9332 = vpack.c.b16 %v9128, %v9124
    %v9333 = vpack.c.b16 %v9129, %v9125
    %v9334 = vpack.c.b16 %v9130, %v9126
    %v9335 = vpack.c.b16 %v9131, %v9127
    %v9336 = vpack.c.b16 %v9136, %v9132
    %v9337 = vpack.c.b16 %v9137, %v9133
    %v9338 = vpack.c.b16 %v9138, %v9134
    %v9339 = vpack.c.b16 %v9139, %v9135
    %v9340 = vpack.c.b16 %v9144, %v9140
    %v9341 = vpack.c.b16 %v9145, %v9141
    %v9342 = vpack.c.b16 %v9146, %v9142
    %v9343 = vpack.c.b16 %v9147, %v9143
    %v9344 = vpack.c.b16 %v9152, %v9148
    %v9345 = vpack.c.b16 %v9153, %v9149
    %v9346 = vpack.c.b16 %v9154, %v9150
    %v9347 = vpack.c.b16 %v9155, %v9151
    %v9348 = vpack.c.b16 %v9160, %v9156
    %v9349 = vpack.c.b16 %v9161, %v9157
    %v9350 = vpack.c.b16 %v9162, %v9158
    %v9351 = vpack.c.b16 %v9163, %v9159
    %v9352 = vpack.c.b16 %v9168, %v9164
    %v9353 = vpack.c.b16 %v9169, %v9165
    %v9354 = vpack.c.b16 %v9170, %v9166
    %v9355 = vpack.c.b16 %v9171, %v9167
    %v9356 = vpack.c.b16 %v9176, %v9172
    %v9357 = vpack.c.b16 %v9177, %v9173
    %v9358 = vpack.c.b16 %v9178, %v9174
    %v9359 = vpack.c.b16 %v9179, %v9175
    %v9360 = vpack.c.b16 %v9184, %v9180
    %v9361 = vpack.c.b16 %v9185, %v9181
    %v9362 = vpack.c.b16 %v9186, %v9182
    %v9363 = vpack.c.b16 %v9187, %v9183
    %v9364 = vpack.c.b16 %v9192, %v9188
    %v9365 = vpack.c.b16 %v9193, %v9189
    %v9366 = vpack.c.b16 %v9194, %v9190
    %v9367 = vpack.c.b16 %v9195, %v9191
    %v9368 = vpack.c.b16 %v9200, %v9196
    %v9369 = vpack.c.b16 %v9201, %v9197
    %v9370 = vpack.c.b16 %v9202, %v9198
    %v9371 = vpack.c.b16 %v9203, %v9199
    %v9372 = vpack.c.b16 %v9208, %v9204
    %v9373 = vpack.c.b16 %v9209, %v9205
    %v9374 = vpack.c.b16 %v9210, %v9206
    %v9375 = vpack.c.b16 %v9211, %v9207
    %v9376 = vpack.c.b16 %v9216, %v9212
    %v9377 = vpack.c.b16 %v9217, %v9213
    %v9378 = vpack.c.b16 %v9218, %v9214
    %v9379 = vpack.c.b16 %v9219, %v9215
    %v9380 = vpack.c.b16 %v9224, %v9220
    %v9381 = vpack.c.b16 %v9225, %v9221
    %v9382 = vpack.c.b16 %v9226, %v9222
    %v9383 = vpack.c.b16 %v9227, %v9223
    %v9384 = vpack.c.b16 %v9232, %v9228
    %v9385 = vpack.c.b16 %v9233, %v9229
    %v9386 = vpack.c.b16 %v9234, %v9230
    %v9387 = vpack.c.b16 %v9235, %v9231
    %v9388 = vpack.c.b16 %v9240, %v9236
    %v9389 = vpack.c.b16 %v9241, %v9237
    %v9390 = vpack.c.b16 %v9242, %v9238
    %v9391 = vpack.c.b16 %v9243, %v9239
    %v9392 = vpack.c.b16 %v9248, %v9244
    %v9393 = vpack.c.b16 %v9249, %v9245
    %v9394 = vpack.c.b16 %v9250, %v9246
    %v9395 = vpack.c.b16 %v9251, %v9247
    %v9396 = vpack.c.b16 %v9256, %v9252
    %v9397 = vpack.c.b16 %v9257, %v9253
    %v9398 = vpack.c.b16 %v9258, %v9254
    %v9399 = vpack.c.b16 %v9259, %v9255
    %v9400 = vpack.c.b16 %v9264, %v9260
    %v9401 = vpack.c.b16 %v9265, %v9261
    %v9402 = vpack.c.b16 %v9266, %v9262
    %v9403 = vpack.c.b16 %v9267, %v9263
    %v9404 = vpack.c.b16 %v9272, %v9268
    %v9405 = vpack.c.b16 %v9273, %v9269
    %v9406 = vpack.c.b16 %v9274, %v9270
    %v9407 = vpack.c.b16 %v9275, %v9271
    %v9408 = vpack.c.b16 %v9280, %v9276
    %v9409 = vpack.c.b16 %v9281, %v9277
    %v9410 = vpack.c.b16 %v9282, %v9278
    %v9411 = vpack.c.b16 %v9283, %v9279
    %9540 = vmatprep.subr.bf16.mxu0 %v9285
    %9541 = vmatpush1.bf16.msra.mxu0 %v9284
    %9542 = vmatprep.subr.bf16.mxu0 %v9289
    %9543 = vmatpush1.bf16.msra.mxu0 %v9288
    %9544 = vmatprep.subr.bf16.mxu0 %v9293
    %9545 = vmatpush1.bf16.msra.mxu0 %v9292
    %9546 = vmatprep.subr.bf16.mxu0 %v9297
    %9547 = vmatpush1.bf16.msra.mxu0 %v9296
    %9548 = vmatprep.subr.bf16.mxu0 %v9301
    %9549 = vmatpush1.bf16.msra.mxu0 %v9300
    %9550 = vmatprep.subr.bf16.mxu0 %v9305
    %9551 = vmatpush1.bf16.msra.mxu0 %v9304
    %9552 = vmatprep.subr.bf16.mxu0 %v9309
    %9553 = vmatpush1.bf16.msra.mxu0 %v9308
    %9554 = vmatprep.subr.bf16.mxu0 %v9313
    %9555 = vmatpush1.bf16.msra.mxu0 %v9312
    %9556 = vmatprep.subr.bf16.mxu0 %v9317
    %9557 = vmatpush1.bf16.msra.mxu0 %v9316
    %9558 = vmatprep.subr.bf16.mxu0 %v9321
    %9559 = vmatpush1.bf16.msra.mxu0 %v9320
    %9560 = vmatprep.subr.bf16.mxu0 %v9325
    %9561 = vmatpush1.bf16.msra.mxu0 %v9324
    %9562 = vmatprep.subr.bf16.mxu0 %v9329
    %9563 = vmatpush1.bf16.msra.mxu0 %v9328
    %9564 = vmatprep.subr.bf16.mxu0 %v9333
    %9565 = vmatpush1.bf16.msra.mxu0 %v9332
    %9566 = vmatprep.subr.bf16.mxu0 %v9337
    %9567 = vmatpush1.bf16.msra.mxu0 %v9336
    %9568 = vmatprep.subr.bf16.mxu0 %v9341
    %9569 = vmatpush1.bf16.msra.mxu0 %v9340
    %9570 = vmatprep.subr.bf16.mxu0 %v9345
    %9571 = vmatpush1.bf16.msra.mxu0 %v9344
    %9572 = vmatprep.mubr.bf16.mxu0 %v8745
    %9573 = vmatmul.mubr.bf16.gmra.mrb[0].mxu0 %v8744
    %v9574 = vpop.f32.mrb[0].mxu0
    %v9575 = vadd.f32 %v8883, %v9574
    %v9576 = vpop.f32.mrb[0].mxu0
    %v9577 = vadd.f32 %v8887, %v9576
    %v9578 = vpop.f32.mrb[0].mxu0
    %v9579 = vpop.f32.mrb[0].mxu0
    %9580 = vdwg.mxu0
    %9581 = vmatprep.subr.bf16.mxu0 %v9349
    %9582 = vmatpush1.bf16.msra.mxu0 %v9348
    %9583 = vmatprep.subr.bf16.mxu0 %v9353
    %9584 = vmatpush1.bf16.msra.mxu0 %v9352
    %9585 = vmatprep.subr.bf16.mxu0 %v9357
    %9586 = vmatpush1.bf16.msra.mxu0 %v9356
    %9587 = vmatprep.subr.bf16.mxu0 %v9361
    %9588 = vmatpush1.bf16.msra.mxu0 %v9360
    %9589 = vmatprep.subr.bf16.mxu0 %v9365
    %9590 = vmatpush1.bf16.msra.mxu0 %v9364
    %9591 = vmatprep.subr.bf16.mxu0 %v9369
    %9592 = vmatpush1.bf16.msra.mxu0 %v9368
    %9593 = vmatprep.subr.bf16.mxu0 %v9373
    %9594 = vmatpush1.bf16.msra.mxu0 %v9372
    %9595 = vmatprep.subr.bf16.mxu0 %v9377
    %9596 = vmatpush1.bf16.msra.mxu0 %v9376
    %9597 = vmatprep.subr.bf16.mxu0 %v9381
    %9598 = vmatpush1.bf16.msra.mxu0 %v9380
    %9599 = vmatprep.subr.bf16.mxu0 %v9385
    %9600 = vmatpush1.bf16.msra.mxu0 %v9384
    %9601 = vmatprep.subr.bf16.mxu0 %v9389
    %9602 = vmatpush1.bf16.msra.mxu0 %v9388
    %9603 = vmatprep.subr.bf16.mxu0 %v9393
    %9604 = vmatpush1.bf16.msra.mxu0 %v9392
    %9605 = vmatprep.subr.bf16.mxu0 %v9397
    %9606 = vmatpush1.bf16.msra.mxu0 %v9396
    %9607 = vmatprep.subr.bf16.mxu0 %v9401
    %9608 = vmatpush1.bf16.msra.mxu0 %v9400
    %9609 = vmatprep.subr.bf16.mxu0 %v9405
    %9610 = vmatpush1.bf16.msra.mxu0 %v9404
    %9611 = vmatprep.subr.bf16.mxu0 %v9409
    %9612 = vmatpush1.bf16.msra.mxu0 %v9408
    %9613 = vmatprep.mubr.bf16.mxu0 %v8747
    %9614 = vmatmul.mubr.bf16.gmra.mrb[0].mxu0 %v8746
    %v9615 = vpop.f32.mrb[0].mxu0
    %v9616 = vadd.f32 %v9575, %v9615
    %v9617 = vpop.f32.mrb[0].mxu0
    %v9618 = vadd.f32 %v9577, %v9617
    %v9619 = vpop.f32.mrb[0].mxu0
    %v9620 = vpop.f32.mrb[0].mxu0
    %9621 = vdwg.mxu0
    %9622 = vmatprep.subr.bf16.mxu0 %v9287
    %9623 = vmatpush1.bf16.msra.mxu0 %v9286
    %9624 = vmatprep.subr.bf16.mxu0 %v9291
    %9625 = vmatpush1.bf16.msra.mxu0 %v9290
    %9626 = vmatprep.subr.bf16.mxu0 %v9295
    %9627 = vmatpush1.bf16.msra.mxu0 %v9294
    %9628 = vmatprep.subr.bf16.mxu0 %v9299
    %9629 = vmatpush1.bf16.msra.mxu0 %v9298
    %9630 = vmatprep.subr.bf16.mxu0 %v9303
    %9631 = vmatpush1.bf16.msra.mxu0 %v9302
    %9632 = vmatprep.subr.bf16.mxu0 %v9307
    %9633 = vmatpush1.bf16.msra.mxu0 %v9306
    %9634 = vmatprep.subr.bf16.mxu0 %v9311
    %9635 = vmatpush1.bf16.msra.mxu0 %v9310
    %9636 = vmatprep.subr.bf16.mxu0 %v9315
    %9637 = vmatpush1.bf16.msra.mxu0 %v9314
    %9638 = vmatprep.subr.bf16.mxu0 %v9319
    %9639 = vmatpush1.bf16.msra.mxu0 %v9318
    %9640 = vmatprep.subr.bf16.mxu0 %v9323
    %9641 = vmatpush1.bf16.msra.mxu0 %v9322
    %9642 = vmatprep.subr.bf16.mxu0 %v9327
    %9643 = vmatpush1.bf16.msra.mxu0 %v9326
    %9644 = vmatprep.subr.bf16.mxu0 %v9331
    %9645 = vmatpush1.bf16.msra.mxu0 %v9330
    %9646 = vmatprep.subr.bf16.mxu0 %v9335
    %9647 = vmatpush1.bf16.msra.mxu0 %v9334
    %9648 = vmatprep.subr.bf16.mxu0 %v9339
    %9649 = vmatpush1.bf16.msra.mxu0 %v9338
    %9650 = vmatprep.subr.bf16.mxu0 %v9343
    %9651 = vmatpush1.bf16.msra.mxu0 %v9342
    %9652 = vmatprep.subr.bf16.mxu0 %v9347
    %9653 = vmatpush1.bf16.msra.mxu0 %v9346
    %9654 = vmatprep.mubr.bf16.mxu0 %v8745
    %9655 = vmatmul.mubr.bf16.gmra.mrb[0].mxu0 %v8744
    %v9656 = vpop.f32.mrb[0].mxu0
    %v9657 = vadd.f32 %v8891, %v9656
    %v9658 = vpop.f32.mrb[0].mxu0
    %v9659 = vadd.f32 %v8895, %v9658
    %v9660 = vpop.f32.mrb[0].mxu0
    %v9661 = vpop.f32.mrb[0].mxu0
    %9662 = vdwg.mxu0
    %9663 = vmatprep.subr.bf16.mxu0 %v9351
    %9664 = vmatpush1.bf16.msra.mxu0 %v9350
    %9665 = vmatprep.subr.bf16.mxu0 %v9355
    %9666 = vmatpush1.bf16.msra.mxu0 %v9354
    %9667 = vmatprep.subr.bf16.mxu0 %v9359
    %9668 = vmatpush1.bf16.msra.mxu0 %v9358
    %9669 = vmatprep.subr.bf16.mxu0 %v9363
    %9670 = vmatpush1.bf16.msra.mxu0 %v9362
    %9671 = vmatprep.subr.bf16.mxu0 %v9367
    %9672 = vmatpush1.bf16.msra.mxu0 %v9366
    %9673 = vmatprep.subr.bf16.mxu0 %v9371
    %9674 = vmatpush1.bf16.msra.mxu0 %v9370
    %9675 = vmatprep.subr.bf16.mxu0 %v9375
    %9676 = vmatpush1.bf16.msra.mxu0 %v9374
    %9677 = vmatprep.subr.bf16.mxu0 %v9379
    %9678 = vmatpush1.bf16.msra.mxu0 %v9378
    %9679 = vmatprep.subr.bf16.mxu0 %v9383
    %9680 = vmatpush1.bf16.msra.mxu0 %v9382
    %9681 = vmatprep.subr.bf16.mxu0 %v9387
    %9682 = vmatpush1.bf16.msra.mxu0 %v9386
    %9683 = vmatprep.subr.bf16.mxu0 %v9391
    %9684 = vmatpush1.bf16.msra.mxu0 %v9390
    %9685 = vmatprep.subr.bf16.mxu0 %v9395
    %9686 = vmatpush1.bf16.msra.mxu0 %v9394
    %9687 = vmatprep.subr.bf16.mxu0 %v9399
    %9688 = vmatpush1.bf16.msra.mxu0 %v9398
    %9689 = vmatprep.subr.bf16.mxu0 %v9403
    %9690 = vmatpush1.bf16.msra.mxu0 %v9402
    %9691 = vmatprep.subr.bf16.mxu0 %v9407
    %9692 = vmatpush1.bf16.msra.mxu0 %v9406
    %9693 = vmatprep.subr.bf16.mxu0 %v9411
    %9694 = vmatpush1.bf16.msra.mxu0 %v9410
    %9695 = vmatprep.mubr.bf16.mxu0 %v8747
    %9696 = vmatmul.mubr.bf16.gmra.mrb[0].mxu0 %v8746
    %v9697 = vpop.f32.mrb[0].mxu0
    %v9698 = vadd.f32 %v9657, %v9697
    %v9699 = vpop.f32.mrb[0].mxu0
    %v9700 = vadd.f32 %v9659, %v9699
    %v9701 = vpop.f32.mrb[0].mxu0
    %v9702 = vpop.f32.mrb[0].mxu0
    %9703 = vdwg.mxu0
    %9704 = vst [vmem:[%s3] sm:$0xff] %v9616
    %9705 = vst [vmem:[%s3 + $0x8] sm:$0xff] %v9618
    %9706 = vst [vmem:[%s3 + $0x10] sm:$0xff] %v9698
    %9707 = vst [vmem:[%s3 + $0x18] sm:$0xff] %v9700
    // Predicated region
    $region22: #{_semgcn_apply.1} parent=1 // pred_check
      _
    $region23: #{_semgcn_apply.1} parent=1 // pred_check_branch
      %9709 = sbr.rel (0) target = $region25
    $region24: #{_semgcn_apply.1} parent=1 // pred_region
      _
    $region25: #{_semgcn_apply.1} parent=1 // pred_fallthru
      _
    // Predicated region
    $region26: #{_semgcn_apply.1} parent=1 // pred_check
      _
    $region27: #{_semgcn_apply.1} parent=1 // pred_check_branch
      %9711 = sbr.rel (0) target = $region29
    $region28: #{_semgcn_apply.1} parent=1 // pred_region
      _
    $region29: #{_semgcn_apply.1} parent=1 // pred_fallthru
      _
    %9712 = vsyncpa [#allocation3], 1
    %9713 = vsyncpa [#allocation5], 1

</llo_original>
